<compile_context>
chip_gen: v7x
topology: tpu7x:2x2x1
jax: 0.10.0
libtpu: 0.0.40
codegen_flags: <defaults>
</compile_context>

<pallas_src>
import math
import jax
import jax.numpy as jnp
from jax.experimental import pallas as pl
from jax.experimental.pallas import tpu as pltpu


def mlp_kernel(x_ref, w1_ref, b1_ref, w2_ref, b2_ref, o_ref, h_ref, acc_ref):
    hk = pl.program_id(1)

    @pl.when(hk == 0)
    def _init():
        acc_ref[...] = jnp.zeros_like(acc_ref)

    # GEMM1 on the MXU: bf16 x bf16 -> f32 accumulate (force bf16 LHS so a
    # f32 caller input never silently promotes to the slow f32 MXU path).
    h = jnp.dot(x_ref[...].astype(jnp.bfloat16), w1_ref[...],
                preferred_element_type=jnp.float32)
    # Bias-add + ReLU in f32 (portable to v5e VPU), then stage the activation
    # chunk through a *bf16* VMEM scratch: GEMM2 consumes bf16 anyway, so the
    # f32 round-trip would be pure extra vst/vld bytes.
    h_ref[...] = jnp.maximum(h + b1_ref[...], 0.0).astype(jnp.bfloat16)

    # GEMM2 partial product over this hidden chunk, accumulated in f32.
    acc_ref[...] += jnp.dot(h_ref[...], w2_ref[...],
                            preferred_element_type=jnp.float32)

    @pl.when(hk == pl.num_programs(1) - 1)
    def _finalize():
        y = jnp.maximum(acc_ref[...] + b2_ref[...], 0.0)
        o_ref[...] = y.astype(o_ref.dtype)


def mlp_forward(x, w1, b1, w2, b2, *, tile_m=512, tile_h=None,
                out_dtype=None, weight_vmem_budget=40 << 20):
    """x: (B, input_dim); w1:(in,hid), w2:(hid,out) (bf16); b:(1,dim) f32.
    Returns (B, output_dim) in out_dtype (defaults to x.dtype)."""
    B, in_dim = x.shape
    hidden_dim = w1.shape[1]
    out_dim = w2.shape[1]
    assert w1.shape == (in_dim, hidden_dim)
    assert w2.shape == (hidden_dim, out_dim)
    assert b1.shape == (1, hidden_dim) and b2.shape == (1, out_dim)
    if out_dtype is None:
        out_dtype = x.dtype
    out_dtype = jnp.dtype(out_dtype)

    # Batch tile: clamp to B (full-dim block is always legal); keep it
    # sublane-aligned otherwise. Ragged last tile is handled by Pallas
    # boundary masking (no jnp.pad -> no extra HBM copy of x).
    if tile_m >= B:
        tile_m = B
    else:
        tile_m = (tile_m // 8) * 8 or 8
    n_tiles_m = pl.cdiv(B, tile_m)

    # Hidden-chunk size: keep the whole hidden dim resident if the weight
    # footprint fits the budget, otherwise halve (staying 128-aligned and an
    # exact divisor of hidden so no garbage columns contaminate the reduction).
    def _weight_bytes(th):
        n_buf = 1 if th == hidden_dim else 2   # double-buffered when streamed
        return n_buf * (in_dim * th * w1.dtype.itemsize
                        + th * b1.dtype.itemsize
                        + th * out_dim * w2.dtype.itemsize
                        + out_dim * b2.dtype.itemsize)

    if tile_h is None:
        tile_h = hidden_dim
        while _weight_bytes(tile_h) > weight_vmem_budget and tile_h % 256 == 0:
            tile_h //= 2
    assert hidden_dim % tile_h == 0, "tile_h must divide hidden_dim exactly"
    assert tile_h % 128 == 0 or tile_h == hidden_dim
    n_tiles_h = hidden_dim // tile_h
    resident = n_tiles_h == 1

    # Constant-index (resident) weight blocks don't need double buffering.
    w_mode = dict(pipeline_mode=pl.Buffered(1)) if resident else {}

    in_specs = [
        # x: one batch tile per m-step, revisited (not re-DMA'd) across h-steps.
        pl.BlockSpec((tile_m, in_dim), lambda i, k: (i, 0)),
        pl.BlockSpec((in_dim, tile_h), lambda i, k: (0, k), **w_mode),
        pl.BlockSpec((1, tile_h), lambda i, k: (0, k), **w_mode),
        pl.BlockSpec((tile_h, out_dim), lambda i, k: (k, 0), **w_mode),
        pl.BlockSpec((1, out_dim), lambda i, k: (0, 0), **w_mode),
    ]
    out_specs = pl.BlockSpec((tile_m, out_dim), lambda i, k: (i, 0))

    # Explicit VMEM budget from the actual footprint (headroom, clamped to
    # 64 MiB so it is legal on v7x and a no-op cap on v5e/v6e).
    n_wbuf = 1 if resident else 2
    vmem_bytes = (
        2 * tile_m * in_dim * x.dtype.itemsize                    # x tile x2
        + n_wbuf * (in_dim * tile_h * w1.dtype.itemsize
                    + tile_h * b1.dtype.itemsize
                    + tile_h * out_dim * w2.dtype.itemsize
                    + out_dim * b2.dtype.itemsize)                # weights
        + 2 * tile_m * out_dim * out_dtype.itemsize               # out tile x2
        + tile_m * tile_h * 2                                     # bf16 h scratch
        + tile_m * out_dim * 4                                    # f32 accumulator
    )
    vmem_limit = int(min(max(int(vmem_bytes * 1.3) + (8 << 20), 32 << 20),
                         64 << 20))

    # Advisory cost estimate for XLA's scheduler.
    flops = 2 * B * (in_dim * hidden_dim + hidden_dim * out_dim)
    bytes_accessed = (
        x.size * x.dtype.itemsize
        + w1.size * w1.dtype.itemsize + b1.size * b1.dtype.itemsize
        + w2.size * w2.dtype.itemsize + b2.size * b2.dtype.itemsize
        + B * out_dim * out_dtype.itemsize
    )
    cost = pl.CostEstimate(flops=flops, transcendentals=0,
                           bytes_accessed=bytes_accessed)

    out = pl.pallas_call(
        mlp_kernel,
        out_shape=jax.ShapeDtypeStruct((B, out_dim), out_dtype),
        grid_spec=pltpu.PrefetchScalarGridSpec(
            num_scalar_prefetch=0,
            grid=(n_tiles_m, n_tiles_h),
            in_specs=in_specs,
            out_specs=out_specs,
            scratch_shapes=[
                pltpu.VMEM((tile_m, tile_h), jnp.bfloat16),   # staged ReLU act
                pltpu.VMEM((tile_m, out_dim), jnp.float32),   # f32 accumulator
            ],
        ),
        compiler_params=pltpu.CompilerParams(
            # Batch tiles independent (megacore shard); hidden axis is a
            # reduction -> arbitrary.
            dimension_semantics=("parallel", "arbitrary"),
            vmem_limit_bytes=vmem_limit,
        ),
        cost_estimate=cost,
    )(x, w1, b1, w2, b2)
    return out


def init_linear_params(key, in_features, out_features,
                       w_dtype=jnp.bfloat16, b_dtype=jnp.float32):
    """Deterministic init mimicking nn.Linear defaults (uniform +/- 1/sqrt(fan_in)).
    Weight stored as (in, out) so the kernel computes x @ W directly."""
    k_w, k_b = jax.random.split(key)
    bound = 1.0 / math.sqrt(in_features)
    w = jax.random.uniform(k_w, (in_features, out_features),
                           minval=-bound, maxval=bound,
                           dtype=jnp.float32).astype(w_dtype)
    b = jax.random.uniform(k_b, (1, out_features),
                           minval=-bound, maxval=bound, dtype=b_dtype)
    return w, b


if __name__ == "__main__":
    # Module defaults: MLP(input_dim=256, hidden_dim=2048, output_dim=256).
    # batch=384 with tile_m=256 exercises both the multi-tile grid and the
    # ragged (masked) last batch tile without any wrapper-side padding.
    batch, input_dim, hidden_dim, output_dim = 384, 256, 2048, 256

    key = jax.random.PRNGKey(0)
    k_x, k_l1, k_l2 = jax.random.split(key, 3)

    x = jax.random.normal(k_x, (batch, input_dim),
                          dtype=jnp.float32).astype(jnp.bfloat16)
    w1, b1 = init_linear_params(k_l1, input_dim, hidden_dim)
    w2, b2 = init_linear_params(k_l2, hidden_dim, output_dim)

    out = mlp_forward(x, w1, b1, w2, b2, tile_m=256)
    out = jax.block_until_ready(out)

    # Pure-JAX reference performing the same bf16-MXU / f32-accumulate math.
    h_ref = jnp.maximum(
        jnp.dot(x, w1, preferred_element_type=jnp.float32) + b1, 0.0)
    ref = jnp.maximum(
        jnp.dot(h_ref.astype(jnp.bfloat16), w2,
                preferred_element_type=jnp.float32) + b2, 0.0).astype(out.dtype)

    assert out.shape == (batch, output_dim)
    assert jnp.allclose(out.astype(jnp.float32), ref.astype(jnp.float32),
                        atol=2e-2, rtol=2e-2), (
        float(jnp.max(jnp.abs(out.astype(jnp.float32) - ref.astype(jnp.float32)))))

    print("KERNEL_OK")
</pallas_src>

<mosaic_0001>
module attributes {stable_mosaic.version = 11 : i64} {
  func.func @mlp_kernel(%arg0: i32, %arg1: i32, %arg2: memref<256x256xbf16, #tpu.memory_space<vmem>>, %arg3: memref<256x2048xbf16, #tpu.memory_space<vmem>>, %arg4: memref<1x2048xf32, #tpu.memory_space<vmem>>, %arg5: memref<2048x256xbf16, #tpu.memory_space<vmem>>, %arg6: memref<1x256xf32, #tpu.memory_space<vmem>>, %arg7: memref<256x256xbf16, #tpu.memory_space<vmem>>, %arg8: memref<256x2048xbf16, #tpu.memory_space<vmem>>, %arg9: memref<256x256xf32, #tpu.memory_space<vmem>>) attributes {dimension_semantics = [#tpu.dimension_semantics<parallel>, #tpu.dimension_semantics<arbitrary>], iteration_bounds = array<i64: 2, 1>, scalar_prefetch = 0 : i64, scratch_operands = 2 : i64, tpu.core_type = #tpu.core_type<tc>, window_params = [{transform_indices = @transform_0, window_bounds = array<i64: 256, 256>}, {pipeline_mode = #tpu.pipeline_mode<synchronous>, transform_indices = @transform_1, window_bounds = array<i64: 256, 2048>}, {pipeline_mode = #tpu.pipeline_mode<synchronous>, transform_indices = @transform_2, window_bounds = array<i64: 1, 2048>}, {pipeline_mode = #tpu.pipeline_mode<synchronous>, transform_indices = @transform_3, window_bounds = array<i64: 2048, 256>}, {pipeline_mode = #tpu.pipeline_mode<synchronous>, transform_indices = @transform_4, window_bounds = array<i64: 1, 256>}, {transform_indices = @transform_5, window_bounds = array<i64: 256, 256>}]} {
    %c0_i32 = arith.constant 0 : i32
    %0 = arith.cmpi eq, %arg1, %c0_i32 : i32
    %1 = arith.extui %0 : i1 to i32
    %c0_i32_0 = arith.constant 0 : i32
    %2 = arith.cmpi ne, %1, %c0_i32_0 : i32
    scf.if %2 {
      %cst_20 = arith.constant 0.000000e+00 : f32
      %22 = vector.broadcast %cst_20 : f32 to vector<256x256xf32>
      %c0_21 = arith.constant 0 : index
      %c0_22 = arith.constant 0 : index
      %23 = vector.load %arg9[%c0_21, %c0_22] : memref<256x256xf32, #tpu.memory_space<vmem>>, vector<256x256xf32>
      tpu.vector_store %arg9[%c0_21, %c0_22], %22 {strides = array<i32>} : memref<256x256xf32, #tpu.memory_space<vmem>>, vector<256x256xf32>,
    } else {
    }
    %c0 = arith.constant 0 : index
    %c0_1 = arith.constant 0 : index
    %3 = vector.load %arg2[%c0, %c0_1] : memref<256x256xbf16, #tpu.memory_space<vmem>>, vector<256x256xbf16>
    %c0_2 = arith.constant 0 : index
    %c0_3 = arith.constant 0 : index
    %4 = vector.load %arg3[%c0_2, %c0_3] : memref<256x2048xbf16, #tpu.memory_space<vmem>>, vector<256x2048xbf16>
    %cst = arith.constant dense<0.000000e+00> : vector<256x2048xf32>
    %5 = tpu.matmul %3, %4, %cst {dimension_numbers = #tpu.dot_dimension_numbers<[1], [0], [0], [1], [0, 0, 1, 1], [], []>} : vector<256x256xbf16>, vector<256x2048xbf16>, vector<256x2048xf32> -> vector<256x2048xf32>
    %c0_4 = arith.constant 0 : index
    %c0_5 = arith.constant 0 : index
    %6 = vector.load %arg4[%c0_4, %c0_5] : memref<1x2048xf32, #tpu.memory_space<vmem>>, vector<1x2048xf32>
    %7 = vector.broadcast %6 : vector<1x2048xf32> to vector<256x2048xf32>
    %8 = arith.addf %5, %7 : vector<256x2048xf32>
    %cst_6 = arith.constant 0.000000e+00 : f32
    %9 = vector.broadcast %cst_6 : f32 to vector<256x2048xf32>
    %10 = arith.maximumf %8, %9 : vector<256x2048xf32>
    %11 = arith.truncf %10 : vector<256x2048xf32> to vector<256x2048xbf16>
    %c0_7 = arith.constant 0 : index
    %c0_8 = arith.constant 0 : index
    %12 = vector.load %arg8[%c0_7, %c0_8] : memref<256x2048xbf16, #tpu.memory_space<vmem>>, vector<256x2048xbf16>
    tpu.vector_store %arg8[%c0_7, %c0_8], %11 {strides = array<i32>} : memref<256x2048xbf16, #tpu.memory_space<vmem>>, vector<256x2048xbf16>,
    %c0_9 = arith.constant 0 : index
    %c0_10 = arith.constant 0 : index
    %13 = vector.load %arg9[%c0_9, %c0_10] : memref<256x256xf32, #tpu.memory_space<vmem>>, vector<256x256xf32>
    %c0_11 = arith.constant 0 : index
    %c0_12 = arith.constant 0 : index
    %14 = vector.load %arg8[%c0_11, %c0_12] : memref<256x2048xbf16, #tpu.memory_space<vmem>>, vector<256x2048xbf16>
    %c0_13 = arith.constant 0 : index
    %c0_14 = arith.constant 0 : index
    %15 = vector.load %arg5[%c0_13, %c0_14] : memref<2048x256xbf16, #tpu.memory_space<vmem>>, vector<2048x256xbf16>
    %cst_15 = arith.constant dense<0.000000e+00> : vector<256x256xf32>
    %16 = tpu.matmul %14, %15, %cst_15 {dimension_numbers = #tpu.dot_dimension_numbers<[1], [0], [0], [1], [0, 0, 1, 1], [], []>} : vector<256x2048xbf16>, vector<2048x256xbf16>, vector<256x256xf32> -> vector<256x256xf32>
    %17 = arith.addf %13, %16 : vector<256x256xf32>
    %c0_16 = arith.constant 0 : index
    %c0_17 = arith.constant 0 : index
    %18 = vector.load %arg9[%c0_16, %c0_17] : memref<256x256xf32, #tpu.memory_space<vmem>>, vector<256x256xf32>
    tpu.vector_store %arg9[%c0_16, %c0_17], %17 {strides = array<i32>} : memref<256x256xf32, #tpu.memory_space<vmem>>, vector<256x256xf32>,
    %c0_i32_18 = arith.constant 0 : i32
    %19 = arith.cmpi eq, %arg1, %c0_i32_18 : i32
    %20 = arith.extui %19 : i1 to i32
    %c0_i32_19 = arith.constant 0 : i32
    %21 = arith.cmpi ne, %20, %c0_i32_19 : i32
    scf.if %21 {
      %c0_20 = arith.constant 0 : index
      %c0_21 = arith.constant 0 : index
      %22 = vector.load %arg9[%c0_20, %c0_21] : memref<256x256xf32, #tpu.memory_space<vmem>>, vector<256x256xf32>
      %c0_22 = arith.constant 0 : index
      %c0_23 = arith.constant 0 : index
      %23 = vector.load %arg6[%c0_22, %c0_23] : memref<1x256xf32, #tpu.memory_space<vmem>>, vector<1x256xf32>
      %24 = vector.broadcast %23 : vector<1x256xf32> to vector<256x256xf32>
      %25 = arith.addf %22, %24 : vector<256x256xf32>
      %cst_24 = arith.constant 0.000000e+00 : f32
      %26 = vector.broadcast %cst_24 : f32 to vector<256x256xf32>
      %27 = arith.maximumf %25, %26 : vector<256x256xf32>
      %28 = arith.truncf %27 : vector<256x256xf32> to vector<256x256xbf16>
      %c0_25 = arith.constant 0 : index
      %c0_26 = arith.constant 0 : index
      %29 = vector.load %arg7[%c0_25, %c0_26] : memref<256x256xbf16, #tpu.memory_space<vmem>>, vector<256x256xbf16>
      tpu.vector_store %arg7[%c0_25, %c0_26], %28 {strides = array<i32>} : memref<256x256xbf16, #tpu.memory_space<vmem>>, vector<256x256xbf16>,
    } else {
    }
    return
  }
  func.func @transform_0(%arg0: i32, %arg1: i32) -> (i32, i32) {
    %c0_i32 = arith.constant 0 : i32
    %c0_i32_0 = arith.constant 0 : i32
    return %arg0, %c0_i32 : i32, i32
  }
  func.func @transform_1(%arg0: i32, %arg1: i32) -> (i32, i32) {
    %c0_i32 = arith.constant 0 : i32
    %c0_i32_0 = arith.constant 0 : i32
    return %c0_i32, %arg1 : i32, i32
  }
  func.func @transform_2(%arg0: i32, %arg1: i32) -> (i32, i32) {
    %c0_i32 = arith.constant 0 : i32
    %c0_i32_0 = arith.constant 0 : i32
    return %c0_i32, %arg1 : i32, i32
  }
  func.func @transform_3(%arg0: i32, %arg1: i32) -> (i32, i32) {
    %c0_i32 = arith.constant 0 : i32
    %c0_i32_0 = arith.constant 0 : i32
    return %arg1, %c0_i32 : i32, i32
  }
  func.func @transform_4(%arg0: i32, %arg1: i32) -> (i32, i32) {
    %c0_i32 = arith.constant 0 : i32
    %c0_i32_0 = arith.constant 0 : i32
    %c0_i32_1 = arith.constant 0 : i32
    return %c0_i32, %c0_i32_0 : i32, i32
  }
  func.func @transform_5(%arg0: i32, %arg1: i32) -> (i32, i32) {
    %c0_i32 = arith.constant 0 : i32
    %c0_i32_0 = arith.constant 0 : i32
    return %arg0, %c0_i32 : i32, i32
  }
}

</mosaic_0001>

<llo_original>
// kernel: tpu_custom_call.1
$region0: #{tpu_custom_call.1}
  #allocation0 [shape = 'u32[]', space=smem, size = 0x4, offset = 0x4, fixed_abs, tag = 'smem constant byte address 0x4 - core index']
  #allocation1 [shape = 'u32[144,128]{1,0:T(1,128)}', space=vmem, size = 0x12000, scoped, tag = 'internal scratch']
  #allocation2 [shape = 'bf16[256,2048]{1,0:T(16,128)(2,1)}', space=vmem, size = 0x100000, scoped, tag = 'scratch operand']
  #allocation3 [shape = 'f32[256,256]{1,0:T(8,128)}', space=vmem, size = 0x40000, scoped, tag = 'scratch operand']
  %s0 = inlined_call_operand.hbm [shape: bf16[384,256], index: 0, kind: input, shape index: {}]
  %s1 = inlined_call_operand.hbm [shape: bf16[256,2048], index: 1, kind: input, shape index: {}]
  %s2 = inlined_call_operand.hbm [shape: f32[1,2048], index: 2, kind: input, shape index: {}]
  %s3 = inlined_call_operand.hbm [shape: bf16[2048,256], index: 3, kind: input, shape index: {}]
  %s4 = inlined_call_operand.vmem [shape: f32[1,256], index: 4, kind: input, shape index: {}]
  %s5 = inlined_call_operand.hbm [shape: bf16[384,256], index: 5, kind: output, shape index: {}]
  %s6 = sld [smem:[#allocation0]]
  $region77: #{tpu_custom_call.1} parent=0
    _
  %s8 = ssub.s32 1, %s6
  %s9 = scalar_select 0, %s8, %s6
  $region1: #{tpu_custom_call.1} parent=0
    #allocation4 [shape = 'u8[262144]{0}', space=vmem, size = 0x40000, scoped, tag = 'input window, operand 0']
    #allocation5 [shape = 's32[2]{0}', space=sflag, size = 0x8, scoped, tag = 'scoped memory for tpu_custom_call.1']
    #allocation6 [shape = 's32[2]{0}', space=sflag, size = 0x8, scoped, tag = 'scoped memory for tpu_custom_call.1']
    #allocation7 [shape = 'u8[1048576]{0}', space=vmem, size = 0x100000, scoped, tag = 'input window, operand 1, single buffered']
    #allocation8 [shape = 's32[1]{0}', space=sflag, size = 0x4, scoped, tag = 'scoped memory for tpu_custom_call.1']
    #allocation9 [shape = 'u8[8192]{0}', space=vmem, size = 0x2000, scoped, tag = 'input window, operand 2, single buffered']
    #allocation10 [shape = 'u8[1048576]{0}', space=vmem, size = 0x100000, scoped, tag = 'input window, operand 3, single buffered']
    #allocation11 [shape = 's32[1]{0}', space=sflag, size = 0x4, scoped, tag = 'scoped memory for tpu_custom_call.1']
    #allocation12 [shape = 'u8[262144]{0}', space=vmem, size = 0x40000, scoped, tag = 'output window, operand 0']
    %10 = vsyncpa [#allocation5], 0
    %s11 = scalar_lea.sflag [#allocation5], 1
    %12 = vsyncpa %s11, 0
    %13 = vsyncpa [#allocation8], 0
    %14 = vsyncpa [#allocation11], 0
    %15 = vsyncpa [#allocation6], 0
    %s16 = scalar_lea.sflag [#allocation6], 1
    %17 = vsyncpa %s16, 0
    loop: start=0, step=1, limit=4
    $region2: #{tpu_custom_call.1} parent=1 // loop_pre_header
      _
    $region3: #{tpu_custom_call.1} parent=1 // loop_header
      %s19 = sphi 0, %s23
      %p20 = scmp.ge.s32.totalorder %s19, 4
      %s26 = sphi 0, %s38
      %s27 = sphi 0, %s34
      %s28 = sphi 0, %s26
      %s29 = sphi 0, %s27
      %s30 = sphi 0, %s28
      %s31 = sphi 0, %s29
      %s41 = sphi 0, %s43
      %s44 = sphi 0, %s41
      %s45 = sphi 0, %s44
      %s61 = sphi 0, %s45
      %s67 = sphi 0, %s69
      %s70 = sphi 0, %s67
      %s71 = sphi 0, %s70
      %s87 = sphi 0, %s71
      %s93 = sphi 0, %s95
      %s96 = sphi 0, %s93
      %s97 = sphi 0, %s96
      %s113 = sphi 0, %s97
      %s119 = sphi 0, %s121
      %s122 = sphi 0, %s119
      %s123 = sphi 0, %s122
      %s139 = sphi 0, %s123
      %s143 = sphi 0, %s143
      %s145 = sphi 0, %s143
      %s146 = sphi 0, %s145
      %s160 = sphi 0, %s146
      %s166 = sphi 0, %s168
      %s169 = sphi 0, %s166
      %s170 = sphi 0, %s169
      %s186 = sphi 0, %s170
    $region4: #{tpu_custom_call.1} parent=1 // loop_header_branch
      %22 = sbr.rel (%p20) target = $region8
    $region5: #{tpu_custom_call.1} parent=1 // loop_body
      %s24 = ssub.s32 %s19, 1
      %s25 = ssub.s32 %s19, 2
      %s32 = sadd.s32 1, %s27
      %p33 = scmp.ge.s32.totalorder %s32, 1
      %s34 = scalar_select %p33, 0, %s32
      %s35 = sadd.s32 1, %s26
      %s36 = scalar_select %p33, %s35, %s26
      %p37 = scmp.ge.s32.totalorder %s36, 2
      %s38 = scalar_select %p37, 0, %s36
      %s39 = ssub.s32 %s26, %s38
      %p40 = scmp.eq.s32.totalorder %s39, 0
      %s42 = sadd.s32 %s41, 1
      %s43 = scalar_select %p40, %s41, %s42
      %p46 = pneg %p40
      %p47 = scmp.eq.s32.totalorder %s19, 1
      %p48 = por %p46, %p47
      %p49 = scmp.ne.s32.totalorder %s41, %s44
      %p50 = scmp.eq.s32.totalorder %s19, 0
      %p51 = por %p49, %p50
      %p52 = scmp.ne.s32.totalorder %s41, %s44
      %p53 = scmp.eq.s32.totalorder %s24, 1
      %p54 = por %p52, %p53
      %p55 = scmp.ne.s32.totalorder %s44, %s45
      %p56 = scmp.eq.s32.totalorder %s24, 0
      %p57 = por %p55, %p56
      %p58 = scmp.ne.s32.totalorder %s44, %s45
      %p59 = scmp.eq.s32.totalorder %s25, 1
      %p60 = por %p58, %p59
      %p62 = scmp.ne.s32.totalorder %s45, %s61
      %p63 = scmp.eq.s32.totalorder %s25, 0
      %p64 = por %p62, %p63
      %s65 = ssub.s32 %s27, %s34
      %p66 = scmp.eq.s32.totalorder %s65, 0
      %s68 = sadd.s32 %s67, 1
      %s69 = scalar_select %p66, %s67, %s68
      %p72 = pneg %p66
      %p73 = scmp.eq.s32.totalorder %s19, 1
      %p74 = por %p72, %p73
      %p75 = scmp.ne.s32.totalorder %s67, %s70
      %p76 = scmp.eq.s32.totalorder %s19, 0
      %p77 = por %p75, %p76
      %p78 = scmp.ne.s32.totalorder %s67, %s70
      %p79 = scmp.eq.s32.totalorder %s24, 1
      %p80 = por %p78, %p79
      %p81 = scmp.ne.s32.totalorder %s70, %s71
      %p82 = scmp.eq.s32.totalorder %s24, 0
      %p83 = por %p81, %p82
      %p84 = scmp.ne.s32.totalorder %s70, %s71
      %p85 = scmp.eq.s32.totalorder %s25, 1
      %p86 = por %p84, %p85
      %p88 = scmp.ne.s32.totalorder %s71, %s87
      %p89 = scmp.eq.s32.totalorder %s25, 0
      %p90 = por %p88, %p89
      %s91 = ssub.s32 %s27, %s34
      %p92 = scmp.eq.s32.totalorder %s91, 0
      %s94 = sadd.s32 %s93, 1
      %s95 = scalar_select %p92, %s93, %s94
      %p98 = pneg %p92
      %p99 = scmp.eq.s32.totalorder %s19, 1
      %p100 = por %p98, %p99
      %p101 = scmp.ne.s32.totalorder %s93, %s96
      %p102 = scmp.eq.s32.totalorder %s19, 0
      %p103 = por %p101, %p102
      %p104 = scmp.ne.s32.totalorder %s93, %s96
      %p105 = scmp.eq.s32.totalorder %s24, 1
      %p106 = por %p104, %p105
      %p107 = scmp.ne.s32.totalorder %s96, %s97
      %p108 = scmp.eq.s32.totalorder %s24, 0
      %p109 = por %p107, %p108
      %p110 = scmp.ne.s32.totalorder %s96, %s97
      %p111 = scmp.eq.s32.totalorder %s25, 1
      %p112 = por %p110, %p111
      %p114 = scmp.ne.s32.totalorder %s97, %s113
      %p115 = scmp.eq.s32.totalorder %s25, 0
      %p116 = por %p114, %p115
      %s117 = ssub.s32 %s27, %s34
      %p118 = scmp.eq.s32.totalorder %s117, 0
      %s120 = sadd.s32 %s119, 1
      %s121 = scalar_select %p118, %s119, %s120
      %p124 = pneg %p118
      %p125 = scmp.eq.s32.totalorder %s19, 1
      %p126 = por %p124, %p125
      %p127 = scmp.ne.s32.totalorder %s119, %s122
      %p128 = scmp.eq.s32.totalorder %s19, 0
      %p129 = por %p127, %p128
      %p130 = scmp.ne.s32.totalorder %s119, %s122
      %p131 = scmp.eq.s32.totalorder %s24, 1
      %p132 = por %p130, %p131
      %p133 = scmp.ne.s32.totalorder %s122, %s123
      %p134 = scmp.eq.s32.totalorder %s24, 0
      %p135 = por %p133, %p134
      %p136 = scmp.ne.s32.totalorder %s122, %s123
      %p137 = scmp.eq.s32.totalorder %s25, 1
      %p138 = por %p136, %p137
      %p140 = scmp.ne.s32.totalorder %s123, %s139
      %p141 = scmp.eq.s32.totalorder %s25, 0
      %p142 = por %p140, %p141
      %s144 = sadd.s32 %s143, 1
      %p147 = scmp.eq.s32.totalorder %s19, 1
      %p148 = scmp.ne.s32.totalorder %s143, %s145
      %p149 = scmp.eq.s32.totalorder %s19, 0
      %p150 = por %p148, %p149
      %p151 = scmp.ne.s32.totalorder %s143, %s145
      %p152 = scmp.eq.s32.totalorder %s24, 1
      %p153 = por %p151, %p152
      %p154 = scmp.ne.s32.totalorder %s145, %s146
      %p155 = scmp.eq.s32.totalorder %s24, 0
      %p156 = por %p154, %p155
      %p157 = scmp.ne.s32.totalorder %s145, %s146
      %p158 = scmp.eq.s32.totalorder %s25, 1
      %p159 = por %p157, %p158
      %p161 = scmp.ne.s32.totalorder %s146, %s160
      %p162 = scmp.eq.s32.totalorder %s25, 0
      %p163 = por %p161, %p162
      %s164 = ssub.s32 %s26, %s38
      %p165 = scmp.eq.s32.totalorder %s164, 0
      %s167 = sadd.s32 %s166, 1
      %s168 = scalar_select %p165, %s166, %s167
      %p171 = pneg %p165
      %p172 = scmp.eq.s32.totalorder %s19, 1
      %p173 = por %p171, %p172
      %p174 = scmp.ne.s32.totalorder %s166, %s169
      %p175 = scmp.eq.s32.totalorder %s19, 0
      %p176 = por %p174, %p175
      %p177 = scmp.ne.s32.totalorder %s166, %s169
      %p178 = scmp.eq.s32.totalorder %s24, 1
      %p179 = por %p177, %p178
      %p180 = scmp.ne.s32.totalorder %s169, %s170
      %p181 = scmp.eq.s32.totalorder %s24, 0
      %p182 = por %p180, %p181
      %p183 = scmp.ne.s32.totalorder %s169, %s170
      %p184 = scmp.eq.s32.totalorder %s25, 1
      %p185 = por %p183, %p184
      %p187 = scmp.ne.s32.totalorder %s170, %s186
      %p188 = scmp.eq.s32.totalorder %s25, 0
      %p189 = por %p187, %p188
      %p190 = scmp.le.s32.totalorder 1, %s19
      %p191 = scmp.lt.s32.totalorder %s19, 3
      %p192 = pnand %p190, %p191
      %p193 = pneg %p192
      // Predicated region
      $region9: #{tpu_custom_call.1} parent=5 // pred_check
        _
      $region10: #{tpu_custom_call.1} parent=5 // pred_check_branch
        %195 = sbr.rel (%p192) target = $region12
      $region11: #{tpu_custom_call.1} parent=5 // pred_region
        %s196 = ssub.s32 %s19, 1
        // Predicated region
        $region13: #{tpu_custom_call.1} parent=11 // pred_check
          %p197 = pneg %p83
        $region14: #{tpu_custom_call.1} parent=11 // pred_check_branch
          %199 = sbr.rel (%p197) target = $region16
        $region15: #{tpu_custom_call.1} parent=11 // pred_region
          %s200 = smul.u32 16, %s29
          %s202 = ssub.s32 32768, 32768
          %203 = vsyncadd [#allocation8], %s202
          %s204 = smul.addr %s200, 64
          %s205 = scalar_lea.hbm %s1, %s204
          %s206 = sshll.u32 [#allocation7], 4
          %s207 = int_to_ptr.vmem [resolvable:$true] %s206
          %212 = dma.hbm_to_vmem [thread:$0]  %s205, 32768, %s207, [#allocation8], 1024, 1024, 64
        $region16: #{tpu_custom_call.1} parent=11 // pred_fallthru
          _
        // Predicated region
        $region17: #{tpu_custom_call.1} parent=11 // pred_check
          %p213 = pneg %p109
        $region18: #{tpu_custom_call.1} parent=11 // pred_check_branch
          %215 = sbr.rel (%p213) target = $region20
        $region19: #{tpu_custom_call.1} parent=11 // pred_region
          %s216 = smul.u32 16, %s29
          %s218 = ssub.s32 256, 256
          %219 = vsyncadd [#allocation8], %s218
          %s220 = smul.addr %s216, 16
          %s221 = scalar_lea.hbm %s2, %s220
          %s223 = sshll.u32 [#allocation9], 4
          %s224 = int_to_ptr.vmem [resolvable:$true] %s223
          %226 = dma.hbm_to_vmem [thread:$0]  %s221, 256, %s224, [#allocation8]
        $region20: #{tpu_custom_call.1} parent=11 // pred_fallthru
          _
        // Predicated region
        $region21: #{tpu_custom_call.1} parent=11 // pred_check
          %p227 = pneg %p135
        $region22: #{tpu_custom_call.1} parent=11 // pred_check_branch
          %229 = sbr.rel (%p227) target = $region24
        $region23: #{tpu_custom_call.1} parent=11 // pred_region
          %s230 = smul.u32 256, %s29
          %s232 = ssub.s32 32768, 32768
          %233 = vsyncadd [#allocation11], %s232
          %s234 = smul.addr %s230, 2
          %s235 = smul.addr %s234, 64
          %s236 = scalar_lea.hbm %s3, %s235
          %s237 = sshll.u32 [#allocation10], 4
          %s238 = int_to_ptr.vmem [resolvable:$true] %s237
          %243 = dma.hbm_to_vmem [thread:$0]  %s236, 32768, %s238, [#allocation11], 128, 128, 8
        $region24: #{tpu_custom_call.1} parent=11 // pred_fallthru
          _
        // Predicated region
        $region25: #{tpu_custom_call.1} parent=11 // pred_check
          %p244 = pneg %p156
        $region26: #{tpu_custom_call.1} parent=11 // pred_check_branch
          %246 = sbr.rel (%p244) target = $region28
        $region27: #{tpu_custom_call.1} parent=11 // pred_region
          _
        $region28: #{tpu_custom_call.1} parent=11 // pred_fallthru
          _
      $region12: #{tpu_custom_call.1} parent=5 // pred_fallthru
        _
      %p247 = scmp.lt.s32.totalorder %s19, 2
      // Predicated region
      $region29: #{tpu_custom_call.1} parent=5 // pred_check
        %p248 = pneg %p247
      $region30: #{tpu_custom_call.1} parent=5 // pred_check_branch
        %250 = sbr.rel (%p248) target = $region32
      $region31: #{tpu_custom_call.1} parent=5 // pred_region
        // Predicated region
        $region33: #{tpu_custom_call.1} parent=31 // pred_check
          %p251 = pneg %p51
        $region34: #{tpu_custom_call.1} parent=31 // pred_check_branch
          %253 = sbr.rel (%p251) target = $region36
        $region35: #{tpu_custom_call.1} parent=31 // pred_region
          %s254 = sand.u32 %s41, 1
          %s255 = scalar_lea.sflag [#allocation5], %s254
          %s256 = sand.u32 %s41, 1
          %s257 = smul.addr %s256, 256
          %s258 = scalar_lea.vmem [#allocation4], %s257
          %s259 = smul.u32 32, %s26
          %s260 = ssub.s32 48, %s259
          %p261 = scmp.lt.s32.totalorder %s260, 32
          %s262 = scalar_select %p261, %s260, 32
          %s263 = smul.u32 64, %s262
          %s264 = smul.u32 %s263, 2
          %s266 = ssub.s32 4096, %s264
          %267 = vsyncadd %s255, %s266
          %p268 = scmp.ne.s32.totalorder 0, %s264
          %s269 = smul.addr %s259, 2
          %s270 = smul.addr %s269, 64
          %s271 = scalar_lea.hbm %s0, %s270
          %s272 = smul.u32 8, %s262
          %s273 = sshll.u32 %s258, 4
          %s274 = int_to_ptr.vmem [resolvable:$true] %s273
          %s275 = sshll.u32 %s272, 4
          %279 = dma.hbm_to_vmem [thread:$0]  (%p268), %s271, %s275, %s274, %s255, 128, 128, 8
        $region36: #{tpu_custom_call.1} parent=31 // pred_fallthru
          _
      $region32: #{tpu_custom_call.1} parent=5 // pred_fallthru
        _
      %p280 = scmp.le.s32.totalorder 1, %s19
      %p281 = scmp.lt.s32.totalorder %s19, 3
      %p282 = pnand %p280, %p281
      %p283 = pneg %p282
      // Predicated region
      $region37: #{tpu_custom_call.1} parent=5 // pred_check
        _
      $region38: #{tpu_custom_call.1} parent=5 // pred_check_branch
        %285 = sbr.rel (%p282) target = $region40
      $region39: #{tpu_custom_call.1} parent=5 // pred_region
        %s286 = ssub.s32 %s19, 1
        %s287 = sand.u32 %s44, 1
        %s288 = scalar_lea.sflag [#allocation5], %s287
        %s289 = sand.u32 %s44, 1
        %s290 = smul.addr %s289, 256
        %s291 = scalar_lea.vmem [#allocation4], %s290
        // Predicated region
        $region41: #{tpu_custom_call.1} parent=39 // pred_check
          %p292 = pneg %p57
        $region42: #{tpu_custom_call.1} parent=39 // pred_check_branch
          %294 = sbr.rel (%p292) target = $region44
        $region43: #{tpu_custom_call.1} parent=39 // pred_region
          %295 = dma.done %s288, 4096
        $region44: #{tpu_custom_call.1} parent=39 // pred_fallthru
          _
        // Predicated region
        $region45: #{tpu_custom_call.1} parent=39 // pred_check
          %p296 = pneg %p83
        $region46: #{tpu_custom_call.1} parent=39 // pred_check_branch
          %298 = sbr.rel (%p296) target = $region48
        $region47: #{tpu_custom_call.1} parent=39 // pred_region
          %299 = dma.done [#allocation8], 32768
        $region48: #{tpu_custom_call.1} parent=39 // pred_fallthru
          _
        // Predicated region
        $region49: #{tpu_custom_call.1} parent=39 // pred_check
          %p300 = pneg %p109
        $region50: #{tpu_custom_call.1} parent=39 // pred_check_branch
          %302 = sbr.rel (%p300) target = $region52
        $region51: #{tpu_custom_call.1} parent=39 // pred_region
          %303 = dma.done [#allocation8], 256
        $region52: #{tpu_custom_call.1} parent=39 // pred_fallthru
          _
        // Predicated region
        $region53: #{tpu_custom_call.1} parent=39 // pred_check
          %p304 = pneg %p135
        $region54: #{tpu_custom_call.1} parent=39 // pred_check_branch
          %306 = sbr.rel (%p304) target = $region56
        $region55: #{tpu_custom_call.1} parent=39 // pred_region
          %307 = dma.done [#allocation11], 32768
        $region56: #{tpu_custom_call.1} parent=39 // pred_fallthru
          _
        %s308 = sand.u32 %s44, 1
        %s309 = scalar_lea.sflag [#allocation5], %s308
        %s310 = sand.u32 %s44, 1
        %s311 = smul.addr %s310, 256
        %s312 = scalar_lea.vmem [#allocation4], %s311
        %p313 = pneg %p57
        %p314 = pneg %p54
        %p315 = pneg %p83
        %p316 = pneg %p80
        %p317 = pneg %p109
        %p318 = pneg %p106
        %p319 = pneg %p135
        %p320 = pneg %p132
        %p321 = pneg %p156
        %p322 = pneg %p153
        %p323 = pneg %p182
        %p324 = pneg %p179
        %s325 = sand.u32 %s169, 1
        %s326 = scalar_lea.sflag [#allocation6], %s325
        %s327 = sand.u32 %s169, 1
        %s328 = smul.addr %s327, 256
        %s329 = scalar_lea.vmem [#allocation12], %s328
        %s330 = smul.u32 32, %s28
        %s331 = ssub.s32 48, %s330
        %p332 = scmp.lt.s32.totalorder %s331, 32
        %s333 = scalar_select %p332, %s331, 32
        %s334 = smul.u32 64, %s333
        %s335 = smul.u32 %s334, 2
        %s336 = smul.u32 16, %s29
        %s337 = smul.u32 16, %s29
        %s338 = smul.u32 256, %s29
        %s339 = smul.u32 32, %s28
        %s340 = ssub.s32 48, %s339
        %p341 = scmp.lt.s32.totalorder %s340, 32
        %s342 = scalar_select %p341, %s340, 32
        %s343 = smul.u32 64, %s342
        %s344 = smul.u32 %s343, 2
        %p345 = scmp.eq.s32.totalorder %s29, 0
        // Predicated region
        $region57: #{tpu_custom_call.1} parent=39 // pred_check
          %p346 = pneg %p345
        $region58: #{tpu_custom_call.1} parent=39 // pred_check_branch
          %348 = sbr.rel (%p346) target = $region60
        $region59: #{tpu_custom_call.1} parent=39 // pred_region
          %349 = vst [vmem:[#allocation3] sm:$0xff] 0.0
          %350 = vst [vmem:[#allocation3 + $0x8] sm:$0xff] 0.0
          %351 = vst [vmem:[#allocation3 + $0x10] sm:$0xff] 0.0
          %352 = vst [vmem:[#allocation3 + $0x18] sm:$0xff] 0.0
          %353 = vst [vmem:[#allocation3 + $0x20] sm:$0xff] 0.0
          %354 = vst [vmem:[#allocation3 + $0x28] sm:$0xff] 0.0
          %355 = vst [vmem:[#allocation3 + $0x30] sm:$0xff] 0.0
          %356 = vst [vmem:[#allocation3 + $0x38] sm:$0xff] 0.0
          %357 = vst [vmem:[#allocation3 + $0x40] sm:$0xff] 0.0
          %358 = vst [vmem:[#allocation3 + $0x48] sm:$0xff] 0.0
          %359 = vst [vmem:[#allocation3 + $0x50] sm:$0xff] 0.0
          %360 = vst [vmem:[#allocation3 + $0x58] sm:$0xff] 0.0
          %361 = vst [vmem:[#allocation3 + $0x60] sm:$0xff] 0.0
          %362 = vst [vmem:[#allocation3 + $0x68] sm:$0xff] 0.0
          %363 = vst [vmem:[#allocation3 + $0x70] sm:$0xff] 0.0
          %364 = vst [vmem:[#allocation3 + $0x78] sm:$0xff] 0.0
          %365 = vst [vmem:[#allocation3 + $0x80] sm:$0xff] 0.0
          %366 = vst [vmem:[#allocation3 + $0x88] sm:$0xff] 0.0
          %367 = vst [vmem:[#allocation3 + $0x90] sm:$0xff] 0.0
          %368 = vst [vmem:[#allocation3 + $0x98] sm:$0xff] 0.0
          %369 = vst [vmem:[#allocation3 + $0xa0] sm:$0xff] 0.0
          %370 = vst [vmem:[#allocation3 + $0xa8] sm:$0xff] 0.0
          %371 = vst [vmem:[#allocation3 + $0xb0] sm:$0xff] 0.0
          %372 = vst [vmem:[#allocation3 + $0xb8] sm:$0xff] 0.0
          %373 = vst [vmem:[#allocation3 + $0xc0] sm:$0xff] 0.0
          %374 = vst [vmem:[#allocation3 + $0xc8] sm:$0xff] 0.0
          %375 = vst [vmem:[#allocation3 + $0xd0] sm:$0xff] 0.0
          %376 = vst [vmem:[#allocation3 + $0xd8] sm:$0xff] 0.0
          %377 = vst [vmem:[#allocation3 + $0xe0] sm:$0xff] 0.0
          %378 = vst [vmem:[#allocation3 + $0xe8] sm:$0xff] 0.0
          %379 = vst [vmem:[#allocation3 + $0xf0] sm:$0xff] 0.0
          %380 = vst [vmem:[#allocation3 + $0xf8] sm:$0xff] 0.0
          %381 = vst [vmem:[#allocation3 + $0x100] sm:$0xff] 0.0
          %382 = vst [vmem:[#allocation3 + $0x108] sm:$0xff] 0.0
          %383 = vst [vmem:[#allocation3 + $0x110] sm:$0xff] 0.0
          %384 = vst [vmem:[#allocation3 + $0x118] sm:$0xff] 0.0
          %385 = vst [vmem:[#allocation3 + $0x120] sm:$0xff] 0.0
          %386 = vst [vmem:[#allocation3 + $0x128] sm:$0xff] 0.0
          %387 = vst [vmem:[#allocation3 + $0x130] sm:$0xff] 0.0
          %388 = vst [vmem:[#allocation3 + $0x138] sm:$0xff] 0.0
          %389 = vst [vmem:[#allocation3 + $0x140] sm:$0xff] 0.0
          %390 = vst [vmem:[#allocation3 + $0x148] sm:$0xff] 0.0
          %391 = vst [vmem:[#allocation3 + $0x150] sm:$0xff] 0.0
          %392 = vst [vmem:[#allocation3 + $0x158] sm:$0xff] 0.0
          %393 = vst [vmem:[#allocation3 + $0x160] sm:$0xff] 0.0
          %394 = vst [vmem:[#allocation3 + $0x168] sm:$0xff] 0.0
          %395 = vst [vmem:[#allocation3 + $0x170] sm:$0xff] 0.0
          %396 = vst [vmem:[#allocation3 + $0x178] sm:$0xff] 0.0
          %397 = vst [vmem:[#allocation3 + $0x180] sm:$0xff] 0.0
          %398 = vst [vmem:[#allocation3 + $0x188] sm:$0xff] 0.0
          %399 = vst [vmem:[#allocation3 + $0x190] sm:$0xff] 0.0
          %400 = vst [vmem:[#allocation3 + $0x198] sm:$0xff] 0.0
          %401 = vst [vmem:[#allocation3 + $0x1a0] sm:$0xff] 0.0
          %402 = vst [vmem:[#allocation3 + $0x1a8] sm:$0xff] 0.0
          %403 = vst [vmem:[#allocation3 + $0x1b0] sm:$0xff] 0.0
          %404 = vst [vmem:[#allocation3 + $0x1b8] sm:$0xff] 0.0
          %405 = vst [vmem:[#allocation3 + $0x1c0] sm:$0xff] 0.0
          %406 = vst [vmem:[#allocation3 + $0x1c8] sm:$0xff] 0.0
          %407 = vst [vmem:[#allocation3 + $0x1d0] sm:$0xff] 0.0
          %408 = vst [vmem:[#allocation3 + $0x1d8] sm:$0xff] 0.0
          %409 = vst [vmem:[#allocation3 + $0x1e0] sm:$0xff] 0.0
          %410 = vst [vmem:[#allocation3 + $0x1e8] sm:$0xff] 0.0
          %411 = vst [vmem:[#allocation3 + $0x1f0] sm:$0xff] 0.0
          %412 = vst [vmem:[#allocation3 + $0x1f8] sm:$0xff] 0.0
        $region60: #{tpu_custom_call.1} parent=39 // pred_fallthru
          _
        %v413 = vld [vmem:[%s291] sm:$0xff]
        %v414 = vld [vmem:[%s291 + $0x8] sm:$0xff]
        %v415 = vld [vmem:[%s291 + $0x10] sm:$0xff]
        %v416 = vld [vmem:[%s291 + $0x18] sm:$0xff]
        %v417 = vld [vmem:[%s291 + $0x20] sm:$0xff]
        %v418 = vld [vmem:[%s291 + $0x28] sm:$0xff]
        %v419 = vld [vmem:[%s291 + $0x30] sm:$0xff]
        %v420 = vld [vmem:[%s291 + $0x38] sm:$0xff]
        %v421 = vld [vmem:[%s291 + $0x40] sm:$0xff]
        %v422 = vld [vmem:[%s291 + $0x48] sm:$0xff]
        %v423 = vld [vmem:[%s291 + $0x50] sm:$0xff]
        %v424 = vld [vmem:[%s291 + $0x58] sm:$0xff]
        %v425 = vld [vmem:[%s291 + $0x60] sm:$0xff]
        %v426 = vld [vmem:[%s291 + $0x68] sm:$0xff]
        %v427 = vld [vmem:[%s291 + $0x70] sm:$0xff]
        %v428 = vld [vmem:[%s291 + $0x78] sm:$0xff]
        %v429 = vld [vmem:[%s291 + $0x80] sm:$0xff]
        %v430 = vld [vmem:[%s291 + $0x88] sm:$0xff]
        %v431 = vld [vmem:[%s291 + $0x90] sm:$0xff]
        %v432 = vld [vmem:[%s291 + $0x98] sm:$0xff]
        %v433 = vld [vmem:[%s291 + $0xa0] sm:$0xff]
        %v434 = vld [vmem:[%s291 + $0xa8] sm:$0xff]
        %v435 = vld [vmem:[%s291 + $0xb0] sm:$0xff]
        %v436 = vld [vmem:[%s291 + $0xb8] sm:$0xff]
        %v437 = vld [vmem:[%s291 + $0xc0] sm:$0xff]
        %v438 = vld [vmem:[%s291 + $0xc8] sm:$0xff]
        %v439 = vld [vmem:[%s291 + $0xd0] sm:$0xff]
        %v440 = vld [vmem:[%s291 + $0xd8] sm:$0xff]
        %v441 = vld [vmem:[%s291 + $0xe0] sm:$0xff]
        %v442 = vld [vmem:[%s291 + $0xe8] sm:$0xff]
        %v443 = vld [vmem:[%s291 + $0xf0] sm:$0xff]
        %v444 = vld [vmem:[%s291 + $0xf8] sm:$0xff]
        %v445 = vld [vmem:[#allocation7] sm:$0xff]
        %v446 = vld [vmem:[#allocation7 + $0x8] sm:$0xff]
        %v447 = vld [vmem:[#allocation7 + $0x10] sm:$0xff]
        %v448 = vld [vmem:[#allocation7 + $0x18] sm:$0xff]
        %v449 = vld [vmem:[#allocation7 + $0x20] sm:$0xff]
        %v450 = vld [vmem:[#allocation7 + $0x28] sm:$0xff]
        %v451 = vld [vmem:[#allocation7 + $0x30] sm:$0xff]
        %v452 = vld [vmem:[#allocation7 + $0x38] sm:$0xff]
        %v453 = vld [vmem:[#allocation7 + $0x40] sm:$0xff]
        %v454 = vld [vmem:[#allocation7 + $0x48] sm:$0xff]
        %v455 = vld [vmem:[#allocation7 + $0x50] sm:$0xff]
        %v456 = vld [vmem:[#allocation7 + $0x58] sm:$0xff]
        %v457 = vld [vmem:[#allocation7 + $0x60] sm:$0xff]
        %v458 = vld [vmem:[#allocation7 + $0x68] sm:$0xff]
        %v459 = vld [vmem:[#allocation7 + $0x70] sm:$0xff]
        %v460 = vld [vmem:[#allocation7 + $0x78] sm:$0xff]
        %v461 = vld [vmem:[#allocation7 + $0x80] sm:$0xff]
        %v462 = vld [vmem:[#allocation7 + $0x88] sm:$0xff]
        %v463 = vld [vmem:[#allocation7 + $0x90] sm:$0xff]
        %v464 = vld [vmem:[#allocation7 + $0x98] sm:$0xff]
        %v465 = vld [vmem:[#allocation7 + $0xa0] sm:$0xff]
        %v466 = vld [vmem:[#allocation7 + $0xa8] sm:$0xff]
        %v467 = vld [vmem:[#allocation7 + $0xb0] sm:$0xff]
        %v468 = vld [vmem:[#allocation7 + $0xb8] sm:$0xff]
        %v469 = vld [vmem:[#allocation7 + $0xc0] sm:$0xff]
        %v470 = vld [vmem:[#allocation7 + $0xc8] sm:$0xff]
        %v471 = vld [vmem:[#allocation7 + $0xd0] sm:$0xff]
        %v472 = vld [vmem:[#allocation7 + $0xd8] sm:$0xff]
        %v473 = vld [vmem:[#allocation7 + $0xe0] sm:$0xff]
        %v474 = vld [vmem:[#allocation7 + $0xe8] sm:$0xff]
        %v475 = vld [vmem:[#allocation7 + $0xf0] sm:$0xff]
        %v476 = vld [vmem:[#allocation7 + $0xf8] sm:$0xff]
        %v477 = vld [vmem:[#allocation7 + $0x100] sm:$0xff]
        %v478 = vld [vmem:[#allocation7 + $0x108] sm:$0xff]
        %v479 = vld [vmem:[#allocation7 + $0x110] sm:$0xff]
        %v480 = vld [vmem:[#allocation7 + $0x118] sm:$0xff]
        %v481 = vld [vmem:[#allocation7 + $0x120] sm:$0xff]
        %v482 = vld [vmem:[#allocation7 + $0x128] sm:$0xff]
        %v483 = vld [vmem:[#allocation7 + $0x130] sm:$0xff]
        %v484 = vld [vmem:[#allocation7 + $0x138] sm:$0xff]
        %v485 = vld [vmem:[#allocation7 + $0x140] sm:$0xff]
        %v486 = vld [vmem:[#allocation7 + $0x148] sm:$0xff]
        %v487 = vld [vmem:[#allocation7 + $0x150] sm:$0xff]
        %v488 = vld [vmem:[#allocation7 + $0x158] sm:$0xff]
        %v489 = vld [vmem:[#allocation7 + $0x160] sm:$0xff]
        %v490 = vld [vmem:[#allocation7 + $0x168] sm:$0xff]
        %v491 = vld [vmem:[#allocation7 + $0x170] sm:$0xff]
        %v492 = vld [vmem:[#allocation7 + $0x178] sm:$0xff]
        %v493 = vld [vmem:[#allocation7 + $0x180] sm:$0xff]
        %v494 = vld [vmem:[#allocation7 + $0x188] sm:$0xff]
        %v495 = vld [vmem:[#allocation7 + $0x190] sm:$0xff]
        %v496 = vld [vmem:[#allocation7 + $0x198] sm:$0xff]
        %v497 = vld [vmem:[#allocation7 + $0x1a0] sm:$0xff]
        %v498 = vld [vmem:[#allocation7 + $0x1a8] sm:$0xff]
        %v499 = vld [vmem:[#allocation7 + $0x1b0] sm:$0xff]
        %v500 = vld [vmem:[#allocation7 + $0x1b8] sm:$0xff]
        %v501 = vld [vmem:[#allocation7 + $0x1c0] sm:$0xff]
        %v502 = vld [vmem:[#allocation7 + $0x1c8] sm:$0xff]
        %v503 = vld [vmem:[#allocation7 + $0x1d0] sm:$0xff]
        %v504 = vld [vmem:[#allocation7 + $0x1d8] sm:$0xff]
        %v505 = vld [vmem:[#allocation7 + $0x1e0] sm:$0xff]
        %v506 = vld [vmem:[#allocation7 + $0x1e8] sm:$0xff]
        %v507 = vld [vmem:[#allocation7 + $0x1f0] sm:$0xff]
        %v508 = vld [vmem:[#allocation7 + $0x1f8] sm:$0xff]
        %v509 = vld [vmem:[#allocation7 + $0x200] sm:$0xff]
        %v510 = vld [vmem:[#allocation7 + $0x208] sm:$0xff]
        %v511 = vld [vmem:[#allocation7 + $0x210] sm:$0xff]
        %v512 = vld [vmem:[#allocation7 + $0x218] sm:$0xff]
        %v513 = vld [vmem:[#allocation7 + $0x220] sm:$0xff]
        %v514 = vld [vmem:[#allocation7 + $0x228] sm:$0xff]
        %v515 = vld [vmem:[#allocation7 + $0x230] sm:$0xff]
        %v516 = vld [vmem:[#allocation7 + $0x238] sm:$0xff]
        %v517 = vld [vmem:[#allocation7 + $0x240] sm:$0xff]
        %v518 = vld [vmem:[#allocation7 + $0x248] sm:$0xff]
        %v519 = vld [vmem:[#allocation7 + $0x250] sm:$0xff]
        %v520 = vld [vmem:[#allocation7 + $0x258] sm:$0xff]
        %v521 = vld [vmem:[#allocation7 + $0x260] sm:$0xff]
        %v522 = vld [vmem:[#allocation7 + $0x268] sm:$0xff]
        %v523 = vld [vmem:[#allocation7 + $0x270] sm:$0xff]
        %v524 = vld [vmem:[#allocation7 + $0x278] sm:$0xff]
        %v525 = vld [vmem:[#allocation7 + $0x280] sm:$0xff]
        %v526 = vld [vmem:[#allocation7 + $0x288] sm:$0xff]
        %v527 = vld [vmem:[#allocation7 + $0x290] sm:$0xff]
        %v528 = vld [vmem:[#allocation7 + $0x298] sm:$0xff]
        %v529 = vld [vmem:[#allocation7 + $0x2a0] sm:$0xff]
        %v530 = vld [vmem:[#allocation7 + $0x2a8] sm:$0xff]
        %v531 = vld [vmem:[#allocation7 + $0x2b0] sm:$0xff]
        %v532 = vld [vmem:[#allocation7 + $0x2b8] sm:$0xff]
        %v533 = vld [vmem:[#allocation7 + $0x2c0] sm:$0xff]
        %v534 = vld [vmem:[#allocation7 + $0x2c8] sm:$0xff]
        %v535 = vld [vmem:[#allocation7 + $0x2d0] sm:$0xff]
        %v536 = vld [vmem:[#allocation7 + $0x2d8] sm:$0xff]
        %v537 = vld [vmem:[#allocation7 + $0x2e0] sm:$0xff]
        %v538 = vld [vmem:[#allocation7 + $0x2e8] sm:$0xff]
        %v539 = vld [vmem:[#allocation7 + $0x2f0] sm:$0xff]
        %v540 = vld [vmem:[#allocation7 + $0x2f8] sm:$0xff]
        %v541 = vld [vmem:[#allocation7 + $0x300] sm:$0xff]
        %v542 = vld [vmem:[#allocation7 + $0x308] sm:$0xff]
        %v543 = vld [vmem:[#allocation7 + $0x310] sm:$0xff]
        %v544 = vld [vmem:[#allocation7 + $0x318] sm:$0xff]
        %v545 = vld [vmem:[#allocation7 + $0x320] sm:$0xff]
        %v546 = vld [vmem:[#allocation7 + $0x328] sm:$0xff]
        %v547 = vld [vmem:[#allocation7 + $0x330] sm:$0xff]
        %v548 = vld [vmem:[#allocation7 + $0x338] sm:$0xff]
        %v549 = vld [vmem:[#allocation7 + $0x340] sm:$0xff]
        %v550 = vld [vmem:[#allocation7 + $0x348] sm:$0xff]
        %v551 = vld [vmem:[#allocation7 + $0x350] sm:$0xff]
        %v552 = vld [vmem:[#allocation7 + $0x358] sm:$0xff]
        %v553 = vld [vmem:[#allocation7 + $0x360] sm:$0xff]
        %v554 = vld [vmem:[#allocation7 + $0x368] sm:$0xff]
        %v555 = vld [vmem:[#allocation7 + $0x370] sm:$0xff]
        %v556 = vld [vmem:[#allocation7 + $0x378] sm:$0xff]
        %v557 = vld [vmem:[#allocation7 + $0x380] sm:$0xff]
        %v558 = vld [vmem:[#allocation7 + $0x388] sm:$0xff]
        %v559 = vld [vmem:[#allocation7 + $0x390] sm:$0xff]
        %v560 = vld [vmem:[#allocation7 + $0x398] sm:$0xff]
        %v561 = vld [vmem:[#allocation7 + $0x3a0] sm:$0xff]
        %v562 = vld [vmem:[#allocation7 + $0x3a8] sm:$0xff]
        %v563 = vld [vmem:[#allocation7 + $0x3b0] sm:$0xff]
        %v564 = vld [vmem:[#allocation7 + $0x3b8] sm:$0xff]
        %v565 = vld [vmem:[#allocation7 + $0x3c0] sm:$0xff]
        %v566 = vld [vmem:[#allocation7 + $0x3c8] sm:$0xff]
        %v567 = vld [vmem:[#allocation7 + $0x3d0] sm:$0xff]
        %v568 = vld [vmem:[#allocation7 + $0x3d8] sm:$0xff]
        %v569 = vld [vmem:[#allocation7 + $0x3e0] sm:$0xff]
        %v570 = vld [vmem:[#allocation7 + $0x3e8] sm:$0xff]
        %v571 = vld [vmem:[#allocation7 + $0x3f0] sm:$0xff]
        %v572 = vld [vmem:[#allocation7 + $0x3f8] sm:$0xff]
        %v573 = vld [vmem:[#allocation7 + $0x400] sm:$0xff]
        %v574 = vld [vmem:[#allocation7 + $0x408] sm:$0xff]
        %v575 = vld [vmem:[#allocation7 + $0x410] sm:$0xff]
        %v576 = vld [vmem:[#allocation7 + $0x418] sm:$0xff]
        %v577 = vld [vmem:[#allocation7 + $0x420] sm:$0xff]
        %v578 = vld [vmem:[#allocation7 + $0x428] sm:$0xff]
        %v579 = vld [vmem:[#allocation7 + $0x430] sm:$0xff]
        %v580 = vld [vmem:[#allocation7 + $0x438] sm:$0xff]
        %v581 = vld [vmem:[#allocation7 + $0x440] sm:$0xff]
        %v582 = vld [vmem:[#allocation7 + $0x448] sm:$0xff]
        %v583 = vld [vmem:[#allocation7 + $0x450] sm:$0xff]
        %v584 = vld [vmem:[#allocation7 + $0x458] sm:$0xff]
        %v585 = vld [vmem:[#allocation7 + $0x460] sm:$0xff]
        %v586 = vld [vmem:[#allocation7 + $0x468] sm:$0xff]
        %v587 = vld [vmem:[#allocation7 + $0x470] sm:$0xff]
        %v588 = vld [vmem:[#allocation7 + $0x478] sm:$0xff]
        %v589 = vld [vmem:[#allocation7 + $0x480] sm:$0xff]
        %v590 = vld [vmem:[#allocation7 + $0x488] sm:$0xff]
        %v591 = vld [vmem:[#allocation7 + $0x490] sm:$0xff]
        %v592 = vld [vmem:[#allocation7 + $0x498] sm:$0xff]
        %v593 = vld [vmem:[#allocation7 + $0x4a0] sm:$0xff]
        %v594 = vld [vmem:[#allocation7 + $0x4a8] sm:$0xff]
        %v595 = vld [vmem:[#allocation7 + $0x4b0] sm:$0xff]
        %v596 = vld [vmem:[#allocation7 + $0x4b8] sm:$0xff]
        %v597 = vld [vmem:[#allocation7 + $0x4c0] sm:$0xff]
        %v598 = vld [vmem:[#allocation7 + $0x4c8] sm:$0xff]
        %v599 = vld [vmem:[#allocation7 + $0x4d0] sm:$0xff]
        %v600 = vld [vmem:[#allocation7 + $0x4d8] sm:$0xff]
        %v601 = vld [vmem:[#allocation7 + $0x4e0] sm:$0xff]
        %v602 = vld [vmem:[#allocation7 + $0x4e8] sm:$0xff]
        %v603 = vld [vmem:[#allocation7 + $0x4f0] sm:$0xff]
        %v604 = vld [vmem:[#allocation7 + $0x4f8] sm:$0xff]
        %v605 = vld [vmem:[#allocation7 + $0x500] sm:$0xff]
        %v606 = vld [vmem:[#allocation7 + $0x508] sm:$0xff]
        %v607 = vld [vmem:[#allocation7 + $0x510] sm:$0xff]
        %v608 = vld [vmem:[#allocation7 + $0x518] sm:$0xff]
        %v609 = vld [vmem:[#allocation7 + $0x520] sm:$0xff]
        %v610 = vld [vmem:[#allocation7 + $0x528] sm:$0xff]
        %v611 = vld [vmem:[#allocation7 + $0x530] sm:$0xff]
        %v612 = vld [vmem:[#allocation7 + $0x538] sm:$0xff]
        %v613 = vld [vmem:[#allocation7 + $0x540] sm:$0xff]
        %v614 = vld [vmem:[#allocation7 + $0x548] sm:$0xff]
        %v615 = vld [vmem:[#allocation7 + $0x550] sm:$0xff]
        %v616 = vld [vmem:[#allocation7 + $0x558] sm:$0xff]
        %v617 = vld [vmem:[#allocation7 + $0x560] sm:$0xff]
        %v618 = vld [vmem:[#allocation7 + $0x568] sm:$0xff]
        %v619 = vld [vmem:[#allocation7 + $0x570] sm:$0xff]
        %v620 = vld [vmem:[#allocation7 + $0x578] sm:$0xff]
        %v621 = vld [vmem:[#allocation7 + $0x580] sm:$0xff]
        %v622 = vld [vmem:[#allocation7 + $0x588] sm:$0xff]
        %v623 = vld [vmem:[#allocation7 + $0x590] sm:$0xff]
        %v624 = vld [vmem:[#allocation7 + $0x598] sm:$0xff]
        %v625 = vld [vmem:[#allocation7 + $0x5a0] sm:$0xff]
        %v626 = vld [vmem:[#allocation7 + $0x5a8] sm:$0xff]
        %v627 = vld [vmem:[#allocation7 + $0x5b0] sm:$0xff]
        %v628 = vld [vmem:[#allocation7 + $0x5b8] sm:$0xff]
        %v629 = vld [vmem:[#allocation7 + $0x5c0] sm:$0xff]
        %v630 = vld [vmem:[#allocation7 + $0x5c8] sm:$0xff]
        %v631 = vld [vmem:[#allocation7 + $0x5d0] sm:$0xff]
        %v632 = vld [vmem:[#allocation7 + $0x5d8] sm:$0xff]
        %v633 = vld [vmem:[#allocation7 + $0x5e0] sm:$0xff]
        %v634 = vld [vmem:[#allocation7 + $0x5e8] sm:$0xff]
        %v635 = vld [vmem:[#allocation7 + $0x5f0] sm:$0xff]
        %v636 = vld [vmem:[#allocation7 + $0x5f8] sm:$0xff]
        %v637 = vld [vmem:[#allocation7 + $0x600] sm:$0xff]
        %v638 = vld [vmem:[#allocation7 + $0x608] sm:$0xff]
        %v639 = vld [vmem:[#allocation7 + $0x610] sm:$0xff]
        %v640 = vld [vmem:[#allocation7 + $0x618] sm:$0xff]
        %v641 = vld [vmem:[#allocation7 + $0x620] sm:$0xff]
        %v642 = vld [vmem:[#allocation7 + $0x628] sm:$0xff]
        %v643 = vld [vmem:[#allocation7 + $0x630] sm:$0xff]
        %v644 = vld [vmem:[#allocation7 + $0x638] sm:$0xff]
        %v645 = vld [vmem:[#allocation7 + $0x640] sm:$0xff]
        %v646 = vld [vmem:[#allocation7 + $0x648] sm:$0xff]
        %v647 = vld [vmem:[#allocation7 + $0x650] sm:$0xff]
        %v648 = vld [vmem:[#allocation7 + $0x658] sm:$0xff]
        %v649 = vld [vmem:[#allocation7 + $0x660] sm:$0xff]
        %v650 = vld [vmem:[#allocation7 + $0x668] sm:$0xff]
        %v651 = vld [vmem:[#allocation7 + $0x670] sm:$0xff]
        %v652 = vld [vmem:[#allocation7 + $0x678] sm:$0xff]
        %v653 = vld [vmem:[#allocation7 + $0x680] sm:$0xff]
        %v654 = vld [vmem:[#allocation7 + $0x688] sm:$0xff]
        %v655 = vld [vmem:[#allocation7 + $0x690] sm:$0xff]
        %v656 = vld [vmem:[#allocation7 + $0x698] sm:$0xff]
        %v657 = vld [vmem:[#allocation7 + $0x6a0] sm:$0xff]
        %v658 = vld [vmem:[#allocation7 + $0x6a8] sm:$0xff]
        %v659 = vld [vmem:[#allocation7 + $0x6b0] sm:$0xff]
        %v660 = vld [vmem:[#allocation7 + $0x6b8] sm:$0xff]
        %v661 = vld [vmem:[#allocation7 + $0x6c0] sm:$0xff]
        %v662 = vld [vmem:[#allocation7 + $0x6c8] sm:$0xff]
        %v663 = vld [vmem:[#allocation7 + $0x6d0] sm:$0xff]
        %v664 = vld [vmem:[#allocation7 + $0x6d8] sm:$0xff]
        %v665 = vld [vmem:[#allocation7 + $0x6e0] sm:$0xff]
        %v666 = vld [vmem:[#allocation7 + $0x6e8] sm:$0xff]
        %v667 = vld [vmem:[#allocation7 + $0x6f0] sm:$0xff]
        %v668 = vld [vmem:[#allocation7 + $0x6f8] sm:$0xff]
        %v669 = vld [vmem:[#allocation7 + $0x700] sm:$0xff]
        %v670 = vld [vmem:[#allocation7 + $0x708] sm:$0xff]
        %v671 = vld [vmem:[#allocation7 + $0x710] sm:$0xff]
        %v672 = vld [vmem:[#allocation7 + $0x718] sm:$0xff]
        %v673 = vld [vmem:[#allocation7 + $0x720] sm:$0xff]
        %v674 = vld [vmem:[#allocation7 + $0x728] sm:$0xff]
        %v675 = vld [vmem:[#allocation7 + $0x730] sm:$0xff]
        %v676 = vld [vmem:[#allocation7 + $0x738] sm:$0xff]
        %v677 = vld [vmem:[#allocation7 + $0x740] sm:$0xff]
        %v678 = vld [vmem:[#allocation7 + $0x748] sm:$0xff]
        %v679 = vld [vmem:[#allocation7 + $0x750] sm:$0xff]
        %v680 = vld [vmem:[#allocation7 + $0x758] sm:$0xff]
        %v681 = vld [vmem:[#allocation7 + $0x760] sm:$0xff]
        %v682 = vld [vmem:[#allocation7 + $0x768] sm:$0xff]
        %v683 = vld [vmem:[#allocation7 + $0x770] sm:$0xff]
        %v684 = vld [vmem:[#allocation7 + $0x778] sm:$0xff]
        %v685 = vld [vmem:[#allocation7 + $0x780] sm:$0xff]
        %v686 = vld [vmem:[#allocation7 + $0x788] sm:$0xff]
        %v687 = vld [vmem:[#allocation7 + $0x790] sm:$0xff]
        %v688 = vld [vmem:[#allocation7 + $0x798] sm:$0xff]
        %v689 = vld [vmem:[#allocation7 + $0x7a0] sm:$0xff]
        %v690 = vld [vmem:[#allocation7 + $0x7a8] sm:$0xff]
        %v691 = vld [vmem:[#allocation7 + $0x7b0] sm:$0xff]
        %v692 = vld [vmem:[#allocation7 + $0x7b8] sm:$0xff]
        %v693 = vld [vmem:[#allocation7 + $0x7c0] sm:$0xff]
        %v694 = vld [vmem:[#allocation7 + $0x7c8] sm:$0xff]
        %v695 = vld [vmem:[#allocation7 + $0x7d0] sm:$0xff]
        %v696 = vld [vmem:[#allocation7 + $0x7d8] sm:$0xff]
        %v697 = vld [vmem:[#allocation7 + $0x7e0] sm:$0xff]
        %v698 = vld [vmem:[#allocation7 + $0x7e8] sm:$0xff]
        %v699 = vld [vmem:[#allocation7 + $0x7f0] sm:$0xff]
        %v700 = vld [vmem:[#allocation7 + $0x7f8] sm:$0xff]
        %v701 = vld [vmem:[#allocation9] sm:$0xff]
        %v702 = vld [vmem:[#allocation9 + $0x8] sm:$0xff]
        %v705 = vlaneseq
        %v706 = vshrl.u32 %v705, 7
        %v707 = vsub.s32 0, %v706
        %v708 = vrot.slane %v701, %v707
        %v709 = vlaneseq
        %v710 = vshrl.u32 %v709, 7
        %v711 = vsub.s32 1, %v710
        %v712 = vrot.slane %v701, %v711
        %v713 = vlaneseq
        %v714 = vshrl.u32 %v713, 7
        %v715 = vsub.s32 2, %v714
        %v716 = vrot.slane %v701, %v715
        %v717 = vlaneseq
        %v718 = vshrl.u32 %v717, 7
        %v719 = vsub.s32 3, %v718
        %v720 = vrot.slane %v701, %v719
        %v721 = vlaneseq
        %v722 = vshrl.u32 %v721, 7
        %v723 = vsub.s32 4, %v722
        %v724 = vrot.slane %v701, %v723
        %v725 = vlaneseq
        %v726 = vshrl.u32 %v725, 7
        %v727 = vsub.s32 5, %v726
        %v728 = vrot.slane %v701, %v727
        %v729 = vlaneseq
        %v730 = vshrl.u32 %v729, 7
        %v731 = vsub.s32 6, %v730
        %v732 = vrot.slane %v701, %v731
        %v733 = vlaneseq
        %v734 = vshrl.u32 %v733, 7
        %v735 = vsub.s32 7, %v734
        %v736 = vrot.slane %v701, %v735
        %v737 = vlaneseq
        %v738 = vshrl.u32 %v737, 7
        %v739 = vsub.s32 0, %v738
        %v740 = vrot.slane %v702, %v739
        %v741 = vlaneseq
        %v742 = vshrl.u32 %v741, 7
        %v743 = vsub.s32 1, %v742
        %v744 = vrot.slane %v702, %v743
        %v745 = vlaneseq
        %v746 = vshrl.u32 %v745, 7
        %v747 = vsub.s32 2, %v746
        %v748 = vrot.slane %v702, %v747
        %v749 = vlaneseq
        %v750 = vshrl.u32 %v749, 7
        %v751 = vsub.s32 3, %v750
        %v752 = vrot.slane %v702, %v751
        %v753 = vlaneseq
        %v754 = vshrl.u32 %v753, 7
        %v755 = vsub.s32 4, %v754
        %v756 = vrot.slane %v702, %v755
        %v757 = vlaneseq
        %v758 = vshrl.u32 %v757, 7
        %v759 = vsub.s32 5, %v758
        %v760 = vrot.slane %v702, %v759
        %v761 = vlaneseq
        %v762 = vshrl.u32 %v761, 7
        %v763 = vsub.s32 6, %v762
        %v764 = vrot.slane %v702, %v763
        %v765 = vlaneseq
        %v766 = vshrl.u32 %v765, 7
        %v767 = vsub.s32 7, %v766
        %v768 = vrot.slane %v702, %v767
        %v817 = vunpack.c.l.b16 %v413
        %v818 = vunpack.c.h.b16 %v413
        %v819 = vunpack.c.l.b16 %v414
        %v820 = vunpack.c.h.b16 %v414
        %v821 = vunpack.c.l.b16 %v415
        %v822 = vunpack.c.h.b16 %v415
        %v823 = vunpack.c.l.b16 %v416
        %v824 = vunpack.c.h.b16 %v416
        %v825 = vunpack.c.l.b16 %v417
        %v826 = vunpack.c.h.b16 %v417
        %v827 = vunpack.c.l.b16 %v418
        %v828 = vunpack.c.h.b16 %v418
        %v829 = vunpack.c.l.b16 %v419
        %v830 = vunpack.c.h.b16 %v419
        %v831 = vunpack.c.l.b16 %v420
        %v832 = vunpack.c.h.b16 %v420
        %v833 = vunpack.c.l.b16 %v421
        %v834 = vunpack.c.h.b16 %v421
        %v835 = vunpack.c.l.b16 %v422
        %v836 = vunpack.c.h.b16 %v422
        %v837 = vunpack.c.l.b16 %v423
        %v838 = vunpack.c.h.b16 %v423
        %v839 = vunpack.c.l.b16 %v424
        %v840 = vunpack.c.h.b16 %v424
        %v841 = vunpack.c.l.b16 %v425
        %v842 = vunpack.c.h.b16 %v425
        %v843 = vunpack.c.l.b16 %v426
        %v844 = vunpack.c.h.b16 %v426
        %v845 = vunpack.c.l.b16 %v427
        %v846 = vunpack.c.h.b16 %v427
        %v847 = vunpack.c.l.b16 %v428
        %v848 = vunpack.c.h.b16 %v428
        %v849 = vunpack.c.l.b16 %v429
        %v850 = vunpack.c.h.b16 %v429
        %v851 = vunpack.c.l.b16 %v430
        %v852 = vunpack.c.h.b16 %v430
        %v853 = vunpack.c.l.b16 %v431
        %v854 = vunpack.c.h.b16 %v431
        %v855 = vunpack.c.l.b16 %v432
        %v856 = vunpack.c.h.b16 %v432
        %v857 = vunpack.c.l.b16 %v433
        %v858 = vunpack.c.h.b16 %v433
        %v859 = vunpack.c.l.b16 %v434
        %v860 = vunpack.c.h.b16 %v434
        %v861 = vunpack.c.l.b16 %v435
        %v862 = vunpack.c.h.b16 %v435
        %v863 = vunpack.c.l.b16 %v436
        %v864 = vunpack.c.h.b16 %v436
        %v865 = vunpack.c.l.b16 %v437
        %v866 = vunpack.c.h.b16 %v437
        %v867 = vunpack.c.l.b16 %v438
        %v868 = vunpack.c.h.b16 %v438
        %v869 = vunpack.c.l.b16 %v439
        %v870 = vunpack.c.h.b16 %v439
        %v871 = vunpack.c.l.b16 %v440
        %v872 = vunpack.c.h.b16 %v440
        %v873 = vunpack.c.l.b16 %v441
        %v874 = vunpack.c.h.b16 %v441
        %v875 = vunpack.c.l.b16 %v442
        %v876 = vunpack.c.h.b16 %v442
        %v877 = vunpack.c.l.b16 %v443
        %v878 = vunpack.c.h.b16 %v443
        %v879 = vunpack.c.l.b16 %v444
        %v880 = vunpack.c.h.b16 %v444
        %v881 = vpack.c.b16 %v819, %v817
        %v882 = vpack.c.b16 %v820, %v818
        %v883 = vpack.c.b16 %v823, %v821
        %v884 = vpack.c.b16 %v824, %v822
        %v885 = vpack.c.b16 %v827, %v825
        %v886 = vpack.c.b16 %v828, %v826
        %v887 = vpack.c.b16 %v831, %v829
        %v888 = vpack.c.b16 %v832, %v830
        %v889 = vpack.c.b16 %v835, %v833
        %v890 = vpack.c.b16 %v836, %v834
        %v891 = vpack.c.b16 %v839, %v837
        %v892 = vpack.c.b16 %v840, %v838
        %v893 = vpack.c.b16 %v843, %v841
        %v894 = vpack.c.b16 %v844, %v842
        %v895 = vpack.c.b16 %v847, %v845
        %v896 = vpack.c.b16 %v848, %v846
        %v897 = vpack.c.b16 %v851, %v849
        %v898 = vpack.c.b16 %v852, %v850
        %v899 = vpack.c.b16 %v855, %v853
        %v900 = vpack.c.b16 %v856, %v854
        %v901 = vpack.c.b16 %v859, %v857
        %v902 = vpack.c.b16 %v860, %v858
        %v903 = vpack.c.b16 %v863, %v861
        %v904 = vpack.c.b16 %v864, %v862
        %v905 = vpack.c.b16 %v867, %v865
        %v906 = vpack.c.b16 %v868, %v866
        %v907 = vpack.c.b16 %v871, %v869
        %v908 = vpack.c.b16 %v872, %v870
        %v909 = vpack.c.b16 %v875, %v873
        %v910 = vpack.c.b16 %v876, %v874
        %v911 = vpack.c.b16 %v879, %v877
        %v912 = vpack.c.b16 %v880, %v878
        %v1201 = vunpack.c.l.b16 %v445
        %v1202 = vunpack.c.h.b16 %v445
        %v1203 = vunpack.c.l.b16 %v446
        %v1204 = vunpack.c.h.b16 %v446
        %v1205 = vunpack.c.l.b16 %v447
        %v1206 = vunpack.c.h.b16 %v447
        %v1207 = vunpack.c.l.b16 %v448
        %v1208 = vunpack.c.h.b16 %v448
        %v1209 = vunpack.c.l.b16 %v449
        %v1210 = vunpack.c.h.b16 %v449
        %v1211 = vunpack.c.l.b16 %v450
        %v1212 = vunpack.c.h.b16 %v450
        %v1213 = vunpack.c.l.b16 %v451
        %v1214 = vunpack.c.h.b16 %v451
        %v1215 = vunpack.c.l.b16 %v452
        %v1216 = vunpack.c.h.b16 %v452
        %v1217 = vunpack.c.l.b16 %v453
        %v1218 = vunpack.c.h.b16 %v453
        %v1219 = vunpack.c.l.b16 %v454
        %v1220 = vunpack.c.h.b16 %v454
        %v1221 = vunpack.c.l.b16 %v455
        %v1222 = vunpack.c.h.b16 %v455
        %v1223 = vunpack.c.l.b16 %v456
        %v1224 = vunpack.c.h.b16 %v456
        %v1225 = vunpack.c.l.b16 %v457
        %v1226 = vunpack.c.h.b16 %v457
        %v1227 = vunpack.c.l.b16 %v458
        %v1228 = vunpack.c.h.b16 %v458
        %v1229 = vunpack.c.l.b16 %v459
        %v1230 = vunpack.c.h.b16 %v459
        %v1231 = vunpack.c.l.b16 %v460
        %v1232 = vunpack.c.h.b16 %v460
        %v1233 = vunpack.c.l.b16 %v461
        %v1234 = vunpack.c.h.b16 %v461
        %v1235 = vunpack.c.l.b16 %v462
        %v1236 = vunpack.c.h.b16 %v462
        %v1237 = vunpack.c.l.b16 %v463
        %v1238 = vunpack.c.h.b16 %v463
        %v1239 = vunpack.c.l.b16 %v464
        %v1240 = vunpack.c.h.b16 %v464
        %v1241 = vunpack.c.l.b16 %v465
        %v1242 = vunpack.c.h.b16 %v465
        %v1243 = vunpack.c.l.b16 %v466
        %v1244 = vunpack.c.h.b16 %v466
        %v1245 = vunpack.c.l.b16 %v467
        %v1246 = vunpack.c.h.b16 %v467
        %v1247 = vunpack.c.l.b16 %v468
        %v1248 = vunpack.c.h.b16 %v468
        %v1249 = vunpack.c.l.b16 %v469
        %v1250 = vunpack.c.h.b16 %v469
        %v1251 = vunpack.c.l.b16 %v470
        %v1252 = vunpack.c.h.b16 %v470
        %v1253 = vunpack.c.l.b16 %v471
        %v1254 = vunpack.c.h.b16 %v471
        %v1255 = vunpack.c.l.b16 %v472
        %v1256 = vunpack.c.h.b16 %v472
        %v1257 = vunpack.c.l.b16 %v473
        %v1258 = vunpack.c.h.b16 %v473
        %v1259 = vunpack.c.l.b16 %v474
        %v1260 = vunpack.c.h.b16 %v474
        %v1261 = vunpack.c.l.b16 %v475
        %v1262 = vunpack.c.h.b16 %v475
        %v1263 = vunpack.c.l.b16 %v476
        %v1264 = vunpack.c.h.b16 %v476
        %v1265 = vunpack.c.l.b16 %v477
        %v1266 = vunpack.c.h.b16 %v477
        %v1267 = vunpack.c.l.b16 %v478
        %v1268 = vunpack.c.h.b16 %v478
        %v1269 = vunpack.c.l.b16 %v479
        %v1270 = vunpack.c.h.b16 %v479
        %v1271 = vunpack.c.l.b16 %v480
        %v1272 = vunpack.c.h.b16 %v480
        %v1273 = vunpack.c.l.b16 %v481
        %v1274 = vunpack.c.h.b16 %v481
        %v1275 = vunpack.c.l.b16 %v482
        %v1276 = vunpack.c.h.b16 %v482
        %v1277 = vunpack.c.l.b16 %v483
        %v1278 = vunpack.c.h.b16 %v483
        %v1279 = vunpack.c.l.b16 %v484
        %v1280 = vunpack.c.h.b16 %v484
        %v1281 = vunpack.c.l.b16 %v485
        %v1282 = vunpack.c.h.b16 %v485
        %v1283 = vunpack.c.l.b16 %v486
        %v1284 = vunpack.c.h.b16 %v486
        %v1285 = vunpack.c.l.b16 %v487
        %v1286 = vunpack.c.h.b16 %v487
        %v1287 = vunpack.c.l.b16 %v488
        %v1288 = vunpack.c.h.b16 %v488
        %v1289 = vunpack.c.l.b16 %v489
        %v1290 = vunpack.c.h.b16 %v489
        %v1291 = vunpack.c.l.b16 %v490
        %v1292 = vunpack.c.h.b16 %v490
        %v1293 = vunpack.c.l.b16 %v491
        %v1294 = vunpack.c.h.b16 %v491
        %v1295 = vunpack.c.l.b16 %v492
        %v1296 = vunpack.c.h.b16 %v492
        %v1297 = vunpack.c.l.b16 %v493
        %v1298 = vunpack.c.h.b16 %v493
        %v1299 = vunpack.c.l.b16 %v494
        %v1300 = vunpack.c.h.b16 %v494
        %v1301 = vunpack.c.l.b16 %v495
        %v1302 = vunpack.c.h.b16 %v495
        %v1303 = vunpack.c.l.b16 %v496
        %v1304 = vunpack.c.h.b16 %v496
        %v1305 = vunpack.c.l.b16 %v497
        %v1306 = vunpack.c.h.b16 %v497
        %v1307 = vunpack.c.l.b16 %v498
        %v1308 = vunpack.c.h.b16 %v498
        %v1309 = vunpack.c.l.b16 %v499
        %v1310 = vunpack.c.h.b16 %v499
        %v1311 = vunpack.c.l.b16 %v500
        %v1312 = vunpack.c.h.b16 %v500
        %v1313 = vunpack.c.l.b16 %v501
        %v1314 = vunpack.c.h.b16 %v501
        %v1315 = vunpack.c.l.b16 %v502
        %v1316 = vunpack.c.h.b16 %v502
        %v1317 = vunpack.c.l.b16 %v503
        %v1318 = vunpack.c.h.b16 %v503
        %v1319 = vunpack.c.l.b16 %v504
        %v1320 = vunpack.c.h.b16 %v504
        %v1321 = vunpack.c.l.b16 %v505
        %v1322 = vunpack.c.h.b16 %v505
        %v1323 = vunpack.c.l.b16 %v506
        %v1324 = vunpack.c.h.b16 %v506
        %v1325 = vunpack.c.l.b16 %v507
        %v1326 = vunpack.c.h.b16 %v507
        %v1327 = vunpack.c.l.b16 %v508
        %v1328 = vunpack.c.h.b16 %v508
        %v1329 = vunpack.c.l.b16 %v509
        %v1330 = vunpack.c.h.b16 %v509
        %v1331 = vunpack.c.l.b16 %v510
        %v1332 = vunpack.c.h.b16 %v510
        %v1333 = vunpack.c.l.b16 %v511
        %v1334 = vunpack.c.h.b16 %v511
        %v1335 = vunpack.c.l.b16 %v512
        %v1336 = vunpack.c.h.b16 %v512
        %v1337 = vunpack.c.l.b16 %v513
        %v1338 = vunpack.c.h.b16 %v513
        %v1339 = vunpack.c.l.b16 %v514
        %v1340 = vunpack.c.h.b16 %v514
        %v1341 = vunpack.c.l.b16 %v515
        %v1342 = vunpack.c.h.b16 %v515
        %v1343 = vunpack.c.l.b16 %v516
        %v1344 = vunpack.c.h.b16 %v516
        %v1345 = vunpack.c.l.b16 %v517
        %v1346 = vunpack.c.h.b16 %v517
        %v1347 = vunpack.c.l.b16 %v518
        %v1348 = vunpack.c.h.b16 %v518
        %v1349 = vunpack.c.l.b16 %v519
        %v1350 = vunpack.c.h.b16 %v519
        %v1351 = vunpack.c.l.b16 %v520
        %v1352 = vunpack.c.h.b16 %v520
        %v1353 = vunpack.c.l.b16 %v521
        %v1354 = vunpack.c.h.b16 %v521
        %v1355 = vunpack.c.l.b16 %v522
        %v1356 = vunpack.c.h.b16 %v522
        %v1357 = vunpack.c.l.b16 %v523
        %v1358 = vunpack.c.h.b16 %v523
        %v1359 = vunpack.c.l.b16 %v524
        %v1360 = vunpack.c.h.b16 %v524
        %v1361 = vunpack.c.l.b16 %v525
        %v1362 = vunpack.c.h.b16 %v525
        %v1363 = vunpack.c.l.b16 %v526
        %v1364 = vunpack.c.h.b16 %v526
        %v1365 = vunpack.c.l.b16 %v527
        %v1366 = vunpack.c.h.b16 %v527
        %v1367 = vunpack.c.l.b16 %v528
        %v1368 = vunpack.c.h.b16 %v528
        %v1369 = vunpack.c.l.b16 %v529
        %v1370 = vunpack.c.h.b16 %v529
        %v1371 = vunpack.c.l.b16 %v530
        %v1372 = vunpack.c.h.b16 %v530
        %v1373 = vunpack.c.l.b16 %v531
        %v1374 = vunpack.c.h.b16 %v531
        %v1375 = vunpack.c.l.b16 %v532
        %v1376 = vunpack.c.h.b16 %v532
        %v1377 = vunpack.c.l.b16 %v533
        %v1378 = vunpack.c.h.b16 %v533
        %v1379 = vunpack.c.l.b16 %v534
        %v1380 = vunpack.c.h.b16 %v534
        %v1381 = vunpack.c.l.b16 %v535
        %v1382 = vunpack.c.h.b16 %v535
        %v1383 = vunpack.c.l.b16 %v536
        %v1384 = vunpack.c.h.b16 %v536
        %v1385 = vunpack.c.l.b16 %v537
        %v1386 = vunpack.c.h.b16 %v537
        %v1387 = vunpack.c.l.b16 %v538
        %v1388 = vunpack.c.h.b16 %v538
        %v1389 = vunpack.c.l.b16 %v539
        %v1390 = vunpack.c.h.b16 %v539
        %v1391 = vunpack.c.l.b16 %v540
        %v1392 = vunpack.c.h.b16 %v540
        %v1393 = vunpack.c.l.b16 %v541
        %v1394 = vunpack.c.h.b16 %v541
        %v1395 = vunpack.c.l.b16 %v542
        %v1396 = vunpack.c.h.b16 %v542
        %v1397 = vunpack.c.l.b16 %v543
        %v1398 = vunpack.c.h.b16 %v543
        %v1399 = vunpack.c.l.b16 %v544
        %v1400 = vunpack.c.h.b16 %v544
        %v1401 = vunpack.c.l.b16 %v545
        %v1402 = vunpack.c.h.b16 %v545
        %v1403 = vunpack.c.l.b16 %v546
        %v1404 = vunpack.c.h.b16 %v546
        %v1405 = vunpack.c.l.b16 %v547
        %v1406 = vunpack.c.h.b16 %v547
        %v1407 = vunpack.c.l.b16 %v548
        %v1408 = vunpack.c.h.b16 %v548
        %v1409 = vunpack.c.l.b16 %v549
        %v1410 = vunpack.c.h.b16 %v549
        %v1411 = vunpack.c.l.b16 %v550
        %v1412 = vunpack.c.h.b16 %v550
        %v1413 = vunpack.c.l.b16 %v551
        %v1414 = vunpack.c.h.b16 %v551
        %v1415 = vunpack.c.l.b16 %v552
        %v1416 = vunpack.c.h.b16 %v552
        %v1417 = vunpack.c.l.b16 %v553
        %v1418 = vunpack.c.h.b16 %v553
        %v1419 = vunpack.c.l.b16 %v554
        %v1420 = vunpack.c.h.b16 %v554
        %v1421 = vunpack.c.l.b16 %v555
        %v1422 = vunpack.c.h.b16 %v555
        %v1423 = vunpack.c.l.b16 %v556
        %v1424 = vunpack.c.h.b16 %v556
        %v1425 = vunpack.c.l.b16 %v557
        %v1426 = vunpack.c.h.b16 %v557
        %v1427 = vunpack.c.l.b16 %v558
        %v1428 = vunpack.c.h.b16 %v558
        %v1429 = vunpack.c.l.b16 %v559
        %v1430 = vunpack.c.h.b16 %v559
        %v1431 = vunpack.c.l.b16 %v560
        %v1432 = vunpack.c.h.b16 %v560
        %v1433 = vunpack.c.l.b16 %v561
        %v1434 = vunpack.c.h.b16 %v561
        %v1435 = vunpack.c.l.b16 %v562
        %v1436 = vunpack.c.h.b16 %v562
        %v1437 = vunpack.c.l.b16 %v563
        %v1438 = vunpack.c.h.b16 %v563
        %v1439 = vunpack.c.l.b16 %v564
        %v1440 = vunpack.c.h.b16 %v564
        %v1441 = vunpack.c.l.b16 %v565
        %v1442 = vunpack.c.h.b16 %v565
        %v1443 = vunpack.c.l.b16 %v566
        %v1444 = vunpack.c.h.b16 %v566
        %v1445 = vunpack.c.l.b16 %v567
        %v1446 = vunpack.c.h.b16 %v567
        %v1447 = vunpack.c.l.b16 %v568
        %v1448 = vunpack.c.h.b16 %v568
        %v1449 = vunpack.c.l.b16 %v569
        %v1450 = vunpack.c.h.b16 %v569
        %v1451 = vunpack.c.l.b16 %v570
        %v1452 = vunpack.c.h.b16 %v570
        %v1453 = vunpack.c.l.b16 %v571
        %v1454 = vunpack.c.h.b16 %v571
        %v1455 = vunpack.c.l.b16 %v572
        %v1456 = vunpack.c.h.b16 %v572
        %v1457 = vunpack.c.l.b16 %v573
        %v1458 = vunpack.c.h.b16 %v573
        %v1459 = vunpack.c.l.b16 %v574
        %v1460 = vunpack.c.h.b16 %v574
        %v1461 = vunpack.c.l.b16 %v575
        %v1462 = vunpack.c.h.b16 %v575
        %v1463 = vunpack.c.l.b16 %v576
        %v1464 = vunpack.c.h.b16 %v576
        %v1465 = vunpack.c.l.b16 %v577
        %v1466 = vunpack.c.h.b16 %v577
        %v1467 = vunpack.c.l.b16 %v578
        %v1468 = vunpack.c.h.b16 %v578
        %v1469 = vunpack.c.l.b16 %v579
        %v1470 = vunpack.c.h.b16 %v579
        %v1471 = vunpack.c.l.b16 %v580
        %v1472 = vunpack.c.h.b16 %v580
        %v1473 = vunpack.c.l.b16 %v581
        %v1474 = vunpack.c.h.b16 %v581
        %v1475 = vunpack.c.l.b16 %v582
        %v1476 = vunpack.c.h.b16 %v582
        %v1477 = vunpack.c.l.b16 %v583
        %v1478 = vunpack.c.h.b16 %v583
        %v1479 = vunpack.c.l.b16 %v584
        %v1480 = vunpack.c.h.b16 %v584
        %v1481 = vunpack.c.l.b16 %v585
        %v1482 = vunpack.c.h.b16 %v585
        %v1483 = vunpack.c.l.b16 %v586
        %v1484 = vunpack.c.h.b16 %v586
        %v1485 = vunpack.c.l.b16 %v587
        %v1486 = vunpack.c.h.b16 %v587
        %v1487 = vunpack.c.l.b16 %v588
        %v1488 = vunpack.c.h.b16 %v588
        %v1489 = vunpack.c.l.b16 %v589
        %v1490 = vunpack.c.h.b16 %v589
        %v1491 = vunpack.c.l.b16 %v590
        %v1492 = vunpack.c.h.b16 %v590
        %v1493 = vunpack.c.l.b16 %v591
        %v1494 = vunpack.c.h.b16 %v591
        %v1495 = vunpack.c.l.b16 %v592
        %v1496 = vunpack.c.h.b16 %v592
        %v1497 = vunpack.c.l.b16 %v593
        %v1498 = vunpack.c.h.b16 %v593
        %v1499 = vunpack.c.l.b16 %v594
        %v1500 = vunpack.c.h.b16 %v594
        %v1501 = vunpack.c.l.b16 %v595
        %v1502 = vunpack.c.h.b16 %v595
        %v1503 = vunpack.c.l.b16 %v596
        %v1504 = vunpack.c.h.b16 %v596
        %v1505 = vunpack.c.l.b16 %v597
        %v1506 = vunpack.c.h.b16 %v597
        %v1507 = vunpack.c.l.b16 %v598
        %v1508 = vunpack.c.h.b16 %v598
        %v1509 = vunpack.c.l.b16 %v599
        %v1510 = vunpack.c.h.b16 %v599
        %v1511 = vunpack.c.l.b16 %v600
        %v1512 = vunpack.c.h.b16 %v600
        %v1513 = vunpack.c.l.b16 %v601
        %v1514 = vunpack.c.h.b16 %v601
        %v1515 = vunpack.c.l.b16 %v602
        %v1516 = vunpack.c.h.b16 %v602
        %v1517 = vunpack.c.l.b16 %v603
        %v1518 = vunpack.c.h.b16 %v603
        %v1519 = vunpack.c.l.b16 %v604
        %v1520 = vunpack.c.h.b16 %v604
        %v1521 = vunpack.c.l.b16 %v605
        %v1522 = vunpack.c.h.b16 %v605
        %v1523 = vunpack.c.l.b16 %v606
        %v1524 = vunpack.c.h.b16 %v606
        %v1525 = vunpack.c.l.b16 %v607
        %v1526 = vunpack.c.h.b16 %v607
        %v1527 = vunpack.c.l.b16 %v608
        %v1528 = vunpack.c.h.b16 %v608
        %v1529 = vunpack.c.l.b16 %v609
        %v1530 = vunpack.c.h.b16 %v609
        %v1531 = vunpack.c.l.b16 %v610
        %v1532 = vunpack.c.h.b16 %v610
        %v1533 = vunpack.c.l.b16 %v611
        %v1534 = vunpack.c.h.b16 %v611
        %v1535 = vunpack.c.l.b16 %v612
        %v1536 = vunpack.c.h.b16 %v612
        %v1537 = vunpack.c.l.b16 %v613
        %v1538 = vunpack.c.h.b16 %v613
        %v1539 = vunpack.c.l.b16 %v614
        %v1540 = vunpack.c.h.b16 %v614
        %v1541 = vunpack.c.l.b16 %v615
        %v1542 = vunpack.c.h.b16 %v615
        %v1543 = vunpack.c.l.b16 %v616
        %v1544 = vunpack.c.h.b16 %v616
        %v1545 = vunpack.c.l.b16 %v617
        %v1546 = vunpack.c.h.b16 %v617
        %v1547 = vunpack.c.l.b16 %v618
        %v1548 = vunpack.c.h.b16 %v618
        %v1549 = vunpack.c.l.b16 %v619
        %v1550 = vunpack.c.h.b16 %v619
        %v1551 = vunpack.c.l.b16 %v620
        %v1552 = vunpack.c.h.b16 %v620
        %v1553 = vunpack.c.l.b16 %v621
        %v1554 = vunpack.c.h.b16 %v621
        %v1555 = vunpack.c.l.b16 %v622
        %v1556 = vunpack.c.h.b16 %v622
        %v1557 = vunpack.c.l.b16 %v623
        %v1558 = vunpack.c.h.b16 %v623
        %v1559 = vunpack.c.l.b16 %v624
        %v1560 = vunpack.c.h.b16 %v624
        %v1561 = vunpack.c.l.b16 %v625
        %v1562 = vunpack.c.h.b16 %v625
        %v1563 = vunpack.c.l.b16 %v626
        %v1564 = vunpack.c.h.b16 %v626
        %v1565 = vunpack.c.l.b16 %v627
        %v1566 = vunpack.c.h.b16 %v627
        %v1567 = vunpack.c.l.b16 %v628
        %v1568 = vunpack.c.h.b16 %v628
        %v1569 = vunpack.c.l.b16 %v629
        %v1570 = vunpack.c.h.b16 %v629
        %v1571 = vunpack.c.l.b16 %v630
        %v1572 = vunpack.c.h.b16 %v630
        %v1573 = vunpack.c.l.b16 %v631
        %v1574 = vunpack.c.h.b16 %v631
        %v1575 = vunpack.c.l.b16 %v632
        %v1576 = vunpack.c.h.b16 %v632
        %v1577 = vunpack.c.l.b16 %v633
        %v1578 = vunpack.c.h.b16 %v633
        %v1579 = vunpack.c.l.b16 %v634
        %v1580 = vunpack.c.h.b16 %v634
        %v1581 = vunpack.c.l.b16 %v635
        %v1582 = vunpack.c.h.b16 %v635
        %v1583 = vunpack.c.l.b16 %v636
        %v1584 = vunpack.c.h.b16 %v636
        %v1585 = vunpack.c.l.b16 %v637
        %v1586 = vunpack.c.h.b16 %v637
        %v1587 = vunpack.c.l.b16 %v638
        %v1588 = vunpack.c.h.b16 %v638
        %v1589 = vunpack.c.l.b16 %v639
        %v1590 = vunpack.c.h.b16 %v639
        %v1591 = vunpack.c.l.b16 %v640
        %v1592 = vunpack.c.h.b16 %v640
        %v1593 = vunpack.c.l.b16 %v641
        %v1594 = vunpack.c.h.b16 %v641
        %v1595 = vunpack.c.l.b16 %v642
        %v1596 = vunpack.c.h.b16 %v642
        %v1597 = vunpack.c.l.b16 %v643
        %v1598 = vunpack.c.h.b16 %v643
        %v1599 = vunpack.c.l.b16 %v644
        %v1600 = vunpack.c.h.b16 %v644
        %v1601 = vunpack.c.l.b16 %v645
        %v1602 = vunpack.c.h.b16 %v645
        %v1603 = vunpack.c.l.b16 %v646
        %v1604 = vunpack.c.h.b16 %v646
        %v1605 = vunpack.c.l.b16 %v647
        %v1606 = vunpack.c.h.b16 %v647
        %v1607 = vunpack.c.l.b16 %v648
        %v1608 = vunpack.c.h.b16 %v648
        %v1609 = vunpack.c.l.b16 %v649
        %v1610 = vunpack.c.h.b16 %v649
        %v1611 = vunpack.c.l.b16 %v650
        %v1612 = vunpack.c.h.b16 %v650
        %v1613 = vunpack.c.l.b16 %v651
        %v1614 = vunpack.c.h.b16 %v651
        %v1615 = vunpack.c.l.b16 %v652
        %v1616 = vunpack.c.h.b16 %v652
        %v1617 = vunpack.c.l.b16 %v653
        %v1618 = vunpack.c.h.b16 %v653
        %v1619 = vunpack.c.l.b16 %v654
        %v1620 = vunpack.c.h.b16 %v654
        %v1621 = vunpack.c.l.b16 %v655
        %v1622 = vunpack.c.h.b16 %v655
        %v1623 = vunpack.c.l.b16 %v656
        %v1624 = vunpack.c.h.b16 %v656
        %v1625 = vunpack.c.l.b16 %v657
        %v1626 = vunpack.c.h.b16 %v657
        %v1627 = vunpack.c.l.b16 %v658
        %v1628 = vunpack.c.h.b16 %v658
        %v1629 = vunpack.c.l.b16 %v659
        %v1630 = vunpack.c.h.b16 %v659
        %v1631 = vunpack.c.l.b16 %v660
        %v1632 = vunpack.c.h.b16 %v660
        %v1633 = vunpack.c.l.b16 %v661
        %v1634 = vunpack.c.h.b16 %v661
        %v1635 = vunpack.c.l.b16 %v662
        %v1636 = vunpack.c.h.b16 %v662
        %v1637 = vunpack.c.l.b16 %v663
        %v1638 = vunpack.c.h.b16 %v663
        %v1639 = vunpack.c.l.b16 %v664
        %v1640 = vunpack.c.h.b16 %v664
        %v1641 = vunpack.c.l.b16 %v665
        %v1642 = vunpack.c.h.b16 %v665
        %v1643 = vunpack.c.l.b16 %v666
        %v1644 = vunpack.c.h.b16 %v666
        %v1645 = vunpack.c.l.b16 %v667
        %v1646 = vunpack.c.h.b16 %v667
        %v1647 = vunpack.c.l.b16 %v668
        %v1648 = vunpack.c.h.b16 %v668
        %v1649 = vunpack.c.l.b16 %v669
        %v1650 = vunpack.c.h.b16 %v669
        %v1651 = vunpack.c.l.b16 %v670
        %v1652 = vunpack.c.h.b16 %v670
        %v1653 = vunpack.c.l.b16 %v671
        %v1654 = vunpack.c.h.b16 %v671
        %v1655 = vunpack.c.l.b16 %v672
        %v1656 = vunpack.c.h.b16 %v672
        %v1657 = vunpack.c.l.b16 %v673
        %v1658 = vunpack.c.h.b16 %v673
        %v1659 = vunpack.c.l.b16 %v674
        %v1660 = vunpack.c.h.b16 %v674
        %v1661 = vunpack.c.l.b16 %v675
        %v1662 = vunpack.c.h.b16 %v675
        %v1663 = vunpack.c.l.b16 %v676
        %v1664 = vunpack.c.h.b16 %v676
        %v1665 = vunpack.c.l.b16 %v677
        %v1666 = vunpack.c.h.b16 %v677
        %v1667 = vunpack.c.l.b16 %v678
        %v1668 = vunpack.c.h.b16 %v678
        %v1669 = vunpack.c.l.b16 %v679
        %v1670 = vunpack.c.h.b16 %v679
        %v1671 = vunpack.c.l.b16 %v680
        %v1672 = vunpack.c.h.b16 %v680
        %v1673 = vunpack.c.l.b16 %v681
        %v1674 = vunpack.c.h.b16 %v681
        %v1675 = vunpack.c.l.b16 %v682
        %v1676 = vunpack.c.h.b16 %v682
        %v1677 = vunpack.c.l.b16 %v683
        %v1678 = vunpack.c.h.b16 %v683
        %v1679 = vunpack.c.l.b16 %v684
        %v1680 = vunpack.c.h.b16 %v684
        %v1681 = vunpack.c.l.b16 %v685
        %v1682 = vunpack.c.h.b16 %v685
        %v1683 = vunpack.c.l.b16 %v686
        %v1684 = vunpack.c.h.b16 %v686
        %v1685 = vunpack.c.l.b16 %v687
        %v1686 = vunpack.c.h.b16 %v687
        %v1687 = vunpack.c.l.b16 %v688
        %v1688 = vunpack.c.h.b16 %v688
        %v1689 = vunpack.c.l.b16 %v689
        %v1690 = vunpack.c.h.b16 %v689
        %v1691 = vunpack.c.l.b16 %v690
        %v1692 = vunpack.c.h.b16 %v690
        %v1693 = vunpack.c.l.b16 %v691
        %v1694 = vunpack.c.h.b16 %v691
        %v1695 = vunpack.c.l.b16 %v692
        %v1696 = vunpack.c.h.b16 %v692
        %v1697 = vunpack.c.l.b16 %v693
        %v1698 = vunpack.c.h.b16 %v693
        %v1699 = vunpack.c.l.b16 %v694
        %v1700 = vunpack.c.h.b16 %v694
        %v1701 = vunpack.c.l.b16 %v695
        %v1702 = vunpack.c.h.b16 %v695
        %v1703 = vunpack.c.l.b16 %v696
        %v1704 = vunpack.c.h.b16 %v696
        %v1705 = vunpack.c.l.b16 %v697
        %v1706 = vunpack.c.h.b16 %v697
        %v1707 = vunpack.c.l.b16 %v698
        %v1708 = vunpack.c.h.b16 %v698
        %v1709 = vunpack.c.l.b16 %v699
        %v1710 = vunpack.c.h.b16 %v699
        %v1711 = vunpack.c.l.b16 %v700
        %v1712 = vunpack.c.h.b16 %v700
        %v1713 = vpack.c.b16 %v1217, %v1201
        %v1714 = vpack.c.b16 %v1218, %v1202
        %v1715 = vpack.c.b16 %v1219, %v1203
        %v1716 = vpack.c.b16 %v1220, %v1204
        %v1717 = vpack.c.b16 %v1221, %v1205
        %v1718 = vpack.c.b16 %v1222, %v1206
        %v1719 = vpack.c.b16 %v1223, %v1207
        %v1720 = vpack.c.b16 %v1224, %v1208
        %v1721 = vpack.c.b16 %v1225, %v1209
        %v1722 = vpack.c.b16 %v1226, %v1210
        %v1723 = vpack.c.b16 %v1227, %v1211
        %v1724 = vpack.c.b16 %v1228, %v1212
        %v1725 = vpack.c.b16 %v1229, %v1213
        %v1726 = vpack.c.b16 %v1230, %v1214
        %v1727 = vpack.c.b16 %v1231, %v1215
        %v1728 = vpack.c.b16 %v1232, %v1216
        %v1729 = vpack.c.b16 %v1249, %v1233
        %v1730 = vpack.c.b16 %v1250, %v1234
        %v1731 = vpack.c.b16 %v1251, %v1235
        %v1732 = vpack.c.b16 %v1252, %v1236
        %v1733 = vpack.c.b16 %v1253, %v1237
        %v1734 = vpack.c.b16 %v1254, %v1238
        %v1735 = vpack.c.b16 %v1255, %v1239
        %v1736 = vpack.c.b16 %v1256, %v1240
        %v1737 = vpack.c.b16 %v1257, %v1241
        %v1738 = vpack.c.b16 %v1258, %v1242
        %v1739 = vpack.c.b16 %v1259, %v1243
        %v1740 = vpack.c.b16 %v1260, %v1244
        %v1741 = vpack.c.b16 %v1261, %v1245
        %v1742 = vpack.c.b16 %v1262, %v1246
        %v1743 = vpack.c.b16 %v1263, %v1247
        %v1744 = vpack.c.b16 %v1264, %v1248
        %v1745 = vpack.c.b16 %v1281, %v1265
        %v1746 = vpack.c.b16 %v1282, %v1266
        %v1747 = vpack.c.b16 %v1283, %v1267
        %v1748 = vpack.c.b16 %v1284, %v1268
        %v1749 = vpack.c.b16 %v1285, %v1269
        %v1750 = vpack.c.b16 %v1286, %v1270
        %v1751 = vpack.c.b16 %v1287, %v1271
        %v1752 = vpack.c.b16 %v1288, %v1272
        %v1753 = vpack.c.b16 %v1289, %v1273
        %v1754 = vpack.c.b16 %v1290, %v1274
        %v1755 = vpack.c.b16 %v1291, %v1275
        %v1756 = vpack.c.b16 %v1292, %v1276
        %v1757 = vpack.c.b16 %v1293, %v1277
        %v1758 = vpack.c.b16 %v1294, %v1278
        %v1759 = vpack.c.b16 %v1295, %v1279
        %v1760 = vpack.c.b16 %v1296, %v1280
        %v1761 = vpack.c.b16 %v1313, %v1297
        %v1762 = vpack.c.b16 %v1314, %v1298
        %v1763 = vpack.c.b16 %v1315, %v1299
        %v1764 = vpack.c.b16 %v1316, %v1300
        %v1765 = vpack.c.b16 %v1317, %v1301
        %v1766 = vpack.c.b16 %v1318, %v1302
        %v1767 = vpack.c.b16 %v1319, %v1303
        %v1768 = vpack.c.b16 %v1320, %v1304
        %v1769 = vpack.c.b16 %v1321, %v1305
        %v1770 = vpack.c.b16 %v1322, %v1306
        %v1771 = vpack.c.b16 %v1323, %v1307
        %v1772 = vpack.c.b16 %v1324, %v1308
        %v1773 = vpack.c.b16 %v1325, %v1309
        %v1774 = vpack.c.b16 %v1326, %v1310
        %v1775 = vpack.c.b16 %v1327, %v1311
        %v1776 = vpack.c.b16 %v1328, %v1312
        %v1777 = vpack.c.b16 %v1345, %v1329
        %v1778 = vpack.c.b16 %v1346, %v1330
        %v1779 = vpack.c.b16 %v1347, %v1331
        %v1780 = vpack.c.b16 %v1348, %v1332
        %v1781 = vpack.c.b16 %v1349, %v1333
        %v1782 = vpack.c.b16 %v1350, %v1334
        %v1783 = vpack.c.b16 %v1351, %v1335
        %v1784 = vpack.c.b16 %v1352, %v1336
        %v1785 = vpack.c.b16 %v1353, %v1337
        %v1786 = vpack.c.b16 %v1354, %v1338
        %v1787 = vpack.c.b16 %v1355, %v1339
        %v1788 = vpack.c.b16 %v1356, %v1340
        %v1789 = vpack.c.b16 %v1357, %v1341
        %v1790 = vpack.c.b16 %v1358, %v1342
        %v1791 = vpack.c.b16 %v1359, %v1343
        %v1792 = vpack.c.b16 %v1360, %v1344
        %v1793 = vpack.c.b16 %v1377, %v1361
        %v1794 = vpack.c.b16 %v1378, %v1362
        %v1795 = vpack.c.b16 %v1379, %v1363
        %v1796 = vpack.c.b16 %v1380, %v1364
        %v1797 = vpack.c.b16 %v1381, %v1365
        %v1798 = vpack.c.b16 %v1382, %v1366
        %v1799 = vpack.c.b16 %v1383, %v1367
        %v1800 = vpack.c.b16 %v1384, %v1368
        %v1801 = vpack.c.b16 %v1385, %v1369
        %v1802 = vpack.c.b16 %v1386, %v1370
        %v1803 = vpack.c.b16 %v1387, %v1371
        %v1804 = vpack.c.b16 %v1388, %v1372
        %v1805 = vpack.c.b16 %v1389, %v1373
        %v1806 = vpack.c.b16 %v1390, %v1374
        %v1807 = vpack.c.b16 %v1391, %v1375
        %v1808 = vpack.c.b16 %v1392, %v1376
        %v1809 = vpack.c.b16 %v1409, %v1393
        %v1810 = vpack.c.b16 %v1410, %v1394
        %v1811 = vpack.c.b16 %v1411, %v1395
        %v1812 = vpack.c.b16 %v1412, %v1396
        %v1813 = vpack.c.b16 %v1413, %v1397
        %v1814 = vpack.c.b16 %v1414, %v1398
        %v1815 = vpack.c.b16 %v1415, %v1399
        %v1816 = vpack.c.b16 %v1416, %v1400
        %v1817 = vpack.c.b16 %v1417, %v1401
        %v1818 = vpack.c.b16 %v1418, %v1402
        %v1819 = vpack.c.b16 %v1419, %v1403
        %v1820 = vpack.c.b16 %v1420, %v1404
        %v1821 = vpack.c.b16 %v1421, %v1405
        %v1822 = vpack.c.b16 %v1422, %v1406
        %v1823 = vpack.c.b16 %v1423, %v1407
        %v1824 = vpack.c.b16 %v1424, %v1408
        %v1825 = vpack.c.b16 %v1441, %v1425
        %v1826 = vpack.c.b16 %v1442, %v1426
        %v1827 = vpack.c.b16 %v1443, %v1427
        %v1828 = vpack.c.b16 %v1444, %v1428
        %v1829 = vpack.c.b16 %v1445, %v1429
        %v1830 = vpack.c.b16 %v1446, %v1430
        %v1831 = vpack.c.b16 %v1447, %v1431
        %v1832 = vpack.c.b16 %v1448, %v1432
        %v1833 = vpack.c.b16 %v1449, %v1433
        %v1834 = vpack.c.b16 %v1450, %v1434
        %v1835 = vpack.c.b16 %v1451, %v1435
        %v1836 = vpack.c.b16 %v1452, %v1436
        %v1837 = vpack.c.b16 %v1453, %v1437
        %v1838 = vpack.c.b16 %v1454, %v1438
        %v1839 = vpack.c.b16 %v1455, %v1439
        %v1840 = vpack.c.b16 %v1456, %v1440
        %v1841 = vpack.c.b16 %v1473, %v1457
        %v1842 = vpack.c.b16 %v1474, %v1458
        %v1843 = vpack.c.b16 %v1475, %v1459
        %v1844 = vpack.c.b16 %v1476, %v1460
        %v1845 = vpack.c.b16 %v1477, %v1461
        %v1846 = vpack.c.b16 %v1478, %v1462
        %v1847 = vpack.c.b16 %v1479, %v1463
        %v1848 = vpack.c.b16 %v1480, %v1464
        %v1849 = vpack.c.b16 %v1481, %v1465
        %v1850 = vpack.c.b16 %v1482, %v1466
        %v1851 = vpack.c.b16 %v1483, %v1467
        %v1852 = vpack.c.b16 %v1484, %v1468
        %v1853 = vpack.c.b16 %v1485, %v1469
        %v1854 = vpack.c.b16 %v1486, %v1470
        %v1855 = vpack.c.b16 %v1487, %v1471
        %v1856 = vpack.c.b16 %v1488, %v1472
        %v1857 = vpack.c.b16 %v1505, %v1489
        %v1858 = vpack.c.b16 %v1506, %v1490
        %v1859 = vpack.c.b16 %v1507, %v1491
        %v1860 = vpack.c.b16 %v1508, %v1492
        %v1861 = vpack.c.b16 %v1509, %v1493
        %v1862 = vpack.c.b16 %v1510, %v1494
        %v1863 = vpack.c.b16 %v1511, %v1495
        %v1864 = vpack.c.b16 %v1512, %v1496
        %v1865 = vpack.c.b16 %v1513, %v1497
        %v1866 = vpack.c.b16 %v1514, %v1498
        %v1867 = vpack.c.b16 %v1515, %v1499
        %v1868 = vpack.c.b16 %v1516, %v1500
        %v1869 = vpack.c.b16 %v1517, %v1501
        %v1870 = vpack.c.b16 %v1518, %v1502
        %v1871 = vpack.c.b16 %v1519, %v1503
        %v1872 = vpack.c.b16 %v1520, %v1504
        %v1873 = vpack.c.b16 %v1537, %v1521
        %v1874 = vpack.c.b16 %v1538, %v1522
        %v1875 = vpack.c.b16 %v1539, %v1523
        %v1876 = vpack.c.b16 %v1540, %v1524
        %v1877 = vpack.c.b16 %v1541, %v1525
        %v1878 = vpack.c.b16 %v1542, %v1526
        %v1879 = vpack.c.b16 %v1543, %v1527
        %v1880 = vpack.c.b16 %v1544, %v1528
        %v1881 = vpack.c.b16 %v1545, %v1529
        %v1882 = vpack.c.b16 %v1546, %v1530
        %v1883 = vpack.c.b16 %v1547, %v1531
        %v1884 = vpack.c.b16 %v1548, %v1532
        %v1885 = vpack.c.b16 %v1549, %v1533
        %v1886 = vpack.c.b16 %v1550, %v1534
        %v1887 = vpack.c.b16 %v1551, %v1535
        %v1888 = vpack.c.b16 %v1552, %v1536
        %v1889 = vpack.c.b16 %v1569, %v1553
        %v1890 = vpack.c.b16 %v1570, %v1554
        %v1891 = vpack.c.b16 %v1571, %v1555
        %v1892 = vpack.c.b16 %v1572, %v1556
        %v1893 = vpack.c.b16 %v1573, %v1557
        %v1894 = vpack.c.b16 %v1574, %v1558
        %v1895 = vpack.c.b16 %v1575, %v1559
        %v1896 = vpack.c.b16 %v1576, %v1560
        %v1897 = vpack.c.b16 %v1577, %v1561
        %v1898 = vpack.c.b16 %v1578, %v1562
        %v1899 = vpack.c.b16 %v1579, %v1563
        %v1900 = vpack.c.b16 %v1580, %v1564
        %v1901 = vpack.c.b16 %v1581, %v1565
        %v1902 = vpack.c.b16 %v1582, %v1566
        %v1903 = vpack.c.b16 %v1583, %v1567
        %v1904 = vpack.c.b16 %v1584, %v1568
        %v1905 = vpack.c.b16 %v1601, %v1585
        %v1906 = vpack.c.b16 %v1602, %v1586
        %v1907 = vpack.c.b16 %v1603, %v1587
        %v1908 = vpack.c.b16 %v1604, %v1588
        %v1909 = vpack.c.b16 %v1605, %v1589
        %v1910 = vpack.c.b16 %v1606, %v1590
        %v1911 = vpack.c.b16 %v1607, %v1591
        %v1912 = vpack.c.b16 %v1608, %v1592
        %v1913 = vpack.c.b16 %v1609, %v1593
        %v1914 = vpack.c.b16 %v1610, %v1594
        %v1915 = vpack.c.b16 %v1611, %v1595
        %v1916 = vpack.c.b16 %v1612, %v1596
        %v1917 = vpack.c.b16 %v1613, %v1597
        %v1918 = vpack.c.b16 %v1614, %v1598
        %v1919 = vpack.c.b16 %v1615, %v1599
        %v1920 = vpack.c.b16 %v1616, %v1600
        %v1921 = vpack.c.b16 %v1633, %v1617
        %v1922 = vpack.c.b16 %v1634, %v1618
        %v1923 = vpack.c.b16 %v1635, %v1619
        %v1924 = vpack.c.b16 %v1636, %v1620
        %v1925 = vpack.c.b16 %v1637, %v1621
        %v1926 = vpack.c.b16 %v1638, %v1622
        %v1927 = vpack.c.b16 %v1639, %v1623
        %v1928 = vpack.c.b16 %v1640, %v1624
        %v1929 = vpack.c.b16 %v1641, %v1625
        %v1930 = vpack.c.b16 %v1642, %v1626
        %v1931 = vpack.c.b16 %v1643, %v1627
        %v1932 = vpack.c.b16 %v1644, %v1628
        %v1933 = vpack.c.b16 %v1645, %v1629
        %v1934 = vpack.c.b16 %v1646, %v1630
        %v1935 = vpack.c.b16 %v1647, %v1631
        %v1936 = vpack.c.b16 %v1648, %v1632
        %v1937 = vpack.c.b16 %v1665, %v1649
        %v1938 = vpack.c.b16 %v1666, %v1650
        %v1939 = vpack.c.b16 %v1667, %v1651
        %v1940 = vpack.c.b16 %v1668, %v1652
        %v1941 = vpack.c.b16 %v1669, %v1653
        %v1942 = vpack.c.b16 %v1670, %v1654
        %v1943 = vpack.c.b16 %v1671, %v1655
        %v1944 = vpack.c.b16 %v1672, %v1656
        %v1945 = vpack.c.b16 %v1673, %v1657
        %v1946 = vpack.c.b16 %v1674, %v1658
        %v1947 = vpack.c.b16 %v1675, %v1659
        %v1948 = vpack.c.b16 %v1676, %v1660
        %v1949 = vpack.c.b16 %v1677, %v1661
        %v1950 = vpack.c.b16 %v1678, %v1662
        %v1951 = vpack.c.b16 %v1679, %v1663
        %v1952 = vpack.c.b16 %v1680, %v1664
        %v1953 = vpack.c.b16 %v1697, %v1681
        %v1954 = vpack.c.b16 %v1698, %v1682
        %v1955 = vpack.c.b16 %v1699, %v1683
        %v1956 = vpack.c.b16 %v1700, %v1684
        %v1957 = vpack.c.b16 %v1701, %v1685
        %v1958 = vpack.c.b16 %v1702, %v1686
        %v1959 = vpack.c.b16 %v1703, %v1687
        %v1960 = vpack.c.b16 %v1704, %v1688
        %v1961 = vpack.c.b16 %v1705, %v1689
        %v1962 = vpack.c.b16 %v1706, %v1690
        %v1963 = vpack.c.b16 %v1707, %v1691
        %v1964 = vpack.c.b16 %v1708, %v1692
        %v1965 = vpack.c.b16 %v1709, %v1693
        %v1966 = vpack.c.b16 %v1710, %v1694
        %v1967 = vpack.c.b16 %v1711, %v1695
        %v1968 = vpack.c.b16 %v1712, %v1696
        %2225 = vmatprep.subr.bf16.mxu0 %v1714
        %2226 = vmatpush1.bf16.msra.mxu0 %v1713
        %2227 = vmatprep.subr.bf16.mxu0 %v1730
        %2228 = vmatpush1.bf16.msra.mxu0 %v1729
        %2229 = vmatprep.subr.bf16.mxu0 %v1746
        %2230 = vmatpush1.bf16.msra.mxu0 %v1745
        %2231 = vmatprep.subr.bf16.mxu0 %v1762
        %2232 = vmatpush1.bf16.msra.mxu0 %v1761
        %2233 = vmatprep.subr.bf16.mxu0 %v1778
        %2234 = vmatpush1.bf16.msra.mxu0 %v1777
        %2235 = vmatprep.subr.bf16.mxu0 %v1794
        %2236 = vmatpush1.bf16.msra.mxu0 %v1793
        %2237 = vmatprep.subr.bf16.mxu0 %v1810
        %2238 = vmatpush1.bf16.msra.mxu0 %v1809
        %2239 = vmatprep.subr.bf16.mxu0 %v1826
        %2240 = vmatpush1.bf16.msra.mxu0 %v1825
        %2241 = vmatprep.subr.bf16.mxu0 %v1842
        %2242 = vmatpush1.bf16.msra.mxu0 %v1841
        %2243 = vmatprep.subr.bf16.mxu0 %v1858
        %2244 = vmatpush1.bf16.msra.mxu0 %v1857
        %2245 = vmatprep.subr.bf16.mxu0 %v1874
        %2246 = vmatpush1.bf16.msra.mxu0 %v1873
        %2247 = vmatprep.subr.bf16.mxu0 %v1890
        %2248 = vmatpush1.bf16.msra.mxu0 %v1889
        %2249 = vmatprep.subr.bf16.mxu0 %v1906
        %2250 = vmatpush1.bf16.msra.mxu0 %v1905
        %2251 = vmatprep.subr.bf16.mxu0 %v1922
        %2252 = vmatpush1.bf16.msra.mxu0 %v1921
        %2253 = vmatprep.subr.bf16.mxu0 %v1938
        %2254 = vmatpush1.bf16.msra.mxu0 %v1937
        %2255 = vmatprep.subr.bf16.mxu0 %v1954
        %2256 = vmatpush1.bf16.msra.mxu0 %v1953
        %2257 = vmatprep.mubr.bf16.mxu0 %v882
        %2258 = vmatmul.mubr.bf16.gmra.mrb[0].mxu0 %v881
        %v2259 = vpop.f32.mrb[0].mxu0
        %v2260 = vadd.f32 %v708, %v2259
        %v2261 = vpop.f32.mrb[0].mxu0
        %v2262 = vadd.f32 %v712, %v2261
        %v2263 = vpop.f32.mrb[0].mxu0
        %v2264 = vadd.f32 %v708, %v2263
        %v2265 = vpop.f32.mrb[0].mxu0
        %v2266 = vadd.f32 %v712, %v2265
        %2267 = vmatprep.mubr.bf16.mxu0 %v884
        %2268 = vmatmul.mubr.bf16.gmra.mrb[0].mxu0 %v883
        %v2269 = vpop.f32.mrb[0].mxu0
        %v2270 = vadd.f32 %v708, %v2269
        %v2271 = vpop.f32.mrb[0].mxu0
        %v2272 = vadd.f32 %v712, %v2271
        %v2273 = vpop.f32.mrb[0].mxu0
        %v2274 = vadd.f32 %v708, %v2273
        %v2275 = vpop.f32.mrb[0].mxu0
        %v2276 = vadd.f32 %v712, %v2275
        %2277 = vmatprep.mubr.bf16.mxu0 %v886
        %2278 = vmatmul.mubr.bf16.gmra.mrb[0].mxu0 %v885
        %v2279 = vpop.f32.mrb[0].mxu0
        %v2280 = vadd.f32 %v708, %v2279
        %v2281 = vpop.f32.mrb[0].mxu0
        %v2282 = vadd.f32 %v712, %v2281
        %v2283 = vpop.f32.mrb[0].mxu0
        %v2284 = vadd.f32 %v708, %v2283
        %v2285 = vpop.f32.mrb[0].mxu0
        %v2286 = vadd.f32 %v712, %v2285
        %2287 = vmatprep.mubr.bf16.mxu0 %v888
        %2288 = vmatmul.mubr.bf16.gmra.mrb[0].mxu0 %v887
        %v2289 = vpop.f32.mrb[0].mxu0
        %v2290 = vadd.f32 %v708, %v2289
        %v2291 = vpop.f32.mrb[0].mxu0
        %v2292 = vadd.f32 %v712, %v2291
        %v2293 = vpop.f32.mrb[0].mxu0
        %v2294 = vadd.f32 %v708, %v2293
        %v2295 = vpop.f32.mrb[0].mxu0
        %v2296 = vadd.f32 %v712, %v2295
        %2297 = vmatprep.mubr.bf16.mxu0 %v890
        %2298 = vmatmul.mubr.bf16.gmra.mrb[0].mxu0 %v889
        %v2299 = vpop.f32.mrb[0].mxu0
        %v2300 = vadd.f32 %v708, %v2299
        %v2301 = vpop.f32.mrb[0].mxu0
        %v2302 = vadd.f32 %v712, %v2301
        %v2303 = vpop.f32.mrb[0].mxu0
        %v2304 = vadd.f32 %v708, %v2303
        %v2305 = vpop.f32.mrb[0].mxu0
        %v2306 = vadd.f32 %v712, %v2305
        %2307 = vmatprep.mubr.bf16.mxu0 %v892
        %2308 = vmatmul.mubr.bf16.gmra.mrb[0].mxu0 %v891
        %v2309 = vpop.f32.mrb[0].mxu0
        %v2310 = vadd.f32 %v708, %v2309
        %v2311 = vpop.f32.mrb[0].mxu0
        %v2312 = vadd.f32 %v712, %v2311
        %v2313 = vpop.f32.mrb[0].mxu0
        %v2314 = vadd.f32 %v708, %v2313
        %v2315 = vpop.f32.mrb[0].mxu0
        %v2316 = vadd.f32 %v712, %v2315
        %2317 = vmatprep.mubr.bf16.mxu0 %v894
        %2318 = vmatmul.mubr.bf16.gmra.mrb[0].mxu0 %v893
        %v2319 = vpop.f32.mrb[0].mxu0
        %v2320 = vadd.f32 %v708, %v2319
        %v2321 = vpop.f32.mrb[0].mxu0
        %v2322 = vadd.f32 %v712, %v2321
        %v2323 = vpop.f32.mrb[0].mxu0
        %v2324 = vadd.f32 %v708, %v2323
        %v2325 = vpop.f32.mrb[0].mxu0
        %v2326 = vadd.f32 %v712, %v2325
        %2327 = vmatprep.mubr.bf16.mxu0 %v896
        %2328 = vmatmul.mubr.bf16.gmra.mrb[0].mxu0 %v895
        %v2329 = vpop.f32.mrb[0].mxu0
        %v2330 = vadd.f32 %v708, %v2329
        %v2331 = vpop.f32.mrb[0].mxu0
        %v2332 = vadd.f32 %v712, %v2331
        %v2333 = vpop.f32.mrb[0].mxu0
        %v2334 = vadd.f32 %v708, %v2333
        %v2335 = vpop.f32.mrb[0].mxu0
        %v2336 = vadd.f32 %v712, %v2335
        %2337 = vmatprep.mubr.bf16.mxu0 %v898
        %2338 = vmatmul.mubr.bf16.gmra.mrb[0].mxu0 %v897
        %v2339 = vpop.f32.mrb[0].mxu0
        %v2340 = vadd.f32 %v708, %v2339
        %v2341 = vpop.f32.mrb[0].mxu0
        %v2342 = vadd.f32 %v712, %v2341
        %v2343 = vpop.f32.mrb[0].mxu0
        %v2344 = vadd.f32 %v708, %v2343
        %v2345 = vpop.f32.mrb[0].mxu0
        %v2346 = vadd.f32 %v712, %v2345
        %2347 = vmatprep.mubr.bf16.mxu0 %v900
        %2348 = vmatmul.mubr.bf16.gmra.mrb[0].mxu0 %v899
        %v2349 = vpop.f32.mrb[0].mxu0
        %v2350 = vadd.f32 %v708, %v2349
        %v2351 = vpop.f32.mrb[0].mxu0
        %v2352 = vadd.f32 %v712, %v2351
        %v2353 = vpop.f32.mrb[0].mxu0
        %v2354 = vadd.f32 %v708, %v2353
        %v2355 = vpop.f32.mrb[0].mxu0
        %v2356 = vadd.f32 %v712, %v2355
        %2357 = vmatprep.mubr.bf16.mxu0 %v902
        %2358 = vmatmul.mubr.bf16.gmra.mrb[0].mxu0 %v901
        %v2359 = vpop.f32.mrb[0].mxu0
        %v2360 = vadd.f32 %v708, %v2359
        %v2361 = vpop.f32.mrb[0].mxu0
        %v2362 = vadd.f32 %v712, %v2361
        %v2363 = vpop.f32.mrb[0].mxu0
        %v2364 = vadd.f32 %v708, %v2363
        %v2365 = vpop.f32.mrb[0].mxu0
        %v2366 = vadd.f32 %v712, %v2365
        %2367 = vmatprep.mubr.bf16.mxu0 %v904
        %2368 = vmatmul.mubr.bf16.gmra.mrb[0].mxu0 %v903
        %v2369 = vpop.f32.mrb[0].mxu0
        %v2370 = vadd.f32 %v708, %v2369
        %v2371 = vpop.f32.mrb[0].mxu0
        %v2372 = vadd.f32 %v712, %v2371
        %v2373 = vpop.f32.mrb[0].mxu0
        %v2374 = vadd.f32 %v708, %v2373
        %v2375 = vpop.f32.mrb[0].mxu0
        %v2376 = vadd.f32 %v712, %v2375
        %2377 = vmatprep.mubr.bf16.mxu0 %v906
        %2378 = vmatmul.mubr.bf16.gmra.mrb[0].mxu0 %v905
        %v2379 = vpop.f32.mrb[0].mxu0
        %v2380 = vadd.f32 %v708, %v2379
        %v2381 = vpop.f32.mrb[0].mxu0
        %v2382 = vadd.f32 %v712, %v2381
        %v2383 = vpop.f32.mrb[0].mxu0
        %v2384 = vadd.f32 %v708, %v2383
        %v2385 = vpop.f32.mrb[0].mxu0
        %v2386 = vadd.f32 %v712, %v2385
        %2387 = vmatprep.mubr.bf16.mxu0 %v908
        %2388 = vmatmul.mubr.bf16.gmra.mrb[0].mxu0 %v907
        %v2389 = vpop.f32.mrb[0].mxu0
        %v2390 = vadd.f32 %v708, %v2389
        %v2391 = vpop.f32.mrb[0].mxu0
        %v2392 = vadd.f32 %v712, %v2391
        %v2393 = vpop.f32.mrb[0].mxu0
        %v2394 = vadd.f32 %v708, %v2393
        %v2395 = vpop.f32.mrb[0].mxu0
        %v2396 = vadd.f32 %v712, %v2395
        %2397 = vmatprep.mubr.bf16.mxu0 %v910
        %2398 = vmatmul.mubr.bf16.gmra.mrb[0].mxu0 %v909
        %v2399 = vpop.f32.mrb[0].mxu0
        %v2400 = vadd.f32 %v708, %v2399
        %v2401 = vpop.f32.mrb[0].mxu0
        %v2402 = vadd.f32 %v712, %v2401
        %v2403 = vpop.f32.mrb[0].mxu0
        %v2404 = vadd.f32 %v708, %v2403
        %v2405 = vpop.f32.mrb[0].mxu0
        %v2406 = vadd.f32 %v712, %v2405
        %2407 = vmatprep.mubr.bf16.mxu0 %v912
        %2408 = vmatmul.mubr.bf16.gmra.mrb[0].mxu0 %v911
        %v2409 = vpop.f32.mrb[0].mxu0
        %v2410 = vadd.f32 %v708, %v2409
        %v2411 = vpop.f32.mrb[0].mxu0
        %v2412 = vadd.f32 %v712, %v2411
        %v2413 = vpop.f32.mrb[0].mxu0
        %v2414 = vadd.f32 %v708, %v2413
        %v2415 = vpop.f32.mrb[0].mxu0
        %v2416 = vadd.f32 %v712, %v2415
        %2417 = vdwg.mxu0
        %2418 = vmatprep.subr.bf16.mxu0 %v1716
        %2419 = vmatpush1.bf16.msra.mxu0 %v1715
        %2420 = vmatprep.subr.bf16.mxu0 %v1732
        %2421 = vmatpush1.bf16.msra.mxu0 %v1731
        %2422 = vmatprep.subr.bf16.mxu0 %v1748
        %2423 = vmatpush1.bf16.msra.mxu0 %v1747
        %2424 = vmatprep.subr.bf16.mxu0 %v1764
        %2425 = vmatpush1.bf16.msra.mxu0 %v1763
        %2426 = vmatprep.subr.bf16.mxu0 %v1780
        %2427 = vmatpush1.bf16.msra.mxu0 %v1779
        %2428 = vmatprep.subr.bf16.mxu0 %v1796
        %2429 = vmatpush1.bf16.msra.mxu0 %v1795
        %2430 = vmatprep.subr.bf16.mxu0 %v1812
        %2431 = vmatpush1.bf16.msra.mxu0 %v1811
        %2432 = vmatprep.subr.bf16.mxu0 %v1828
        %2433 = vmatpush1.bf16.msra.mxu0 %v1827
        %2434 = vmatprep.subr.bf16.mxu0 %v1844
        %2435 = vmatpush1.bf16.msra.mxu0 %v1843
        %2436 = vmatprep.subr.bf16.mxu0 %v1860
        %2437 = vmatpush1.bf16.msra.mxu0 %v1859
        %2438 = vmatprep.subr.bf16.mxu0 %v1876
        %2439 = vmatpush1.bf16.msra.mxu0 %v1875
        %2440 = vmatprep.subr.bf16.mxu0 %v1892
        %2441 = vmatpush1.bf16.msra.mxu0 %v1891
        %2442 = vmatprep.subr.bf16.mxu0 %v1908
        %2443 = vmatpush1.bf16.msra.mxu0 %v1907
        %2444 = vmatprep.subr.bf16.mxu0 %v1924
        %2445 = vmatpush1.bf16.msra.mxu0 %v1923
        %2446 = vmatprep.subr.bf16.mxu0 %v1940
        %2447 = vmatpush1.bf16.msra.mxu0 %v1939
        %2448 = vmatprep.subr.bf16.mxu0 %v1956
        %2449 = vmatpush1.bf16.msra.mxu0 %v1955
        %2450 = vmatprep.mubr.bf16.mxu0 %v882
        %2451 = vmatmul.mubr.bf16.gmra.mrb[0].mxu0 %v881
        %v2452 = vpop.f32.mrb[0].mxu0
        %v2453 = vadd.f32 %v716, %v2452
        %v2454 = vpop.f32.mrb[0].mxu0
        %v2455 = vadd.f32 %v720, %v2454
        %v2456 = vpop.f32.mrb[0].mxu0
        %v2457 = vadd.f32 %v716, %v2456
        %v2458 = vpop.f32.mrb[0].mxu0
        %v2459 = vadd.f32 %v720, %v2458
        %2460 = vmatprep.mubr.bf16.mxu0 %v884
        %2461 = vmatmul.mubr.bf16.gmra.mrb[0].mxu0 %v883
        %v2462 = vpop.f32.mrb[0].mxu0
        %v2463 = vadd.f32 %v716, %v2462
        %v2464 = vpop.f32.mrb[0].mxu0
        %v2465 = vadd.f32 %v720, %v2464
        %v2466 = vpop.f32.mrb[0].mxu0
        %v2467 = vadd.f32 %v716, %v2466
        %v2468 = vpop.f32.mrb[0].mxu0
        %v2469 = vadd.f32 %v720, %v2468
        %2470 = vmatprep.mubr.bf16.mxu0 %v886
        %2471 = vmatmul.mubr.bf16.gmra.mrb[0].mxu0 %v885
        %v2472 = vpop.f32.mrb[0].mxu0
        %v2473 = vadd.f32 %v716, %v2472
        %v2474 = vpop.f32.mrb[0].mxu0
        %v2475 = vadd.f32 %v720, %v2474
        %v2476 = vpop.f32.mrb[0].mxu0
        %v2477 = vadd.f32 %v716, %v2476
        %v2478 = vpop.f32.mrb[0].mxu0
        %v2479 = vadd.f32 %v720, %v2478
        %2480 = vmatprep.mubr.bf16.mxu0 %v888
        %2481 = vmatmul.mubr.bf16.gmra.mrb[0].mxu0 %v887
        %v2482 = vpop.f32.mrb[0].mxu0
        %v2483 = vadd.f32 %v716, %v2482
        %v2484 = vpop.f32.mrb[0].mxu0
        %v2485 = vadd.f32 %v720, %v2484
        %v2486 = vpop.f32.mrb[0].mxu0
        %v2487 = vadd.f32 %v716, %v2486
        %v2488 = vpop.f32.mrb[0].mxu0
        %v2489 = vadd.f32 %v720, %v2488
        %2490 = vmatprep.mubr.bf16.mxu0 %v890
        %2491 = vmatmul.mubr.bf16.gmra.mrb[0].mxu0 %v889
        %v2492 = vpop.f32.mrb[0].mxu0
        %v2493 = vadd.f32 %v716, %v2492
        %v2494 = vpop.f32.mrb[0].mxu0
        %v2495 = vadd.f32 %v720, %v2494
        %v2496 = vpop.f32.mrb[0].mxu0
        %v2497 = vadd.f32 %v716, %v2496
        %v2498 = vpop.f32.mrb[0].mxu0
        %v2499 = vadd.f32 %v720, %v2498
        %2500 = vmatprep.mubr.bf16.mxu0 %v892
        %2501 = vmatmul.mubr.bf16.gmra.mrb[0].mxu0 %v891
        %v2502 = vpop.f32.mrb[0].mxu0
        %v2503 = vadd.f32 %v716, %v2502
        %v2504 = vpop.f32.mrb[0].mxu0
        %v2505 = vadd.f32 %v720, %v2504
        %v2506 = vpop.f32.mrb[0].mxu0
        %v2507 = vadd.f32 %v716, %v2506
        %v2508 = vpop.f32.mrb[0].mxu0
        %v2509 = vadd.f32 %v720, %v2508
        %2510 = vmatprep.mubr.bf16.mxu0 %v894
        %2511 = vmatmul.mubr.bf16.gmra.mrb[0].mxu0 %v893
        %v2512 = vpop.f32.mrb[0].mxu0
        %v2513 = vadd.f32 %v716, %v2512
        %v2514 = vpop.f32.mrb[0].mxu0
        %v2515 = vadd.f32 %v720, %v2514
        %v2516 = vpop.f32.mrb[0].mxu0
        %v2517 = vadd.f32 %v716, %v2516
        %v2518 = vpop.f32.mrb[0].mxu0
        %v2519 = vadd.f32 %v720, %v2518
        %2520 = vmatprep.mubr.bf16.mxu0 %v896
        %2521 = vmatmul.mubr.bf16.gmra.mrb[0].mxu0 %v895
        %v2522 = vpop.f32.mrb[0].mxu0
        %v2523 = vadd.f32 %v716, %v2522
        %v2524 = vpop.f32.mrb[0].mxu0
        %v2525 = vadd.f32 %v720, %v2524
        %v2526 = vpop.f32.mrb[0].mxu0
        %v2527 = vadd.f32 %v716, %v2526
        %v2528 = vpop.f32.mrb[0].mxu0
        %v2529 = vadd.f32 %v720, %v2528
        %2530 = vmatprep.mubr.bf16.mxu0 %v898
        %2531 = vmatmul.mubr.bf16.gmra.mrb[0].mxu0 %v897
        %v2532 = vpop.f32.mrb[0].mxu0
        %v2533 = vadd.f32 %v716, %v2532
        %v2534 = vpop.f32.mrb[0].mxu0
        %v2535 = vadd.f32 %v720, %v2534
        %v2536 = vpop.f32.mrb[0].mxu0
        %v2537 = vadd.f32 %v716, %v2536
        %v2538 = vpop.f32.mrb[0].mxu0
        %v2539 = vadd.f32 %v720, %v2538
        %2540 = vmatprep.mubr.bf16.mxu0 %v900
        %2541 = vmatmul.mubr.bf16.gmra.mrb[0].mxu0 %v899
        %v2542 = vpop.f32.mrb[0].mxu0
        %v2543 = vadd.f32 %v716, %v2542
        %v2544 = vpop.f32.mrb[0].mxu0
        %v2545 = vadd.f32 %v720, %v2544
        %v2546 = vpop.f32.mrb[0].mxu0
        %v2547 = vadd.f32 %v716, %v2546
        %v2548 = vpop.f32.mrb[0].mxu0
        %v2549 = vadd.f32 %v720, %v2548
        %2550 = vmatprep.mubr.bf16.mxu0 %v902
        %2551 = vmatmul.mubr.bf16.gmra.mrb[0].mxu0 %v901
        %v2552 = vpop.f32.mrb[0].mxu0
        %v2553 = vadd.f32 %v716, %v2552
        %v2554 = vpop.f32.mrb[0].mxu0
        %v2555 = vadd.f32 %v720, %v2554
        %v2556 = vpop.f32.mrb[0].mxu0
        %v2557 = vadd.f32 %v716, %v2556
        %v2558 = vpop.f32.mrb[0].mxu0
        %v2559 = vadd.f32 %v720, %v2558
        %2560 = vmatprep.mubr.bf16.mxu0 %v904
        %2561 = vmatmul.mubr.bf16.gmra.mrb[0].mxu0 %v903
        %v2562 = vpop.f32.mrb[0].mxu0
        %v2563 = vadd.f32 %v716, %v2562
        %v2564 = vpop.f32.mrb[0].mxu0
        %v2565 = vadd.f32 %v720, %v2564
        %v2566 = vpop.f32.mrb[0].mxu0
        %v2567 = vadd.f32 %v716, %v2566
        %v2568 = vpop.f32.mrb[0].mxu0
        %v2569 = vadd.f32 %v720, %v2568
        %2570 = vmatprep.mubr.bf16.mxu0 %v906
        %2571 = vmatmul.mubr.bf16.gmra.mrb[0].mxu0 %v905
        %v2572 = vpop.f32.mrb[0].mxu0
        %v2573 = vadd.f32 %v716, %v2572
        %v2574 = vpop.f32.mrb[0].mxu0
        %v2575 = vadd.f32 %v720, %v2574
        %v2576 = vpop.f32.mrb[0].mxu0
        %v2577 = vadd.f32 %v716, %v2576
        %v2578 = vpop.f32.mrb[0].mxu0
        %v2579 = vadd.f32 %v720, %v2578
        %2580 = vmatprep.mubr.bf16.mxu0 %v908
        %2581 = vmatmul.mubr.bf16.gmra.mrb[0].mxu0 %v907
        %v2582 = vpop.f32.mrb[0].mxu0
        %v2583 = vadd.f32 %v716, %v2582
        %v2584 = vpop.f32.mrb[0].mxu0
        %v2585 = vadd.f32 %v720, %v2584
        %v2586 = vpop.f32.mrb[0].mxu0
        %v2587 = vadd.f32 %v716, %v2586
        %v2588 = vpop.f32.mrb[0].mxu0
        %v2589 = vadd.f32 %v720, %v2588
        %2590 = vmatprep.mubr.bf16.mxu0 %v910
        %2591 = vmatmul.mubr.bf16.gmra.mrb[0].mxu0 %v909
        %v2592 = vpop.f32.mrb[0].mxu0
        %v2593 = vadd.f32 %v716, %v2592
        %v2594 = vpop.f32.mrb[0].mxu0
        %v2595 = vadd.f32 %v720, %v2594
        %v2596 = vpop.f32.mrb[0].mxu0
        %v2597 = vadd.f32 %v716, %v2596
        %v2598 = vpop.f32.mrb[0].mxu0
        %v2599 = vadd.f32 %v720, %v2598
        %2600 = vmatprep.mubr.bf16.mxu0 %v912
        %2601 = vmatmul.mubr.bf16.gmra.mrb[0].mxu0 %v911
        %v2602 = vpop.f32.mrb[0].mxu0
        %v2603 = vadd.f32 %v716, %v2602
        %v2604 = vpop.f32.mrb[0].mxu0
        %v2605 = vadd.f32 %v720, %v2604
        %v2606 = vpop.f32.mrb[0].mxu0
        %v2607 = vadd.f32 %v716, %v2606
        %v2608 = vpop.f32.mrb[0].mxu0
        %v2609 = vadd.f32 %v720, %v2608
        %2610 = vdwg.mxu0
        %2611 = vmatprep.subr.bf16.mxu0 %v1718
        %2612 = vmatpush1.bf16.msra.mxu0 %v1717
        %2613 = vmatprep.subr.bf16.mxu0 %v1734
        %2614 = vmatpush1.bf16.msra.mxu0 %v1733
        %2615 = vmatprep.subr.bf16.mxu0 %v1750
        %2616 = vmatpush1.bf16.msra.mxu0 %v1749
        %2617 = vmatprep.subr.bf16.mxu0 %v1766
        %2618 = vmatpush1.bf16.msra.mxu0 %v1765
        %2619 = vmatprep.subr.bf16.mxu0 %v1782
        %2620 = vmatpush1.bf16.msra.mxu0 %v1781
        %2621 = vmatprep.subr.bf16.mxu0 %v1798
        %2622 = vmatpush1.bf16.msra.mxu0 %v1797
        %2623 = vmatprep.subr.bf16.mxu0 %v1814
        %2624 = vmatpush1.bf16.msra.mxu0 %v1813
        %2625 = vmatprep.subr.bf16.mxu0 %v1830
        %2626 = vmatpush1.bf16.msra.mxu0 %v1829
        %2627 = vmatprep.subr.bf16.mxu0 %v1846
        %2628 = vmatpush1.bf16.msra.mxu0 %v1845
        %2629 = vmatprep.subr.bf16.mxu0 %v1862
        %2630 = vmatpush1.bf16.msra.mxu0 %v1861
        %2631 = vmatprep.subr.bf16.mxu0 %v1878
        %2632 = vmatpush1.bf16.msra.mxu0 %v1877
        %2633 = vmatprep.subr.bf16.mxu0 %v1894
        %2634 = vmatpush1.bf16.msra.mxu0 %v1893
        %2635 = vmatprep.subr.bf16.mxu0 %v1910
        %2636 = vmatpush1.bf16.msra.mxu0 %v1909
        %2637 = vmatprep.subr.bf16.mxu0 %v1926
        %2638 = vmatpush1.bf16.msra.mxu0 %v1925
        %2639 = vmatprep.subr.bf16.mxu0 %v1942
        %2640 = vmatpush1.bf16.msra.mxu0 %v1941
        %2641 = vmatprep.subr.bf16.mxu0 %v1958
        %2642 = vmatpush1.bf16.msra.mxu0 %v1957
        %2643 = vmatprep.mubr.bf16.mxu0 %v882
        %2644 = vmatmul.mubr.bf16.gmra.mrb[0].mxu0 %v881
        %v2645 = vpop.f32.mrb[0].mxu0
        %v2646 = vadd.f32 %v724, %v2645
        %v2647 = vpop.f32.mrb[0].mxu0
        %v2648 = vadd.f32 %v728, %v2647
        %v2649 = vpop.f32.mrb[0].mxu0
        %v2650 = vadd.f32 %v724, %v2649
        %v2651 = vpop.f32.mrb[0].mxu0
        %v2652 = vadd.f32 %v728, %v2651
        %2653 = vmatprep.mubr.bf16.mxu0 %v884
        %2654 = vmatmul.mubr.bf16.gmra.mrb[0].mxu0 %v883
        %v2655 = vpop.f32.mrb[0].mxu0
        %v2656 = vadd.f32 %v724, %v2655
        %v2657 = vpop.f32.mrb[0].mxu0
        %v2658 = vadd.f32 %v728, %v2657
        %v2659 = vpop.f32.mrb[0].mxu0
        %v2660 = vadd.f32 %v724, %v2659
        %v2661 = vpop.f32.mrb[0].mxu0
        %v2662 = vadd.f32 %v728, %v2661
        %2663 = vmatprep.mubr.bf16.mxu0 %v886
        %2664 = vmatmul.mubr.bf16.gmra.mrb[0].mxu0 %v885
        %v2665 = vpop.f32.mrb[0].mxu0
        %v2666 = vadd.f32 %v724, %v2665
        %v2667 = vpop.f32.mrb[0].mxu0
        %v2668 = vadd.f32 %v728, %v2667
        %v2669 = vpop.f32.mrb[0].mxu0
        %v2670 = vadd.f32 %v724, %v2669
        %v2671 = vpop.f32.mrb[0].mxu0
        %v2672 = vadd.f32 %v728, %v2671
        %2673 = vmatprep.mubr.bf16.mxu0 %v888
        %2674 = vmatmul.mubr.bf16.gmra.mrb[0].mxu0 %v887
        %v2675 = vpop.f32.mrb[0].mxu0
        %v2676 = vadd.f32 %v724, %v2675
        %v2677 = vpop.f32.mrb[0].mxu0
        %v2678 = vadd.f32 %v728, %v2677
        %v2679 = vpop.f32.mrb[0].mxu0
        %v2680 = vadd.f32 %v724, %v2679
        %v2681 = vpop.f32.mrb[0].mxu0
        %v2682 = vadd.f32 %v728, %v2681
        %2683 = vmatprep.mubr.bf16.mxu0 %v890
        %2684 = vmatmul.mubr.bf16.gmra.mrb[0].mxu0 %v889
        %v2685 = vpop.f32.mrb[0].mxu0
        %v2686 = vadd.f32 %v724, %v2685
        %v2687 = vpop.f32.mrb[0].mxu0
        %v2688 = vadd.f32 %v728, %v2687
        %v2689 = vpop.f32.mrb[0].mxu0
        %v2690 = vadd.f32 %v724, %v2689
        %v2691 = vpop.f32.mrb[0].mxu0
        %v2692 = vadd.f32 %v728, %v2691
        %2693 = vmatprep.mubr.bf16.mxu0 %v892
        %2694 = vmatmul.mubr.bf16.gmra.mrb[0].mxu0 %v891
        %v2695 = vpop.f32.mrb[0].mxu0
        %v2696 = vadd.f32 %v724, %v2695
        %v2697 = vpop.f32.mrb[0].mxu0
        %v2698 = vadd.f32 %v728, %v2697
        %v2699 = vpop.f32.mrb[0].mxu0
        %v2700 = vadd.f32 %v724, %v2699
        %v2701 = vpop.f32.mrb[0].mxu0
        %v2702 = vadd.f32 %v728, %v2701
        %2703 = vmatprep.mubr.bf16.mxu0 %v894
        %2704 = vmatmul.mubr.bf16.gmra.mrb[0].mxu0 %v893
        %v2705 = vpop.f32.mrb[0].mxu0
        %v2706 = vadd.f32 %v724, %v2705
        %v2707 = vpop.f32.mrb[0].mxu0
        %v2708 = vadd.f32 %v728, %v2707
        %v2709 = vpop.f32.mrb[0].mxu0
        %v2710 = vadd.f32 %v724, %v2709
        %v2711 = vpop.f32.mrb[0].mxu0
        %v2712 = vadd.f32 %v728, %v2711
        %2713 = vmatprep.mubr.bf16.mxu0 %v896
        %2714 = vmatmul.mubr.bf16.gmra.mrb[0].mxu0 %v895
        %v2715 = vpop.f32.mrb[0].mxu0
        %v2716 = vadd.f32 %v724, %v2715
        %v2717 = vpop.f32.mrb[0].mxu0
        %v2718 = vadd.f32 %v728, %v2717
        %v2719 = vpop.f32.mrb[0].mxu0
        %v2720 = vadd.f32 %v724, %v2719
        %v2721 = vpop.f32.mrb[0].mxu0
        %v2722 = vadd.f32 %v728, %v2721
        %2723 = vmatprep.mubr.bf16.mxu0 %v898
        %2724 = vmatmul.mubr.bf16.gmra.mrb[0].mxu0 %v897
        %v2725 = vpop.f32.mrb[0].mxu0
        %v2726 = vadd.f32 %v724, %v2725
        %v2727 = vpop.f32.mrb[0].mxu0
        %v2728 = vadd.f32 %v728, %v2727
        %v2729 = vpop.f32.mrb[0].mxu0
        %v2730 = vadd.f32 %v724, %v2729
        %v2731 = vpop.f32.mrb[0].mxu0
        %v2732 = vadd.f32 %v728, %v2731
        %2733 = vmatprep.mubr.bf16.mxu0 %v900
        %2734 = vmatmul.mubr.bf16.gmra.mrb[0].mxu0 %v899
        %v2735 = vpop.f32.mrb[0].mxu0
        %v2736 = vadd.f32 %v724, %v2735
        %v2737 = vpop.f32.mrb[0].mxu0
        %v2738 = vadd.f32 %v728, %v2737
        %v2739 = vpop.f32.mrb[0].mxu0
        %v2740 = vadd.f32 %v724, %v2739
        %v2741 = vpop.f32.mrb[0].mxu0
        %v2742 = vadd.f32 %v728, %v2741
        %2743 = vmatprep.mubr.bf16.mxu0 %v902
        %2744 = vmatmul.mubr.bf16.gmra.mrb[0].mxu0 %v901
        %v2745 = vpop.f32.mrb[0].mxu0
        %v2746 = vadd.f32 %v724, %v2745
        %v2747 = vpop.f32.mrb[0].mxu0
        %v2748 = vadd.f32 %v728, %v2747
        %v2749 = vpop.f32.mrb[0].mxu0
        %v2750 = vadd.f32 %v724, %v2749
        %v2751 = vpop.f32.mrb[0].mxu0
        %v2752 = vadd.f32 %v728, %v2751
        %2753 = vmatprep.mubr.bf16.mxu0 %v904
        %2754 = vmatmul.mubr.bf16.gmra.mrb[0].mxu0 %v903
        %v2755 = vpop.f32.mrb[0].mxu0
        %v2756 = vadd.f32 %v724, %v2755
        %v2757 = vpop.f32.mrb[0].mxu0
        %v2758 = vadd.f32 %v728, %v2757
        %v2759 = vpop.f32.mrb[0].mxu0
        %v2760 = vadd.f32 %v724, %v2759
        %v2761 = vpop.f32.mrb[0].mxu0
        %v2762 = vadd.f32 %v728, %v2761
        %2763 = vmatprep.mubr.bf16.mxu0 %v906
        %2764 = vmatmul.mubr.bf16.gmra.mrb[0].mxu0 %v905
        %v2765 = vpop.f32.mrb[0].mxu0
        %v2766 = vadd.f32 %v724, %v2765
        %v2767 = vpop.f32.mrb[0].mxu0
        %v2768 = vadd.f32 %v728, %v2767
        %v2769 = vpop.f32.mrb[0].mxu0
        %v2770 = vadd.f32 %v724, %v2769
        %v2771 = vpop.f32.mrb[0].mxu0
        %v2772 = vadd.f32 %v728, %v2771
        %2773 = vmatprep.mubr.bf16.mxu0 %v908
        %2774 = vmatmul.mubr.bf16.gmra.mrb[0].mxu0 %v907
        %v2775 = vpop.f32.mrb[0].mxu0
        %v2776 = vadd.f32 %v724, %v2775
        %v2777 = vpop.f32.mrb[0].mxu0
        %v2778 = vadd.f32 %v728, %v2777
        %v2779 = vpop.f32.mrb[0].mxu0
        %v2780 = vadd.f32 %v724, %v2779
        %v2781 = vpop.f32.mrb[0].mxu0
        %v2782 = vadd.f32 %v728, %v2781
        %2783 = vmatprep.mubr.bf16.mxu0 %v910
        %2784 = vmatmul.mubr.bf16.gmra.mrb[0].mxu0 %v909
        %v2785 = vpop.f32.mrb[0].mxu0
        %v2786 = vadd.f32 %v724, %v2785
        %v2787 = vpop.f32.mrb[0].mxu0
        %v2788 = vadd.f32 %v728, %v2787
        %v2789 = vpop.f32.mrb[0].mxu0
        %v2790 = vadd.f32 %v724, %v2789
        %v2791 = vpop.f32.mrb[0].mxu0
        %v2792 = vadd.f32 %v728, %v2791
        %2793 = vmatprep.mubr.bf16.mxu0 %v912
        %2794 = vmatmul.mubr.bf16.gmra.mrb[0].mxu0 %v911
        %v2795 = vpop.f32.mrb[0].mxu0
        %v2796 = vadd.f32 %v724, %v2795
        %v2797 = vpop.f32.mrb[0].mxu0
        %v2798 = vadd.f32 %v728, %v2797
        %v2799 = vpop.f32.mrb[0].mxu0
        %v2800 = vadd.f32 %v724, %v2799
        %v2801 = vpop.f32.mrb[0].mxu0
        %v2802 = vadd.f32 %v728, %v2801
        %2803 = vdwg.mxu0
        %2804 = vmatprep.subr.bf16.mxu0 %v1720
        %2805 = vmatpush1.bf16.msra.mxu0 %v1719
        %2806 = vmatprep.subr.bf16.mxu0 %v1736
        %2807 = vmatpush1.bf16.msra.mxu0 %v1735
        %2808 = vmatprep.subr.bf16.mxu0 %v1752
        %2809 = vmatpush1.bf16.msra.mxu0 %v1751
        %2810 = vmatprep.subr.bf16.mxu0 %v1768
        %2811 = vmatpush1.bf16.msra.mxu0 %v1767
        %2812 = vmatprep.subr.bf16.mxu0 %v1784
        %2813 = vmatpush1.bf16.msra.mxu0 %v1783
        %2814 = vmatprep.subr.bf16.mxu0 %v1800
        %2815 = vmatpush1.bf16.msra.mxu0 %v1799
        %2816 = vmatprep.subr.bf16.mxu0 %v1816
        %2817 = vmatpush1.bf16.msra.mxu0 %v1815
        %2818 = vmatprep.subr.bf16.mxu0 %v1832
        %2819 = vmatpush1.bf16.msra.mxu0 %v1831
        %2820 = vmatprep.subr.bf16.mxu0 %v1848
        %2821 = vmatpush1.bf16.msra.mxu0 %v1847
        %2822 = vmatprep.subr.bf16.mxu0 %v1864
        %2823 = vmatpush1.bf16.msra.mxu0 %v1863
        %2824 = vmatprep.subr.bf16.mxu0 %v1880
        %2825 = vmatpush1.bf16.msra.mxu0 %v1879
        %2826 = vmatprep.subr.bf16.mxu0 %v1896
        %2827 = vmatpush1.bf16.msra.mxu0 %v1895
        %2828 = vmatprep.subr.bf16.mxu0 %v1912
        %2829 = vmatpush1.bf16.msra.mxu0 %v1911
        %2830 = vmatprep.subr.bf16.mxu0 %v1928
        %2831 = vmatpush1.bf16.msra.mxu0 %v1927
        %2832 = vmatprep.subr.bf16.mxu0 %v1944
        %2833 = vmatpush1.bf16.msra.mxu0 %v1943
        %2834 = vmatprep.subr.bf16.mxu0 %v1960
        %2835 = vmatpush1.bf16.msra.mxu0 %v1959
        %2836 = vmatprep.mubr.bf16.mxu0 %v882
        %2837 = vmatmul.mubr.bf16.gmra.mrb[0].mxu0 %v881
        %v2838 = vpop.f32.mrb[0].mxu0
        %v2839 = vadd.f32 %v732, %v2838
        %v2840 = vpop.f32.mrb[0].mxu0
        %v2841 = vadd.f32 %v736, %v2840
        %v2842 = vpop.f32.mrb[0].mxu0
        %v2843 = vadd.f32 %v732, %v2842
        %v2844 = vpop.f32.mrb[0].mxu0
        %v2845 = vadd.f32 %v736, %v2844
        %2846 = vmatprep.mubr.bf16.mxu0 %v884
        %2847 = vmatmul.mubr.bf16.gmra.mrb[0].mxu0 %v883
        %v2848 = vpop.f32.mrb[0].mxu0
        %v2849 = vadd.f32 %v732, %v2848
        %v2850 = vpop.f32.mrb[0].mxu0
        %v2851 = vadd.f32 %v736, %v2850
        %v2852 = vpop.f32.mrb[0].mxu0
        %v2853 = vadd.f32 %v732, %v2852
        %v2854 = vpop.f32.mrb[0].mxu0
        %v2855 = vadd.f32 %v736, %v2854
        %2856 = vmatprep.mubr.bf16.mxu0 %v886
        %2857 = vmatmul.mubr.bf16.gmra.mrb[0].mxu0 %v885
        %v2858 = vpop.f32.mrb[0].mxu0
        %v2859 = vadd.f32 %v732, %v2858
        %v2860 = vpop.f32.mrb[0].mxu0
        %v2861 = vadd.f32 %v736, %v2860
        %v2862 = vpop.f32.mrb[0].mxu0
        %v2863 = vadd.f32 %v732, %v2862
        %v2864 = vpop.f32.mrb[0].mxu0
        %v2865 = vadd.f32 %v736, %v2864
        %2866 = vmatprep.mubr.bf16.mxu0 %v888
        %2867 = vmatmul.mubr.bf16.gmra.mrb[0].mxu0 %v887
        %v2868 = vpop.f32.mrb[0].mxu0
        %v2869 = vadd.f32 %v732, %v2868
        %v2870 = vpop.f32.mrb[0].mxu0
        %v2871 = vadd.f32 %v736, %v2870
        %v2872 = vpop.f32.mrb[0].mxu0
        %v2873 = vadd.f32 %v732, %v2872
        %v2874 = vpop.f32.mrb[0].mxu0
        %v2875 = vadd.f32 %v736, %v2874
        %2876 = vmatprep.mubr.bf16.mxu0 %v890
        %2877 = vmatmul.mubr.bf16.gmra.mrb[0].mxu0 %v889
        %v2878 = vpop.f32.mrb[0].mxu0
        %v2879 = vadd.f32 %v732, %v2878
        %v2880 = vpop.f32.mrb[0].mxu0
        %v2881 = vadd.f32 %v736, %v2880
        %v2882 = vpop.f32.mrb[0].mxu0
        %v2883 = vadd.f32 %v732, %v2882
        %v2884 = vpop.f32.mrb[0].mxu0
        %v2885 = vadd.f32 %v736, %v2884
        %2886 = vmatprep.mubr.bf16.mxu0 %v892
        %2887 = vmatmul.mubr.bf16.gmra.mrb[0].mxu0 %v891
        %v2888 = vpop.f32.mrb[0].mxu0
        %v2889 = vadd.f32 %v732, %v2888
        %v2890 = vpop.f32.mrb[0].mxu0
        %v2891 = vadd.f32 %v736, %v2890
        %v2892 = vpop.f32.mrb[0].mxu0
        %v2893 = vadd.f32 %v732, %v2892
        %v2894 = vpop.f32.mrb[0].mxu0
        %v2895 = vadd.f32 %v736, %v2894
        %2896 = vmatprep.mubr.bf16.mxu0 %v894
        %2897 = vmatmul.mubr.bf16.gmra.mrb[0].mxu0 %v893
        %v2898 = vpop.f32.mrb[0].mxu0
        %v2899 = vadd.f32 %v732, %v2898
        %v2900 = vpop.f32.mrb[0].mxu0
        %v2901 = vadd.f32 %v736, %v2900
        %v2902 = vpop.f32.mrb[0].mxu0
        %v2903 = vadd.f32 %v732, %v2902
        %v2904 = vpop.f32.mrb[0].mxu0
        %v2905 = vadd.f32 %v736, %v2904
        %2906 = vmatprep.mubr.bf16.mxu0 %v896
        %2907 = vmatmul.mubr.bf16.gmra.mrb[0].mxu0 %v895
        %v2908 = vpop.f32.mrb[0].mxu0
        %v2909 = vadd.f32 %v732, %v2908
        %v2910 = vpop.f32.mrb[0].mxu0
        %v2911 = vadd.f32 %v736, %v2910
        %v2912 = vpop.f32.mrb[0].mxu0
        %v2913 = vadd.f32 %v732, %v2912
        %v2914 = vpop.f32.mrb[0].mxu0
        %v2915 = vadd.f32 %v736, %v2914
        %2916 = vmatprep.mubr.bf16.mxu0 %v898
        %2917 = vmatmul.mubr.bf16.gmra.mrb[0].mxu0 %v897
        %v2918 = vpop.f32.mrb[0].mxu0
        %v2919 = vadd.f32 %v732, %v2918
        %v2920 = vpop.f32.mrb[0].mxu0
        %v2921 = vadd.f32 %v736, %v2920
        %v2922 = vpop.f32.mrb[0].mxu0
        %v2923 = vadd.f32 %v732, %v2922
        %v2924 = vpop.f32.mrb[0].mxu0
        %v2925 = vadd.f32 %v736, %v2924
        %2926 = vmatprep.mubr.bf16.mxu0 %v900
        %2927 = vmatmul.mubr.bf16.gmra.mrb[0].mxu0 %v899
        %v2928 = vpop.f32.mrb[0].mxu0
        %v2929 = vadd.f32 %v732, %v2928
        %v2930 = vpop.f32.mrb[0].mxu0
        %v2931 = vadd.f32 %v736, %v2930
        %v2932 = vpop.f32.mrb[0].mxu0
        %v2933 = vadd.f32 %v732, %v2932
        %v2934 = vpop.f32.mrb[0].mxu0
        %v2935 = vadd.f32 %v736, %v2934
        %2936 = vmatprep.mubr.bf16.mxu0 %v902
        %2937 = vmatmul.mubr.bf16.gmra.mrb[0].mxu0 %v901
        %v2938 = vpop.f32.mrb[0].mxu0
        %v2939 = vadd.f32 %v732, %v2938
        %v2940 = vpop.f32.mrb[0].mxu0
        %v2941 = vadd.f32 %v736, %v2940
        %v2942 = vpop.f32.mrb[0].mxu0
        %v2943 = vadd.f32 %v732, %v2942
        %v2944 = vpop.f32.mrb[0].mxu0
        %v2945 = vadd.f32 %v736, %v2944
        %2946 = vmatprep.mubr.bf16.mxu0 %v904
        %2947 = vmatmul.mubr.bf16.gmra.mrb[0].mxu0 %v903
        %v2948 = vpop.f32.mrb[0].mxu0
        %v2949 = vadd.f32 %v732, %v2948
        %v2950 = vpop.f32.mrb[0].mxu0
        %v2951 = vadd.f32 %v736, %v2950
        %v2952 = vpop.f32.mrb[0].mxu0
        %v2953 = vadd.f32 %v732, %v2952
        %v2954 = vpop.f32.mrb[0].mxu0
        %v2955 = vadd.f32 %v736, %v2954
        %2956 = vmatprep.mubr.bf16.mxu0 %v906
        %2957 = vmatmul.mubr.bf16.gmra.mrb[0].mxu0 %v905
        %v2958 = vpop.f32.mrb[0].mxu0
        %v2959 = vadd.f32 %v732, %v2958
        %v2960 = vpop.f32.mrb[0].mxu0
        %v2961 = vadd.f32 %v736, %v2960
        %v2962 = vpop.f32.mrb[0].mxu0
        %v2963 = vadd.f32 %v732, %v2962
        %v2964 = vpop.f32.mrb[0].mxu0
        %v2965 = vadd.f32 %v736, %v2964
        %2966 = vmatprep.mubr.bf16.mxu0 %v908
        %2967 = vmatmul.mubr.bf16.gmra.mrb[0].mxu0 %v907
        %v2968 = vpop.f32.mrb[0].mxu0
        %v2969 = vadd.f32 %v732, %v2968
        %v2970 = vpop.f32.mrb[0].mxu0
        %v2971 = vadd.f32 %v736, %v2970
        %v2972 = vpop.f32.mrb[0].mxu0
        %v2973 = vadd.f32 %v732, %v2972
        %v2974 = vpop.f32.mrb[0].mxu0
        %v2975 = vadd.f32 %v736, %v2974
        %2976 = vmatprep.mubr.bf16.mxu0 %v910
        %2977 = vmatmul.mubr.bf16.gmra.mrb[0].mxu0 %v909
        %v2978 = vpop.f32.mrb[0].mxu0
        %v2979 = vadd.f32 %v732, %v2978
        %v2980 = vpop.f32.mrb[0].mxu0
        %v2981 = vadd.f32 %v736, %v2980
        %v2982 = vpop.f32.mrb[0].mxu0
        %v2983 = vadd.f32 %v732, %v2982
        %v2984 = vpop.f32.mrb[0].mxu0
        %v2985 = vadd.f32 %v736, %v2984
        %2986 = vmatprep.mubr.bf16.mxu0 %v912
        %2987 = vmatmul.mubr.bf16.gmra.mrb[0].mxu0 %v911
        %v2988 = vpop.f32.mrb[0].mxu0
        %v2989 = vadd.f32 %v732, %v2988
        %v2990 = vpop.f32.mrb[0].mxu0
        %v2991 = vadd.f32 %v736, %v2990
        %v2992 = vpop.f32.mrb[0].mxu0
        %v2993 = vadd.f32 %v732, %v2992
        %v2994 = vpop.f32.mrb[0].mxu0
        %v2995 = vadd.f32 %v736, %v2994
        %2996 = vdwg.mxu0
        %2997 = vmatprep.subr.bf16.mxu0 %v1722
        %2998 = vmatpush1.bf16.msra.mxu0 %v1721
        %2999 = vmatprep.subr.bf16.mxu0 %v1738
        %3000 = vmatpush1.bf16.msra.mxu0 %v1737
        %3001 = vmatprep.subr.bf16.mxu0 %v1754
        %3002 = vmatpush1.bf16.msra.mxu0 %v1753
        %3003 = vmatprep.subr.bf16.mxu0 %v1770
        %3004 = vmatpush1.bf16.msra.mxu0 %v1769
        %3005 = vmatprep.subr.bf16.mxu0 %v1786
        %3006 = vmatpush1.bf16.msra.mxu0 %v1785
        %3007 = vmatprep.subr.bf16.mxu0 %v1802
        %3008 = vmatpush1.bf16.msra.mxu0 %v1801
        %3009 = vmatprep.subr.bf16.mxu0 %v1818
        %3010 = vmatpush1.bf16.msra.mxu0 %v1817
        %3011 = vmatprep.subr.bf16.mxu0 %v1834
        %3012 = vmatpush1.bf16.msra.mxu0 %v1833
        %3013 = vmatprep.subr.bf16.mxu0 %v1850
        %3014 = vmatpush1.bf16.msra.mxu0 %v1849
        %3015 = vmatprep.subr.bf16.mxu0 %v1866
        %3016 = vmatpush1.bf16.msra.mxu0 %v1865
        %3017 = vmatprep.subr.bf16.mxu0 %v1882
        %3018 = vmatpush1.bf16.msra.mxu0 %v1881
        %3019 = vmatprep.subr.bf16.mxu0 %v1898
        %3020 = vmatpush1.bf16.msra.mxu0 %v1897
        %3021 = vmatprep.subr.bf16.mxu0 %v1914
        %3022 = vmatpush1.bf16.msra.mxu0 %v1913
        %3023 = vmatprep.subr.bf16.mxu0 %v1930
        %3024 = vmatpush1.bf16.msra.mxu0 %v1929
        %3025 = vmatprep.subr.bf16.mxu0 %v1946
        %3026 = vmatpush1.bf16.msra.mxu0 %v1945
        %3027 = vmatprep.subr.bf16.mxu0 %v1962
        %3028 = vmatpush1.bf16.msra.mxu0 %v1961
        %3029 = vmatprep.mubr.bf16.mxu0 %v882
        %3030 = vmatmul.mubr.bf16.gmra.mrb[0].mxu0 %v881
        %v3031 = vpop.f32.mrb[0].mxu0
        %v3032 = vadd.f32 %v740, %v3031
        %v3033 = vpop.f32.mrb[0].mxu0
        %v3034 = vadd.f32 %v744, %v3033
        %v3035 = vpop.f32.mrb[0].mxu0
        %v3036 = vadd.f32 %v740, %v3035
        %v3037 = vpop.f32.mrb[0].mxu0
        %v3038 = vadd.f32 %v744, %v3037
        %3039 = vmatprep.mubr.bf16.mxu0 %v884
        %3040 = vmatmul.mubr.bf16.gmra.mrb[0].mxu0 %v883
        %v3041 = vpop.f32.mrb[0].mxu0
        %v3042 = vadd.f32 %v740, %v3041
        %v3043 = vpop.f32.mrb[0].mxu0
        %v3044 = vadd.f32 %v744, %v3043
        %v3045 = vpop.f32.mrb[0].mxu0
        %v3046 = vadd.f32 %v740, %v3045
        %v3047 = vpop.f32.mrb[0].mxu0
        %v3048 = vadd.f32 %v744, %v3047
        %3049 = vmatprep.mubr.bf16.mxu0 %v886
        %3050 = vmatmul.mubr.bf16.gmra.mrb[0].mxu0 %v885
        %v3051 = vpop.f32.mrb[0].mxu0
        %v3052 = vadd.f32 %v740, %v3051
        %v3053 = vpop.f32.mrb[0].mxu0
        %v3054 = vadd.f32 %v744, %v3053
        %v3055 = vpop.f32.mrb[0].mxu0
        %v3056 = vadd.f32 %v740, %v3055
        %v3057 = vpop.f32.mrb[0].mxu0
        %v3058 = vadd.f32 %v744, %v3057
        %3059 = vmatprep.mubr.bf16.mxu0 %v888
        %3060 = vmatmul.mubr.bf16.gmra.mrb[0].mxu0 %v887
        %v3061 = vpop.f32.mrb[0].mxu0
        %v3062 = vadd.f32 %v740, %v3061
        %v3063 = vpop.f32.mrb[0].mxu0
        %v3064 = vadd.f32 %v744, %v3063
        %v3065 = vpop.f32.mrb[0].mxu0
        %v3066 = vadd.f32 %v740, %v3065
        %v3067 = vpop.f32.mrb[0].mxu0
        %v3068 = vadd.f32 %v744, %v3067
        %3069 = vmatprep.mubr.bf16.mxu0 %v890
        %3070 = vmatmul.mubr.bf16.gmra.mrb[0].mxu0 %v889
        %v3071 = vpop.f32.mrb[0].mxu0
        %v3072 = vadd.f32 %v740, %v3071
        %v3073 = vpop.f32.mrb[0].mxu0
        %v3074 = vadd.f32 %v744, %v3073
        %v3075 = vpop.f32.mrb[0].mxu0
        %v3076 = vadd.f32 %v740, %v3075
        %v3077 = vpop.f32.mrb[0].mxu0
        %v3078 = vadd.f32 %v744, %v3077
        %3079 = vmatprep.mubr.bf16.mxu0 %v892
        %3080 = vmatmul.mubr.bf16.gmra.mrb[0].mxu0 %v891
        %v3081 = vpop.f32.mrb[0].mxu0
        %v3082 = vadd.f32 %v740, %v3081
        %v3083 = vpop.f32.mrb[0].mxu0
        %v3084 = vadd.f32 %v744, %v3083
        %v3085 = vpop.f32.mrb[0].mxu0
        %v3086 = vadd.f32 %v740, %v3085
        %v3087 = vpop.f32.mrb[0].mxu0
        %v3088 = vadd.f32 %v744, %v3087
        %3089 = vmatprep.mubr.bf16.mxu0 %v894
        %3090 = vmatmul.mubr.bf16.gmra.mrb[0].mxu0 %v893
        %v3091 = vpop.f32.mrb[0].mxu0
        %v3092 = vadd.f32 %v740, %v3091
        %v3093 = vpop.f32.mrb[0].mxu0
        %v3094 = vadd.f32 %v744, %v3093
        %v3095 = vpop.f32.mrb[0].mxu0
        %v3096 = vadd.f32 %v740, %v3095
        %v3097 = vpop.f32.mrb[0].mxu0
        %v3098 = vadd.f32 %v744, %v3097
        %3099 = vmatprep.mubr.bf16.mxu0 %v896
        %3100 = vmatmul.mubr.bf16.gmra.mrb[0].mxu0 %v895
        %v3101 = vpop.f32.mrb[0].mxu0
        %v3102 = vadd.f32 %v740, %v3101
        %v3103 = vpop.f32.mrb[0].mxu0
        %v3104 = vadd.f32 %v744, %v3103
        %v3105 = vpop.f32.mrb[0].mxu0
        %v3106 = vadd.f32 %v740, %v3105
        %v3107 = vpop.f32.mrb[0].mxu0
        %v3108 = vadd.f32 %v744, %v3107
        %3109 = vmatprep.mubr.bf16.mxu0 %v898
        %3110 = vmatmul.mubr.bf16.gmra.mrb[0].mxu0 %v897
        %v3111 = vpop.f32.mrb[0].mxu0
        %v3112 = vadd.f32 %v740, %v3111
        %v3113 = vpop.f32.mrb[0].mxu0
        %v3114 = vadd.f32 %v744, %v3113
        %v3115 = vpop.f32.mrb[0].mxu0
        %v3116 = vadd.f32 %v740, %v3115
        %v3117 = vpop.f32.mrb[0].mxu0
        %v3118 = vadd.f32 %v744, %v3117
        %3119 = vmatprep.mubr.bf16.mxu0 %v900
        %3120 = vmatmul.mubr.bf16.gmra.mrb[0].mxu0 %v899
        %v3121 = vpop.f32.mrb[0].mxu0
        %v3122 = vadd.f32 %v740, %v3121
        %v3123 = vpop.f32.mrb[0].mxu0
        %v3124 = vadd.f32 %v744, %v3123
        %v3125 = vpop.f32.mrb[0].mxu0
        %v3126 = vadd.f32 %v740, %v3125
        %v3127 = vpop.f32.mrb[0].mxu0
        %v3128 = vadd.f32 %v744, %v3127
        %3129 = vmatprep.mubr.bf16.mxu0 %v902
        %3130 = vmatmul.mubr.bf16.gmra.mrb[0].mxu0 %v901
        %v3131 = vpop.f32.mrb[0].mxu0
        %v3132 = vadd.f32 %v740, %v3131
        %v3133 = vpop.f32.mrb[0].mxu0
        %v3134 = vadd.f32 %v744, %v3133
        %v3135 = vpop.f32.mrb[0].mxu0
        %v3136 = vadd.f32 %v740, %v3135
        %v3137 = vpop.f32.mrb[0].mxu0
        %v3138 = vadd.f32 %v744, %v3137
        %3139 = vmatprep.mubr.bf16.mxu0 %v904
        %3140 = vmatmul.mubr.bf16.gmra.mrb[0].mxu0 %v903
        %v3141 = vpop.f32.mrb[0].mxu0
        %v3142 = vadd.f32 %v740, %v3141
        %v3143 = vpop.f32.mrb[0].mxu0
        %v3144 = vadd.f32 %v744, %v3143
        %v3145 = vpop.f32.mrb[0].mxu0
        %v3146 = vadd.f32 %v740, %v3145
        %v3147 = vpop.f32.mrb[0].mxu0
        %v3148 = vadd.f32 %v744, %v3147
        %3149 = vmatprep.mubr.bf16.mxu0 %v906
        %3150 = vmatmul.mubr.bf16.gmra.mrb[0].mxu0 %v905
        %v3151 = vpop.f32.mrb[0].mxu0
        %v3152 = vadd.f32 %v740, %v3151
        %v3153 = vpop.f32.mrb[0].mxu0
        %v3154 = vadd.f32 %v744, %v3153
        %v3155 = vpop.f32.mrb[0].mxu0
        %v3156 = vadd.f32 %v740, %v3155
        %v3157 = vpop.f32.mrb[0].mxu0
        %v3158 = vadd.f32 %v744, %v3157
        %3159 = vmatprep.mubr.bf16.mxu0 %v908
        %3160 = vmatmul.mubr.bf16.gmra.mrb[0].mxu0 %v907
        %v3161 = vpop.f32.mrb[0].mxu0
        %v3162 = vadd.f32 %v740, %v3161
        %v3163 = vpop.f32.mrb[0].mxu0
        %v3164 = vadd.f32 %v744, %v3163
        %v3165 = vpop.f32.mrb[0].mxu0
        %v3166 = vadd.f32 %v740, %v3165
        %v3167 = vpop.f32.mrb[0].mxu0
        %v3168 = vadd.f32 %v744, %v3167
        %3169 = vmatprep.mubr.bf16.mxu0 %v910
        %3170 = vmatmul.mubr.bf16.gmra.mrb[0].mxu0 %v909
        %v3171 = vpop.f32.mrb[0].mxu0
        %v3172 = vadd.f32 %v740, %v3171
        %v3173 = vpop.f32.mrb[0].mxu0
        %v3174 = vadd.f32 %v744, %v3173
        %v3175 = vpop.f32.mrb[0].mxu0
        %v3176 = vadd.f32 %v740, %v3175
        %v3177 = vpop.f32.mrb[0].mxu0
        %v3178 = vadd.f32 %v744, %v3177
        %3179 = vmatprep.mubr.bf16.mxu0 %v912
        %3180 = vmatmul.mubr.bf16.gmra.mrb[0].mxu0 %v911
        %v3181 = vpop.f32.mrb[0].mxu0
        %v3182 = vadd.f32 %v740, %v3181
        %v3183 = vpop.f32.mrb[0].mxu0
        %v3184 = vadd.f32 %v744, %v3183
        %v3185 = vpop.f32.mrb[0].mxu0
        %v3186 = vadd.f32 %v740, %v3185
        %v3187 = vpop.f32.mrb[0].mxu0
        %v3188 = vadd.f32 %v744, %v3187
        %3189 = vdwg.mxu0
        %3190 = vmatprep.subr.bf16.mxu0 %v1724
        %3191 = vmatpush1.bf16.msra.mxu0 %v1723
        %3192 = vmatprep.subr.bf16.mxu0 %v1740
        %3193 = vmatpush1.bf16.msra.mxu0 %v1739
        %3194 = vmatprep.subr.bf16.mxu0 %v1756
        %3195 = vmatpush1.bf16.msra.mxu0 %v1755
        %3196 = vmatprep.subr.bf16.mxu0 %v1772
        %3197 = vmatpush1.bf16.msra.mxu0 %v1771
        %3198 = vmatprep.subr.bf16.mxu0 %v1788
        %3199 = vmatpush1.bf16.msra.mxu0 %v1787
        %3200 = vmatprep.subr.bf16.mxu0 %v1804
        %3201 = vmatpush1.bf16.msra.mxu0 %v1803
        %3202 = vmatprep.subr.bf16.mxu0 %v1820
        %3203 = vmatpush1.bf16.msra.mxu0 %v1819
        %3204 = vmatprep.subr.bf16.mxu0 %v1836
        %3205 = vmatpush1.bf16.msra.mxu0 %v1835
        %3206 = vmatprep.subr.bf16.mxu0 %v1852
        %3207 = vmatpush1.bf16.msra.mxu0 %v1851
        %3208 = vmatprep.subr.bf16.mxu0 %v1868
        %3209 = vmatpush1.bf16.msra.mxu0 %v1867
        %3210 = vmatprep.subr.bf16.mxu0 %v1884
        %3211 = vmatpush1.bf16.msra.mxu0 %v1883
        %3212 = vmatprep.subr.bf16.mxu0 %v1900
        %3213 = vmatpush1.bf16.msra.mxu0 %v1899
        %3214 = vmatprep.subr.bf16.mxu0 %v1916
        %3215 = vmatpush1.bf16.msra.mxu0 %v1915
        %3216 = vmatprep.subr.bf16.mxu0 %v1932
        %3217 = vmatpush1.bf16.msra.mxu0 %v1931
        %3218 = vmatprep.subr.bf16.mxu0 %v1948
        %3219 = vmatpush1.bf16.msra.mxu0 %v1947
        %3220 = vmatprep.subr.bf16.mxu0 %v1964
        %3221 = vmatpush1.bf16.msra.mxu0 %v1963
        %3222 = vmatprep.mubr.bf16.mxu0 %v882
        %3223 = vmatmul.mubr.bf16.gmra.mrb[0].mxu0 %v881
        %v3224 = vpop.f32.mrb[0].mxu0
        %v3225 = vadd.f32 %v748, %v3224
        %v3226 = vpop.f32.mrb[0].mxu0
        %v3227 = vadd.f32 %v752, %v3226
        %v3228 = vpop.f32.mrb[0].mxu0
        %v3229 = vadd.f32 %v748, %v3228
        %v3230 = vpop.f32.mrb[0].mxu0
        %v3231 = vadd.f32 %v752, %v3230
        %3232 = vmatprep.mubr.bf16.mxu0 %v884
        %3233 = vmatmul.mubr.bf16.gmra.mrb[0].mxu0 %v883
        %v3234 = vpop.f32.mrb[0].mxu0
        %v3235 = vadd.f32 %v748, %v3234
        %v3236 = vpop.f32.mrb[0].mxu0
        %v3237 = vadd.f32 %v752, %v3236
        %v3238 = vpop.f32.mrb[0].mxu0
        %v3239 = vadd.f32 %v748, %v3238
        %v3240 = vpop.f32.mrb[0].mxu0
        %v3241 = vadd.f32 %v752, %v3240
        %3242 = vmatprep.mubr.bf16.mxu0 %v886
        %3243 = vmatmul.mubr.bf16.gmra.mrb[0].mxu0 %v885
        %v3244 = vpop.f32.mrb[0].mxu0
        %v3245 = vadd.f32 %v748, %v3244
        %v3246 = vpop.f32.mrb[0].mxu0
        %v3247 = vadd.f32 %v752, %v3246
        %v3248 = vpop.f32.mrb[0].mxu0
        %v3249 = vadd.f32 %v748, %v3248
        %v3250 = vpop.f32.mrb[0].mxu0
        %v3251 = vadd.f32 %v752, %v3250
        %3252 = vmatprep.mubr.bf16.mxu0 %v888
        %3253 = vmatmul.mubr.bf16.gmra.mrb[0].mxu0 %v887
        %v3254 = vpop.f32.mrb[0].mxu0
        %v3255 = vadd.f32 %v748, %v3254
        %v3256 = vpop.f32.mrb[0].mxu0
        %v3257 = vadd.f32 %v752, %v3256
        %v3258 = vpop.f32.mrb[0].mxu0
        %v3259 = vadd.f32 %v748, %v3258
        %v3260 = vpop.f32.mrb[0].mxu0
        %v3261 = vadd.f32 %v752, %v3260
        %3262 = vmatprep.mubr.bf16.mxu0 %v890
        %3263 = vmatmul.mubr.bf16.gmra.mrb[0].mxu0 %v889
        %v3264 = vpop.f32.mrb[0].mxu0
        %v3265 = vadd.f32 %v748, %v3264
        %v3266 = vpop.f32.mrb[0].mxu0
        %v3267 = vadd.f32 %v752, %v3266
        %v3268 = vpop.f32.mrb[0].mxu0
        %v3269 = vadd.f32 %v748, %v3268
        %v3270 = vpop.f32.mrb[0].mxu0
        %v3271 = vadd.f32 %v752, %v3270
        %3272 = vmatprep.mubr.bf16.mxu0 %v892
        %3273 = vmatmul.mubr.bf16.gmra.mrb[0].mxu0 %v891
        %v3274 = vpop.f32.mrb[0].mxu0
        %v3275 = vadd.f32 %v748, %v3274
        %v3276 = vpop.f32.mrb[0].mxu0
        %v3277 = vadd.f32 %v752, %v3276
        %v3278 = vpop.f32.mrb[0].mxu0
        %v3279 = vadd.f32 %v748, %v3278
        %v3280 = vpop.f32.mrb[0].mxu0
        %v3281 = vadd.f32 %v752, %v3280
        %3282 = vmatprep.mubr.bf16.mxu0 %v894
        %3283 = vmatmul.mubr.bf16.gmra.mrb[0].mxu0 %v893
        %v3284 = vpop.f32.mrb[0].mxu0
        %v3285 = vadd.f32 %v748, %v3284
        %v3286 = vpop.f32.mrb[0].mxu0
        %v3287 = vadd.f32 %v752, %v3286
        %v3288 = vpop.f32.mrb[0].mxu0
        %v3289 = vadd.f32 %v748, %v3288
        %v3290 = vpop.f32.mrb[0].mxu0
        %v3291 = vadd.f32 %v752, %v3290
        %3292 = vmatprep.mubr.bf16.mxu0 %v896
        %3293 = vmatmul.mubr.bf16.gmra.mrb[0].mxu0 %v895
        %v3294 = vpop.f32.mrb[0].mxu0
        %v3295 = vadd.f32 %v748, %v3294
        %v3296 = vpop.f32.mrb[0].mxu0
        %v3297 = vadd.f32 %v752, %v3296
        %v3298 = vpop.f32.mrb[0].mxu0
        %v3299 = vadd.f32 %v748, %v3298
        %v3300 = vpop.f32.mrb[0].mxu0
        %v3301 = vadd.f32 %v752, %v3300
        %3302 = vmatprep.mubr.bf16.mxu0 %v898
        %3303 = vmatmul.mubr.bf16.gmra.mrb[0].mxu0 %v897
        %v3304 = vpop.f32.mrb[0].mxu0
        %v3305 = vadd.f32 %v748, %v3304
        %v3306 = vpop.f32.mrb[0].mxu0
        %v3307 = vadd.f32 %v752, %v3306
        %v3308 = vpop.f32.mrb[0].mxu0
        %v3309 = vadd.f32 %v748, %v3308
        %v3310 = vpop.f32.mrb[0].mxu0
        %v3311 = vadd.f32 %v752, %v3310
        %3312 = vmatprep.mubr.bf16.mxu0 %v900
        %3313 = vmatmul.mubr.bf16.gmra.mrb[0].mxu0 %v899
        %v3314 = vpop.f32.mrb[0].mxu0
        %v3315 = vadd.f32 %v748, %v3314
        %v3316 = vpop.f32.mrb[0].mxu0
        %v3317 = vadd.f32 %v752, %v3316
        %v3318 = vpop.f32.mrb[0].mxu0
        %v3319 = vadd.f32 %v748, %v3318
        %v3320 = vpop.f32.mrb[0].mxu0
        %v3321 = vadd.f32 %v752, %v3320
        %3322 = vmatprep.mubr.bf16.mxu0 %v902
        %3323 = vmatmul.mubr.bf16.gmra.mrb[0].mxu0 %v901
        %v3324 = vpop.f32.mrb[0].mxu0
        %v3325 = vadd.f32 %v748, %v3324
        %v3326 = vpop.f32.mrb[0].mxu0
        %v3327 = vadd.f32 %v752, %v3326
        %v3328 = vpop.f32.mrb[0].mxu0
        %v3329 = vadd.f32 %v748, %v3328
        %v3330 = vpop.f32.mrb[0].mxu0
        %v3331 = vadd.f32 %v752, %v3330
        %3332 = vmatprep.mubr.bf16.mxu0 %v904
        %3333 = vmatmul.mubr.bf16.gmra.mrb[0].mxu0 %v903
        %v3334 = vpop.f32.mrb[0].mxu0
        %v3335 = vadd.f32 %v748, %v3334
        %v3336 = vpop.f32.mrb[0].mxu0
        %v3337 = vadd.f32 %v752, %v3336
        %v3338 = vpop.f32.mrb[0].mxu0
        %v3339 = vadd.f32 %v748, %v3338
        %v3340 = vpop.f32.mrb[0].mxu0
        %v3341 = vadd.f32 %v752, %v3340
        %3342 = vmatprep.mubr.bf16.mxu0 %v906
        %3343 = vmatmul.mubr.bf16.gmra.mrb[0].mxu0 %v905
        %v3344 = vpop.f32.mrb[0].mxu0
        %v3345 = vadd.f32 %v748, %v3344
        %v3346 = vpop.f32.mrb[0].mxu0
        %v3347 = vadd.f32 %v752, %v3346
        %v3348 = vpop.f32.mrb[0].mxu0
        %v3349 = vadd.f32 %v748, %v3348
        %v3350 = vpop.f32.mrb[0].mxu0
        %v3351 = vadd.f32 %v752, %v3350
        %3352 = vmatprep.mubr.bf16.mxu0 %v908
        %3353 = vmatmul.mubr.bf16.gmra.mrb[0].mxu0 %v907
        %v3354 = vpop.f32.mrb[0].mxu0
        %v3355 = vadd.f32 %v748, %v3354
        %v3356 = vpop.f32.mrb[0].mxu0
        %v3357 = vadd.f32 %v752, %v3356
        %v3358 = vpop.f32.mrb[0].mxu0
        %v3359 = vadd.f32 %v748, %v3358
        %v3360 = vpop.f32.mrb[0].mxu0
        %v3361 = vadd.f32 %v752, %v3360
        %3362 = vmatprep.mubr.bf16.mxu0 %v910
        %3363 = vmatmul.mubr.bf16.gmra.mrb[0].mxu0 %v909
        %v3364 = vpop.f32.mrb[0].mxu0
        %v3365 = vadd.f32 %v748, %v3364
        %v3366 = vpop.f32.mrb[0].mxu0
        %v3367 = vadd.f32 %v752, %v3366
        %v3368 = vpop.f32.mrb[0].mxu0
        %v3369 = vadd.f32 %v748, %v3368
        %v3370 = vpop.f32.mrb[0].mxu0
        %v3371 = vadd.f32 %v752, %v3370
        %3372 = vmatprep.mubr.bf16.mxu0 %v912
        %3373 = vmatmul.mubr.bf16.gmra.mrb[0].mxu0 %v911
        %v3374 = vpop.f32.mrb[0].mxu0
        %v3375 = vadd.f32 %v748, %v3374
        %v3376 = vpop.f32.mrb[0].mxu0
        %v3377 = vadd.f32 %v752, %v3376
        %v3378 = vpop.f32.mrb[0].mxu0
        %v3379 = vadd.f32 %v748, %v3378
        %v3380 = vpop.f32.mrb[0].mxu0
        %v3381 = vadd.f32 %v752, %v3380
        %3382 = vdwg.mxu0
        %3383 = vmatprep.subr.bf16.mxu0 %v1726
        %3384 = vmatpush1.bf16.msra.mxu0 %v1725
        %3385 = vmatprep.subr.bf16.mxu0 %v1742
        %3386 = vmatpush1.bf16.msra.mxu0 %v1741
        %3387 = vmatprep.subr.bf16.mxu0 %v1758
        %3388 = vmatpush1.bf16.msra.mxu0 %v1757
        %3389 = vmatprep.subr.bf16.mxu0 %v1774
        %3390 = vmatpush1.bf16.msra.mxu0 %v1773
        %3391 = vmatprep.subr.bf16.mxu0 %v1790
        %3392 = vmatpush1.bf16.msra.mxu0 %v1789
        %3393 = vmatprep.subr.bf16.mxu0 %v1806
        %3394 = vmatpush1.bf16.msra.mxu0 %v1805
        %3395 = vmatprep.subr.bf16.mxu0 %v1822
        %3396 = vmatpush1.bf16.msra.mxu0 %v1821
        %3397 = vmatprep.subr.bf16.mxu0 %v1838
        %3398 = vmatpush1.bf16.msra.mxu0 %v1837
        %3399 = vmatprep.subr.bf16.mxu0 %v1854
        %3400 = vmatpush1.bf16.msra.mxu0 %v1853
        %3401 = vmatprep.subr.bf16.mxu0 %v1870
        %3402 = vmatpush1.bf16.msra.mxu0 %v1869
        %3403 = vmatprep.subr.bf16.mxu0 %v1886
        %3404 = vmatpush1.bf16.msra.mxu0 %v1885
        %3405 = vmatprep.subr.bf16.mxu0 %v1902
        %3406 = vmatpush1.bf16.msra.mxu0 %v1901
        %3407 = vmatprep.subr.bf16.mxu0 %v1918
        %3408 = vmatpush1.bf16.msra.mxu0 %v1917
        %3409 = vmatprep.subr.bf16.mxu0 %v1934
        %3410 = vmatpush1.bf16.msra.mxu0 %v1933
        %3411 = vmatprep.subr.bf16.mxu0 %v1950
        %3412 = vmatpush1.bf16.msra.mxu0 %v1949
        %3413 = vmatprep.subr.bf16.mxu0 %v1966
        %3414 = vmatpush1.bf16.msra.mxu0 %v1965
        %3415 = vmatprep.mubr.bf16.mxu0 %v882
        %3416 = vmatmul.mubr.bf16.gmra.mrb[0].mxu0 %v881
        %v3417 = vpop.f32.mrb[0].mxu0
        %v3418 = vadd.f32 %v756, %v3417
        %v3419 = vpop.f32.mrb[0].mxu0
        %v3420 = vadd.f32 %v760, %v3419
        %v3421 = vpop.f32.mrb[0].mxu0
        %v3422 = vadd.f32 %v756, %v3421
        %v3423 = vpop.f32.mrb[0].mxu0
        %v3424 = vadd.f32 %v760, %v3423
        %3425 = vmatprep.mubr.bf16.mxu0 %v884
        %3426 = vmatmul.mubr.bf16.gmra.mrb[0].mxu0 %v883
        %v3427 = vpop.f32.mrb[0].mxu0
        %v3428 = vadd.f32 %v756, %v3427
        %v3429 = vpop.f32.mrb[0].mxu0
        %v3430 = vadd.f32 %v760, %v3429
        %v3431 = vpop.f32.mrb[0].mxu0
        %v3432 = vadd.f32 %v756, %v3431
        %v3433 = vpop.f32.mrb[0].mxu0
        %v3434 = vadd.f32 %v760, %v3433
        %3435 = vmatprep.mubr.bf16.mxu0 %v886
        %3436 = vmatmul.mubr.bf16.gmra.mrb[0].mxu0 %v885
        %v3437 = vpop.f32.mrb[0].mxu0
        %v3438 = vadd.f32 %v756, %v3437
        %v3439 = vpop.f32.mrb[0].mxu0
        %v3440 = vadd.f32 %v760, %v3439
        %v3441 = vpop.f32.mrb[0].mxu0
        %v3442 = vadd.f32 %v756, %v3441
        %v3443 = vpop.f32.mrb[0].mxu0
        %v3444 = vadd.f32 %v760, %v3443
        %3445 = vmatprep.mubr.bf16.mxu0 %v888
        %3446 = vmatmul.mubr.bf16.gmra.mrb[0].mxu0 %v887
        %v3447 = vpop.f32.mrb[0].mxu0
        %v3448 = vadd.f32 %v756, %v3447
        %v3449 = vpop.f32.mrb[0].mxu0
        %v3450 = vadd.f32 %v760, %v3449
        %v3451 = vpop.f32.mrb[0].mxu0
        %v3452 = vadd.f32 %v756, %v3451
        %v3453 = vpop.f32.mrb[0].mxu0
        %v3454 = vadd.f32 %v760, %v3453
        %3455 = vmatprep.mubr.bf16.mxu0 %v890
        %3456 = vmatmul.mubr.bf16.gmra.mrb[0].mxu0 %v889
        %v3457 = vpop.f32.mrb[0].mxu0
        %v3458 = vadd.f32 %v756, %v3457
        %v3459 = vpop.f32.mrb[0].mxu0
        %v3460 = vadd.f32 %v760, %v3459
        %v3461 = vpop.f32.mrb[0].mxu0
        %v3462 = vadd.f32 %v756, %v3461
        %v3463 = vpop.f32.mrb[0].mxu0
        %v3464 = vadd.f32 %v760, %v3463
        %3465 = vmatprep.mubr.bf16.mxu0 %v892
        %3466 = vmatmul.mubr.bf16.gmra.mrb[0].mxu0 %v891
        %v3467 = vpop.f32.mrb[0].mxu0
        %v3468 = vadd.f32 %v756, %v3467
        %v3469 = vpop.f32.mrb[0].mxu0
        %v3470 = vadd.f32 %v760, %v3469
        %v3471 = vpop.f32.mrb[0].mxu0
        %v3472 = vadd.f32 %v756, %v3471
        %v3473 = vpop.f32.mrb[0].mxu0
        %v3474 = vadd.f32 %v760, %v3473
        %3475 = vmatprep.mubr.bf16.mxu0 %v894
        %3476 = vmatmul.mubr.bf16.gmra.mrb[0].mxu0 %v893
        %v3477 = vpop.f32.mrb[0].mxu0
        %v3478 = vadd.f32 %v756, %v3477
        %v3479 = vpop.f32.mrb[0].mxu0
        %v3480 = vadd.f32 %v760, %v3479
        %v3481 = vpop.f32.mrb[0].mxu0
        %v3482 = vadd.f32 %v756, %v3481
        %v3483 = vpop.f32.mrb[0].mxu0
        %v3484 = vadd.f32 %v760, %v3483
        %3485 = vmatprep.mubr.bf16.mxu0 %v896
        %3486 = vmatmul.mubr.bf16.gmra.mrb[0].mxu0 %v895
        %v3487 = vpop.f32.mrb[0].mxu0
        %v3488 = vadd.f32 %v756, %v3487
        %v3489 = vpop.f32.mrb[0].mxu0
        %v3490 = vadd.f32 %v760, %v3489
        %v3491 = vpop.f32.mrb[0].mxu0
        %v3492 = vadd.f32 %v756, %v3491
        %v3493 = vpop.f32.mrb[0].mxu0
        %v3494 = vadd.f32 %v760, %v3493
        %3495 = vmatprep.mubr.bf16.mxu0 %v898
        %3496 = vmatmul.mubr.bf16.gmra.mrb[0].mxu0 %v897
        %v3497 = vpop.f32.mrb[0].mxu0
        %v3498 = vadd.f32 %v756, %v3497
        %v3499 = vpop.f32.mrb[0].mxu0
        %v3500 = vadd.f32 %v760, %v3499
        %v3501 = vpop.f32.mrb[0].mxu0
        %v3502 = vadd.f32 %v756, %v3501
        %v3503 = vpop.f32.mrb[0].mxu0
        %v3504 = vadd.f32 %v760, %v3503
        %3505 = vmatprep.mubr.bf16.mxu0 %v900
        %3506 = vmatmul.mubr.bf16.gmra.mrb[0].mxu0 %v899
        %v3507 = vpop.f32.mrb[0].mxu0
        %v3508 = vadd.f32 %v756, %v3507
        %v3509 = vpop.f32.mrb[0].mxu0
        %v3510 = vadd.f32 %v760, %v3509
        %v3511 = vpop.f32.mrb[0].mxu0
        %v3512 = vadd.f32 %v756, %v3511
        %v3513 = vpop.f32.mrb[0].mxu0
        %v3514 = vadd.f32 %v760, %v3513
        %3515 = vmatprep.mubr.bf16.mxu0 %v902
        %3516 = vmatmul.mubr.bf16.gmra.mrb[0].mxu0 %v901
        %v3517 = vpop.f32.mrb[0].mxu0
        %v3518 = vadd.f32 %v756, %v3517
        %v3519 = vpop.f32.mrb[0].mxu0
        %v3520 = vadd.f32 %v760, %v3519
        %v3521 = vpop.f32.mrb[0].mxu0
        %v3522 = vadd.f32 %v756, %v3521
        %v3523 = vpop.f32.mrb[0].mxu0
        %v3524 = vadd.f32 %v760, %v3523
        %3525 = vmatprep.mubr.bf16.mxu0 %v904
        %3526 = vmatmul.mubr.bf16.gmra.mrb[0].mxu0 %v903
        %v3527 = vpop.f32.mrb[0].mxu0
        %v3528 = vadd.f32 %v756, %v3527
        %v3529 = vpop.f32.mrb[0].mxu0
        %v3530 = vadd.f32 %v760, %v3529
        %v3531 = vpop.f32.mrb[0].mxu0
        %v3532 = vadd.f32 %v756, %v3531
        %v3533 = vpop.f32.mrb[0].mxu0
        %v3534 = vadd.f32 %v760, %v3533
        %3535 = vmatprep.mubr.bf16.mxu0 %v906
        %3536 = vmatmul.mubr.bf16.gmra.mrb[0].mxu0 %v905
        %v3537 = vpop.f32.mrb[0].mxu0
        %v3538 = vadd.f32 %v756, %v3537
        %v3539 = vpop.f32.mrb[0].mxu0
        %v3540 = vadd.f32 %v760, %v3539
        %v3541 = vpop.f32.mrb[0].mxu0
        %v3542 = vadd.f32 %v756, %v3541
        %v3543 = vpop.f32.mrb[0].mxu0
        %v3544 = vadd.f32 %v760, %v3543
        %3545 = vmatprep.mubr.bf16.mxu0 %v908
        %3546 = vmatmul.mubr.bf16.gmra.mrb[0].mxu0 %v907
        %v3547 = vpop.f32.mrb[0].mxu0
        %v3548 = vadd.f32 %v756, %v3547
        %v3549 = vpop.f32.mrb[0].mxu0
        %v3550 = vadd.f32 %v760, %v3549
        %v3551 = vpop.f32.mrb[0].mxu0
        %v3552 = vadd.f32 %v756, %v3551
        %v3553 = vpop.f32.mrb[0].mxu0
        %v3554 = vadd.f32 %v760, %v3553
        %3555 = vmatprep.mubr.bf16.mxu0 %v910
        %3556 = vmatmul.mubr.bf16.gmra.mrb[0].mxu0 %v909
        %v3557 = vpop.f32.mrb[0].mxu0
        %v3558 = vadd.f32 %v756, %v3557
        %v3559 = vpop.f32.mrb[0].mxu0
        %v3560 = vadd.f32 %v760, %v3559
        %v3561 = vpop.f32.mrb[0].mxu0
        %v3562 = vadd.f32 %v756, %v3561
        %v3563 = vpop.f32.mrb[0].mxu0
        %v3564 = vadd.f32 %v760, %v3563
        %3565 = vmatprep.mubr.bf16.mxu0 %v912
        %3566 = vmatmul.mubr.bf16.gmra.mrb[0].mxu0 %v911
        %v3567 = vpop.f32.mrb[0].mxu0
        %v3568 = vadd.f32 %v756, %v3567
        %v3569 = vpop.f32.mrb[0].mxu0
        %v3570 = vadd.f32 %v760, %v3569
        %v3571 = vpop.f32.mrb[0].mxu0
        %v3572 = vadd.f32 %v756, %v3571
        %v3573 = vpop.f32.mrb[0].mxu0
        %v3574 = vadd.f32 %v760, %v3573
        %3575 = vdwg.mxu0
        %3576 = vmatprep.subr.bf16.mxu0 %v1728
        %3577 = vmatpush1.bf16.msra.mxu0 %v1727
        %3578 = vmatprep.subr.bf16.mxu0 %v1744
        %3579 = vmatpush1.bf16.msra.mxu0 %v1743
        %3580 = vmatprep.subr.bf16.mxu0 %v1760
        %3581 = vmatpush1.bf16.msra.mxu0 %v1759
        %3582 = vmatprep.subr.bf16.mxu0 %v1776
        %3583 = vmatpush1.bf16.msra.mxu0 %v1775
        %3584 = vmatprep.subr.bf16.mxu0 %v1792
        %3585 = vmatpush1.bf16.msra.mxu0 %v1791
        %3586 = vmatprep.subr.bf16.mxu0 %v1808
        %3587 = vmatpush1.bf16.msra.mxu0 %v1807
        %3588 = vmatprep.subr.bf16.mxu0 %v1824
        %3589 = vmatpush1.bf16.msra.mxu0 %v1823
        %3590 = vmatprep.subr.bf16.mxu0 %v1840
        %3591 = vmatpush1.bf16.msra.mxu0 %v1839
        %3592 = vmatprep.subr.bf16.mxu0 %v1856
        %3593 = vmatpush1.bf16.msra.mxu0 %v1855
        %3594 = vmatprep.subr.bf16.mxu0 %v1872
        %3595 = vmatpush1.bf16.msra.mxu0 %v1871
        %3596 = vmatprep.subr.bf16.mxu0 %v1888
        %3597 = vmatpush1.bf16.msra.mxu0 %v1887
        %3598 = vmatprep.subr.bf16.mxu0 %v1904
        %3599 = vmatpush1.bf16.msra.mxu0 %v1903
        %3600 = vmatprep.subr.bf16.mxu0 %v1920
        %3601 = vmatpush1.bf16.msra.mxu0 %v1919
        %3602 = vmatprep.subr.bf16.mxu0 %v1936
        %3603 = vmatpush1.bf16.msra.mxu0 %v1935
        %3604 = vmatprep.subr.bf16.mxu0 %v1952
        %3605 = vmatpush1.bf16.msra.mxu0 %v1951
        %3606 = vmatprep.subr.bf16.mxu0 %v1968
        %3607 = vmatpush1.bf16.msra.mxu0 %v1967
        %3608 = vmatprep.mubr.bf16.mxu0 %v882
        %3609 = vmatmul.mubr.bf16.gmra.mrb[0].mxu0 %v881
        %v3610 = vpop.f32.mrb[0].mxu0
        %v3611 = vadd.f32 %v764, %v3610
        %v3612 = vpop.f32.mrb[0].mxu0
        %v3613 = vadd.f32 %v768, %v3612
        %v3614 = vpop.f32.mrb[0].mxu0
        %v3615 = vadd.f32 %v764, %v3614
        %v3616 = vpop.f32.mrb[0].mxu0
        %v3617 = vadd.f32 %v768, %v3616
        %3618 = vmatprep.mubr.bf16.mxu0 %v884
        %3619 = vmatmul.mubr.bf16.gmra.mrb[0].mxu0 %v883
        %v3620 = vpop.f32.mrb[0].mxu0
        %v3621 = vadd.f32 %v764, %v3620
        %v3622 = vpop.f32.mrb[0].mxu0
        %v3623 = vadd.f32 %v768, %v3622
        %v3624 = vpop.f32.mrb[0].mxu0
        %v3625 = vadd.f32 %v764, %v3624
        %v3626 = vpop.f32.mrb[0].mxu0
        %v3627 = vadd.f32 %v768, %v3626
        %3628 = vmatprep.mubr.bf16.mxu0 %v886
        %3629 = vmatmul.mubr.bf16.gmra.mrb[0].mxu0 %v885
        %v3630 = vpop.f32.mrb[0].mxu0
        %v3631 = vadd.f32 %v764, %v3630
        %v3632 = vpop.f32.mrb[0].mxu0
        %v3633 = vadd.f32 %v768, %v3632
        %v3634 = vpop.f32.mrb[0].mxu0
        %v3635 = vadd.f32 %v764, %v3634
        %v3636 = vpop.f32.mrb[0].mxu0
        %v3637 = vadd.f32 %v768, %v3636
        %3638 = vmatprep.mubr.bf16.mxu0 %v888
        %3639 = vmatmul.mubr.bf16.gmra.mrb[0].mxu0 %v887
        %v3640 = vpop.f32.mrb[0].mxu0
        %v3641 = vadd.f32 %v764, %v3640
        %v3642 = vpop.f32.mrb[0].mxu0
        %v3643 = vadd.f32 %v768, %v3642
        %v3644 = vpop.f32.mrb[0].mxu0
        %v3645 = vadd.f32 %v764, %v3644
        %v3646 = vpop.f32.mrb[0].mxu0
        %v3647 = vadd.f32 %v768, %v3646
        %3648 = vmatprep.mubr.bf16.mxu0 %v890
        %3649 = vmatmul.mubr.bf16.gmra.mrb[0].mxu0 %v889
        %v3650 = vpop.f32.mrb[0].mxu0
        %v3651 = vadd.f32 %v764, %v3650
        %v3652 = vpop.f32.mrb[0].mxu0
        %v3653 = vadd.f32 %v768, %v3652
        %v3654 = vpop.f32.mrb[0].mxu0
        %v3655 = vadd.f32 %v764, %v3654
        %v3656 = vpop.f32.mrb[0].mxu0
        %v3657 = vadd.f32 %v768, %v3656
        %3658 = vmatprep.mubr.bf16.mxu0 %v892
        %3659 = vmatmul.mubr.bf16.gmra.mrb[0].mxu0 %v891
        %v3660 = vpop.f32.mrb[0].mxu0
        %v3661 = vadd.f32 %v764, %v3660
        %v3662 = vpop.f32.mrb[0].mxu0
        %v3663 = vadd.f32 %v768, %v3662
        %v3664 = vpop.f32.mrb[0].mxu0
        %v3665 = vadd.f32 %v764, %v3664
        %v3666 = vpop.f32.mrb[0].mxu0
        %v3667 = vadd.f32 %v768, %v3666
        %3668 = vmatprep.mubr.bf16.mxu0 %v894
        %3669 = vmatmul.mubr.bf16.gmra.mrb[0].mxu0 %v893
        %v3670 = vpop.f32.mrb[0].mxu0
        %v3671 = vadd.f32 %v764, %v3670
        %v3672 = vpop.f32.mrb[0].mxu0
        %v3673 = vadd.f32 %v768, %v3672
        %v3674 = vpop.f32.mrb[0].mxu0
        %v3675 = vadd.f32 %v764, %v3674
        %v3676 = vpop.f32.mrb[0].mxu0
        %v3677 = vadd.f32 %v768, %v3676
        %3678 = vmatprep.mubr.bf16.mxu0 %v896
        %3679 = vmatmul.mubr.bf16.gmra.mrb[0].mxu0 %v895
        %v3680 = vpop.f32.mrb[0].mxu0
        %v3681 = vadd.f32 %v764, %v3680
        %v3682 = vpop.f32.mrb[0].mxu0
        %v3683 = vadd.f32 %v768, %v3682
        %v3684 = vpop.f32.mrb[0].mxu0
        %v3685 = vadd.f32 %v764, %v3684
        %v3686 = vpop.f32.mrb[0].mxu0
        %v3687 = vadd.f32 %v768, %v3686
        %3688 = vmatprep.mubr.bf16.mxu0 %v898
        %3689 = vmatmul.mubr.bf16.gmra.mrb[0].mxu0 %v897
        %v3690 = vpop.f32.mrb[0].mxu0
        %v3691 = vadd.f32 %v764, %v3690
        %v3692 = vpop.f32.mrb[0].mxu0
        %v3693 = vadd.f32 %v768, %v3692
        %v3694 = vpop.f32.mrb[0].mxu0
        %v3695 = vadd.f32 %v764, %v3694
        %v3696 = vpop.f32.mrb[0].mxu0
        %v3697 = vadd.f32 %v768, %v3696
        %3698 = vmatprep.mubr.bf16.mxu0 %v900
        %3699 = vmatmul.mubr.bf16.gmra.mrb[0].mxu0 %v899
        %v3700 = vpop.f32.mrb[0].mxu0
        %v3701 = vadd.f32 %v764, %v3700
        %v3702 = vpop.f32.mrb[0].mxu0
        %v3703 = vadd.f32 %v768, %v3702
        %v3704 = vpop.f32.mrb[0].mxu0
        %v3705 = vadd.f32 %v764, %v3704
        %v3706 = vpop.f32.mrb[0].mxu0
        %v3707 = vadd.f32 %v768, %v3706
        %3708 = vmatprep.mubr.bf16.mxu0 %v902
        %3709 = vmatmul.mubr.bf16.gmra.mrb[0].mxu0 %v901
        %v3710 = vpop.f32.mrb[0].mxu0
        %v3711 = vadd.f32 %v764, %v3710
        %v3712 = vpop.f32.mrb[0].mxu0
        %v3713 = vadd.f32 %v768, %v3712
        %v3714 = vpop.f32.mrb[0].mxu0
        %v3715 = vadd.f32 %v764, %v3714
        %v3716 = vpop.f32.mrb[0].mxu0
        %v3717 = vadd.f32 %v768, %v3716
        %3718 = vmatprep.mubr.bf16.mxu0 %v904
        %3719 = vmatmul.mubr.bf16.gmra.mrb[0].mxu0 %v903
        %v3720 = vpop.f32.mrb[0].mxu0
        %v3721 = vadd.f32 %v764, %v3720
        %v3722 = vpop.f32.mrb[0].mxu0
        %v3723 = vadd.f32 %v768, %v3722
        %v3724 = vpop.f32.mrb[0].mxu0
        %v3725 = vadd.f32 %v764, %v3724
        %v3726 = vpop.f32.mrb[0].mxu0
        %v3727 = vadd.f32 %v768, %v3726
        %3728 = vmatprep.mubr.bf16.mxu0 %v906
        %3729 = vmatmul.mubr.bf16.gmra.mrb[0].mxu0 %v905
        %v3730 = vpop.f32.mrb[0].mxu0
        %v3731 = vadd.f32 %v764, %v3730
        %v3732 = vpop.f32.mrb[0].mxu0
        %v3733 = vadd.f32 %v768, %v3732
        %v3734 = vpop.f32.mrb[0].mxu0
        %v3735 = vadd.f32 %v764, %v3734
        %v3736 = vpop.f32.mrb[0].mxu0
        %v3737 = vadd.f32 %v768, %v3736
        %3738 = vmatprep.mubr.bf16.mxu0 %v908
        %3739 = vmatmul.mubr.bf16.gmra.mrb[0].mxu0 %v907
        %v3740 = vpop.f32.mrb[0].mxu0
        %v3741 = vadd.f32 %v764, %v3740
        %v3742 = vpop.f32.mrb[0].mxu0
        %v3743 = vadd.f32 %v768, %v3742
        %v3744 = vpop.f32.mrb[0].mxu0
        %v3745 = vadd.f32 %v764, %v3744
        %v3746 = vpop.f32.mrb[0].mxu0
        %v3747 = vadd.f32 %v768, %v3746
        %3748 = vmatprep.mubr.bf16.mxu0 %v910
        %3749 = vmatmul.mubr.bf16.gmra.mrb[0].mxu0 %v909
        %v3750 = vpop.f32.mrb[0].mxu0
        %v3751 = vadd.f32 %v764, %v3750
        %v3752 = vpop.f32.mrb[0].mxu0
        %v3753 = vadd.f32 %v768, %v3752
        %v3754 = vpop.f32.mrb[0].mxu0
        %v3755 = vadd.f32 %v764, %v3754
        %v3756 = vpop.f32.mrb[0].mxu0
        %v3757 = vadd.f32 %v768, %v3756
        %3758 = vmatprep.mubr.bf16.mxu0 %v912
        %3759 = vmatmul.mubr.bf16.gmra.mrb[0].mxu0 %v911
        %v3760 = vpop.f32.mrb[0].mxu0
        %v3761 = vadd.f32 %v764, %v3760
        %v3762 = vpop.f32.mrb[0].mxu0
        %v3763 = vadd.f32 %v768, %v3762
        %v3764 = vpop.f32.mrb[0].mxu0
        %v3765 = vadd.f32 %v764, %v3764
        %v3766 = vpop.f32.mrb[0].mxu0
        %v3767 = vadd.f32 %v768, %v3766
        %3768 = vdwg.mxu0
        %v3769 = vmax.f32 %v2260, 0.0
        %v3770 = vmax.f32 %v2262, 0.0
        %v3771 = vmax.f32 %v2453, 0.0
        %v3772 = vmax.f32 %v2455, 0.0
        %v3773 = vmax.f32 %v2646, 0.0
        %v3774 = vmax.f32 %v2648, 0.0
        %v3775 = vmax.f32 %v2839, 0.0
        %v3776 = vmax.f32 %v2841, 0.0
        %v3777 = vmax.f32 %v3032, 0.0
        %v3778 = vmax.f32 %v3034, 0.0
        %v3779 = vmax.f32 %v3225, 0.0
        %v3780 = vmax.f32 %v3227, 0.0
        %v3781 = vmax.f32 %v3418, 0.0
        %v3782 = vmax.f32 %v3420, 0.0
        %v3783 = vmax.f32 %v3611, 0.0
        %v3784 = vmax.f32 %v3613, 0.0
        %v3785 = vmax.f32 %v2264, 0.0
        %v3786 = vmax.f32 %v2266, 0.0
        %v3787 = vmax.f32 %v2457, 0.0
        %v3788 = vmax.f32 %v2459, 0.0
        %v3789 = vmax.f32 %v2650, 0.0
        %v3790 = vmax.f32 %v2652, 0.0
        %v3791 = vmax.f32 %v2843, 0.0
        %v3792 = vmax.f32 %v2845, 0.0
        %v3793 = vmax.f32 %v3036, 0.0
        %v3794 = vmax.f32 %v3038, 0.0
        %v3795 = vmax.f32 %v3229, 0.0
        %v3796 = vmax.f32 %v3231, 0.0
        %v3797 = vmax.f32 %v3422, 0.0
        %v3798 = vmax.f32 %v3424, 0.0
        %v3799 = vmax.f32 %v3615, 0.0
        %v3800 = vmax.f32 %v3617, 0.0
        %v3801 = vmax.f32 %v2270, 0.0
        %v3802 = vmax.f32 %v2272, 0.0
        %v3803 = vmax.f32 %v2463, 0.0
        %v3804 = vmax.f32 %v2465, 0.0
        %v3805 = vmax.f32 %v2656, 0.0
        %v3806 = vmax.f32 %v2658, 0.0
        %v3807 = vmax.f32 %v2849, 0.0
        %v3808 = vmax.f32 %v2851, 0.0
        %v3809 = vmax.f32 %v3042, 0.0
        %v3810 = vmax.f32 %v3044, 0.0
        %v3811 = vmax.f32 %v3235, 0.0
        %v3812 = vmax.f32 %v3237, 0.0
        %v3813 = vmax.f32 %v3428, 0.0
        %v3814 = vmax.f32 %v3430, 0.0
        %v3815 = vmax.f32 %v3621, 0.0
        %v3816 = vmax.f32 %v3623, 0.0
        %v3817 = vmax.f32 %v2274, 0.0
        %v3818 = vmax.f32 %v2276, 0.0
        %v3819 = vmax.f32 %v2467, 0.0
        %v3820 = vmax.f32 %v2469, 0.0
        %v3821 = vmax.f32 %v2660, 0.0
        %v3822 = vmax.f32 %v2662, 0.0
        %v3823 = vmax.f32 %v2853, 0.0
        %v3824 = vmax.f32 %v2855, 0.0
        %v3825 = vmax.f32 %v3046, 0.0
        %v3826 = vmax.f32 %v3048, 0.0
        %v3827 = vmax.f32 %v3239, 0.0
        %v3828 = vmax.f32 %v3241, 0.0
        %v3829 = vmax.f32 %v3432, 0.0
        %v3830 = vmax.f32 %v3434, 0.0
        %v3831 = vmax.f32 %v3625, 0.0
        %v3832 = vmax.f32 %v3627, 0.0
        %v3833 = vmax.f32 %v2280, 0.0
        %v3834 = vmax.f32 %v2282, 0.0
        %v3835 = vmax.f32 %v2473, 0.0
        %v3836 = vmax.f32 %v2475, 0.0
        %v3837 = vmax.f32 %v2666, 0.0
        %v3838 = vmax.f32 %v2668, 0.0
        %v3839 = vmax.f32 %v2859, 0.0
        %v3840 = vmax.f32 %v2861, 0.0
        %v3841 = vmax.f32 %v3052, 0.0
        %v3842 = vmax.f32 %v3054, 0.0
        %v3843 = vmax.f32 %v3245, 0.0
        %v3844 = vmax.f32 %v3247, 0.0
        %v3845 = vmax.f32 %v3438, 0.0
        %v3846 = vmax.f32 %v3440, 0.0
        %v3847 = vmax.f32 %v3631, 0.0
        %v3848 = vmax.f32 %v3633, 0.0
        %v3849 = vmax.f32 %v2284, 0.0
        %v3850 = vmax.f32 %v2286, 0.0
        %v3851 = vmax.f32 %v2477, 0.0
        %v3852 = vmax.f32 %v2479, 0.0
        %v3853 = vmax.f32 %v2670, 0.0
        %v3854 = vmax.f32 %v2672, 0.0
        %v3855 = vmax.f32 %v2863, 0.0
        %v3856 = vmax.f32 %v2865, 0.0
        %v3857 = vmax.f32 %v3056, 0.0
        %v3858 = vmax.f32 %v3058, 0.0
        %v3859 = vmax.f32 %v3249, 0.0
        %v3860 = vmax.f32 %v3251, 0.0
        %v3861 = vmax.f32 %v3442, 0.0
        %v3862 = vmax.f32 %v3444, 0.0
        %v3863 = vmax.f32 %v3635, 0.0
        %v3864 = vmax.f32 %v3637, 0.0
        %v3865 = vmax.f32 %v2290, 0.0
        %v3866 = vmax.f32 %v2292, 0.0
        %v3867 = vmax.f32 %v2483, 0.0
        %v3868 = vmax.f32 %v2485, 0.0
        %v3869 = vmax.f32 %v2676, 0.0
        %v3870 = vmax.f32 %v2678, 0.0
        %v3871 = vmax.f32 %v2869, 0.0
        %v3872 = vmax.f32 %v2871, 0.0
        %v3873 = vmax.f32 %v3062, 0.0
        %v3874 = vmax.f32 %v3064, 0.0
        %v3875 = vmax.f32 %v3255, 0.0
        %v3876 = vmax.f32 %v3257, 0.0
        %v3877 = vmax.f32 %v3448, 0.0
        %v3878 = vmax.f32 %v3450, 0.0
        %v3879 = vmax.f32 %v3641, 0.0
        %v3880 = vmax.f32 %v3643, 0.0
        %v3881 = vmax.f32 %v2294, 0.0
        %v3882 = vmax.f32 %v2296, 0.0
        %v3883 = vmax.f32 %v2487, 0.0
        %v3884 = vmax.f32 %v2489, 0.0
        %v3885 = vmax.f32 %v2680, 0.0
        %v3886 = vmax.f32 %v2682, 0.0
        %v3887 = vmax.f32 %v2873, 0.0
        %v3888 = vmax.f32 %v2875, 0.0
        %v3889 = vmax.f32 %v3066, 0.0
        %v3890 = vmax.f32 %v3068, 0.0
        %v3891 = vmax.f32 %v3259, 0.0
        %v3892 = vmax.f32 %v3261, 0.0
        %v3893 = vmax.f32 %v3452, 0.0
        %v3894 = vmax.f32 %v3454, 0.0
        %v3895 = vmax.f32 %v3645, 0.0
        %v3896 = vmax.f32 %v3647, 0.0
        %v3897 = vmax.f32 %v2300, 0.0
        %v3898 = vmax.f32 %v2302, 0.0
        %v3899 = vmax.f32 %v2493, 0.0
        %v3900 = vmax.f32 %v2495, 0.0
        %v3901 = vmax.f32 %v2686, 0.0
        %v3902 = vmax.f32 %v2688, 0.0
        %v3903 = vmax.f32 %v2879, 0.0
        %v3904 = vmax.f32 %v2881, 0.0
        %v3905 = vmax.f32 %v3072, 0.0
        %v3906 = vmax.f32 %v3074, 0.0
        %v3907 = vmax.f32 %v3265, 0.0
        %v3908 = vmax.f32 %v3267, 0.0
        %v3909 = vmax.f32 %v3458, 0.0
        %v3910 = vmax.f32 %v3460, 0.0
        %v3911 = vmax.f32 %v3651, 0.0
        %v3912 = vmax.f32 %v3653, 0.0
        %v3913 = vmax.f32 %v2304, 0.0
        %v3914 = vmax.f32 %v2306, 0.0
        %v3915 = vmax.f32 %v2497, 0.0
        %v3916 = vmax.f32 %v2499, 0.0
        %v3917 = vmax.f32 %v2690, 0.0
        %v3918 = vmax.f32 %v2692, 0.0
        %v3919 = vmax.f32 %v2883, 0.0
        %v3920 = vmax.f32 %v2885, 0.0
        %v3921 = vmax.f32 %v3076, 0.0
        %v3922 = vmax.f32 %v3078, 0.0
        %v3923 = vmax.f32 %v3269, 0.0
        %v3924 = vmax.f32 %v3271, 0.0
        %v3925 = vmax.f32 %v3462, 0.0
        %v3926 = vmax.f32 %v3464, 0.0
        %v3927 = vmax.f32 %v3655, 0.0
        %v3928 = vmax.f32 %v3657, 0.0
        %v3929 = vmax.f32 %v2310, 0.0
        %v3930 = vmax.f32 %v2312, 0.0
        %v3931 = vmax.f32 %v2503, 0.0
        %v3932 = vmax.f32 %v2505, 0.0
        %v3933 = vmax.f32 %v2696, 0.0
        %v3934 = vmax.f32 %v2698, 0.0
        %v3935 = vmax.f32 %v2889, 0.0
        %v3936 = vmax.f32 %v2891, 0.0
        %v3937 = vmax.f32 %v3082, 0.0
        %v3938 = vmax.f32 %v3084, 0.0
        %v3939 = vmax.f32 %v3275, 0.0
        %v3940 = vmax.f32 %v3277, 0.0
        %v3941 = vmax.f32 %v3468, 0.0
        %v3942 = vmax.f32 %v3470, 0.0
        %v3943 = vmax.f32 %v3661, 0.0
        %v3944 = vmax.f32 %v3663, 0.0
        %v3945 = vmax.f32 %v2314, 0.0
        %v3946 = vmax.f32 %v2316, 0.0
        %v3947 = vmax.f32 %v2507, 0.0
        %v3948 = vmax.f32 %v2509, 0.0
        %v3949 = vmax.f32 %v2700, 0.0
        %v3950 = vmax.f32 %v2702, 0.0
        %v3951 = vmax.f32 %v2893, 0.0
        %v3952 = vmax.f32 %v2895, 0.0
        %v3953 = vmax.f32 %v3086, 0.0
        %v3954 = vmax.f32 %v3088, 0.0
        %v3955 = vmax.f32 %v3279, 0.0
        %v3956 = vmax.f32 %v3281, 0.0
        %v3957 = vmax.f32 %v3472, 0.0
        %v3958 = vmax.f32 %v3474, 0.0
        %v3959 = vmax.f32 %v3665, 0.0
        %v3960 = vmax.f32 %v3667, 0.0
        %v3961 = vmax.f32 %v2320, 0.0
        %v3962 = vmax.f32 %v2322, 0.0
        %v3963 = vmax.f32 %v2513, 0.0
        %v3964 = vmax.f32 %v2515, 0.0
        %v3965 = vmax.f32 %v2706, 0.0
        %v3966 = vmax.f32 %v2708, 0.0
        %v3967 = vmax.f32 %v2899, 0.0
        %v3968 = vmax.f32 %v2901, 0.0
        %v3969 = vmax.f32 %v3092, 0.0
        %v3970 = vmax.f32 %v3094, 0.0
        %v3971 = vmax.f32 %v3285, 0.0
        %v3972 = vmax.f32 %v3287, 0.0
        %v3973 = vmax.f32 %v3478, 0.0
        %v3974 = vmax.f32 %v3480, 0.0
        %v3975 = vmax.f32 %v3671, 0.0
        %v3976 = vmax.f32 %v3673, 0.0
        %v3977 = vmax.f32 %v2324, 0.0
        %v3978 = vmax.f32 %v2326, 0.0
        %v3979 = vmax.f32 %v2517, 0.0
        %v3980 = vmax.f32 %v2519, 0.0
        %v3981 = vmax.f32 %v2710, 0.0
        %v3982 = vmax.f32 %v2712, 0.0
        %v3983 = vmax.f32 %v2903, 0.0
        %v3984 = vmax.f32 %v2905, 0.0
        %v3985 = vmax.f32 %v3096, 0.0
        %v3986 = vmax.f32 %v3098, 0.0
        %v3987 = vmax.f32 %v3289, 0.0
        %v3988 = vmax.f32 %v3291, 0.0
        %v3989 = vmax.f32 %v3482, 0.0
        %v3990 = vmax.f32 %v3484, 0.0
        %v3991 = vmax.f32 %v3675, 0.0
        %v3992 = vmax.f32 %v3677, 0.0
        %v3993 = vmax.f32 %v2330, 0.0
        %v3994 = vmax.f32 %v2332, 0.0
        %v3995 = vmax.f32 %v2523, 0.0
        %v3996 = vmax.f32 %v2525, 0.0
        %v3997 = vmax.f32 %v2716, 0.0
        %v3998 = vmax.f32 %v2718, 0.0
        %v3999 = vmax.f32 %v2909, 0.0
        %v4000 = vmax.f32 %v2911, 0.0
        %v4001 = vmax.f32 %v3102, 0.0
        %v4002 = vmax.f32 %v3104, 0.0
        %v4003 = vmax.f32 %v3295, 0.0
        %v4004 = vmax.f32 %v3297, 0.0
        %v4005 = vmax.f32 %v3488, 0.0
        %v4006 = vmax.f32 %v3490, 0.0
        %v4007 = vmax.f32 %v3681, 0.0
        %v4008 = vmax.f32 %v3683, 0.0
        %v4009 = vmax.f32 %v2334, 0.0
        %v4010 = vmax.f32 %v2336, 0.0
        %v4011 = vmax.f32 %v2527, 0.0
        %v4012 = vmax.f32 %v2529, 0.0
        %v4013 = vmax.f32 %v2720, 0.0
        %v4014 = vmax.f32 %v2722, 0.0
        %v4015 = vmax.f32 %v2913, 0.0
        %v4016 = vmax.f32 %v2915, 0.0
        %v4017 = vmax.f32 %v3106, 0.0
        %v4018 = vmax.f32 %v3108, 0.0
        %v4019 = vmax.f32 %v3299, 0.0
        %v4020 = vmax.f32 %v3301, 0.0
        %v4021 = vmax.f32 %v3492, 0.0
        %v4022 = vmax.f32 %v3494, 0.0
        %v4023 = vmax.f32 %v3685, 0.0
        %v4024 = vmax.f32 %v3687, 0.0
        %v4025 = vmax.f32 %v2340, 0.0
        %v4026 = vmax.f32 %v2342, 0.0
        %v4027 = vmax.f32 %v2533, 0.0
        %v4028 = vmax.f32 %v2535, 0.0
        %v4029 = vmax.f32 %v2726, 0.0
        %v4030 = vmax.f32 %v2728, 0.0
        %v4031 = vmax.f32 %v2919, 0.0
        %v4032 = vmax.f32 %v2921, 0.0
        %v4033 = vmax.f32 %v3112, 0.0
        %v4034 = vmax.f32 %v3114, 0.0
        %v4035 = vmax.f32 %v3305, 0.0
        %v4036 = vmax.f32 %v3307, 0.0
        %v4037 = vmax.f32 %v3498, 0.0
        %v4038 = vmax.f32 %v3500, 0.0
        %v4039 = vmax.f32 %v3691, 0.0
        %v4040 = vmax.f32 %v3693, 0.0
        %v4041 = vmax.f32 %v2344, 0.0
        %v4042 = vmax.f32 %v2346, 0.0
        %v4043 = vmax.f32 %v2537, 0.0
        %v4044 = vmax.f32 %v2539, 0.0
        %v4045 = vmax.f32 %v2730, 0.0
        %v4046 = vmax.f32 %v2732, 0.0
        %v4047 = vmax.f32 %v2923, 0.0
        %v4048 = vmax.f32 %v2925, 0.0
        %v4049 = vmax.f32 %v3116, 0.0
        %v4050 = vmax.f32 %v3118, 0.0
        %v4051 = vmax.f32 %v3309, 0.0
        %v4052 = vmax.f32 %v3311, 0.0
        %v4053 = vmax.f32 %v3502, 0.0
        %v4054 = vmax.f32 %v3504, 0.0
        %v4055 = vmax.f32 %v3695, 0.0
        %v4056 = vmax.f32 %v3697, 0.0
        %v4057 = vmax.f32 %v2350, 0.0
        %v4058 = vmax.f32 %v2352, 0.0
        %v4059 = vmax.f32 %v2543, 0.0
        %v4060 = vmax.f32 %v2545, 0.0
        %v4061 = vmax.f32 %v2736, 0.0
        %v4062 = vmax.f32 %v2738, 0.0
        %v4063 = vmax.f32 %v2929, 0.0
        %v4064 = vmax.f32 %v2931, 0.0
        %v4065 = vmax.f32 %v3122, 0.0
        %v4066 = vmax.f32 %v3124, 0.0
        %v4067 = vmax.f32 %v3315, 0.0
        %v4068 = vmax.f32 %v3317, 0.0
        %v4069 = vmax.f32 %v3508, 0.0
        %v4070 = vmax.f32 %v3510, 0.0
        %v4071 = vmax.f32 %v3701, 0.0
        %v4072 = vmax.f32 %v3703, 0.0
        %v4073 = vmax.f32 %v2354, 0.0
        %v4074 = vmax.f32 %v2356, 0.0
        %v4075 = vmax.f32 %v2547, 0.0
        %v4076 = vmax.f32 %v2549, 0.0
        %v4077 = vmax.f32 %v2740, 0.0
        %v4078 = vmax.f32 %v2742, 0.0
        %v4079 = vmax.f32 %v2933, 0.0
        %v4080 = vmax.f32 %v2935, 0.0
        %v4081 = vmax.f32 %v3126, 0.0
        %v4082 = vmax.f32 %v3128, 0.0
        %v4083 = vmax.f32 %v3319, 0.0
        %v4084 = vmax.f32 %v3321, 0.0
        %v4085 = vmax.f32 %v3512, 0.0
        %v4086 = vmax.f32 %v3514, 0.0
        %v4087 = vmax.f32 %v3705, 0.0
        %v4088 = vmax.f32 %v3707, 0.0
        %v4089 = vmax.f32 %v2360, 0.0
        %v4090 = vmax.f32 %v2362, 0.0
        %v4091 = vmax.f32 %v2553, 0.0
        %v4092 = vmax.f32 %v2555, 0.0
        %v4093 = vmax.f32 %v2746, 0.0
        %v4094 = vmax.f32 %v2748, 0.0
        %v4095 = vmax.f32 %v2939, 0.0
        %v4096 = vmax.f32 %v2941, 0.0
        %v4097 = vmax.f32 %v3132, 0.0
        %v4098 = vmax.f32 %v3134, 0.0
        %v4099 = vmax.f32 %v3325, 0.0
        %v4100 = vmax.f32 %v3327, 0.0
        %v4101 = vmax.f32 %v3518, 0.0
        %v4102 = vmax.f32 %v3520, 0.0
        %v4103 = vmax.f32 %v3711, 0.0
        %v4104 = vmax.f32 %v3713, 0.0
        %v4105 = vmax.f32 %v2364, 0.0
        %v4106 = vmax.f32 %v2366, 0.0
        %v4107 = vmax.f32 %v2557, 0.0
        %v4108 = vmax.f32 %v2559, 0.0
        %v4109 = vmax.f32 %v2750, 0.0
        %v4110 = vmax.f32 %v2752, 0.0
        %v4111 = vmax.f32 %v2943, 0.0
        %v4112 = vmax.f32 %v2945, 0.0
        %v4113 = vmax.f32 %v3136, 0.0
        %v4114 = vmax.f32 %v3138, 0.0
        %v4115 = vmax.f32 %v3329, 0.0
        %v4116 = vmax.f32 %v3331, 0.0
        %v4117 = vmax.f32 %v3522, 0.0
        %v4118 = vmax.f32 %v3524, 0.0
        %v4119 = vmax.f32 %v3715, 0.0
        %v4120 = vmax.f32 %v3717, 0.0
        %v4121 = vmax.f32 %v2370, 0.0
        %v4122 = vmax.f32 %v2372, 0.0
        %v4123 = vmax.f32 %v2563, 0.0
        %v4124 = vmax.f32 %v2565, 0.0
        %v4125 = vmax.f32 %v2756, 0.0
        %v4126 = vmax.f32 %v2758, 0.0
        %v4127 = vmax.f32 %v2949, 0.0
        %v4128 = vmax.f32 %v2951, 0.0
        %v4129 = vmax.f32 %v3142, 0.0
        %v4130 = vmax.f32 %v3144, 0.0
        %v4131 = vmax.f32 %v3335, 0.0
        %v4132 = vmax.f32 %v3337, 0.0
        %v4133 = vmax.f32 %v3528, 0.0
        %v4134 = vmax.f32 %v3530, 0.0
        %v4135 = vmax.f32 %v3721, 0.0
        %v4136 = vmax.f32 %v3723, 0.0
        %v4137 = vmax.f32 %v2374, 0.0
        %v4138 = vmax.f32 %v2376, 0.0
        %v4139 = vmax.f32 %v2567, 0.0
        %v4140 = vmax.f32 %v2569, 0.0
        %v4141 = vmax.f32 %v2760, 0.0
        %v4142 = vmax.f32 %v2762, 0.0
        %v4143 = vmax.f32 %v2953, 0.0
        %v4144 = vmax.f32 %v2955, 0.0
        %v4145 = vmax.f32 %v3146, 0.0
        %v4146 = vmax.f32 %v3148, 0.0
        %v4147 = vmax.f32 %v3339, 0.0
        %v4148 = vmax.f32 %v3341, 0.0
        %v4149 = vmax.f32 %v3532, 0.0
        %v4150 = vmax.f32 %v3534, 0.0
        %v4151 = vmax.f32 %v3725, 0.0
        %v4152 = vmax.f32 %v3727, 0.0
        %v4153 = vmax.f32 %v2380, 0.0
        %v4154 = vmax.f32 %v2382, 0.0
        %v4155 = vmax.f32 %v2573, 0.0
        %v4156 = vmax.f32 %v2575, 0.0
        %v4157 = vmax.f32 %v2766, 0.0
        %v4158 = vmax.f32 %v2768, 0.0
        %v4159 = vmax.f32 %v2959, 0.0
        %v4160 = vmax.f32 %v2961, 0.0
        %v4161 = vmax.f32 %v3152, 0.0
        %v4162 = vmax.f32 %v3154, 0.0
        %v4163 = vmax.f32 %v3345, 0.0
        %v4164 = vmax.f32 %v3347, 0.0
        %v4165 = vmax.f32 %v3538, 0.0
        %v4166 = vmax.f32 %v3540, 0.0
        %v4167 = vmax.f32 %v3731, 0.0
        %v4168 = vmax.f32 %v3733, 0.0
        %v4169 = vmax.f32 %v2384, 0.0
        %v4170 = vmax.f32 %v2386, 0.0
        %v4171 = vmax.f32 %v2577, 0.0
        %v4172 = vmax.f32 %v2579, 0.0
        %v4173 = vmax.f32 %v2770, 0.0
        %v4174 = vmax.f32 %v2772, 0.0
        %v4175 = vmax.f32 %v2963, 0.0
        %v4176 = vmax.f32 %v2965, 0.0
        %v4177 = vmax.f32 %v3156, 0.0
        %v4178 = vmax.f32 %v3158, 0.0
        %v4179 = vmax.f32 %v3349, 0.0
        %v4180 = vmax.f32 %v3351, 0.0
        %v4181 = vmax.f32 %v3542, 0.0
        %v4182 = vmax.f32 %v3544, 0.0
        %v4183 = vmax.f32 %v3735, 0.0
        %v4184 = vmax.f32 %v3737, 0.0
        %v4185 = vmax.f32 %v2390, 0.0
        %v4186 = vmax.f32 %v2392, 0.0
        %v4187 = vmax.f32 %v2583, 0.0
        %v4188 = vmax.f32 %v2585, 0.0
        %v4189 = vmax.f32 %v2776, 0.0
        %v4190 = vmax.f32 %v2778, 0.0
        %v4191 = vmax.f32 %v2969, 0.0
        %v4192 = vmax.f32 %v2971, 0.0
        %v4193 = vmax.f32 %v3162, 0.0
        %v4194 = vmax.f32 %v3164, 0.0
        %v4195 = vmax.f32 %v3355, 0.0
        %v4196 = vmax.f32 %v3357, 0.0
        %v4197 = vmax.f32 %v3548, 0.0
        %v4198 = vmax.f32 %v3550, 0.0
        %v4199 = vmax.f32 %v3741, 0.0
        %v4200 = vmax.f32 %v3743, 0.0
        %v4201 = vmax.f32 %v2394, 0.0
        %v4202 = vmax.f32 %v2396, 0.0
        %v4203 = vmax.f32 %v2587, 0.0
        %v4204 = vmax.f32 %v2589, 0.0
        %v4205 = vmax.f32 %v2780, 0.0
        %v4206 = vmax.f32 %v2782, 0.0
        %v4207 = vmax.f32 %v2973, 0.0
        %v4208 = vmax.f32 %v2975, 0.0
        %v4209 = vmax.f32 %v3166, 0.0
        %v4210 = vmax.f32 %v3168, 0.0
        %v4211 = vmax.f32 %v3359, 0.0
        %v4212 = vmax.f32 %v3361, 0.0
        %v4213 = vmax.f32 %v3552, 0.0
        %v4214 = vmax.f32 %v3554, 0.0
        %v4215 = vmax.f32 %v3745, 0.0
        %v4216 = vmax.f32 %v3747, 0.0
        %v4217 = vmax.f32 %v2400, 0.0
        %v4218 = vmax.f32 %v2402, 0.0
        %v4219 = vmax.f32 %v2593, 0.0
        %v4220 = vmax.f32 %v2595, 0.0
        %v4221 = vmax.f32 %v2786, 0.0
        %v4222 = vmax.f32 %v2788, 0.0
        %v4223 = vmax.f32 %v2979, 0.0
        %v4224 = vmax.f32 %v2981, 0.0
        %v4225 = vmax.f32 %v3172, 0.0
        %v4226 = vmax.f32 %v3174, 0.0
        %v4227 = vmax.f32 %v3365, 0.0
        %v4228 = vmax.f32 %v3367, 0.0
        %v4229 = vmax.f32 %v3558, 0.0
        %v4230 = vmax.f32 %v3560, 0.0
        %v4231 = vmax.f32 %v3751, 0.0
        %v4232 = vmax.f32 %v3753, 0.0
        %v4233 = vmax.f32 %v2404, 0.0
        %v4234 = vmax.f32 %v2406, 0.0
        %v4235 = vmax.f32 %v2597, 0.0
        %v4236 = vmax.f32 %v2599, 0.0
        %v4237 = vmax.f32 %v2790, 0.0
        %v4238 = vmax.f32 %v2792, 0.0
        %v4239 = vmax.f32 %v2983, 0.0
        %v4240 = vmax.f32 %v2985, 0.0
        %v4241 = vmax.f32 %v3176, 0.0
        %v4242 = vmax.f32 %v3178, 0.0
        %v4243 = vmax.f32 %v3369, 0.0
        %v4244 = vmax.f32 %v3371, 0.0
        %v4245 = vmax.f32 %v3562, 0.0
        %v4246 = vmax.f32 %v3564, 0.0
        %v4247 = vmax.f32 %v3755, 0.0
        %v4248 = vmax.f32 %v3757, 0.0
        %v4249 = vmax.f32 %v2410, 0.0
        %v4250 = vmax.f32 %v2412, 0.0
        %v4251 = vmax.f32 %v2603, 0.0
        %v4252 = vmax.f32 %v2605, 0.0
        %v4253 = vmax.f32 %v2796, 0.0
        %v4254 = vmax.f32 %v2798, 0.0
        %v4255 = vmax.f32 %v2989, 0.0
        %v4256 = vmax.f32 %v2991, 0.0
        %v4257 = vmax.f32 %v3182, 0.0
        %v4258 = vmax.f32 %v3184, 0.0
        %v4259 = vmax.f32 %v3375, 0.0
        %v4260 = vmax.f32 %v3377, 0.0
        %v4261 = vmax.f32 %v3568, 0.0
        %v4262 = vmax.f32 %v3570, 0.0
        %v4263 = vmax.f32 %v3761, 0.0
        %v4264 = vmax.f32 %v3763, 0.0
        %v4265 = vmax.f32 %v2414, 0.0
        %v4266 = vmax.f32 %v2416, 0.0
        %v4267 = vmax.f32 %v2607, 0.0
        %v4268 = vmax.f32 %v2609, 0.0
        %v4269 = vmax.f32 %v2800, 0.0
        %v4270 = vmax.f32 %v2802, 0.0
        %v4271 = vmax.f32 %v2993, 0.0
        %v4272 = vmax.f32 %v2995, 0.0
        %v4273 = vmax.f32 %v3186, 0.0
        %v4274 = vmax.f32 %v3188, 0.0
        %v4275 = vmax.f32 %v3379, 0.0
        %v4276 = vmax.f32 %v3381, 0.0
        %v4277 = vmax.f32 %v3572, 0.0
        %v4278 = vmax.f32 %v3574, 0.0
        %v4279 = vmax.f32 %v3765, 0.0
        %v4280 = vmax.f32 %v3767, 0.0
        %v4281 = vpack.c.bf16 %v3785, %v3769
        %v4282 = vpack.c.bf16 %v3786, %v3770
        %v4283 = vpack.c.bf16 %v3787, %v3771
        %v4284 = vpack.c.bf16 %v3788, %v3772
        %v4285 = vpack.c.bf16 %v3789, %v3773
        %v4286 = vpack.c.bf16 %v3790, %v3774
        %v4287 = vpack.c.bf16 %v3791, %v3775
        %v4288 = vpack.c.bf16 %v3792, %v3776
        %v4289 = vpack.c.bf16 %v3793, %v3777
        %v4290 = vpack.c.bf16 %v3794, %v3778
        %v4291 = vpack.c.bf16 %v3795, %v3779
        %v4292 = vpack.c.bf16 %v3796, %v3780
        %v4293 = vpack.c.bf16 %v3797, %v3781
        %v4294 = vpack.c.bf16 %v3798, %v3782
        %v4295 = vpack.c.bf16 %v3799, %v3783
        %v4296 = vpack.c.bf16 %v3800, %v3784
        %v4297 = vpack.c.bf16 %v3817, %v3801
        %v4298 = vpack.c.bf16 %v3818, %v3802
        %v4299 = vpack.c.bf16 %v3819, %v3803
        %v4300 = vpack.c.bf16 %v3820, %v3804
        %v4301 = vpack.c.bf16 %v3821, %v3805
        %v4302 = vpack.c.bf16 %v3822, %v3806
        %v4303 = vpack.c.bf16 %v3823, %v3807
        %v4304 = vpack.c.bf16 %v3824, %v3808
        %v4305 = vpack.c.bf16 %v3825, %v3809
        %v4306 = vpack.c.bf16 %v3826, %v3810
        %v4307 = vpack.c.bf16 %v3827, %v3811
        %v4308 = vpack.c.bf16 %v3828, %v3812
        %v4309 = vpack.c.bf16 %v3829, %v3813
        %v4310 = vpack.c.bf16 %v3830, %v3814
        %v4311 = vpack.c.bf16 %v3831, %v3815
        %v4312 = vpack.c.bf16 %v3832, %v3816
        %v4313 = vpack.c.bf16 %v3849, %v3833
        %v4314 = vpack.c.bf16 %v3850, %v3834
        %v4315 = vpack.c.bf16 %v3851, %v3835
        %v4316 = vpack.c.bf16 %v3852, %v3836
        %v4317 = vpack.c.bf16 %v3853, %v3837
        %v4318 = vpack.c.bf16 %v3854, %v3838
        %v4319 = vpack.c.bf16 %v3855, %v3839
        %v4320 = vpack.c.bf16 %v3856, %v3840
        %v4321 = vpack.c.bf16 %v3857, %v3841
        %v4322 = vpack.c.bf16 %v3858, %v3842
        %v4323 = vpack.c.bf16 %v3859, %v3843
        %v4324 = vpack.c.bf16 %v3860, %v3844
        %v4325 = vpack.c.bf16 %v3861, %v3845
        %v4326 = vpack.c.bf16 %v3862, %v3846
        %v4327 = vpack.c.bf16 %v3863, %v3847
        %v4328 = vpack.c.bf16 %v3864, %v3848
        %v4329 = vpack.c.bf16 %v3881, %v3865
        %v4330 = vpack.c.bf16 %v3882, %v3866
        %v4331 = vpack.c.bf16 %v3883, %v3867
        %v4332 = vpack.c.bf16 %v3884, %v3868
        %v4333 = vpack.c.bf16 %v3885, %v3869
        %v4334 = vpack.c.bf16 %v3886, %v3870
        %v4335 = vpack.c.bf16 %v3887, %v3871
        %v4336 = vpack.c.bf16 %v3888, %v3872
        %v4337 = vpack.c.bf16 %v3889, %v3873
        %v4338 = vpack.c.bf16 %v3890, %v3874
        %v4339 = vpack.c.bf16 %v3891, %v3875
        %v4340 = vpack.c.bf16 %v3892, %v3876
        %v4341 = vpack.c.bf16 %v3893, %v3877
        %v4342 = vpack.c.bf16 %v3894, %v3878
        %v4343 = vpack.c.bf16 %v3895, %v3879
        %v4344 = vpack.c.bf16 %v3896, %v3880
        %v4345 = vpack.c.bf16 %v3913, %v3897
        %v4346 = vpack.c.bf16 %v3914, %v3898
        %v4347 = vpack.c.bf16 %v3915, %v3899
        %v4348 = vpack.c.bf16 %v3916, %v3900
        %v4349 = vpack.c.bf16 %v3917, %v3901
        %v4350 = vpack.c.bf16 %v3918, %v3902
        %v4351 = vpack.c.bf16 %v3919, %v3903
        %v4352 = vpack.c.bf16 %v3920, %v3904
        %v4353 = vpack.c.bf16 %v3921, %v3905
        %v4354 = vpack.c.bf16 %v3922, %v3906
        %v4355 = vpack.c.bf16 %v3923, %v3907
        %v4356 = vpack.c.bf16 %v3924, %v3908
        %v4357 = vpack.c.bf16 %v3925, %v3909
        %v4358 = vpack.c.bf16 %v3926, %v3910
        %v4359 = vpack.c.bf16 %v3927, %v3911
        %v4360 = vpack.c.bf16 %v3928, %v3912
        %v4361 = vpack.c.bf16 %v3945, %v3929
        %v4362 = vpack.c.bf16 %v3946, %v3930
        %v4363 = vpack.c.bf16 %v3947, %v3931
        %v4364 = vpack.c.bf16 %v3948, %v3932
        %v4365 = vpack.c.bf16 %v3949, %v3933
        %v4366 = vpack.c.bf16 %v3950, %v3934
        %v4367 = vpack.c.bf16 %v3951, %v3935
        %v4368 = vpack.c.bf16 %v3952, %v3936
        %v4369 = vpack.c.bf16 %v3953, %v3937
        %v4370 = vpack.c.bf16 %v3954, %v3938
        %v4371 = vpack.c.bf16 %v3955, %v3939
        %v4372 = vpack.c.bf16 %v3956, %v3940
        %v4373 = vpack.c.bf16 %v3957, %v3941
        %v4374 = vpack.c.bf16 %v3958, %v3942
        %v4375 = vpack.c.bf16 %v3959, %v3943
        %v4376 = vpack.c.bf16 %v3960, %v3944
        %v4377 = vpack.c.bf16 %v3977, %v3961
        %v4378 = vpack.c.bf16 %v3978, %v3962
        %v4379 = vpack.c.bf16 %v3979, %v3963
        %v4380 = vpack.c.bf16 %v3980, %v3964
        %v4381 = vpack.c.bf16 %v3981, %v3965
        %v4382 = vpack.c.bf16 %v3982, %v3966
        %v4383 = vpack.c.bf16 %v3983, %v3967
        %v4384 = vpack.c.bf16 %v3984, %v3968
        %v4385 = vpack.c.bf16 %v3985, %v3969
        %v4386 = vpack.c.bf16 %v3986, %v3970
        %v4387 = vpack.c.bf16 %v3987, %v3971
        %v4388 = vpack.c.bf16 %v3988, %v3972
        %v4389 = vpack.c.bf16 %v3989, %v3973
        %v4390 = vpack.c.bf16 %v3990, %v3974
        %v4391 = vpack.c.bf16 %v3991, %v3975
        %v4392 = vpack.c.bf16 %v3992, %v3976
        %v4393 = vpack.c.bf16 %v4009, %v3993
        %v4394 = vpack.c.bf16 %v4010, %v3994
        %v4395 = vpack.c.bf16 %v4011, %v3995
        %v4396 = vpack.c.bf16 %v4012, %v3996
        %v4397 = vpack.c.bf16 %v4013, %v3997
        %v4398 = vpack.c.bf16 %v4014, %v3998
        %v4399 = vpack.c.bf16 %v4015, %v3999
        %v4400 = vpack.c.bf16 %v4016, %v4000
        %v4401 = vpack.c.bf16 %v4017, %v4001
        %v4402 = vpack.c.bf16 %v4018, %v4002
        %v4403 = vpack.c.bf16 %v4019, %v4003
        %v4404 = vpack.c.bf16 %v4020, %v4004
        %v4405 = vpack.c.bf16 %v4021, %v4005
        %v4406 = vpack.c.bf16 %v4022, %v4006
        %v4407 = vpack.c.bf16 %v4023, %v4007
        %v4408 = vpack.c.bf16 %v4024, %v4008
        %v4409 = vpack.c.bf16 %v4041, %v4025
        %v4410 = vpack.c.bf16 %v4042, %v4026
        %v4411 = vpack.c.bf16 %v4043, %v4027
        %v4412 = vpack.c.bf16 %v4044, %v4028
        %v4413 = vpack.c.bf16 %v4045, %v4029
        %v4414 = vpack.c.bf16 %v4046, %v4030
        %v4415 = vpack.c.bf16 %v4047, %v4031
        %v4416 = vpack.c.bf16 %v4048, %v4032
        %v4417 = vpack.c.bf16 %v4049, %v4033
        %v4418 = vpack.c.bf16 %v4050, %v4034
        %v4419 = vpack.c.bf16 %v4051, %v4035
        %v4420 = vpack.c.bf16 %v4052, %v4036
        %v4421 = vpack.c.bf16 %v4053, %v4037
        %v4422 = vpack.c.bf16 %v4054, %v4038
        %v4423 = vpack.c.bf16 %v4055, %v4039
        %v4424 = vpack.c.bf16 %v4056, %v4040
        %v4425 = vpack.c.bf16 %v4073, %v4057
        %v4426 = vpack.c.bf16 %v4074, %v4058
        %v4427 = vpack.c.bf16 %v4075, %v4059
        %v4428 = vpack.c.bf16 %v4076, %v4060
        %v4429 = vpack.c.bf16 %v4077, %v4061
        %v4430 = vpack.c.bf16 %v4078, %v4062
        %v4431 = vpack.c.bf16 %v4079, %v4063
        %v4432 = vpack.c.bf16 %v4080, %v4064
        %v4433 = vpack.c.bf16 %v4081, %v4065
        %v4434 = vpack.c.bf16 %v4082, %v4066
        %v4435 = vpack.c.bf16 %v4083, %v4067
        %v4436 = vpack.c.bf16 %v4084, %v4068
        %v4437 = vpack.c.bf16 %v4085, %v4069
        %v4438 = vpack.c.bf16 %v4086, %v4070
        %v4439 = vpack.c.bf16 %v4087, %v4071
        %v4440 = vpack.c.bf16 %v4088, %v4072
        %v4441 = vpack.c.bf16 %v4105, %v4089
        %v4442 = vpack.c.bf16 %v4106, %v4090
        %v4443 = vpack.c.bf16 %v4107, %v4091
        %v4444 = vpack.c.bf16 %v4108, %v4092
        %v4445 = vpack.c.bf16 %v4109, %v4093
        %v4446 = vpack.c.bf16 %v4110, %v4094
        %v4447 = vpack.c.bf16 %v4111, %v4095
        %v4448 = vpack.c.bf16 %v4112, %v4096
        %v4449 = vpack.c.bf16 %v4113, %v4097
        %v4450 = vpack.c.bf16 %v4114, %v4098
        %v4451 = vpack.c.bf16 %v4115, %v4099
        %v4452 = vpack.c.bf16 %v4116, %v4100
        %v4453 = vpack.c.bf16 %v4117, %v4101
        %v4454 = vpack.c.bf16 %v4118, %v4102
        %v4455 = vpack.c.bf16 %v4119, %v4103
        %v4456 = vpack.c.bf16 %v4120, %v4104
        %v4457 = vpack.c.bf16 %v4137, %v4121
        %v4458 = vpack.c.bf16 %v4138, %v4122
        %v4459 = vpack.c.bf16 %v4139, %v4123
        %v4460 = vpack.c.bf16 %v4140, %v4124
        %v4461 = vpack.c.bf16 %v4141, %v4125
        %v4462 = vpack.c.bf16 %v4142, %v4126
        %v4463 = vpack.c.bf16 %v4143, %v4127
        %v4464 = vpack.c.bf16 %v4144, %v4128
        %v4465 = vpack.c.bf16 %v4145, %v4129
        %v4466 = vpack.c.bf16 %v4146, %v4130
        %v4467 = vpack.c.bf16 %v4147, %v4131
        %v4468 = vpack.c.bf16 %v4148, %v4132
        %v4469 = vpack.c.bf16 %v4149, %v4133
        %v4470 = vpack.c.bf16 %v4150, %v4134
        %v4471 = vpack.c.bf16 %v4151, %v4135
        %v4472 = vpack.c.bf16 %v4152, %v4136
        %v4473 = vpack.c.bf16 %v4169, %v4153
        %v4474 = vpack.c.bf16 %v4170, %v4154
        %v4475 = vpack.c.bf16 %v4171, %v4155
        %v4476 = vpack.c.bf16 %v4172, %v4156
        %v4477 = vpack.c.bf16 %v4173, %v4157
        %v4478 = vpack.c.bf16 %v4174, %v4158
        %v4479 = vpack.c.bf16 %v4175, %v4159
        %v4480 = vpack.c.bf16 %v4176, %v4160
        %v4481 = vpack.c.bf16 %v4177, %v4161
        %v4482 = vpack.c.bf16 %v4178, %v4162
        %v4483 = vpack.c.bf16 %v4179, %v4163
        %v4484 = vpack.c.bf16 %v4180, %v4164
        %v4485 = vpack.c.bf16 %v4181, %v4165
        %v4486 = vpack.c.bf16 %v4182, %v4166
        %v4487 = vpack.c.bf16 %v4183, %v4167
        %v4488 = vpack.c.bf16 %v4184, %v4168
        %v4489 = vpack.c.bf16 %v4201, %v4185
        %v4490 = vpack.c.bf16 %v4202, %v4186
        %v4491 = vpack.c.bf16 %v4203, %v4187
        %v4492 = vpack.c.bf16 %v4204, %v4188
        %v4493 = vpack.c.bf16 %v4205, %v4189
        %v4494 = vpack.c.bf16 %v4206, %v4190
        %v4495 = vpack.c.bf16 %v4207, %v4191
        %v4496 = vpack.c.bf16 %v4208, %v4192
        %v4497 = vpack.c.bf16 %v4209, %v4193
        %v4498 = vpack.c.bf16 %v4210, %v4194
        %v4499 = vpack.c.bf16 %v4211, %v4195
        %v4500 = vpack.c.bf16 %v4212, %v4196
        %v4501 = vpack.c.bf16 %v4213, %v4197
        %v4502 = vpack.c.bf16 %v4214, %v4198
        %v4503 = vpack.c.bf16 %v4215, %v4199
        %v4504 = vpack.c.bf16 %v4216, %v4200
        %v4505 = vpack.c.bf16 %v4233, %v4217
        %v4506 = vpack.c.bf16 %v4234, %v4218
        %v4507 = vpack.c.bf16 %v4235, %v4219
        %v4508 = vpack.c.bf16 %v4236, %v4220
        %v4509 = vpack.c.bf16 %v4237, %v4221
        %v4510 = vpack.c.bf16 %v4238, %v4222
        %v4511 = vpack.c.bf16 %v4239, %v4223
        %v4512 = vpack.c.bf16 %v4240, %v4224
        %v4513 = vpack.c.bf16 %v4241, %v4225
        %v4514 = vpack.c.bf16 %v4242, %v4226
        %v4515 = vpack.c.bf16 %v4243, %v4227
        %v4516 = vpack.c.bf16 %v4244, %v4228
        %v4517 = vpack.c.bf16 %v4245, %v4229
        %v4518 = vpack.c.bf16 %v4246, %v4230
        %v4519 = vpack.c.bf16 %v4247, %v4231
        %v4520 = vpack.c.bf16 %v4248, %v4232
        %v4521 = vpack.c.bf16 %v4265, %v4249
        %v4522 = vpack.c.bf16 %v4266, %v4250
        %v4523 = vpack.c.bf16 %v4267, %v4251
        %v4524 = vpack.c.bf16 %v4268, %v4252
        %v4525 = vpack.c.bf16 %v4269, %v4253
        %v4526 = vpack.c.bf16 %v4270, %v4254
        %v4527 = vpack.c.bf16 %v4271, %v4255
        %v4528 = vpack.c.bf16 %v4272, %v4256
        %v4529 = vpack.c.bf16 %v4273, %v4257
        %v4530 = vpack.c.bf16 %v4274, %v4258
        %v4531 = vpack.c.bf16 %v4275, %v4259
        %v4532 = vpack.c.bf16 %v4276, %v4260
        %v4533 = vpack.c.bf16 %v4277, %v4261
        %v4534 = vpack.c.bf16 %v4278, %v4262
        %v4535 = vpack.c.bf16 %v4279, %v4263
        %v4536 = vpack.c.bf16 %v4280, %v4264
        %4537 = vst [vmem:[#allocation2] sm:$0xff] %v4281
        %4538 = vst [vmem:[#allocation2 + $0x8] sm:$0xff] %v4282
        %4539 = vst [vmem:[#allocation2 + $0x10] sm:$0xff] %v4283
        %4540 = vst [vmem:[#allocation2 + $0x18] sm:$0xff] %v4284
        %4541 = vst [vmem:[#allocation2 + $0x20] sm:$0xff] %v4285
        %4542 = vst [vmem:[#allocation2 + $0x28] sm:$0xff] %v4286
        %4543 = vst [vmem:[#allocation2 + $0x30] sm:$0xff] %v4287
        %4544 = vst [vmem:[#allocation2 + $0x38] sm:$0xff] %v4288
        %4545 = vst [vmem:[#allocation2 + $0x40] sm:$0xff] %v4289
        %4546 = vst [vmem:[#allocation2 + $0x48] sm:$0xff] %v4290
        %4547 = vst [vmem:[#allocation2 + $0x50] sm:$0xff] %v4291
        %4548 = vst [vmem:[#allocation2 + $0x58] sm:$0xff] %v4292
        %4549 = vst [vmem:[#allocation2 + $0x60] sm:$0xff] %v4293
        %4550 = vst [vmem:[#allocation2 + $0x68] sm:$0xff] %v4294
        %4551 = vst [vmem:[#allocation2 + $0x70] sm:$0xff] %v4295
        %4552 = vst [vmem:[#allocation2 + $0x78] sm:$0xff] %v4296
        %4553 = vst [vmem:[#allocation2 + $0x80] sm:$0xff] %v4297
        %4554 = vst [vmem:[#allocation2 + $0x88] sm:$0xff] %v4298
        %4555 = vst [vmem:[#allocation2 + $0x90] sm:$0xff] %v4299
        %4556 = vst [vmem:[#allocation2 + $0x98] sm:$0xff] %v4300
        %4557 = vst [vmem:[#allocation2 + $0xa0] sm:$0xff] %v4301
        %4558 = vst [vmem:[#allocation2 + $0xa8] sm:$0xff] %v4302
        %4559 = vst [vmem:[#allocation2 + $0xb0] sm:$0xff] %v4303
        %4560 = vst [vmem:[#allocation2 + $0xb8] sm:$0xff] %v4304
        %4561 = vst [vmem:[#allocation2 + $0xc0] sm:$0xff] %v4305
        %4562 = vst [vmem:[#allocation2 + $0xc8] sm:$0xff] %v4306
        %4563 = vst [vmem:[#allocation2 + $0xd0] sm:$0xff] %v4307
        %4564 = vst [vmem:[#allocation2 + $0xd8] sm:$0xff] %v4308
        %4565 = vst [vmem:[#allocation2 + $0xe0] sm:$0xff] %v4309
        %4566 = vst [vmem:[#allocation2 + $0xe8] sm:$0xff] %v4310
        %4567 = vst [vmem:[#allocation2 + $0xf0] sm:$0xff] %v4311
        %4568 = vst [vmem:[#allocation2 + $0xf8] sm:$0xff] %v4312
        %4569 = vst [vmem:[#allocation2 + $0x100] sm:$0xff] %v4313
        %4570 = vst [vmem:[#allocation2 + $0x108] sm:$0xff] %v4314
        %4571 = vst [vmem:[#allocation2 + $0x110] sm:$0xff] %v4315
        %4572 = vst [vmem:[#allocation2 + $0x118] sm:$0xff] %v4316
        %4573 = vst [vmem:[#allocation2 + $0x120] sm:$0xff] %v4317
        %4574 = vst [vmem:[#allocation2 + $0x128] sm:$0xff] %v4318
        %4575 = vst [vmem:[#allocation2 + $0x130] sm:$0xff] %v4319
        %4576 = vst [vmem:[#allocation2 + $0x138] sm:$0xff] %v4320
        %4577 = vst [vmem:[#allocation2 + $0x140] sm:$0xff] %v4321
        %4578 = vst [vmem:[#allocation2 + $0x148] sm:$0xff] %v4322
        %4579 = vst [vmem:[#allocation2 + $0x150] sm:$0xff] %v4323
        %4580 = vst [vmem:[#allocation2 + $0x158] sm:$0xff] %v4324
        %4581 = vst [vmem:[#allocation2 + $0x160] sm:$0xff] %v4325
        %4582 = vst [vmem:[#allocation2 + $0x168] sm:$0xff] %v4326
        %4583 = vst [vmem:[#allocation2 + $0x170] sm:$0xff] %v4327
        %4584 = vst [vmem:[#allocation2 + $0x178] sm:$0xff] %v4328
        %4585 = vst [vmem:[#allocation2 + $0x180] sm:$0xff] %v4329
        %4586 = vst [vmem:[#allocation2 + $0x188] sm:$0xff] %v4330
        %4587 = vst [vmem:[#allocation2 + $0x190] sm:$0xff] %v4331
        %4588 = vst [vmem:[#allocation2 + $0x198] sm:$0xff] %v4332
        %4589 = vst [vmem:[#allocation2 + $0x1a0] sm:$0xff] %v4333
        %4590 = vst [vmem:[#allocation2 + $0x1a8] sm:$0xff] %v4334
        %4591 = vst [vmem:[#allocation2 + $0x1b0] sm:$0xff] %v4335
        %4592 = vst [vmem:[#allocation2 + $0x1b8] sm:$0xff] %v4336
        %4593 = vst [vmem:[#allocation2 + $0x1c0] sm:$0xff] %v4337
        %4594 = vst [vmem:[#allocation2 + $0x1c8] sm:$0xff] %v4338
        %4595 = vst [vmem:[#allocation2 + $0x1d0] sm:$0xff] %v4339
        %4596 = vst [vmem:[#allocation2 + $0x1d8] sm:$0xff] %v4340
        %4597 = vst [vmem:[#allocation2 + $0x1e0] sm:$0xff] %v4341
        %4598 = vst [vmem:[#allocation2 + $0x1e8] sm:$0xff] %v4342
        %4599 = vst [vmem:[#allocation2 + $0x1f0] sm:$0xff] %v4343
        %4600 = vst [vmem:[#allocation2 + $0x1f8] sm:$0xff] %v4344
        %4601 = vst [vmem:[#allocation2 + $0x200] sm:$0xff] %v4345
        %4602 = vst [vmem:[#allocation2 + $0x208] sm:$0xff] %v4346
        %4603 = vst [vmem:[#allocation2 + $0x210] sm:$0xff] %v4347
        %4604 = vst [vmem:[#allocation2 + $0x218] sm:$0xff] %v4348
        %4605 = vst [vmem:[#allocation2 + $0x220] sm:$0xff] %v4349
        %4606 = vst [vmem:[#allocation2 + $0x228] sm:$0xff] %v4350
        %4607 = vst [vmem:[#allocation2 + $0x230] sm:$0xff] %v4351
        %4608 = vst [vmem:[#allocation2 + $0x238] sm:$0xff] %v4352
        %4609 = vst [vmem:[#allocation2 + $0x240] sm:$0xff] %v4353
        %4610 = vst [vmem:[#allocation2 + $0x248] sm:$0xff] %v4354
        %4611 = vst [vmem:[#allocation2 + $0x250] sm:$0xff] %v4355
        %4612 = vst [vmem:[#allocation2 + $0x258] sm:$0xff] %v4356
        %4613 = vst [vmem:[#allocation2 + $0x260] sm:$0xff] %v4357
        %4614 = vst [vmem:[#allocation2 + $0x268] sm:$0xff] %v4358
        %4615 = vst [vmem:[#allocation2 + $0x270] sm:$0xff] %v4359
        %4616 = vst [vmem:[#allocation2 + $0x278] sm:$0xff] %v4360
        %4617 = vst [vmem:[#allocation2 + $0x280] sm:$0xff] %v4361
        %4618 = vst [vmem:[#allocation2 + $0x288] sm:$0xff] %v4362
        %4619 = vst [vmem:[#allocation2 + $0x290] sm:$0xff] %v4363
        %4620 = vst [vmem:[#allocation2 + $0x298] sm:$0xff] %v4364
        %4621 = vst [vmem:[#allocation2 + $0x2a0] sm:$0xff] %v4365
        %4622 = vst [vmem:[#allocation2 + $0x2a8] sm:$0xff] %v4366
        %4623 = vst [vmem:[#allocation2 + $0x2b0] sm:$0xff] %v4367
        %4624 = vst [vmem:[#allocation2 + $0x2b8] sm:$0xff] %v4368
        %4625 = vst [vmem:[#allocation2 + $0x2c0] sm:$0xff] %v4369
        %4626 = vst [vmem:[#allocation2 + $0x2c8] sm:$0xff] %v4370
        %4627 = vst [vmem:[#allocation2 + $0x2d0] sm:$0xff] %v4371
        %4628 = vst [vmem:[#allocation2 + $0x2d8] sm:$0xff] %v4372
        %4629 = vst [vmem:[#allocation2 + $0x2e0] sm:$0xff] %v4373
        %4630 = vst [vmem:[#allocation2 + $0x2e8] sm:$0xff] %v4374
        %4631 = vst [vmem:[#allocation2 + $0x2f0] sm:$0xff] %v4375
        %4632 = vst [vmem:[#allocation2 + $0x2f8] sm:$0xff] %v4376
        %4633 = vst [vmem:[#allocation2 + $0x300] sm:$0xff] %v4377
        %4634 = vst [vmem:[#allocation2 + $0x308] sm:$0xff] %v4378
        %4635 = vst [vmem:[#allocation2 + $0x310] sm:$0xff] %v4379
        %4636 = vst [vmem:[#allocation2 + $0x318] sm:$0xff] %v4380
        %4637 = vst [vmem:[#allocation2 + $0x320] sm:$0xff] %v4381
        %4638 = vst [vmem:[#allocation2 + $0x328] sm:$0xff] %v4382
        %4639 = vst [vmem:[#allocation2 + $0x330] sm:$0xff] %v4383
        %4640 = vst [vmem:[#allocation2 + $0x338] sm:$0xff] %v4384
        %4641 = vst [vmem:[#allocation2 + $0x340] sm:$0xff] %v4385
        %4642 = vst [vmem:[#allocation2 + $0x348] sm:$0xff] %v4386
        %4643 = vst [vmem:[#allocation2 + $0x350] sm:$0xff] %v4387
        %4644 = vst [vmem:[#allocation2 + $0x358] sm:$0xff] %v4388
        %4645 = vst [vmem:[#allocation2 + $0x360] sm:$0xff] %v4389
        %4646 = vst [vmem:[#allocation2 + $0x368] sm:$0xff] %v4390
        %4647 = vst [vmem:[#allocation2 + $0x370] sm:$0xff] %v4391
        %4648 = vst [vmem:[#allocation2 + $0x378] sm:$0xff] %v4392
        %4649 = vst [vmem:[#allocation2 + $0x380] sm:$0xff] %v4393
        %4650 = vst [vmem:[#allocation2 + $0x388] sm:$0xff] %v4394
        %4651 = vst [vmem:[#allocation2 + $0x390] sm:$0xff] %v4395
        %4652 = vst [vmem:[#allocation2 + $0x398] sm:$0xff] %v4396
        %4653 = vst [vmem:[#allocation2 + $0x3a0] sm:$0xff] %v4397
        %4654 = vst [vmem:[#allocation2 + $0x3a8] sm:$0xff] %v4398
        %4655 = vst [vmem:[#allocation2 + $0x3b0] sm:$0xff] %v4399
        %4656 = vst [vmem:[#allocation2 + $0x3b8] sm:$0xff] %v4400
        %4657 = vst [vmem:[#allocation2 + $0x3c0] sm:$0xff] %v4401
        %4658 = vst [vmem:[#allocation2 + $0x3c8] sm:$0xff] %v4402
        %4659 = vst [vmem:[#allocation2 + $0x3d0] sm:$0xff] %v4403
        %4660 = vst [vmem:[#allocation2 + $0x3d8] sm:$0xff] %v4404
        %4661 = vst [vmem:[#allocation2 + $0x3e0] sm:$0xff] %v4405
        %4662 = vst [vmem:[#allocation2 + $0x3e8] sm:$0xff] %v4406
        %4663 = vst [vmem:[#allocation2 + $0x3f0] sm:$0xff] %v4407
        %4664 = vst [vmem:[#allocation2 + $0x3f8] sm:$0xff] %v4408
        %4665 = vst [vmem:[#allocation2 + $0x400] sm:$0xff] %v4409
        %4666 = vst [vmem:[#allocation2 + $0x408] sm:$0xff] %v4410
        %4667 = vst [vmem:[#allocation2 + $0x410] sm:$0xff] %v4411
        %4668 = vst [vmem:[#allocation2 + $0x418] sm:$0xff] %v4412
        %4669 = vst [vmem:[#allocation2 + $0x420] sm:$0xff] %v4413
        %4670 = vst [vmem:[#allocation2 + $0x428] sm:$0xff] %v4414
        %4671 = vst [vmem:[#allocation2 + $0x430] sm:$0xff] %v4415
        %4672 = vst [vmem:[#allocation2 + $0x438] sm:$0xff] %v4416
        %4673 = vst [vmem:[#allocation2 + $0x440] sm:$0xff] %v4417
        %4674 = vst [vmem:[#allocation2 + $0x448] sm:$0xff] %v4418
        %4675 = vst [vmem:[#allocation2 + $0x450] sm:$0xff] %v4419
        %4676 = vst [vmem:[#allocation2 + $0x458] sm:$0xff] %v4420
        %4677 = vst [vmem:[#allocation2 + $0x460] sm:$0xff] %v4421
        %4678 = vst [vmem:[#allocation2 + $0x468] sm:$0xff] %v4422
        %4679 = vst [vmem:[#allocation2 + $0x470] sm:$0xff] %v4423
        %4680 = vst [vmem:[#allocation2 + $0x478] sm:$0xff] %v4424
        %4681 = vst [vmem:[#allocation2 + $0x480] sm:$0xff] %v4425
        %4682 = vst [vmem:[#allocation2 + $0x488] sm:$0xff] %v4426
        %4683 = vst [vmem:[#allocation2 + $0x490] sm:$0xff] %v4427
        %4684 = vst [vmem:[#allocation2 + $0x498] sm:$0xff] %v4428
        %4685 = vst [vmem:[#allocation2 + $0x4a0] sm:$0xff] %v4429
        %4686 = vst [vmem:[#allocation2 + $0x4a8] sm:$0xff] %v4430
        %4687 = vst [vmem:[#allocation2 + $0x4b0] sm:$0xff] %v4431
        %4688 = vst [vmem:[#allocation2 + $0x4b8] sm:$0xff] %v4432
        %4689 = vst [vmem:[#allocation2 + $0x4c0] sm:$0xff] %v4433
        %4690 = vst [vmem:[#allocation2 + $0x4c8] sm:$0xff] %v4434
        %4691 = vst [vmem:[#allocation2 + $0x4d0] sm:$0xff] %v4435
        %4692 = vst [vmem:[#allocation2 + $0x4d8] sm:$0xff] %v4436
        %4693 = vst [vmem:[#allocation2 + $0x4e0] sm:$0xff] %v4437
        %4694 = vst [vmem:[#allocation2 + $0x4e8] sm:$0xff] %v4438
        %4695 = vst [vmem:[#allocation2 + $0x4f0] sm:$0xff] %v4439
        %4696 = vst [vmem:[#allocation2 + $0x4f8] sm:$0xff] %v4440
        %4697 = vst [vmem:[#allocation2 + $0x500] sm:$0xff] %v4441
        %4698 = vst [vmem:[#allocation2 + $0x508] sm:$0xff] %v4442
        %4699 = vst [vmem:[#allocation2 + $0x510] sm:$0xff] %v4443
        %4700 = vst [vmem:[#allocation2 + $0x518] sm:$0xff] %v4444
        %4701 = vst [vmem:[#allocation2 + $0x520] sm:$0xff] %v4445
        %4702 = vst [vmem:[#allocation2 + $0x528] sm:$0xff] %v4446
        %4703 = vst [vmem:[#allocation2 + $0x530] sm:$0xff] %v4447
        %4704 = vst [vmem:[#allocation2 + $0x538] sm:$0xff] %v4448
        %4705 = vst [vmem:[#allocation2 + $0x540] sm:$0xff] %v4449
        %4706 = vst [vmem:[#allocation2 + $0x548] sm:$0xff] %v4450
        %4707 = vst [vmem:[#allocation2 + $0x550] sm:$0xff] %v4451
        %4708 = vst [vmem:[#allocation2 + $0x558] sm:$0xff] %v4452
        %4709 = vst [vmem:[#allocation2 + $0x560] sm:$0xff] %v4453
        %4710 = vst [vmem:[#allocation2 + $0x568] sm:$0xff] %v4454
        %4711 = vst [vmem:[#allocation2 + $0x570] sm:$0xff] %v4455
        %4712 = vst [vmem:[#allocation2 + $0x578] sm:$0xff] %v4456
        %4713 = vst [vmem:[#allocation2 + $0x580] sm:$0xff] %v4457
        %4714 = vst [vmem:[#allocation2 + $0x588] sm:$0xff] %v4458
        %4715 = vst [vmem:[#allocation2 + $0x590] sm:$0xff] %v4459
        %4716 = vst [vmem:[#allocation2 + $0x598] sm:$0xff] %v4460
        %4717 = vst [vmem:[#allocation2 + $0x5a0] sm:$0xff] %v4461
        %4718 = vst [vmem:[#allocation2 + $0x5a8] sm:$0xff] %v4462
        %4719 = vst [vmem:[#allocation2 + $0x5b0] sm:$0xff] %v4463
        %4720 = vst [vmem:[#allocation2 + $0x5b8] sm:$0xff] %v4464
        %4721 = vst [vmem:[#allocation2 + $0x5c0] sm:$0xff] %v4465
        %4722 = vst [vmem:[#allocation2 + $0x5c8] sm:$0xff] %v4466
        %4723 = vst [vmem:[#allocation2 + $0x5d0] sm:$0xff] %v4467
        %4724 = vst [vmem:[#allocation2 + $0x5d8] sm:$0xff] %v4468
        %4725 = vst [vmem:[#allocation2 + $0x5e0] sm:$0xff] %v4469
        %4726 = vst [vmem:[#allocation2 + $0x5e8] sm:$0xff] %v4470
        %4727 = vst [vmem:[#allocation2 + $0x5f0] sm:$0xff] %v4471
        %4728 = vst [vmem:[#allocation2 + $0x5f8] sm:$0xff] %v4472
        %4729 = vst [vmem:[#allocation2 + $0x600] sm:$0xff] %v4473
        %4730 = vst [vmem:[#allocation2 + $0x608] sm:$0xff] %v4474
        %4731 = vst [vmem:[#allocation2 + $0x610] sm:$0xff] %v4475
        %4732 = vst [vmem:[#allocation2 + $0x618] sm:$0xff] %v4476
        %4733 = vst [vmem:[#allocation2 + $0x620] sm:$0xff] %v4477
        %4734 = vst [vmem:[#allocation2 + $0x628] sm:$0xff] %v4478
        %4735 = vst [vmem:[#allocation2 + $0x630] sm:$0xff] %v4479
        %4736 = vst [vmem:[#allocation2 + $0x638] sm:$0xff] %v4480
        %4737 = vst [vmem:[#allocation2 + $0x640] sm:$0xff] %v4481
        %4738 = vst [vmem:[#allocation2 + $0x648] sm:$0xff] %v4482
        %4739 = vst [vmem:[#allocation2 + $0x650] sm:$0xff] %v4483
        %4740 = vst [vmem:[#allocation2 + $0x658] sm:$0xff] %v4484
        %4741 = vst [vmem:[#allocation2 + $0x660] sm:$0xff] %v4485
        %4742 = vst [vmem:[#allocation2 + $0x668] sm:$0xff] %v4486
        %4743 = vst [vmem:[#allocation2 + $0x670] sm:$0xff] %v4487
        %4744 = vst [vmem:[#allocation2 + $0x678] sm:$0xff] %v4488
        %4745 = vst [vmem:[#allocation2 + $0x680] sm:$0xff] %v4489
        %4746 = vst [vmem:[#allocation2 + $0x688] sm:$0xff] %v4490
        %4747 = vst [vmem:[#allocation2 + $0x690] sm:$0xff] %v4491
        %4748 = vst [vmem:[#allocation2 + $0x698] sm:$0xff] %v4492
        %4749 = vst [vmem:[#allocation2 + $0x6a0] sm:$0xff] %v4493
        %4750 = vst [vmem:[#allocation2 + $0x6a8] sm:$0xff] %v4494
        %4751 = vst [vmem:[#allocation2 + $0x6b0] sm:$0xff] %v4495
        %4752 = vst [vmem:[#allocation2 + $0x6b8] sm:$0xff] %v4496
        %4753 = vst [vmem:[#allocation2 + $0x6c0] sm:$0xff] %v4497
        %4754 = vst [vmem:[#allocation2 + $0x6c8] sm:$0xff] %v4498
        %4755 = vst [vmem:[#allocation2 + $0x6d0] sm:$0xff] %v4499
        %4756 = vst [vmem:[#allocation2 + $0x6d8] sm:$0xff] %v4500
        %4757 = vst [vmem:[#allocation2 + $0x6e0] sm:$0xff] %v4501
        %4758 = vst [vmem:[#allocation2 + $0x6e8] sm:$0xff] %v4502
        %4759 = vst [vmem:[#allocation2 + $0x6f0] sm:$0xff] %v4503
        %4760 = vst [vmem:[#allocation2 + $0x6f8] sm:$0xff] %v4504
        %4761 = vst [vmem:[#allocation2 + $0x700] sm:$0xff] %v4505
        %4762 = vst [vmem:[#allocation2 + $0x708] sm:$0xff] %v4506
        %4763 = vst [vmem:[#allocation2 + $0x710] sm:$0xff] %v4507
        %4764 = vst [vmem:[#allocation2 + $0x718] sm:$0xff] %v4508
        %4765 = vst [vmem:[#allocation2 + $0x720] sm:$0xff] %v4509
        %4766 = vst [vmem:[#allocation2 + $0x728] sm:$0xff] %v4510
        %4767 = vst [vmem:[#allocation2 + $0x730] sm:$0xff] %v4511
        %4768 = vst [vmem:[#allocation2 + $0x738] sm:$0xff] %v4512
        %4769 = vst [vmem:[#allocation2 + $0x740] sm:$0xff] %v4513
        %4770 = vst [vmem:[#allocation2 + $0x748] sm:$0xff] %v4514
        %4771 = vst [vmem:[#allocation2 + $0x750] sm:$0xff] %v4515
        %4772 = vst [vmem:[#allocation2 + $0x758] sm:$0xff] %v4516
        %4773 = vst [vmem:[#allocation2 + $0x760] sm:$0xff] %v4517
        %4774 = vst [vmem:[#allocation2 + $0x768] sm:$0xff] %v4518
        %4775 = vst [vmem:[#allocation2 + $0x770] sm:$0xff] %v4519
        %4776 = vst [vmem:[#allocation2 + $0x778] sm:$0xff] %v4520
        %4777 = vst [vmem:[#allocation2 + $0x780] sm:$0xff] %v4521
        %4778 = vst [vmem:[#allocation2 + $0x788] sm:$0xff] %v4522
        %4779 = vst [vmem:[#allocation2 + $0x790] sm:$0xff] %v4523
        %4780 = vst [vmem:[#allocation2 + $0x798] sm:$0xff] %v4524
        %4781 = vst [vmem:[#allocation2 + $0x7a0] sm:$0xff] %v4525
        %4782 = vst [vmem:[#allocation2 + $0x7a8] sm:$0xff] %v4526
        %4783 = vst [vmem:[#allocation2 + $0x7b0] sm:$0xff] %v4527
        %4784 = vst [vmem:[#allocation2 + $0x7b8] sm:$0xff] %v4528
        %4785 = vst [vmem:[#allocation2 + $0x7c0] sm:$0xff] %v4529
        %4786 = vst [vmem:[#allocation2 + $0x7c8] sm:$0xff] %v4530
        %4787 = vst [vmem:[#allocation2 + $0x7d0] sm:$0xff] %v4531
        %4788 = vst [vmem:[#allocation2 + $0x7d8] sm:$0xff] %v4532
        %4789 = vst [vmem:[#allocation2 + $0x7e0] sm:$0xff] %v4533
        %4790 = vst [vmem:[#allocation2 + $0x7e8] sm:$0xff] %v4534
        %4791 = vst [vmem:[#allocation2 + $0x7f0] sm:$0xff] %v4535
        %4792 = vst [vmem:[#allocation2 + $0x7f8] sm:$0xff] %v4536
        %v4793 = vld [vmem:[#allocation3] sm:$0xff]
        %v4794 = vld [vmem:[#allocation3 + $0x8] sm:$0xff]
        %v4795 = vld [vmem:[#allocation3 + $0x10] sm:$0xff]
        %v4796 = vld [vmem:[#allocation3 + $0x18] sm:$0xff]
        %v4797 = vld [vmem:[#allocation3 + $0x20] sm:$0xff]
        %v4798 = vld [vmem:[#allocation3 + $0x28] sm:$0xff]
        %v4799 = vld [vmem:[#allocation3 + $0x30] sm:$0xff]
        %v4800 = vld [vmem:[#allocation3 + $0x38] sm:$0xff]
        %v4801 = vld [vmem:[#allocation3 + $0x40] sm:$0xff]
        %v4802 = vld [vmem:[#allocation3 + $0x48] sm:$0xff]
        %v4803 = vld [vmem:[#allocation3 + $0x50] sm:$0xff]
        %v4804 = vld [vmem:[#allocation3 + $0x58] sm:$0xff]
        %v4805 = vld [vmem:[#allocation3 + $0x60] sm:$0xff]
        %v4806 = vld [vmem:[#allocation3 + $0x68] sm:$0xff]
        %v4807 = vld [vmem:[#allocation3 + $0x70] sm:$0xff]
        %v4808 = vld [vmem:[#allocation3 + $0x78] sm:$0xff]
        %v4809 = vld [vmem:[#allocation3 + $0x80] sm:$0xff]
        %v4810 = vld [vmem:[#allocation3 + $0x88] sm:$0xff]
        %v4811 = vld [vmem:[#allocation3 + $0x90] sm:$0xff]
        %v4812 = vld [vmem:[#allocation3 + $0x98] sm:$0xff]
        %v4813 = vld [vmem:[#allocation3 + $0xa0] sm:$0xff]
        %v4814 = vld [vmem:[#allocation3 + $0xa8] sm:$0xff]
        %v4815 = vld [vmem:[#allocation3 + $0xb0] sm:$0xff]
        %v4816 = vld [vmem:[#allocation3 + $0xb8] sm:$0xff]
        %v4817 = vld [vmem:[#allocation3 + $0xc0] sm:$0xff]
        %v4818 = vld [vmem:[#allocation3 + $0xc8] sm:$0xff]
        %v4819 = vld [vmem:[#allocation3 + $0xd0] sm:$0xff]
        %v4820 = vld [vmem:[#allocation3 + $0xd8] sm:$0xff]
        %v4821 = vld [vmem:[#allocation3 + $0xe0] sm:$0xff]
        %v4822 = vld [vmem:[#allocation3 + $0xe8] sm:$0xff]
        %v4823 = vld [vmem:[#allocation3 + $0xf0] sm:$0xff]
        %v4824 = vld [vmem:[#allocation3 + $0xf8] sm:$0xff]
        %v4825 = vld [vmem:[#allocation3 + $0x100] sm:$0xff]
        %v4826 = vld [vmem:[#allocation3 + $0x108] sm:$0xff]
        %v4827 = vld [vmem:[#allocation3 + $0x110] sm:$0xff]
        %v4828 = vld [vmem:[#allocation3 + $0x118] sm:$0xff]
        %v4829 = vld [vmem:[#allocation3 + $0x120] sm:$0xff]
        %v4830 = vld [vmem:[#allocation3 + $0x128] sm:$0xff]
        %v4831 = vld [vmem:[#allocation3 + $0x130] sm:$0xff]
        %v4832 = vld [vmem:[#allocation3 + $0x138] sm:$0xff]
        %v4833 = vld [vmem:[#allocation3 + $0x140] sm:$0xff]
        %v4834 = vld [vmem:[#allocation3 + $0x148] sm:$0xff]
        %v4835 = vld [vmem:[#allocation3 + $0x150] sm:$0xff]
        %v4836 = vld [vmem:[#allocation3 + $0x158] sm:$0xff]
        %v4837 = vld [vmem:[#allocation3 + $0x160] sm:$0xff]
        %v4838 = vld [vmem:[#allocation3 + $0x168] sm:$0xff]
        %v4839 = vld [vmem:[#allocation3 + $0x170] sm:$0xff]
        %v4840 = vld [vmem:[#allocation3 + $0x178] sm:$0xff]
        %v4841 = vld [vmem:[#allocation3 + $0x180] sm:$0xff]
        %v4842 = vld [vmem:[#allocation3 + $0x188] sm:$0xff]
        %v4843 = vld [vmem:[#allocation3 + $0x190] sm:$0xff]
        %v4844 = vld [vmem:[#allocation3 + $0x198] sm:$0xff]
        %v4845 = vld [vmem:[#allocation3 + $0x1a0] sm:$0xff]
        %v4846 = vld [vmem:[#allocation3 + $0x1a8] sm:$0xff]
        %v4847 = vld [vmem:[#allocation3 + $0x1b0] sm:$0xff]
        %v4848 = vld [vmem:[#allocation3 + $0x1b8] sm:$0xff]
        %v4849 = vld [vmem:[#allocation3 + $0x1c0] sm:$0xff]
        %v4850 = vld [vmem:[#allocation3 + $0x1c8] sm:$0xff]
        %v4851 = vld [vmem:[#allocation3 + $0x1d0] sm:$0xff]
        %v4852 = vld [vmem:[#allocation3 + $0x1d8] sm:$0xff]
        %v4853 = vld [vmem:[#allocation3 + $0x1e0] sm:$0xff]
        %v4854 = vld [vmem:[#allocation3 + $0x1e8] sm:$0xff]
        %v4855 = vld [vmem:[#allocation3 + $0x1f0] sm:$0xff]
        %v4856 = vld [vmem:[#allocation3 + $0x1f8] sm:$0xff]
        %v4857 = vld [vmem:[#allocation2] sm:$0xff]
        %v4858 = vld [vmem:[#allocation2 + $0x8] sm:$0xff]
        %v4859 = vld [vmem:[#allocation2 + $0x10] sm:$0xff]
        %v4860 = vld [vmem:[#allocation2 + $0x18] sm:$0xff]
        %v4861 = vld [vmem:[#allocation2 + $0x20] sm:$0xff]
        %v4862 = vld [vmem:[#allocation2 + $0x28] sm:$0xff]
        %v4863 = vld [vmem:[#allocation2 + $0x30] sm:$0xff]
        %v4864 = vld [vmem:[#allocation2 + $0x38] sm:$0xff]
        %v4865 = vld [vmem:[#allocation2 + $0x40] sm:$0xff]
        %v4866 = vld [vmem:[#allocation2 + $0x48] sm:$0xff]
        %v4867 = vld [vmem:[#allocation2 + $0x50] sm:$0xff]
        %v4868 = vld [vmem:[#allocation2 + $0x58] sm:$0xff]
        %v4869 = vld [vmem:[#allocation2 + $0x60] sm:$0xff]
        %v4870 = vld [vmem:[#allocation2 + $0x68] sm:$0xff]
        %v4871 = vld [vmem:[#allocation2 + $0x70] sm:$0xff]
        %v4872 = vld [vmem:[#allocation2 + $0x78] sm:$0xff]
        %v4873 = vld [vmem:[#allocation2 + $0x80] sm:$0xff]
        %v4874 = vld [vmem:[#allocation2 + $0x88] sm:$0xff]
        %v4875 = vld [vmem:[#allocation2 + $0x90] sm:$0xff]
        %v4876 = vld [vmem:[#allocation2 + $0x98] sm:$0xff]
        %v4877 = vld [vmem:[#allocation2 + $0xa0] sm:$0xff]
        %v4878 = vld [vmem:[#allocation2 + $0xa8] sm:$0xff]
        %v4879 = vld [vmem:[#allocation2 + $0xb0] sm:$0xff]
        %v4880 = vld [vmem:[#allocation2 + $0xb8] sm:$0xff]
        %v4881 = vld [vmem:[#allocation2 + $0xc0] sm:$0xff]
        %v4882 = vld [vmem:[#allocation2 + $0xc8] sm:$0xff]
        %v4883 = vld [vmem:[#allocation2 + $0xd0] sm:$0xff]
        %v4884 = vld [vmem:[#allocation2 + $0xd8] sm:$0xff]
        %v4885 = vld [vmem:[#allocation2 + $0xe0] sm:$0xff]
        %v4886 = vld [vmem:[#allocation2 + $0xe8] sm:$0xff]
        %v4887 = vld [vmem:[#allocation2 + $0xf0] sm:$0xff]
        %v4888 = vld [vmem:[#allocation2 + $0xf8] sm:$0xff]
        %v4889 = vld [vmem:[#allocation2 + $0x100] sm:$0xff]
        %v4890 = vld [vmem:[#allocation2 + $0x108] sm:$0xff]
        %v4891 = vld [vmem:[#allocation2 + $0x110] sm:$0xff]
        %v4892 = vld [vmem:[#allocation2 + $0x118] sm:$0xff]
        %v4893 = vld [vmem:[#allocation2 + $0x120] sm:$0xff]
        %v4894 = vld [vmem:[#allocation2 + $0x128] sm:$0xff]
        %v4895 = vld [vmem:[#allocation2 + $0x130] sm:$0xff]
        %v4896 = vld [vmem:[#allocation2 + $0x138] sm:$0xff]
        %v4897 = vld [vmem:[#allocation2 + $0x140] sm:$0xff]
        %v4898 = vld [vmem:[#allocation2 + $0x148] sm:$0xff]
        %v4899 = vld [vmem:[#allocation2 + $0x150] sm:$0xff]
        %v4900 = vld [vmem:[#allocation2 + $0x158] sm:$0xff]
        %v4901 = vld [vmem:[#allocation2 + $0x160] sm:$0xff]
        %v4902 = vld [vmem:[#allocation2 + $0x168] sm:$0xff]
        %v4903 = vld [vmem:[#allocation2 + $0x170] sm:$0xff]
        %v4904 = vld [vmem:[#allocation2 + $0x178] sm:$0xff]
        %v4905 = vld [vmem:[#allocation2 + $0x180] sm:$0xff]
        %v4906 = vld [vmem:[#allocation2 + $0x188] sm:$0xff]
        %v4907 = vld [vmem:[#allocation2 + $0x190] sm:$0xff]
        %v4908 = vld [vmem:[#allocation2 + $0x198] sm:$0xff]
        %v4909 = vld [vmem:[#allocation2 + $0x1a0] sm:$0xff]
        %v4910 = vld [vmem:[#allocation2 + $0x1a8] sm:$0xff]
        %v4911 = vld [vmem:[#allocation2 + $0x1b0] sm:$0xff]
        %v4912 = vld [vmem:[#allocation2 + $0x1b8] sm:$0xff]
        %v4913 = vld [vmem:[#allocation2 + $0x1c0] sm:$0xff]
        %v4914 = vld [vmem:[#allocation2 + $0x1c8] sm:$0xff]
        %v4915 = vld [vmem:[#allocation2 + $0x1d0] sm:$0xff]
        %v4916 = vld [vmem:[#allocation2 + $0x1d8] sm:$0xff]
        %v4917 = vld [vmem:[#allocation2 + $0x1e0] sm:$0xff]
        %v4918 = vld [vmem:[#allocation2 + $0x1e8] sm:$0xff]
        %v4919 = vld [vmem:[#allocation2 + $0x1f0] sm:$0xff]
        %v4920 = vld [vmem:[#allocation2 + $0x1f8] sm:$0xff]
        %v4921 = vld [vmem:[#allocation2 + $0x200] sm:$0xff]
        %v4922 = vld [vmem:[#allocation2 + $0x208] sm:$0xff]
        %v4923 = vld [vmem:[#allocation2 + $0x210] sm:$0xff]
        %v4924 = vld [vmem:[#allocation2 + $0x218] sm:$0xff]
        %v4925 = vld [vmem:[#allocation2 + $0x220] sm:$0xff]
        %v4926 = vld [vmem:[#allocation2 + $0x228] sm:$0xff]
        %v4927 = vld [vmem:[#allocation2 + $0x230] sm:$0xff]
        %v4928 = vld [vmem:[#allocation2 + $0x238] sm:$0xff]
        %v4929 = vld [vmem:[#allocation2 + $0x240] sm:$0xff]
        %v4930 = vld [vmem:[#allocation2 + $0x248] sm:$0xff]
        %v4931 = vld [vmem:[#allocation2 + $0x250] sm:$0xff]
        %v4932 = vld [vmem:[#allocation2 + $0x258] sm:$0xff]
        %v4933 = vld [vmem:[#allocation2 + $0x260] sm:$0xff]
        %v4934 = vld [vmem:[#allocation2 + $0x268] sm:$0xff]
        %v4935 = vld [vmem:[#allocation2 + $0x270] sm:$0xff]
        %v4936 = vld [vmem:[#allocation2 + $0x278] sm:$0xff]
        %v4937 = vld [vmem:[#allocation2 + $0x280] sm:$0xff]
        %v4938 = vld [vmem:[#allocation2 + $0x288] sm:$0xff]
        %v4939 = vld [vmem:[#allocation2 + $0x290] sm:$0xff]
        %v4940 = vld [vmem:[#allocation2 + $0x298] sm:$0xff]
        %v4941 = vld [vmem:[#allocation2 + $0x2a0] sm:$0xff]
        %v4942 = vld [vmem:[#allocation2 + $0x2a8] sm:$0xff]
        %v4943 = vld [vmem:[#allocation2 + $0x2b0] sm:$0xff]
        %v4944 = vld [vmem:[#allocation2 + $0x2b8] sm:$0xff]
        %v4945 = vld [vmem:[#allocation2 + $0x2c0] sm:$0xff]
        %v4946 = vld [vmem:[#allocation2 + $0x2c8] sm:$0xff]
        %v4947 = vld [vmem:[#allocation2 + $0x2d0] sm:$0xff]
        %v4948 = vld [vmem:[#allocation2 + $0x2d8] sm:$0xff]
        %v4949 = vld [vmem:[#allocation2 + $0x2e0] sm:$0xff]
        %v4950 = vld [vmem:[#allocation2 + $0x2e8] sm:$0xff]
        %v4951 = vld [vmem:[#allocation2 + $0x2f0] sm:$0xff]
        %v4952 = vld [vmem:[#allocation2 + $0x2f8] sm:$0xff]
        %v4953 = vld [vmem:[#allocation2 + $0x300] sm:$0xff]
        %v4954 = vld [vmem:[#allocation2 + $0x308] sm:$0xff]
        %v4955 = vld [vmem:[#allocation2 + $0x310] sm:$0xff]
        %v4956 = vld [vmem:[#allocation2 + $0x318] sm:$0xff]
        %v4957 = vld [vmem:[#allocation2 + $0x320] sm:$0xff]
        %v4958 = vld [vmem:[#allocation2 + $0x328] sm:$0xff]
        %v4959 = vld [vmem:[#allocation2 + $0x330] sm:$0xff]
        %v4960 = vld [vmem:[#allocation2 + $0x338] sm:$0xff]
        %v4961 = vld [vmem:[#allocation2 + $0x340] sm:$0xff]
        %v4962 = vld [vmem:[#allocation2 + $0x348] sm:$0xff]
        %v4963 = vld [vmem:[#allocation2 + $0x350] sm:$0xff]
        %v4964 = vld [vmem:[#allocation2 + $0x358] sm:$0xff]
        %v4965 = vld [vmem:[#allocation2 + $0x360] sm:$0xff]
        %v4966 = vld [vmem:[#allocation2 + $0x368] sm:$0xff]
        %v4967 = vld [vmem:[#allocation2 + $0x370] sm:$0xff]
        %v4968 = vld [vmem:[#allocation2 + $0x378] sm:$0xff]
        %v4969 = vld [vmem:[#allocation2 + $0x380] sm:$0xff]
        %v4970 = vld [vmem:[#allocation2 + $0x388] sm:$0xff]
        %v4971 = vld [vmem:[#allocation2 + $0x390] sm:$0xff]
        %v4972 = vld [vmem:[#allocation2 + $0x398] sm:$0xff]
        %v4973 = vld [vmem:[#allocation2 + $0x3a0] sm:$0xff]
        %v4974 = vld [vmem:[#allocation2 + $0x3a8] sm:$0xff]
        %v4975 = vld [vmem:[#allocation2 + $0x3b0] sm:$0xff]
        %v4976 = vld [vmem:[#allocation2 + $0x3b8] sm:$0xff]
        %v4977 = vld [vmem:[#allocation2 + $0x3c0] sm:$0xff]
        %v4978 = vld [vmem:[#allocation2 + $0x3c8] sm:$0xff]
        %v4979 = vld [vmem:[#allocation2 + $0x3d0] sm:$0xff]
        %v4980 = vld [vmem:[#allocation2 + $0x3d8] sm:$0xff]
        %v4981 = vld [vmem:[#allocation2 + $0x3e0] sm:$0xff]
        %v4982 = vld [vmem:[#allocation2 + $0x3e8] sm:$0xff]
        %v4983 = vld [vmem:[#allocation2 + $0x3f0] sm:$0xff]
        %v4984 = vld [vmem:[#allocation2 + $0x3f8] sm:$0xff]
        %v4985 = vld [vmem:[#allocation2 + $0x400] sm:$0xff]
        %v4986 = vld [vmem:[#allocation2 + $0x408] sm:$0xff]
        %v4987 = vld [vmem:[#allocation2 + $0x410] sm:$0xff]
        %v4988 = vld [vmem:[#allocation2 + $0x418] sm:$0xff]
        %v4989 = vld [vmem:[#allocation2 + $0x420] sm:$0xff]
        %v4990 = vld [vmem:[#allocation2 + $0x428] sm:$0xff]
        %v4991 = vld [vmem:[#allocation2 + $0x430] sm:$0xff]
        %v4992 = vld [vmem:[#allocation2 + $0x438] sm:$0xff]
        %v4993 = vld [vmem:[#allocation2 + $0x440] sm:$0xff]
        %v4994 = vld [vmem:[#allocation2 + $0x448] sm:$0xff]
        %v4995 = vld [vmem:[#allocation2 + $0x450] sm:$0xff]
        %v4996 = vld [vmem:[#allocation2 + $0x458] sm:$0xff]
        %v4997 = vld [vmem:[#allocation2 + $0x460] sm:$0xff]
        %v4998 = vld [vmem:[#allocation2 + $0x468] sm:$0xff]
        %v4999 = vld [vmem:[#allocation2 + $0x470] sm:$0xff]
        %v5000 = vld [vmem:[#allocation2 + $0x478] sm:$0xff]
        %v5001 = vld [vmem:[#allocation2 + $0x480] sm:$0xff]
        %v5002 = vld [vmem:[#allocation2 + $0x488] sm:$0xff]
        %v5003 = vld [vmem:[#allocation2 + $0x490] sm:$0xff]
        %v5004 = vld [vmem:[#allocation2 + $0x498] sm:$0xff]
        %v5005 = vld [vmem:[#allocation2 + $0x4a0] sm:$0xff]
        %v5006 = vld [vmem:[#allocation2 + $0x4a8] sm:$0xff]
        %v5007 = vld [vmem:[#allocation2 + $0x4b0] sm:$0xff]
        %v5008 = vld [vmem:[#allocation2 + $0x4b8] sm:$0xff]
        %v5009 = vld [vmem:[#allocation2 + $0x4c0] sm:$0xff]
        %v5010 = vld [vmem:[#allocation2 + $0x4c8] sm:$0xff]
        %v5011 = vld [vmem:[#allocation2 + $0x4d0] sm:$0xff]
        %v5012 = vld [vmem:[#allocation2 + $0x4d8] sm:$0xff]
        %v5013 = vld [vmem:[#allocation2 + $0x4e0] sm:$0xff]
        %v5014 = vld [vmem:[#allocation2 + $0x4e8] sm:$0xff]
        %v5015 = vld [vmem:[#allocation2 + $0x4f0] sm:$0xff]
        %v5016 = vld [vmem:[#allocation2 + $0x4f8] sm:$0xff]
        %v5017 = vld [vmem:[#allocation2 + $0x500] sm:$0xff]
        %v5018 = vld [vmem:[#allocation2 + $0x508] sm:$0xff]
        %v5019 = vld [vmem:[#allocation2 + $0x510] sm:$0xff]
        %v5020 = vld [vmem:[#allocation2 + $0x518] sm:$0xff]
        %v5021 = vld [vmem:[#allocation2 + $0x520] sm:$0xff]
        %v5022 = vld [vmem:[#allocation2 + $0x528] sm:$0xff]
        %v5023 = vld [vmem:[#allocation2 + $0x530] sm:$0xff]
        %v5024 = vld [vmem:[#allocation2 + $0x538] sm:$0xff]
        %v5025 = vld [vmem:[#allocation2 + $0x540] sm:$0xff]
        %v5026 = vld [vmem:[#allocation2 + $0x548] sm:$0xff]
        %v5027 = vld [vmem:[#allocation2 + $0x550] sm:$0xff]
        %v5028 = vld [vmem:[#allocation2 + $0x558] sm:$0xff]
        %v5029 = vld [vmem:[#allocation2 + $0x560] sm:$0xff]
        %v5030 = vld [vmem:[#allocation2 + $0x568] sm:$0xff]
        %v5031 = vld [vmem:[#allocation2 + $0x570] sm:$0xff]
        %v5032 = vld [vmem:[#allocation2 + $0x578] sm:$0xff]
        %v5033 = vld [vmem:[#allocation2 + $0x580] sm:$0xff]
        %v5034 = vld [vmem:[#allocation2 + $0x588] sm:$0xff]
        %v5035 = vld [vmem:[#allocation2 + $0x590] sm:$0xff]
        %v5036 = vld [vmem:[#allocation2 + $0x598] sm:$0xff]
        %v5037 = vld [vmem:[#allocation2 + $0x5a0] sm:$0xff]
        %v5038 = vld [vmem:[#allocation2 + $0x5a8] sm:$0xff]
        %v5039 = vld [vmem:[#allocation2 + $0x5b0] sm:$0xff]
        %v5040 = vld [vmem:[#allocation2 + $0x5b8] sm:$0xff]
        %v5041 = vld [vmem:[#allocation2 + $0x5c0] sm:$0xff]
        %v5042 = vld [vmem:[#allocation2 + $0x5c8] sm:$0xff]
        %v5043 = vld [vmem:[#allocation2 + $0x5d0] sm:$0xff]
        %v5044 = vld [vmem:[#allocation2 + $0x5d8] sm:$0xff]
        %v5045 = vld [vmem:[#allocation2 + $0x5e0] sm:$0xff]
        %v5046 = vld [vmem:[#allocation2 + $0x5e8] sm:$0xff]
        %v5047 = vld [vmem:[#allocation2 + $0x5f0] sm:$0xff]
        %v5048 = vld [vmem:[#allocation2 + $0x5f8] sm:$0xff]
        %v5049 = vld [vmem:[#allocation2 + $0x600] sm:$0xff]
        %v5050 = vld [vmem:[#allocation2 + $0x608] sm:$0xff]
        %v5051 = vld [vmem:[#allocation2 + $0x610] sm:$0xff]
        %v5052 = vld [vmem:[#allocation2 + $0x618] sm:$0xff]
        %v5053 = vld [vmem:[#allocation2 + $0x620] sm:$0xff]
        %v5054 = vld [vmem:[#allocation2 + $0x628] sm:$0xff]
        %v5055 = vld [vmem:[#allocation2 + $0x630] sm:$0xff]
        %v5056 = vld [vmem:[#allocation2 + $0x638] sm:$0xff]
        %v5057 = vld [vmem:[#allocation2 + $0x640] sm:$0xff]
        %v5058 = vld [vmem:[#allocation2 + $0x648] sm:$0xff]
        %v5059 = vld [vmem:[#allocation2 + $0x650] sm:$0xff]
        %v5060 = vld [vmem:[#allocation2 + $0x658] sm:$0xff]
        %v5061 = vld [vmem:[#allocation2 + $0x660] sm:$0xff]
        %v5062 = vld [vmem:[#allocation2 + $0x668] sm:$0xff]
        %v5063 = vld [vmem:[#allocation2 + $0x670] sm:$0xff]
        %v5064 = vld [vmem:[#allocation2 + $0x678] sm:$0xff]
        %v5065 = vld [vmem:[#allocation2 + $0x680] sm:$0xff]
        %v5066 = vld [vmem:[#allocation2 + $0x688] sm:$0xff]
        %v5067 = vld [vmem:[#allocation2 + $0x690] sm:$0xff]
        %v5068 = vld [vmem:[#allocation2 + $0x698] sm:$0xff]
        %v5069 = vld [vmem:[#allocation2 + $0x6a0] sm:$0xff]
        %v5070 = vld [vmem:[#allocation2 + $0x6a8] sm:$0xff]
        %v5071 = vld [vmem:[#allocation2 + $0x6b0] sm:$0xff]
        %v5072 = vld [vmem:[#allocation2 + $0x6b8] sm:$0xff]
        %v5073 = vld [vmem:[#allocation2 + $0x6c0] sm:$0xff]
        %v5074 = vld [vmem:[#allocation2 + $0x6c8] sm:$0xff]
        %v5075 = vld [vmem:[#allocation2 + $0x6d0] sm:$0xff]
        %v5076 = vld [vmem:[#allocation2 + $0x6d8] sm:$0xff]
        %v5077 = vld [vmem:[#allocation2 + $0x6e0] sm:$0xff]
        %v5078 = vld [vmem:[#allocation2 + $0x6e8] sm:$0xff]
        %v5079 = vld [vmem:[#allocation2 + $0x6f0] sm:$0xff]
        %v5080 = vld [vmem:[#allocation2 + $0x6f8] sm:$0xff]
        %v5081 = vld [vmem:[#allocation2 + $0x700] sm:$0xff]
        %v5082 = vld [vmem:[#allocation2 + $0x708] sm:$0xff]
        %v5083 = vld [vmem:[#allocation2 + $0x710] sm:$0xff]
        %v5084 = vld [vmem:[#allocation2 + $0x718] sm:$0xff]
        %v5085 = vld [vmem:[#allocation2 + $0x720] sm:$0xff]
        %v5086 = vld [vmem:[#allocation2 + $0x728] sm:$0xff]
        %v5087 = vld [vmem:[#allocation2 + $0x730] sm:$0xff]
        %v5088 = vld [vmem:[#allocation2 + $0x738] sm:$0xff]
        %v5089 = vld [vmem:[#allocation2 + $0x740] sm:$0xff]
        %v5090 = vld [vmem:[#allocation2 + $0x748] sm:$0xff]
        %v5091 = vld [vmem:[#allocation2 + $0x750] sm:$0xff]
        %v5092 = vld [vmem:[#allocation2 + $0x758] sm:$0xff]
        %v5093 = vld [vmem:[#allocation2 + $0x760] sm:$0xff]
        %v5094 = vld [vmem:[#allocation2 + $0x768] sm:$0xff]
        %v5095 = vld [vmem:[#allocation2 + $0x770] sm:$0xff]
        %v5096 = vld [vmem:[#allocation2 + $0x778] sm:$0xff]
        %v5097 = vld [vmem:[#allocation2 + $0x780] sm:$0xff]
        %v5098 = vld [vmem:[#allocation2 + $0x788] sm:$0xff]
        %v5099 = vld [vmem:[#allocation2 + $0x790] sm:$0xff]
        %v5100 = vld [vmem:[#allocation2 + $0x798] sm:$0xff]
        %v5101 = vld [vmem:[#allocation2 + $0x7a0] sm:$0xff]
        %v5102 = vld [vmem:[#allocation2 + $0x7a8] sm:$0xff]
        %v5103 = vld [vmem:[#allocation2 + $0x7b0] sm:$0xff]
        %v5104 = vld [vmem:[#allocation2 + $0x7b8] sm:$0xff]
        %v5105 = vld [vmem:[#allocation2 + $0x7c0] sm:$0xff]
        %v5106 = vld [vmem:[#allocation2 + $0x7c8] sm:$0xff]
        %v5107 = vld [vmem:[#allocation2 + $0x7d0] sm:$0xff]
        %v5108 = vld [vmem:[#allocation2 + $0x7d8] sm:$0xff]
        %v5109 = vld [vmem:[#allocation2 + $0x7e0] sm:$0xff]
        %v5110 = vld [vmem:[#allocation2 + $0x7e8] sm:$0xff]
        %v5111 = vld [vmem:[#allocation2 + $0x7f0] sm:$0xff]
        %v5112 = vld [vmem:[#allocation2 + $0x7f8] sm:$0xff]
        %v5113 = vld [vmem:[#allocation10] sm:$0xff]
        %v5114 = vld [vmem:[#allocation10 + $0x8] sm:$0xff]
        %v5115 = vld [vmem:[#allocation10 + $0x10] sm:$0xff]
        %v5116 = vld [vmem:[#allocation10 + $0x18] sm:$0xff]
        %v5117 = vld [vmem:[#allocation10 + $0x20] sm:$0xff]
        %v5118 = vld [vmem:[#allocation10 + $0x28] sm:$0xff]
        %v5119 = vld [vmem:[#allocation10 + $0x30] sm:$0xff]
        %v5120 = vld [vmem:[#allocation10 + $0x38] sm:$0xff]
        %v5121 = vld [vmem:[#allocation10 + $0x40] sm:$0xff]
        %v5122 = vld [vmem:[#allocation10 + $0x48] sm:$0xff]
        %v5123 = vld [vmem:[#allocation10 + $0x50] sm:$0xff]
        %v5124 = vld [vmem:[#allocation10 + $0x58] sm:$0xff]
        %v5125 = vld [vmem:[#allocation10 + $0x60] sm:$0xff]
        %v5126 = vld [vmem:[#allocation10 + $0x68] sm:$0xff]
        %v5127 = vld [vmem:[#allocation10 + $0x70] sm:$0xff]
        %v5128 = vld [vmem:[#allocation10 + $0x78] sm:$0xff]
        %v5129 = vld [vmem:[#allocation10 + $0x80] sm:$0xff]
        %v5130 = vld [vmem:[#allocation10 + $0x88] sm:$0xff]
        %v5131 = vld [vmem:[#allocation10 + $0x90] sm:$0xff]
        %v5132 = vld [vmem:[#allocation10 + $0x98] sm:$0xff]
        %v5133 = vld [vmem:[#allocation10 + $0xa0] sm:$0xff]
        %v5134 = vld [vmem:[#allocation10 + $0xa8] sm:$0xff]
        %v5135 = vld [vmem:[#allocation10 + $0xb0] sm:$0xff]
        %v5136 = vld [vmem:[#allocation10 + $0xb8] sm:$0xff]
        %v5137 = vld [vmem:[#allocation10 + $0xc0] sm:$0xff]
        %v5138 = vld [vmem:[#allocation10 + $0xc8] sm:$0xff]
        %v5139 = vld [vmem:[#allocation10 + $0xd0] sm:$0xff]
        %v5140 = vld [vmem:[#allocation10 + $0xd8] sm:$0xff]
        %v5141 = vld [vmem:[#allocation10 + $0xe0] sm:$0xff]
        %v5142 = vld [vmem:[#allocation10 + $0xe8] sm:$0xff]
        %v5143 = vld [vmem:[#allocation10 + $0xf0] sm:$0xff]
        %v5144 = vld [vmem:[#allocation10 + $0xf8] sm:$0xff]
        %v5145 = vld [vmem:[#allocation10 + $0x100] sm:$0xff]
        %v5146 = vld [vmem:[#allocation10 + $0x108] sm:$0xff]
        %v5147 = vld [vmem:[#allocation10 + $0x110] sm:$0xff]
        %v5148 = vld [vmem:[#allocation10 + $0x118] sm:$0xff]
        %v5149 = vld [vmem:[#allocation10 + $0x120] sm:$0xff]
        %v5150 = vld [vmem:[#allocation10 + $0x128] sm:$0xff]
        %v5151 = vld [vmem:[#allocation10 + $0x130] sm:$0xff]
        %v5152 = vld [vmem:[#allocation10 + $0x138] sm:$0xff]
        %v5153 = vld [vmem:[#allocation10 + $0x140] sm:$0xff]
        %v5154 = vld [vmem:[#allocation10 + $0x148] sm:$0xff]
        %v5155 = vld [vmem:[#allocation10 + $0x150] sm:$0xff]
        %v5156 = vld [vmem:[#allocation10 + $0x158] sm:$0xff]
        %v5157 = vld [vmem:[#allocation10 + $0x160] sm:$0xff]
        %v5158 = vld [vmem:[#allocation10 + $0x168] sm:$0xff]
        %v5159 = vld [vmem:[#allocation10 + $0x170] sm:$0xff]
        %v5160 = vld [vmem:[#allocation10 + $0x178] sm:$0xff]
        %v5161 = vld [vmem:[#allocation10 + $0x180] sm:$0xff]
        %v5162 = vld [vmem:[#allocation10 + $0x188] sm:$0xff]
        %v5163 = vld [vmem:[#allocation10 + $0x190] sm:$0xff]
        %v5164 = vld [vmem:[#allocation10 + $0x198] sm:$0xff]
        %v5165 = vld [vmem:[#allocation10 + $0x1a0] sm:$0xff]
        %v5166 = vld [vmem:[#allocation10 + $0x1a8] sm:$0xff]
        %v5167 = vld [vmem:[#allocation10 + $0x1b0] sm:$0xff]
        %v5168 = vld [vmem:[#allocation10 + $0x1b8] sm:$0xff]
        %v5169 = vld [vmem:[#allocation10 + $0x1c0] sm:$0xff]
        %v5170 = vld [vmem:[#allocation10 + $0x1c8] sm:$0xff]
        %v5171 = vld [vmem:[#allocation10 + $0x1d0] sm:$0xff]
        %v5172 = vld [vmem:[#allocation10 + $0x1d8] sm:$0xff]
        %v5173 = vld [vmem:[#allocation10 + $0x1e0] sm:$0xff]
        %v5174 = vld [vmem:[#allocation10 + $0x1e8] sm:$0xff]
        %v5175 = vld [vmem:[#allocation10 + $0x1f0] sm:$0xff]
        %v5176 = vld [vmem:[#allocation10 + $0x1f8] sm:$0xff]
        %v5177 = vld [vmem:[#allocation10 + $0x200] sm:$0xff]
        %v5178 = vld [vmem:[#allocation10 + $0x208] sm:$0xff]
        %v5179 = vld [vmem:[#allocation10 + $0x210] sm:$0xff]
        %v5180 = vld [vmem:[#allocation10 + $0x218] sm:$0xff]
        %v5181 = vld [vmem:[#allocation10 + $0x220] sm:$0xff]
        %v5182 = vld [vmem:[#allocation10 + $0x228] sm:$0xff]
        %v5183 = vld [vmem:[#allocation10 + $0x230] sm:$0xff]
        %v5184 = vld [vmem:[#allocation10 + $0x238] sm:$0xff]
        %v5185 = vld [vmem:[#allocation10 + $0x240] sm:$0xff]
        %v5186 = vld [vmem:[#allocation10 + $0x248] sm:$0xff]
        %v5187 = vld [vmem:[#allocation10 + $0x250] sm:$0xff]
        %v5188 = vld [vmem:[#allocation10 + $0x258] sm:$0xff]
        %v5189 = vld [vmem:[#allocation10 + $0x260] sm:$0xff]
        %v5190 = vld [vmem:[#allocation10 + $0x268] sm:$0xff]
        %v5191 = vld [vmem:[#allocation10 + $0x270] sm:$0xff]
        %v5192 = vld [vmem:[#allocation10 + $0x278] sm:$0xff]
        %v5193 = vld [vmem:[#allocation10 + $0x280] sm:$0xff]
        %v5194 = vld [vmem:[#allocation10 + $0x288] sm:$0xff]
        %v5195 = vld [vmem:[#allocation10 + $0x290] sm:$0xff]
        %v5196 = vld [vmem:[#allocation10 + $0x298] sm:$0xff]
        %v5197 = vld [vmem:[#allocation10 + $0x2a0] sm:$0xff]
        %v5198 = vld [vmem:[#allocation10 + $0x2a8] sm:$0xff]
        %v5199 = vld [vmem:[#allocation10 + $0x2b0] sm:$0xff]
        %v5200 = vld [vmem:[#allocation10 + $0x2b8] sm:$0xff]
        %v5201 = vld [vmem:[#allocation10 + $0x2c0] sm:$0xff]
        %v5202 = vld [vmem:[#allocation10 + $0x2c8] sm:$0xff]
        %v5203 = vld [vmem:[#allocation10 + $0x2d0] sm:$0xff]
        %v5204 = vld [vmem:[#allocation10 + $0x2d8] sm:$0xff]
        %v5205 = vld [vmem:[#allocation10 + $0x2e0] sm:$0xff]
        %v5206 = vld [vmem:[#allocation10 + $0x2e8] sm:$0xff]
        %v5207 = vld [vmem:[#allocation10 + $0x2f0] sm:$0xff]
        %v5208 = vld [vmem:[#allocation10 + $0x2f8] sm:$0xff]
        %v5209 = vld [vmem:[#allocation10 + $0x300] sm:$0xff]
        %v5210 = vld [vmem:[#allocation10 + $0x308] sm:$0xff]
        %v5211 = vld [vmem:[#allocation10 + $0x310] sm:$0xff]
        %v5212 = vld [vmem:[#allocation10 + $0x318] sm:$0xff]
        %v5213 = vld [vmem:[#allocation10 + $0x320] sm:$0xff]
        %v5214 = vld [vmem:[#allocation10 + $0x328] sm:$0xff]
        %v5215 = vld [vmem:[#allocation10 + $0x330] sm:$0xff]
        %v5216 = vld [vmem:[#allocation10 + $0x338] sm:$0xff]
        %v5217 = vld [vmem:[#allocation10 + $0x340] sm:$0xff]
        %v5218 = vld [vmem:[#allocation10 + $0x348] sm:$0xff]
        %v5219 = vld [vmem:[#allocation10 + $0x350] sm:$0xff]
        %v5220 = vld [vmem:[#allocation10 + $0x358] sm:$0xff]
        %v5221 = vld [vmem:[#allocation10 + $0x360] sm:$0xff]
        %v5222 = vld [vmem:[#allocation10 + $0x368] sm:$0xff]
        %v5223 = vld [vmem:[#allocation10 + $0x370] sm:$0xff]
        %v5224 = vld [vmem:[#allocation10 + $0x378] sm:$0xff]
        %v5225 = vld [vmem:[#allocation10 + $0x380] sm:$0xff]
        %v5226 = vld [vmem:[#allocation10 + $0x388] sm:$0xff]
        %v5227 = vld [vmem:[#allocation10 + $0x390] sm:$0xff]
        %v5228 = vld [vmem:[#allocation10 + $0x398] sm:$0xff]
        %v5229 = vld [vmem:[#allocation10 + $0x3a0] sm:$0xff]
        %v5230 = vld [vmem:[#allocation10 + $0x3a8] sm:$0xff]
        %v5231 = vld [vmem:[#allocation10 + $0x3b0] sm:$0xff]
        %v5232 = vld [vmem:[#allocation10 + $0x3b8] sm:$0xff]
        %v5233 = vld [vmem:[#allocation10 + $0x3c0] sm:$0xff]
        %v5234 = vld [vmem:[#allocation10 + $0x3c8] sm:$0xff]
        %v5235 = vld [vmem:[#allocation10 + $0x3d0] sm:$0xff]
        %v5236 = vld [vmem:[#allocation10 + $0x3d8] sm:$0xff]
        %v5237 = vld [vmem:[#allocation10 + $0x3e0] sm:$0xff]
        %v5238 = vld [vmem:[#allocation10 + $0x3e8] sm:$0xff]
        %v5239 = vld [vmem:[#allocation10 + $0x3f0] sm:$0xff]
        %v5240 = vld [vmem:[#allocation10 + $0x3f8] sm:$0xff]
        %v5241 = vld [vmem:[#allocation10 + $0x400] sm:$0xff]
        %v5242 = vld [vmem:[#allocation10 + $0x408] sm:$0xff]
        %v5243 = vld [vmem:[#allocation10 + $0x410] sm:$0xff]
        %v5244 = vld [vmem:[#allocation10 + $0x418] sm:$0xff]
        %v5245 = vld [vmem:[#allocation10 + $0x420] sm:$0xff]
        %v5246 = vld [vmem:[#allocation10 + $0x428] sm:$0xff]
        %v5247 = vld [vmem:[#allocation10 + $0x430] sm:$0xff]
        %v5248 = vld [vmem:[#allocation10 + $0x438] sm:$0xff]
        %v5249 = vld [vmem:[#allocation10 + $0x440] sm:$0xff]
        %v5250 = vld [vmem:[#allocation10 + $0x448] sm:$0xff]
        %v5251 = vld [vmem:[#allocation10 + $0x450] sm:$0xff]
        %v5252 = vld [vmem:[#allocation10 + $0x458] sm:$0xff]
        %v5253 = vld [vmem:[#allocation10 + $0x460] sm:$0xff]
        %v5254 = vld [vmem:[#allocation10 + $0x468] sm:$0xff]
        %v5255 = vld [vmem:[#allocation10 + $0x470] sm:$0xff]
        %v5256 = vld [vmem:[#allocation10 + $0x478] sm:$0xff]
        %v5257 = vld [vmem:[#allocation10 + $0x480] sm:$0xff]
        %v5258 = vld [vmem:[#allocation10 + $0x488] sm:$0xff]
        %v5259 = vld [vmem:[#allocation10 + $0x490] sm:$0xff]
        %v5260 = vld [vmem:[#allocation10 + $0x498] sm:$0xff]
        %v5261 = vld [vmem:[#allocation10 + $0x4a0] sm:$0xff]
        %v5262 = vld [vmem:[#allocation10 + $0x4a8] sm:$0xff]
        %v5263 = vld [vmem:[#allocation10 + $0x4b0] sm:$0xff]
        %v5264 = vld [vmem:[#allocation10 + $0x4b8] sm:$0xff]
        %v5265 = vld [vmem:[#allocation10 + $0x4c0] sm:$0xff]
        %v5266 = vld [vmem:[#allocation10 + $0x4c8] sm:$0xff]
        %v5267 = vld [vmem:[#allocation10 + $0x4d0] sm:$0xff]
        %v5268 = vld [vmem:[#allocation10 + $0x4d8] sm:$0xff]
        %v5269 = vld [vmem:[#allocation10 + $0x4e0] sm:$0xff]
        %v5270 = vld [vmem:[#allocation10 + $0x4e8] sm:$0xff]
        %v5271 = vld [vmem:[#allocation10 + $0x4f0] sm:$0xff]
        %v5272 = vld [vmem:[#allocation10 + $0x4f8] sm:$0xff]
        %v5273 = vld [vmem:[#allocation10 + $0x500] sm:$0xff]
        %v5274 = vld [vmem:[#allocation10 + $0x508] sm:$0xff]
        %v5275 = vld [vmem:[#allocation10 + $0x510] sm:$0xff]
        %v5276 = vld [vmem:[#allocation10 + $0x518] sm:$0xff]
        %v5277 = vld [vmem:[#allocation10 + $0x520] sm:$0xff]
        %v5278 = vld [vmem:[#allocation10 + $0x528] sm:$0xff]
        %v5279 = vld [vmem:[#allocation10 + $0x530] sm:$0xff]
        %v5280 = vld [vmem:[#allocation10 + $0x538] sm:$0xff]
        %v5281 = vld [vmem:[#allocation10 + $0x540] sm:$0xff]
        %v5282 = vld [vmem:[#allocation10 + $0x548] sm:$0xff]
        %v5283 = vld [vmem:[#allocation10 + $0x550] sm:$0xff]
        %v5284 = vld [vmem:[#allocation10 + $0x558] sm:$0xff]
        %v5285 = vld [vmem:[#allocation10 + $0x560] sm:$0xff]
        %v5286 = vld [vmem:[#allocation10 + $0x568] sm:$0xff]
        %v5287 = vld [vmem:[#allocation10 + $0x570] sm:$0xff]
        %v5288 = vld [vmem:[#allocation10 + $0x578] sm:$0xff]
        %v5289 = vld [vmem:[#allocation10 + $0x580] sm:$0xff]
        %v5290 = vld [vmem:[#allocation10 + $0x588] sm:$0xff]
        %v5291 = vld [vmem:[#allocation10 + $0x590] sm:$0xff]
        %v5292 = vld [vmem:[#allocation10 + $0x598] sm:$0xff]
        %v5293 = vld [vmem:[#allocation10 + $0x5a0] sm:$0xff]
        %v5294 = vld [vmem:[#allocation10 + $0x5a8] sm:$0xff]
        %v5295 = vld [vmem:[#allocation10 + $0x5b0] sm:$0xff]
        %v5296 = vld [vmem:[#allocation10 + $0x5b8] sm:$0xff]
        %v5297 = vld [vmem:[#allocation10 + $0x5c0] sm:$0xff]
        %v5298 = vld [vmem:[#allocation10 + $0x5c8] sm:$0xff]
        %v5299 = vld [vmem:[#allocation10 + $0x5d0] sm:$0xff]
        %v5300 = vld [vmem:[#allocation10 + $0x5d8] sm:$0xff]
        %v5301 = vld [vmem:[#allocation10 + $0x5e0] sm:$0xff]
        %v5302 = vld [vmem:[#allocation10 + $0x5e8] sm:$0xff]
        %v5303 = vld [vmem:[#allocation10 + $0x5f0] sm:$0xff]
        %v5304 = vld [vmem:[#allocation10 + $0x5f8] sm:$0xff]
        %v5305 = vld [vmem:[#allocation10 + $0x600] sm:$0xff]
        %v5306 = vld [vmem:[#allocation10 + $0x608] sm:$0xff]
        %v5307 = vld [vmem:[#allocation10 + $0x610] sm:$0xff]
        %v5308 = vld [vmem:[#allocation10 + $0x618] sm:$0xff]
        %v5309 = vld [vmem:[#allocation10 + $0x620] sm:$0xff]
        %v5310 = vld [vmem:[#allocation10 + $0x628] sm:$0xff]
        %v5311 = vld [vmem:[#allocation10 + $0x630] sm:$0xff]
        %v5312 = vld [vmem:[#allocation10 + $0x638] sm:$0xff]
        %v5313 = vld [vmem:[#allocation10 + $0x640] sm:$0xff]
        %v5314 = vld [vmem:[#allocation10 + $0x648] sm:$0xff]
        %v5315 = vld [vmem:[#allocation10 + $0x650] sm:$0xff]
        %v5316 = vld [vmem:[#allocation10 + $0x658] sm:$0xff]
        %v5317 = vld [vmem:[#allocation10 + $0x660] sm:$0xff]
        %v5318 = vld [vmem:[#allocation10 + $0x668] sm:$0xff]
        %v5319 = vld [vmem:[#allocation10 + $0x670] sm:$0xff]
        %v5320 = vld [vmem:[#allocation10 + $0x678] sm:$0xff]
        %v5321 = vld [vmem:[#allocation10 + $0x680] sm:$0xff]
        %v5322 = vld [vmem:[#allocation10 + $0x688] sm:$0xff]
        %v5323 = vld [vmem:[#allocation10 + $0x690] sm:$0xff]
        %v5324 = vld [vmem:[#allocation10 + $0x698] sm:$0xff]
        %v5325 = vld [vmem:[#allocation10 + $0x6a0] sm:$0xff]
        %v5326 = vld [vmem:[#allocation10 + $0x6a8] sm:$0xff]
        %v5327 = vld [vmem:[#allocation10 + $0x6b0] sm:$0xff]
        %v5328 = vld [vmem:[#allocation10 + $0x6b8] sm:$0xff]
        %v5329 = vld [vmem:[#allocation10 + $0x6c0] sm:$0xff]
        %v5330 = vld [vmem:[#allocation10 + $0x6c8] sm:$0xff]
        %v5331 = vld [vmem:[#allocation10 + $0x6d0] sm:$0xff]
        %v5332 = vld [vmem:[#allocation10 + $0x6d8] sm:$0xff]
        %v5333 = vld [vmem:[#allocation10 + $0x6e0] sm:$0xff]
        %v5334 = vld [vmem:[#allocation10 + $0x6e8] sm:$0xff]
        %v5335 = vld [vmem:[#allocation10 + $0x6f0] sm:$0xff]
        %v5336 = vld [vmem:[#allocation10 + $0x6f8] sm:$0xff]
        %v5337 = vld [vmem:[#allocation10 + $0x700] sm:$0xff]
        %v5338 = vld [vmem:[#allocation10 + $0x708] sm:$0xff]
        %v5339 = vld [vmem:[#allocation10 + $0x710] sm:$0xff]
        %v5340 = vld [vmem:[#allocation10 + $0x718] sm:$0xff]
        %v5341 = vld [vmem:[#allocation10 + $0x720] sm:$0xff]
        %v5342 = vld [vmem:[#allocation10 + $0x728] sm:$0xff]
        %v5343 = vld [vmem:[#allocation10 + $0x730] sm:$0xff]
        %v5344 = vld [vmem:[#allocation10 + $0x738] sm:$0xff]
        %v5345 = vld [vmem:[#allocation10 + $0x740] sm:$0xff]
        %v5346 = vld [vmem:[#allocation10 + $0x748] sm:$0xff]
        %v5347 = vld [vmem:[#allocation10 + $0x750] sm:$0xff]
        %v5348 = vld [vmem:[#allocation10 + $0x758] sm:$0xff]
        %v5349 = vld [vmem:[#allocation10 + $0x760] sm:$0xff]
        %v5350 = vld [vmem:[#allocation10 + $0x768] sm:$0xff]
        %v5351 = vld [vmem:[#allocation10 + $0x770] sm:$0xff]
        %v5352 = vld [vmem:[#allocation10 + $0x778] sm:$0xff]
        %v5353 = vld [vmem:[#allocation10 + $0x780] sm:$0xff]
        %v5354 = vld [vmem:[#allocation10 + $0x788] sm:$0xff]
        %v5355 = vld [vmem:[#allocation10 + $0x790] sm:$0xff]
        %v5356 = vld [vmem:[#allocation10 + $0x798] sm:$0xff]
        %v5357 = vld [vmem:[#allocation10 + $0x7a0] sm:$0xff]
        %v5358 = vld [vmem:[#allocation10 + $0x7a8] sm:$0xff]
        %v5359 = vld [vmem:[#allocation10 + $0x7b0] sm:$0xff]
        %v5360 = vld [vmem:[#allocation10 + $0x7b8] sm:$0xff]
        %v5361 = vld [vmem:[#allocation10 + $0x7c0] sm:$0xff]
        %v5362 = vld [vmem:[#allocation10 + $0x7c8] sm:$0xff]
        %v5363 = vld [vmem:[#allocation10 + $0x7d0] sm:$0xff]
        %v5364 = vld [vmem:[#allocation10 + $0x7d8] sm:$0xff]
        %v5365 = vld [vmem:[#allocation10 + $0x7e0] sm:$0xff]
        %v5366 = vld [vmem:[#allocation10 + $0x7e8] sm:$0xff]
        %v5367 = vld [vmem:[#allocation10 + $0x7f0] sm:$0xff]
        %v5368 = vld [vmem:[#allocation10 + $0x7f8] sm:$0xff]
        %v5625 = vunpack.c.l.b16 %v5113
        %v5626 = vunpack.c.h.b16 %v5113
        %v5627 = vunpack.c.l.b16 %v5114
        %v5628 = vunpack.c.h.b16 %v5114
        %v5629 = vunpack.c.l.b16 %v5115
        %v5630 = vunpack.c.h.b16 %v5115
        %v5631 = vunpack.c.l.b16 %v5116
        %v5632 = vunpack.c.h.b16 %v5116
        %v5633 = vunpack.c.l.b16 %v5117
        %v5634 = vunpack.c.h.b16 %v5117
        %v5635 = vunpack.c.l.b16 %v5118
        %v5636 = vunpack.c.h.b16 %v5118
        %v5637 = vunpack.c.l.b16 %v5119
        %v5638 = vunpack.c.h.b16 %v5119
        %v5639 = vunpack.c.l.b16 %v5120
        %v5640 = vunpack.c.h.b16 %v5120
        %v5641 = vunpack.c.l.b16 %v5121
        %v5642 = vunpack.c.h.b16 %v5121
        %v5643 = vunpack.c.l.b16 %v5122
        %v5644 = vunpack.c.h.b16 %v5122
        %v5645 = vunpack.c.l.b16 %v5123
        %v5646 = vunpack.c.h.b16 %v5123
        %v5647 = vunpack.c.l.b16 %v5124
        %v5648 = vunpack.c.h.b16 %v5124
        %v5649 = vunpack.c.l.b16 %v5125
        %v5650 = vunpack.c.h.b16 %v5125
        %v5651 = vunpack.c.l.b16 %v5126
        %v5652 = vunpack.c.h.b16 %v5126
        %v5653 = vunpack.c.l.b16 %v5127
        %v5654 = vunpack.c.h.b16 %v5127
        %v5655 = vunpack.c.l.b16 %v5128
        %v5656 = vunpack.c.h.b16 %v5128
        %v5657 = vunpack.c.l.b16 %v5129
        %v5658 = vunpack.c.h.b16 %v5129
        %v5659 = vunpack.c.l.b16 %v5130
        %v5660 = vunpack.c.h.b16 %v5130
        %v5661 = vunpack.c.l.b16 %v5131
        %v5662 = vunpack.c.h.b16 %v5131
        %v5663 = vunpack.c.l.b16 %v5132
        %v5664 = vunpack.c.h.b16 %v5132
        %v5665 = vunpack.c.l.b16 %v5133
        %v5666 = vunpack.c.h.b16 %v5133
        %v5667 = vunpack.c.l.b16 %v5134
        %v5668 = vunpack.c.h.b16 %v5134
        %v5669 = vunpack.c.l.b16 %v5135
        %v5670 = vunpack.c.h.b16 %v5135
        %v5671 = vunpack.c.l.b16 %v5136
        %v5672 = vunpack.c.h.b16 %v5136
        %v5673 = vunpack.c.l.b16 %v5137
        %v5674 = vunpack.c.h.b16 %v5137
        %v5675 = vunpack.c.l.b16 %v5138
        %v5676 = vunpack.c.h.b16 %v5138
        %v5677 = vunpack.c.l.b16 %v5139
        %v5678 = vunpack.c.h.b16 %v5139
        %v5679 = vunpack.c.l.b16 %v5140
        %v5680 = vunpack.c.h.b16 %v5140
        %v5681 = vunpack.c.l.b16 %v5141
        %v5682 = vunpack.c.h.b16 %v5141
        %v5683 = vunpack.c.l.b16 %v5142
        %v5684 = vunpack.c.h.b16 %v5142
        %v5685 = vunpack.c.l.b16 %v5143
        %v5686 = vunpack.c.h.b16 %v5143
        %v5687 = vunpack.c.l.b16 %v5144
        %v5688 = vunpack.c.h.b16 %v5144
        %v5689 = vunpack.c.l.b16 %v5145
        %v5690 = vunpack.c.h.b16 %v5145
        %v5691 = vunpack.c.l.b16 %v5146
        %v5692 = vunpack.c.h.b16 %v5146
        %v5693 = vunpack.c.l.b16 %v5147
        %v5694 = vunpack.c.h.b16 %v5147
        %v5695 = vunpack.c.l.b16 %v5148
        %v5696 = vunpack.c.h.b16 %v5148
        %v5697 = vunpack.c.l.b16 %v5149
        %v5698 = vunpack.c.h.b16 %v5149
        %v5699 = vunpack.c.l.b16 %v5150
        %v5700 = vunpack.c.h.b16 %v5150
        %v5701 = vunpack.c.l.b16 %v5151
        %v5702 = vunpack.c.h.b16 %v5151
        %v5703 = vunpack.c.l.b16 %v5152
        %v5704 = vunpack.c.h.b16 %v5152
        %v5705 = vunpack.c.l.b16 %v5153
        %v5706 = vunpack.c.h.b16 %v5153
        %v5707 = vunpack.c.l.b16 %v5154
        %v5708 = vunpack.c.h.b16 %v5154
        %v5709 = vunpack.c.l.b16 %v5155
        %v5710 = vunpack.c.h.b16 %v5155
        %v5711 = vunpack.c.l.b16 %v5156
        %v5712 = vunpack.c.h.b16 %v5156
        %v5713 = vunpack.c.l.b16 %v5157
        %v5714 = vunpack.c.h.b16 %v5157
        %v5715 = vunpack.c.l.b16 %v5158
        %v5716 = vunpack.c.h.b16 %v5158
        %v5717 = vunpack.c.l.b16 %v5159
        %v5718 = vunpack.c.h.b16 %v5159
        %v5719 = vunpack.c.l.b16 %v5160
        %v5720 = vunpack.c.h.b16 %v5160
        %v5721 = vunpack.c.l.b16 %v5161
        %v5722 = vunpack.c.h.b16 %v5161
        %v5723 = vunpack.c.l.b16 %v5162
        %v5724 = vunpack.c.h.b16 %v5162
        %v5725 = vunpack.c.l.b16 %v5163
        %v5726 = vunpack.c.h.b16 %v5163
        %v5727 = vunpack.c.l.b16 %v5164
        %v5728 = vunpack.c.h.b16 %v5164
        %v5729 = vunpack.c.l.b16 %v5165
        %v5730 = vunpack.c.h.b16 %v5165
        %v5731 = vunpack.c.l.b16 %v5166
        %v5732 = vunpack.c.h.b16 %v5166
        %v5733 = vunpack.c.l.b16 %v5167
        %v5734 = vunpack.c.h.b16 %v5167
        %v5735 = vunpack.c.l.b16 %v5168
        %v5736 = vunpack.c.h.b16 %v5168
        %v5737 = vunpack.c.l.b16 %v5169
        %v5738 = vunpack.c.h.b16 %v5169
        %v5739 = vunpack.c.l.b16 %v5170
        %v5740 = vunpack.c.h.b16 %v5170
        %v5741 = vunpack.c.l.b16 %v5171
        %v5742 = vunpack.c.h.b16 %v5171
        %v5743 = vunpack.c.l.b16 %v5172
        %v5744 = vunpack.c.h.b16 %v5172
        %v5745 = vunpack.c.l.b16 %v5173
        %v5746 = vunpack.c.h.b16 %v5173
        %v5747 = vunpack.c.l.b16 %v5174
        %v5748 = vunpack.c.h.b16 %v5174
        %v5749 = vunpack.c.l.b16 %v5175
        %v5750 = vunpack.c.h.b16 %v5175
        %v5751 = vunpack.c.l.b16 %v5176
        %v5752 = vunpack.c.h.b16 %v5176
        %v5753 = vunpack.c.l.b16 %v5177
        %v5754 = vunpack.c.h.b16 %v5177
        %v5755 = vunpack.c.l.b16 %v5178
        %v5756 = vunpack.c.h.b16 %v5178
        %v5757 = vunpack.c.l.b16 %v5179
        %v5758 = vunpack.c.h.b16 %v5179
        %v5759 = vunpack.c.l.b16 %v5180
        %v5760 = vunpack.c.h.b16 %v5180
        %v5761 = vunpack.c.l.b16 %v5181
        %v5762 = vunpack.c.h.b16 %v5181
        %v5763 = vunpack.c.l.b16 %v5182
        %v5764 = vunpack.c.h.b16 %v5182
        %v5765 = vunpack.c.l.b16 %v5183
        %v5766 = vunpack.c.h.b16 %v5183
        %v5767 = vunpack.c.l.b16 %v5184
        %v5768 = vunpack.c.h.b16 %v5184
        %v5769 = vunpack.c.l.b16 %v5185
        %v5770 = vunpack.c.h.b16 %v5185
        %v5771 = vunpack.c.l.b16 %v5186
        %v5772 = vunpack.c.h.b16 %v5186
        %v5773 = vunpack.c.l.b16 %v5187
        %v5774 = vunpack.c.h.b16 %v5187
        %v5775 = vunpack.c.l.b16 %v5188
        %v5776 = vunpack.c.h.b16 %v5188
        %v5777 = vunpack.c.l.b16 %v5189
        %v5778 = vunpack.c.h.b16 %v5189
        %v5779 = vunpack.c.l.b16 %v5190
        %v5780 = vunpack.c.h.b16 %v5190
        %v5781 = vunpack.c.l.b16 %v5191
        %v5782 = vunpack.c.h.b16 %v5191
        %v5783 = vunpack.c.l.b16 %v5192
        %v5784 = vunpack.c.h.b16 %v5192
        %v5785 = vunpack.c.l.b16 %v5193
        %v5786 = vunpack.c.h.b16 %v5193
        %v5787 = vunpack.c.l.b16 %v5194
        %v5788 = vunpack.c.h.b16 %v5194
        %v5789 = vunpack.c.l.b16 %v5195
        %v5790 = vunpack.c.h.b16 %v5195
        %v5791 = vunpack.c.l.b16 %v5196
        %v5792 = vunpack.c.h.b16 %v5196
        %v5793 = vunpack.c.l.b16 %v5197
        %v5794 = vunpack.c.h.b16 %v5197
        %v5795 = vunpack.c.l.b16 %v5198
        %v5796 = vunpack.c.h.b16 %v5198
        %v5797 = vunpack.c.l.b16 %v5199
        %v5798 = vunpack.c.h.b16 %v5199
        %v5799 = vunpack.c.l.b16 %v5200
        %v5800 = vunpack.c.h.b16 %v5200
        %v5801 = vunpack.c.l.b16 %v5201
        %v5802 = vunpack.c.h.b16 %v5201
        %v5803 = vunpack.c.l.b16 %v5202
        %v5804 = vunpack.c.h.b16 %v5202
        %v5805 = vunpack.c.l.b16 %v5203
        %v5806 = vunpack.c.h.b16 %v5203
        %v5807 = vunpack.c.l.b16 %v5204
        %v5808 = vunpack.c.h.b16 %v5204
        %v5809 = vunpack.c.l.b16 %v5205
        %v5810 = vunpack.c.h.b16 %v5205
        %v5811 = vunpack.c.l.b16 %v5206
        %v5812 = vunpack.c.h.b16 %v5206
        %v5813 = vunpack.c.l.b16 %v5207
        %v5814 = vunpack.c.h.b16 %v5207
        %v5815 = vunpack.c.l.b16 %v5208
        %v5816 = vunpack.c.h.b16 %v5208
        %v5817 = vunpack.c.l.b16 %v5209
        %v5818 = vunpack.c.h.b16 %v5209
        %v5819 = vunpack.c.l.b16 %v5210
        %v5820 = vunpack.c.h.b16 %v5210
        %v5821 = vunpack.c.l.b16 %v5211
        %v5822 = vunpack.c.h.b16 %v5211
        %v5823 = vunpack.c.l.b16 %v5212
        %v5824 = vunpack.c.h.b16 %v5212
        %v5825 = vunpack.c.l.b16 %v5213
        %v5826 = vunpack.c.h.b16 %v5213
        %v5827 = vunpack.c.l.b16 %v5214
        %v5828 = vunpack.c.h.b16 %v5214
        %v5829 = vunpack.c.l.b16 %v5215
        %v5830 = vunpack.c.h.b16 %v5215
        %v5831 = vunpack.c.l.b16 %v5216
        %v5832 = vunpack.c.h.b16 %v5216
        %v5833 = vunpack.c.l.b16 %v5217
        %v5834 = vunpack.c.h.b16 %v5217
        %v5835 = vunpack.c.l.b16 %v5218
        %v5836 = vunpack.c.h.b16 %v5218
        %v5837 = vunpack.c.l.b16 %v5219
        %v5838 = vunpack.c.h.b16 %v5219
        %v5839 = vunpack.c.l.b16 %v5220
        %v5840 = vunpack.c.h.b16 %v5220
        %v5841 = vunpack.c.l.b16 %v5221
        %v5842 = vunpack.c.h.b16 %v5221
        %v5843 = vunpack.c.l.b16 %v5222
        %v5844 = vunpack.c.h.b16 %v5222
        %v5845 = vunpack.c.l.b16 %v5223
        %v5846 = vunpack.c.h.b16 %v5223
        %v5847 = vunpack.c.l.b16 %v5224
        %v5848 = vunpack.c.h.b16 %v5224
        %v5849 = vunpack.c.l.b16 %v5225
        %v5850 = vunpack.c.h.b16 %v5225
        %v5851 = vunpack.c.l.b16 %v5226
        %v5852 = vunpack.c.h.b16 %v5226
        %v5853 = vunpack.c.l.b16 %v5227
        %v5854 = vunpack.c.h.b16 %v5227
        %v5855 = vunpack.c.l.b16 %v5228
        %v5856 = vunpack.c.h.b16 %v5228
        %v5857 = vunpack.c.l.b16 %v5229
        %v5858 = vunpack.c.h.b16 %v5229
        %v5859 = vunpack.c.l.b16 %v5230
        %v5860 = vunpack.c.h.b16 %v5230
        %v5861 = vunpack.c.l.b16 %v5231
        %v5862 = vunpack.c.h.b16 %v5231
        %v5863 = vunpack.c.l.b16 %v5232
        %v5864 = vunpack.c.h.b16 %v5232
        %v5865 = vunpack.c.l.b16 %v5233
        %v5866 = vunpack.c.h.b16 %v5233
        %v5867 = vunpack.c.l.b16 %v5234
        %v5868 = vunpack.c.h.b16 %v5234
        %v5869 = vunpack.c.l.b16 %v5235
        %v5870 = vunpack.c.h.b16 %v5235
        %v5871 = vunpack.c.l.b16 %v5236
        %v5872 = vunpack.c.h.b16 %v5236
        %v5873 = vunpack.c.l.b16 %v5237
        %v5874 = vunpack.c.h.b16 %v5237
        %v5875 = vunpack.c.l.b16 %v5238
        %v5876 = vunpack.c.h.b16 %v5238
        %v5877 = vunpack.c.l.b16 %v5239
        %v5878 = vunpack.c.h.b16 %v5239
        %v5879 = vunpack.c.l.b16 %v5240
        %v5880 = vunpack.c.h.b16 %v5240
        %v5881 = vunpack.c.l.b16 %v5241
        %v5882 = vunpack.c.h.b16 %v5241
        %v5883 = vunpack.c.l.b16 %v5242
        %v5884 = vunpack.c.h.b16 %v5242
        %v5885 = vunpack.c.l.b16 %v5243
        %v5886 = vunpack.c.h.b16 %v5243
        %v5887 = vunpack.c.l.b16 %v5244
        %v5888 = vunpack.c.h.b16 %v5244
        %v5889 = vunpack.c.l.b16 %v5245
        %v5890 = vunpack.c.h.b16 %v5245
        %v5891 = vunpack.c.l.b16 %v5246
        %v5892 = vunpack.c.h.b16 %v5246
        %v5893 = vunpack.c.l.b16 %v5247
        %v5894 = vunpack.c.h.b16 %v5247
        %v5895 = vunpack.c.l.b16 %v5248
        %v5896 = vunpack.c.h.b16 %v5248
        %v5897 = vunpack.c.l.b16 %v5249
        %v5898 = vunpack.c.h.b16 %v5249
        %v5899 = vunpack.c.l.b16 %v5250
        %v5900 = vunpack.c.h.b16 %v5250
        %v5901 = vunpack.c.l.b16 %v5251
        %v5902 = vunpack.c.h.b16 %v5251
        %v5903 = vunpack.c.l.b16 %v5252
        %v5904 = vunpack.c.h.b16 %v5252
        %v5905 = vunpack.c.l.b16 %v5253
        %v5906 = vunpack.c.h.b16 %v5253
        %v5907 = vunpack.c.l.b16 %v5254
        %v5908 = vunpack.c.h.b16 %v5254
        %v5909 = vunpack.c.l.b16 %v5255
        %v5910 = vunpack.c.h.b16 %v5255
        %v5911 = vunpack.c.l.b16 %v5256
        %v5912 = vunpack.c.h.b16 %v5256
        %v5913 = vunpack.c.l.b16 %v5257
        %v5914 = vunpack.c.h.b16 %v5257
        %v5915 = vunpack.c.l.b16 %v5258
        %v5916 = vunpack.c.h.b16 %v5258
        %v5917 = vunpack.c.l.b16 %v5259
        %v5918 = vunpack.c.h.b16 %v5259
        %v5919 = vunpack.c.l.b16 %v5260
        %v5920 = vunpack.c.h.b16 %v5260
        %v5921 = vunpack.c.l.b16 %v5261
        %v5922 = vunpack.c.h.b16 %v5261
        %v5923 = vunpack.c.l.b16 %v5262
        %v5924 = vunpack.c.h.b16 %v5262
        %v5925 = vunpack.c.l.b16 %v5263
        %v5926 = vunpack.c.h.b16 %v5263
        %v5927 = vunpack.c.l.b16 %v5264
        %v5928 = vunpack.c.h.b16 %v5264
        %v5929 = vunpack.c.l.b16 %v5265
        %v5930 = vunpack.c.h.b16 %v5265
        %v5931 = vunpack.c.l.b16 %v5266
        %v5932 = vunpack.c.h.b16 %v5266
        %v5933 = vunpack.c.l.b16 %v5267
        %v5934 = vunpack.c.h.b16 %v5267
        %v5935 = vunpack.c.l.b16 %v5268
        %v5936 = vunpack.c.h.b16 %v5268
        %v5937 = vunpack.c.l.b16 %v5269
        %v5938 = vunpack.c.h.b16 %v5269
        %v5939 = vunpack.c.l.b16 %v5270
        %v5940 = vunpack.c.h.b16 %v5270
        %v5941 = vunpack.c.l.b16 %v5271
        %v5942 = vunpack.c.h.b16 %v5271
        %v5943 = vunpack.c.l.b16 %v5272
        %v5944 = vunpack.c.h.b16 %v5272
        %v5945 = vunpack.c.l.b16 %v5273
        %v5946 = vunpack.c.h.b16 %v5273
        %v5947 = vunpack.c.l.b16 %v5274
        %v5948 = vunpack.c.h.b16 %v5274
        %v5949 = vunpack.c.l.b16 %v5275
        %v5950 = vunpack.c.h.b16 %v5275
        %v5951 = vunpack.c.l.b16 %v5276
        %v5952 = vunpack.c.h.b16 %v5276
        %v5953 = vunpack.c.l.b16 %v5277
        %v5954 = vunpack.c.h.b16 %v5277
        %v5955 = vunpack.c.l.b16 %v5278
        %v5956 = vunpack.c.h.b16 %v5278
        %v5957 = vunpack.c.l.b16 %v5279
        %v5958 = vunpack.c.h.b16 %v5279
        %v5959 = vunpack.c.l.b16 %v5280
        %v5960 = vunpack.c.h.b16 %v5280
        %v5961 = vunpack.c.l.b16 %v5281
        %v5962 = vunpack.c.h.b16 %v5281
        %v5963 = vunpack.c.l.b16 %v5282
        %v5964 = vunpack.c.h.b16 %v5282
        %v5965 = vunpack.c.l.b16 %v5283
        %v5966 = vunpack.c.h.b16 %v5283
        %v5967 = vunpack.c.l.b16 %v5284
        %v5968 = vunpack.c.h.b16 %v5284
        %v5969 = vunpack.c.l.b16 %v5285
        %v5970 = vunpack.c.h.b16 %v5285
        %v5971 = vunpack.c.l.b16 %v5286
        %v5972 = vunpack.c.h.b16 %v5286
        %v5973 = vunpack.c.l.b16 %v5287
        %v5974 = vunpack.c.h.b16 %v5287
        %v5975 = vunpack.c.l.b16 %v5288
        %v5976 = vunpack.c.h.b16 %v5288
        %v5977 = vunpack.c.l.b16 %v5289
        %v5978 = vunpack.c.h.b16 %v5289
        %v5979 = vunpack.c.l.b16 %v5290
        %v5980 = vunpack.c.h.b16 %v5290
        %v5981 = vunpack.c.l.b16 %v5291
        %v5982 = vunpack.c.h.b16 %v5291
        %v5983 = vunpack.c.l.b16 %v5292
        %v5984 = vunpack.c.h.b16 %v5292
        %v5985 = vunpack.c.l.b16 %v5293
        %v5986 = vunpack.c.h.b16 %v5293
        %v5987 = vunpack.c.l.b16 %v5294
        %v5988 = vunpack.c.h.b16 %v5294
        %v5989 = vunpack.c.l.b16 %v5295
        %v5990 = vunpack.c.h.b16 %v5295
        %v5991 = vunpack.c.l.b16 %v5296
        %v5992 = vunpack.c.h.b16 %v5296
        %v5993 = vunpack.c.l.b16 %v5297
        %v5994 = vunpack.c.h.b16 %v5297
        %v5995 = vunpack.c.l.b16 %v5298
        %v5996 = vunpack.c.h.b16 %v5298
        %v5997 = vunpack.c.l.b16 %v5299
        %v5998 = vunpack.c.h.b16 %v5299
        %v5999 = vunpack.c.l.b16 %v5300
        %v6000 = vunpack.c.h.b16 %v5300
        %v6001 = vunpack.c.l.b16 %v5301
        %v6002 = vunpack.c.h.b16 %v5301
        %v6003 = vunpack.c.l.b16 %v5302
        %v6004 = vunpack.c.h.b16 %v5302
        %v6005 = vunpack.c.l.b16 %v5303
        %v6006 = vunpack.c.h.b16 %v5303
        %v6007 = vunpack.c.l.b16 %v5304
        %v6008 = vunpack.c.h.b16 %v5304
        %v6009 = vunpack.c.l.b16 %v5305
        %v6010 = vunpack.c.h.b16 %v5305
        %v6011 = vunpack.c.l.b16 %v5306
        %v6012 = vunpack.c.h.b16 %v5306
        %v6013 = vunpack.c.l.b16 %v5307
        %v6014 = vunpack.c.h.b16 %v5307
        %v6015 = vunpack.c.l.b16 %v5308
        %v6016 = vunpack.c.h.b16 %v5308
        %v6017 = vunpack.c.l.b16 %v5309
        %v6018 = vunpack.c.h.b16 %v5309
        %v6019 = vunpack.c.l.b16 %v5310
        %v6020 = vunpack.c.h.b16 %v5310
        %v6021 = vunpack.c.l.b16 %v5311
        %v6022 = vunpack.c.h.b16 %v5311
        %v6023 = vunpack.c.l.b16 %v5312
        %v6024 = vunpack.c.h.b16 %v5312
        %v6025 = vunpack.c.l.b16 %v5313
        %v6026 = vunpack.c.h.b16 %v5313
        %v6027 = vunpack.c.l.b16 %v5314
        %v6028 = vunpack.c.h.b16 %v5314
        %v6029 = vunpack.c.l.b16 %v5315
        %v6030 = vunpack.c.h.b16 %v5315
        %v6031 = vunpack.c.l.b16 %v5316
        %v6032 = vunpack.c.h.b16 %v5316
        %v6033 = vunpack.c.l.b16 %v5317
        %v6034 = vunpack.c.h.b16 %v5317
        %v6035 = vunpack.c.l.b16 %v5318
        %v6036 = vunpack.c.h.b16 %v5318
        %v6037 = vunpack.c.l.b16 %v5319
        %v6038 = vunpack.c.h.b16 %v5319
        %v6039 = vunpack.c.l.b16 %v5320
        %v6040 = vunpack.c.h.b16 %v5320
        %v6041 = vunpack.c.l.b16 %v5321
        %v6042 = vunpack.c.h.b16 %v5321
        %v6043 = vunpack.c.l.b16 %v5322
        %v6044 = vunpack.c.h.b16 %v5322
        %v6045 = vunpack.c.l.b16 %v5323
        %v6046 = vunpack.c.h.b16 %v5323
        %v6047 = vunpack.c.l.b16 %v5324
        %v6048 = vunpack.c.h.b16 %v5324
        %v6049 = vunpack.c.l.b16 %v5325
        %v6050 = vunpack.c.h.b16 %v5325
        %v6051 = vunpack.c.l.b16 %v5326
        %v6052 = vunpack.c.h.b16 %v5326
        %v6053 = vunpack.c.l.b16 %v5327
        %v6054 = vunpack.c.h.b16 %v5327
        %v6055 = vunpack.c.l.b16 %v5328
        %v6056 = vunpack.c.h.b16 %v5328
        %v6057 = vunpack.c.l.b16 %v5329
        %v6058 = vunpack.c.h.b16 %v5329
        %v6059 = vunpack.c.l.b16 %v5330
        %v6060 = vunpack.c.h.b16 %v5330
        %v6061 = vunpack.c.l.b16 %v5331
        %v6062 = vunpack.c.h.b16 %v5331
        %v6063 = vunpack.c.l.b16 %v5332
        %v6064 = vunpack.c.h.b16 %v5332
        %v6065 = vunpack.c.l.b16 %v5333
        %v6066 = vunpack.c.h.b16 %v5333
        %v6067 = vunpack.c.l.b16 %v5334
        %v6068 = vunpack.c.h.b16 %v5334
        %v6069 = vunpack.c.l.b16 %v5335
        %v6070 = vunpack.c.h.b16 %v5335
        %v6071 = vunpack.c.l.b16 %v5336
        %v6072 = vunpack.c.h.b16 %v5336
        %v6073 = vunpack.c.l.b16 %v5337
        %v6074 = vunpack.c.h.b16 %v5337
        %v6075 = vunpack.c.l.b16 %v5338
        %v6076 = vunpack.c.h.b16 %v5338
        %v6077 = vunpack.c.l.b16 %v5339
        %v6078 = vunpack.c.h.b16 %v5339
        %v6079 = vunpack.c.l.b16 %v5340
        %v6080 = vunpack.c.h.b16 %v5340
        %v6081 = vunpack.c.l.b16 %v5341
        %v6082 = vunpack.c.h.b16 %v5341
        %v6083 = vunpack.c.l.b16 %v5342
        %v6084 = vunpack.c.h.b16 %v5342
        %v6085 = vunpack.c.l.b16 %v5343
        %v6086 = vunpack.c.h.b16 %v5343
        %v6087 = vunpack.c.l.b16 %v5344
        %v6088 = vunpack.c.h.b16 %v5344
        %v6089 = vunpack.c.l.b16 %v5345
        %v6090 = vunpack.c.h.b16 %v5345
        %v6091 = vunpack.c.l.b16 %v5346
        %v6092 = vunpack.c.h.b16 %v5346
        %v6093 = vunpack.c.l.b16 %v5347
        %v6094 = vunpack.c.h.b16 %v5347
        %v6095 = vunpack.c.l.b16 %v5348
        %v6096 = vunpack.c.h.b16 %v5348
        %v6097 = vunpack.c.l.b16 %v5349
        %v6098 = vunpack.c.h.b16 %v5349
        %v6099 = vunpack.c.l.b16 %v5350
        %v6100 = vunpack.c.h.b16 %v5350
        %v6101 = vunpack.c.l.b16 %v5351
        %v6102 = vunpack.c.h.b16 %v5351
        %v6103 = vunpack.c.l.b16 %v5352
        %v6104 = vunpack.c.h.b16 %v5352
        %v6105 = vunpack.c.l.b16 %v5353
        %v6106 = vunpack.c.h.b16 %v5353
        %v6107 = vunpack.c.l.b16 %v5354
        %v6108 = vunpack.c.h.b16 %v5354
        %v6109 = vunpack.c.l.b16 %v5355
        %v6110 = vunpack.c.h.b16 %v5355
        %v6111 = vunpack.c.l.b16 %v5356
        %v6112 = vunpack.c.h.b16 %v5356
        %v6113 = vunpack.c.l.b16 %v5357
        %v6114 = vunpack.c.h.b16 %v5357
        %v6115 = vunpack.c.l.b16 %v5358
        %v6116 = vunpack.c.h.b16 %v5358
        %v6117 = vunpack.c.l.b16 %v5359
        %v6118 = vunpack.c.h.b16 %v5359
        %v6119 = vunpack.c.l.b16 %v5360
        %v6120 = vunpack.c.h.b16 %v5360
        %v6121 = vunpack.c.l.b16 %v5361
        %v6122 = vunpack.c.h.b16 %v5361
        %v6123 = vunpack.c.l.b16 %v5362
        %v6124 = vunpack.c.h.b16 %v5362
        %v6125 = vunpack.c.l.b16 %v5363
        %v6126 = vunpack.c.h.b16 %v5363
        %v6127 = vunpack.c.l.b16 %v5364
        %v6128 = vunpack.c.h.b16 %v5364
        %v6129 = vunpack.c.l.b16 %v5365
        %v6130 = vunpack.c.h.b16 %v5365
        %v6131 = vunpack.c.l.b16 %v5366
        %v6132 = vunpack.c.h.b16 %v5366
        %v6133 = vunpack.c.l.b16 %v5367
        %v6134 = vunpack.c.h.b16 %v5367
        %v6135 = vunpack.c.l.b16 %v5368
        %v6136 = vunpack.c.h.b16 %v5368
        %v6137 = vpack.c.b16 %v5627, %v5625
        %v6138 = vpack.c.b16 %v5628, %v5626
        %v6139 = vpack.c.b16 %v5631, %v5629
        %v6140 = vpack.c.b16 %v5632, %v5630
        %v6141 = vpack.c.b16 %v5635, %v5633
        %v6142 = vpack.c.b16 %v5636, %v5634
        %v6143 = vpack.c.b16 %v5639, %v5637
        %v6144 = vpack.c.b16 %v5640, %v5638
        %v6145 = vpack.c.b16 %v5643, %v5641
        %v6146 = vpack.c.b16 %v5644, %v5642
        %v6147 = vpack.c.b16 %v5647, %v5645
        %v6148 = vpack.c.b16 %v5648, %v5646
        %v6149 = vpack.c.b16 %v5651, %v5649
        %v6150 = vpack.c.b16 %v5652, %v5650
        %v6151 = vpack.c.b16 %v5655, %v5653
        %v6152 = vpack.c.b16 %v5656, %v5654
        %v6153 = vpack.c.b16 %v5659, %v5657
        %v6154 = vpack.c.b16 %v5660, %v5658
        %v6155 = vpack.c.b16 %v5663, %v5661
        %v6156 = vpack.c.b16 %v5664, %v5662
        %v6157 = vpack.c.b16 %v5667, %v5665
        %v6158 = vpack.c.b16 %v5668, %v5666
        %v6159 = vpack.c.b16 %v5671, %v5669
        %v6160 = vpack.c.b16 %v5672, %v5670
        %v6161 = vpack.c.b16 %v5675, %v5673
        %v6162 = vpack.c.b16 %v5676, %v5674
        %v6163 = vpack.c.b16 %v5679, %v5677
        %v6164 = vpack.c.b16 %v5680, %v5678
        %v6165 = vpack.c.b16 %v5683, %v5681
        %v6166 = vpack.c.b16 %v5684, %v5682
        %v6167 = vpack.c.b16 %v5687, %v5685
        %v6168 = vpack.c.b16 %v5688, %v5686
        %v6169 = vpack.c.b16 %v5691, %v5689
        %v6170 = vpack.c.b16 %v5692, %v5690
        %v6171 = vpack.c.b16 %v5695, %v5693
        %v6172 = vpack.c.b16 %v5696, %v5694
        %v6173 = vpack.c.b16 %v5699, %v5697
        %v6174 = vpack.c.b16 %v5700, %v5698
        %v6175 = vpack.c.b16 %v5703, %v5701
        %v6176 = vpack.c.b16 %v5704, %v5702
        %v6177 = vpack.c.b16 %v5707, %v5705
        %v6178 = vpack.c.b16 %v5708, %v5706
        %v6179 = vpack.c.b16 %v5711, %v5709
        %v6180 = vpack.c.b16 %v5712, %v5710
        %v6181 = vpack.c.b16 %v5715, %v5713
        %v6182 = vpack.c.b16 %v5716, %v5714
        %v6183 = vpack.c.b16 %v5719, %v5717
        %v6184 = vpack.c.b16 %v5720, %v5718
        %v6185 = vpack.c.b16 %v5723, %v5721
        %v6186 = vpack.c.b16 %v5724, %v5722
        %v6187 = vpack.c.b16 %v5727, %v5725
        %v6188 = vpack.c.b16 %v5728, %v5726
        %v6189 = vpack.c.b16 %v5731, %v5729
        %v6190 = vpack.c.b16 %v5732, %v5730
        %v6191 = vpack.c.b16 %v5735, %v5733
        %v6192 = vpack.c.b16 %v5736, %v5734
        %v6193 = vpack.c.b16 %v5739, %v5737
        %v6194 = vpack.c.b16 %v5740, %v5738
        %v6195 = vpack.c.b16 %v5743, %v5741
        %v6196 = vpack.c.b16 %v5744, %v5742
        %v6197 = vpack.c.b16 %v5747, %v5745
        %v6198 = vpack.c.b16 %v5748, %v5746
        %v6199 = vpack.c.b16 %v5751, %v5749
        %v6200 = vpack.c.b16 %v5752, %v5750
        %v6201 = vpack.c.b16 %v5755, %v5753
        %v6202 = vpack.c.b16 %v5756, %v5754
        %v6203 = vpack.c.b16 %v5759, %v5757
        %v6204 = vpack.c.b16 %v5760, %v5758
        %v6205 = vpack.c.b16 %v5763, %v5761
        %v6206 = vpack.c.b16 %v5764, %v5762
        %v6207 = vpack.c.b16 %v5767, %v5765
        %v6208 = vpack.c.b16 %v5768, %v5766
        %v6209 = vpack.c.b16 %v5771, %v5769
        %v6210 = vpack.c.b16 %v5772, %v5770
        %v6211 = vpack.c.b16 %v5775, %v5773
        %v6212 = vpack.c.b16 %v5776, %v5774
        %v6213 = vpack.c.b16 %v5779, %v5777
        %v6214 = vpack.c.b16 %v5780, %v5778
        %v6215 = vpack.c.b16 %v5783, %v5781
        %v6216 = vpack.c.b16 %v5784, %v5782
        %v6217 = vpack.c.b16 %v5787, %v5785
        %v6218 = vpack.c.b16 %v5788, %v5786
        %v6219 = vpack.c.b16 %v5791, %v5789
        %v6220 = vpack.c.b16 %v5792, %v5790
        %v6221 = vpack.c.b16 %v5795, %v5793
        %v6222 = vpack.c.b16 %v5796, %v5794
        %v6223 = vpack.c.b16 %v5799, %v5797
        %v6224 = vpack.c.b16 %v5800, %v5798
        %v6225 = vpack.c.b16 %v5803, %v5801
        %v6226 = vpack.c.b16 %v5804, %v5802
        %v6227 = vpack.c.b16 %v5807, %v5805
        %v6228 = vpack.c.b16 %v5808, %v5806
        %v6229 = vpack.c.b16 %v5811, %v5809
        %v6230 = vpack.c.b16 %v5812, %v5810
        %v6231 = vpack.c.b16 %v5815, %v5813
        %v6232 = vpack.c.b16 %v5816, %v5814
        %v6233 = vpack.c.b16 %v5819, %v5817
        %v6234 = vpack.c.b16 %v5820, %v5818
        %v6235 = vpack.c.b16 %v5823, %v5821
        %v6236 = vpack.c.b16 %v5824, %v5822
        %v6237 = vpack.c.b16 %v5827, %v5825
        %v6238 = vpack.c.b16 %v5828, %v5826
        %v6239 = vpack.c.b16 %v5831, %v5829
        %v6240 = vpack.c.b16 %v5832, %v5830
        %v6241 = vpack.c.b16 %v5835, %v5833
        %v6242 = vpack.c.b16 %v5836, %v5834
        %v6243 = vpack.c.b16 %v5839, %v5837
        %v6244 = vpack.c.b16 %v5840, %v5838
        %v6245 = vpack.c.b16 %v5843, %v5841
        %v6246 = vpack.c.b16 %v5844, %v5842
        %v6247 = vpack.c.b16 %v5847, %v5845
        %v6248 = vpack.c.b16 %v5848, %v5846
        %v6249 = vpack.c.b16 %v5851, %v5849
        %v6250 = vpack.c.b16 %v5852, %v5850
        %v6251 = vpack.c.b16 %v5855, %v5853
        %v6252 = vpack.c.b16 %v5856, %v5854
        %v6253 = vpack.c.b16 %v5859, %v5857
        %v6254 = vpack.c.b16 %v5860, %v5858
        %v6255 = vpack.c.b16 %v5863, %v5861
        %v6256 = vpack.c.b16 %v5864, %v5862
        %v6257 = vpack.c.b16 %v5867, %v5865
        %v6258 = vpack.c.b16 %v5868, %v5866
        %v6259 = vpack.c.b16 %v5871, %v5869
        %v6260 = vpack.c.b16 %v5872, %v5870
        %v6261 = vpack.c.b16 %v5875, %v5873
        %v6262 = vpack.c.b16 %v5876, %v5874
        %v6263 = vpack.c.b16 %v5879, %v5877
        %v6264 = vpack.c.b16 %v5880, %v5878
        %v6265 = vpack.c.b16 %v5883, %v5881
        %v6266 = vpack.c.b16 %v5884, %v5882
        %v6267 = vpack.c.b16 %v5887, %v5885
        %v6268 = vpack.c.b16 %v5888, %v5886
        %v6269 = vpack.c.b16 %v5891, %v5889
        %v6270 = vpack.c.b16 %v5892, %v5890
        %v6271 = vpack.c.b16 %v5895, %v5893
        %v6272 = vpack.c.b16 %v5896, %v5894
        %v6273 = vpack.c.b16 %v5899, %v5897
        %v6274 = vpack.c.b16 %v5900, %v5898
        %v6275 = vpack.c.b16 %v5903, %v5901
        %v6276 = vpack.c.b16 %v5904, %v5902
        %v6277 = vpack.c.b16 %v5907, %v5905
        %v6278 = vpack.c.b16 %v5908, %v5906
        %v6279 = vpack.c.b16 %v5911, %v5909
        %v6280 = vpack.c.b16 %v5912, %v5910
        %v6281 = vpack.c.b16 %v5915, %v5913
        %v6282 = vpack.c.b16 %v5916, %v5914
        %v6283 = vpack.c.b16 %v5919, %v5917
        %v6284 = vpack.c.b16 %v5920, %v5918
        %v6285 = vpack.c.b16 %v5923, %v5921
        %v6286 = vpack.c.b16 %v5924, %v5922
        %v6287 = vpack.c.b16 %v5927, %v5925
        %v6288 = vpack.c.b16 %v5928, %v5926
        %v6289 = vpack.c.b16 %v5931, %v5929
        %v6290 = vpack.c.b16 %v5932, %v5930
        %v6291 = vpack.c.b16 %v5935, %v5933
        %v6292 = vpack.c.b16 %v5936, %v5934
        %v6293 = vpack.c.b16 %v5939, %v5937
        %v6294 = vpack.c.b16 %v5940, %v5938
        %v6295 = vpack.c.b16 %v5943, %v5941
        %v6296 = vpack.c.b16 %v5944, %v5942
        %v6297 = vpack.c.b16 %v5947, %v5945
        %v6298 = vpack.c.b16 %v5948, %v5946
        %v6299 = vpack.c.b16 %v5951, %v5949
        %v6300 = vpack.c.b16 %v5952, %v5950
        %v6301 = vpack.c.b16 %v5955, %v5953
        %v6302 = vpack.c.b16 %v5956, %v5954
        %v6303 = vpack.c.b16 %v5959, %v5957
        %v6304 = vpack.c.b16 %v5960, %v5958
        %v6305 = vpack.c.b16 %v5963, %v5961
        %v6306 = vpack.c.b16 %v5964, %v5962
        %v6307 = vpack.c.b16 %v5967, %v5965
        %v6308 = vpack.c.b16 %v5968, %v5966
        %v6309 = vpack.c.b16 %v5971, %v5969
        %v6310 = vpack.c.b16 %v5972, %v5970
        %v6311 = vpack.c.b16 %v5975, %v5973
        %v6312 = vpack.c.b16 %v5976, %v5974
        %v6313 = vpack.c.b16 %v5979, %v5977
        %v6314 = vpack.c.b16 %v5980, %v5978
        %v6315 = vpack.c.b16 %v5983, %v5981
        %v6316 = vpack.c.b16 %v5984, %v5982
        %v6317 = vpack.c.b16 %v5987, %v5985
        %v6318 = vpack.c.b16 %v5988, %v5986
        %v6319 = vpack.c.b16 %v5991, %v5989
        %v6320 = vpack.c.b16 %v5992, %v5990
        %v6321 = vpack.c.b16 %v5995, %v5993
        %v6322 = vpack.c.b16 %v5996, %v5994
        %v6323 = vpack.c.b16 %v5999, %v5997
        %v6324 = vpack.c.b16 %v6000, %v5998
        %v6325 = vpack.c.b16 %v6003, %v6001
        %v6326 = vpack.c.b16 %v6004, %v6002
        %v6327 = vpack.c.b16 %v6007, %v6005
        %v6328 = vpack.c.b16 %v6008, %v6006
        %v6329 = vpack.c.b16 %v6011, %v6009
        %v6330 = vpack.c.b16 %v6012, %v6010
        %v6331 = vpack.c.b16 %v6015, %v6013
        %v6332 = vpack.c.b16 %v6016, %v6014
        %v6333 = vpack.c.b16 %v6019, %v6017
        %v6334 = vpack.c.b16 %v6020, %v6018
        %v6335 = vpack.c.b16 %v6023, %v6021
        %v6336 = vpack.c.b16 %v6024, %v6022
        %v6337 = vpack.c.b16 %v6027, %v6025
        %v6338 = vpack.c.b16 %v6028, %v6026
        %v6339 = vpack.c.b16 %v6031, %v6029
        %v6340 = vpack.c.b16 %v6032, %v6030
        %v6341 = vpack.c.b16 %v6035, %v6033
        %v6342 = vpack.c.b16 %v6036, %v6034
        %v6343 = vpack.c.b16 %v6039, %v6037
        %v6344 = vpack.c.b16 %v6040, %v6038
        %v6345 = vpack.c.b16 %v6043, %v6041
        %v6346 = vpack.c.b16 %v6044, %v6042
        %v6347 = vpack.c.b16 %v6047, %v6045
        %v6348 = vpack.c.b16 %v6048, %v6046
        %v6349 = vpack.c.b16 %v6051, %v6049
        %v6350 = vpack.c.b16 %v6052, %v6050
        %v6351 = vpack.c.b16 %v6055, %v6053
        %v6352 = vpack.c.b16 %v6056, %v6054
        %v6353 = vpack.c.b16 %v6059, %v6057
        %v6354 = vpack.c.b16 %v6060, %v6058
        %v6355 = vpack.c.b16 %v6063, %v6061
        %v6356 = vpack.c.b16 %v6064, %v6062
        %v6357 = vpack.c.b16 %v6067, %v6065
        %v6358 = vpack.c.b16 %v6068, %v6066
        %v6359 = vpack.c.b16 %v6071, %v6069
        %v6360 = vpack.c.b16 %v6072, %v6070
        %v6361 = vpack.c.b16 %v6075, %v6073
        %v6362 = vpack.c.b16 %v6076, %v6074
        %v6363 = vpack.c.b16 %v6079, %v6077
        %v6364 = vpack.c.b16 %v6080, %v6078
        %v6365 = vpack.c.b16 %v6083, %v6081
        %v6366 = vpack.c.b16 %v6084, %v6082
        %v6367 = vpack.c.b16 %v6087, %v6085
        %v6368 = vpack.c.b16 %v6088, %v6086
        %v6369 = vpack.c.b16 %v6091, %v6089
        %v6370 = vpack.c.b16 %v6092, %v6090
        %v6371 = vpack.c.b16 %v6095, %v6093
        %v6372 = vpack.c.b16 %v6096, %v6094
        %v6373 = vpack.c.b16 %v6099, %v6097
        %v6374 = vpack.c.b16 %v6100, %v6098
        %v6375 = vpack.c.b16 %v6103, %v6101
        %v6376 = vpack.c.b16 %v6104, %v6102
        %v6377 = vpack.c.b16 %v6107, %v6105
        %v6378 = vpack.c.b16 %v6108, %v6106
        %v6379 = vpack.c.b16 %v6111, %v6109
        %v6380 = vpack.c.b16 %v6112, %v6110
        %v6381 = vpack.c.b16 %v6115, %v6113
        %v6382 = vpack.c.b16 %v6116, %v6114
        %v6383 = vpack.c.b16 %v6119, %v6117
        %v6384 = vpack.c.b16 %v6120, %v6118
        %v6385 = vpack.c.b16 %v6123, %v6121
        %v6386 = vpack.c.b16 %v6124, %v6122
        %v6387 = vpack.c.b16 %v6127, %v6125
        %v6388 = vpack.c.b16 %v6128, %v6126
        %v6389 = vpack.c.b16 %v6131, %v6129
        %v6390 = vpack.c.b16 %v6132, %v6130
        %v6391 = vpack.c.b16 %v6135, %v6133
        %v6392 = vpack.c.b16 %v6136, %v6134
        %6649 = vmatprep.subr.bf16.mxu0 %v6138
        %6650 = vmatpush1.bf16.msra.mxu0 %v6137
        %6651 = vmatprep.subr.bf16.mxu0 %v6140
        %6652 = vmatpush1.bf16.msra.mxu0 %v6139
        %6653 = vmatprep.subr.bf16.mxu0 %v6142
        %6654 = vmatpush1.bf16.msra.mxu0 %v6141
        %6655 = vmatprep.subr.bf16.mxu0 %v6144
        %6656 = vmatpush1.bf16.msra.mxu0 %v6143
        %6657 = vmatprep.subr.bf16.mxu0 %v6146
        %6658 = vmatpush1.bf16.msra.mxu0 %v6145
        %6659 = vmatprep.subr.bf16.mxu0 %v6148
        %6660 = vmatpush1.bf16.msra.mxu0 %v6147
        %6661 = vmatprep.subr.bf16.mxu0 %v6150
        %6662 = vmatpush1.bf16.msra.mxu0 %v6149
        %6663 = vmatprep.subr.bf16.mxu0 %v6152
        %6664 = vmatpush1.bf16.msra.mxu0 %v6151
        %6665 = vmatprep.subr.bf16.mxu0 %v6154
        %6666 = vmatpush1.bf16.msra.mxu0 %v6153
        %6667 = vmatprep.subr.bf16.mxu0 %v6156
        %6668 = vmatpush1.bf16.msra.mxu0 %v6155
        %6669 = vmatprep.subr.bf16.mxu0 %v6158
        %6670 = vmatpush1.bf16.msra.mxu0 %v6157
        %6671 = vmatprep.subr.bf16.mxu0 %v6160
        %6672 = vmatpush1.bf16.msra.mxu0 %v6159
        %6673 = vmatprep.subr.bf16.mxu0 %v6162
        %6674 = vmatpush1.bf16.msra.mxu0 %v6161
        %6675 = vmatprep.subr.bf16.mxu0 %v6164
        %6676 = vmatpush1.bf16.msra.mxu0 %v6163
        %6677 = vmatprep.subr.bf16.mxu0 %v6166
        %6678 = vmatpush1.bf16.msra.mxu0 %v6165
        %6679 = vmatprep.subr.bf16.mxu0 %v6168
        %6680 = vmatpush1.bf16.msra.mxu0 %v6167
        %6681 = vmatprep.mubr.bf16.mxu0 %v4858
        %6682 = vmatmul.mubr.bf16.gmra.mrb[0].mxu0 %v4857
        %v6683 = vpop.f32.mrb[0].mxu0
        %v6684 = vadd.f32 0.0, %v6683
        %v6685 = vpop.f32.mrb[0].mxu0
        %v6686 = vadd.f32 0.0, %v6685
        %v6687 = vpop.f32.mrb[0].mxu0
        %v6688 = vadd.f32 0.0, %v6687
        %v6689 = vpop.f32.mrb[0].mxu0
        %v6690 = vadd.f32 0.0, %v6689
        %6691 = vmatprep.mubr.bf16.mxu0 %v4874
        %6692 = vmatmul.mubr.bf16.gmra.mrb[0].mxu0 %v4873
        %v6693 = vpop.f32.mrb[0].mxu0
        %v6694 = vadd.f32 0.0, %v6693
        %v6695 = vpop.f32.mrb[0].mxu0
        %v6696 = vadd.f32 0.0, %v6695
        %v6697 = vpop.f32.mrb[0].mxu0
        %v6698 = vadd.f32 0.0, %v6697
        %v6699 = vpop.f32.mrb[0].mxu0
        %v6700 = vadd.f32 0.0, %v6699
        %6701 = vmatprep.mubr.bf16.mxu0 %v4890
        %6702 = vmatmul.mubr.bf16.gmra.mrb[0].mxu0 %v4889
        %v6703 = vpop.f32.mrb[0].mxu0
        %v6704 = vadd.f32 0.0, %v6703
        %v6705 = vpop.f32.mrb[0].mxu0
        %v6706 = vadd.f32 0.0, %v6705
        %v6707 = vpop.f32.mrb[0].mxu0
        %v6708 = vadd.f32 0.0, %v6707
        %v6709 = vpop.f32.mrb[0].mxu0
        %v6710 = vadd.f32 0.0, %v6709
        %6711 = vmatprep.mubr.bf16.mxu0 %v4906
        %6712 = vmatmul.mubr.bf16.gmra.mrb[0].mxu0 %v4905
        %v6713 = vpop.f32.mrb[0].mxu0
        %v6714 = vadd.f32 0.0, %v6713
        %v6715 = vpop.f32.mrb[0].mxu0
        %v6716 = vadd.f32 0.0, %v6715
        %v6717 = vpop.f32.mrb[0].mxu0
        %v6718 = vadd.f32 0.0, %v6717
        %v6719 = vpop.f32.mrb[0].mxu0
        %v6720 = vadd.f32 0.0, %v6719
        %6721 = vmatprep.mubr.bf16.mxu0 %v4922
        %6722 = vmatmul.mubr.bf16.gmra.mrb[0].mxu0 %v4921
        %v6723 = vpop.f32.mrb[0].mxu0
        %v6724 = vadd.f32 0.0, %v6723
        %v6725 = vpop.f32.mrb[0].mxu0
        %v6726 = vadd.f32 0.0, %v6725
        %v6727 = vpop.f32.mrb[0].mxu0
        %v6728 = vadd.f32 0.0, %v6727
        %v6729 = vpop.f32.mrb[0].mxu0
        %v6730 = vadd.f32 0.0, %v6729
        %6731 = vmatprep.mubr.bf16.mxu0 %v4938
        %6732 = vmatmul.mubr.bf16.gmra.mrb[0].mxu0 %v4937
        %v6733 = vpop.f32.mrb[0].mxu0
        %v6734 = vadd.f32 0.0, %v6733
        %v6735 = vpop.f32.mrb[0].mxu0
        %v6736 = vadd.f32 0.0, %v6735
        %v6737 = vpop.f32.mrb[0].mxu0
        %v6738 = vadd.f32 0.0, %v6737
        %v6739 = vpop.f32.mrb[0].mxu0
        %v6740 = vadd.f32 0.0, %v6739
        %6741 = vmatprep.mubr.bf16.mxu0 %v4954
        %6742 = vmatmul.mubr.bf16.gmra.mrb[0].mxu0 %v4953
        %v6743 = vpop.f32.mrb[0].mxu0
        %v6744 = vadd.f32 0.0, %v6743
        %v6745 = vpop.f32.mrb[0].mxu0
        %v6746 = vadd.f32 0.0, %v6745
        %v6747 = vpop.f32.mrb[0].mxu0
        %v6748 = vadd.f32 0.0, %v6747
        %v6749 = vpop.f32.mrb[0].mxu0
        %v6750 = vadd.f32 0.0, %v6749
        %6751 = vmatprep.mubr.bf16.mxu0 %v4970
        %6752 = vmatmul.mubr.bf16.gmra.mrb[0].mxu0 %v4969
        %v6753 = vpop.f32.mrb[0].mxu0
        %v6754 = vadd.f32 0.0, %v6753
        %v6755 = vpop.f32.mrb[0].mxu0
        %v6756 = vadd.f32 0.0, %v6755
        %v6757 = vpop.f32.mrb[0].mxu0
        %v6758 = vadd.f32 0.0, %v6757
        %v6759 = vpop.f32.mrb[0].mxu0
        %v6760 = vadd.f32 0.0, %v6759
        %6761 = vmatprep.mubr.bf16.mxu0 %v4986
        %6762 = vmatmul.mubr.bf16.gmra.mrb[0].mxu0 %v4985
        %v6763 = vpop.f32.mrb[0].mxu0
        %v6764 = vadd.f32 0.0, %v6763
        %v6765 = vpop.f32.mrb[0].mxu0
        %v6766 = vadd.f32 0.0, %v6765
        %v6767 = vpop.f32.mrb[0].mxu0
        %v6768 = vadd.f32 0.0, %v6767
        %v6769 = vpop.f32.mrb[0].mxu0
        %v6770 = vadd.f32 0.0, %v6769
        %6771 = vmatprep.mubr.bf16.mxu0 %v5002
        %6772 = vmatmul.mubr.bf16.gmra.mrb[0].mxu0 %v5001
        %v6773 = vpop.f32.mrb[0].mxu0
        %v6774 = vadd.f32 0.0, %v6773
        %v6775 = vpop.f32.mrb[0].mxu0
        %v6776 = vadd.f32 0.0, %v6775
        %v6777 = vpop.f32.mrb[0].mxu0
        %v6778 = vadd.f32 0.0, %v6777
        %v6779 = vpop.f32.mrb[0].mxu0
        %v6780 = vadd.f32 0.0, %v6779
        %6781 = vmatprep.mubr.bf16.mxu0 %v5018
        %6782 = vmatmul.mubr.bf16.gmra.mrb[0].mxu0 %v5017
        %v6783 = vpop.f32.mrb[0].mxu0
        %v6784 = vadd.f32 0.0, %v6783
        %v6785 = vpop.f32.mrb[0].mxu0
        %v6786 = vadd.f32 0.0, %v6785
        %v6787 = vpop.f32.mrb[0].mxu0
        %v6788 = vadd.f32 0.0, %v6787
        %v6789 = vpop.f32.mrb[0].mxu0
        %v6790 = vadd.f32 0.0, %v6789
        %6791 = vmatprep.mubr.bf16.mxu0 %v5034
        %6792 = vmatmul.mubr.bf16.gmra.mrb[0].mxu0 %v5033
        %v6793 = vpop.f32.mrb[0].mxu0
        %v6794 = vadd.f32 0.0, %v6793
        %v6795 = vpop.f32.mrb[0].mxu0
        %v6796 = vadd.f32 0.0, %v6795
        %v6797 = vpop.f32.mrb[0].mxu0
        %v6798 = vadd.f32 0.0, %v6797
        %v6799 = vpop.f32.mrb[0].mxu0
        %v6800 = vadd.f32 0.0, %v6799
        %6801 = vmatprep.mubr.bf16.mxu0 %v5050
        %6802 = vmatmul.mubr.bf16.gmra.mrb[0].mxu0 %v5049
        %v6803 = vpop.f32.mrb[0].mxu0
        %v6804 = vadd.f32 0.0, %v6803
        %v6805 = vpop.f32.mrb[0].mxu0
        %v6806 = vadd.f32 0.0, %v6805
        %v6807 = vpop.f32.mrb[0].mxu0
        %v6808 = vadd.f32 0.0, %v6807
        %v6809 = vpop.f32.mrb[0].mxu0
        %v6810 = vadd.f32 0.0, %v6809
        %6811 = vmatprep.mubr.bf16.mxu0 %v5066
        %6812 = vmatmul.mubr.bf16.gmra.mrb[0].mxu0 %v5065
        %v6813 = vpop.f32.mrb[0].mxu0
        %v6814 = vadd.f32 0.0, %v6813
        %v6815 = vpop.f32.mrb[0].mxu0
        %v6816 = vadd.f32 0.0, %v6815
        %v6817 = vpop.f32.mrb[0].mxu0
        %v6818 = vadd.f32 0.0, %v6817
        %v6819 = vpop.f32.mrb[0].mxu0
        %v6820 = vadd.f32 0.0, %v6819
        %6821 = vmatprep.mubr.bf16.mxu0 %v5082
        %6822 = vmatmul.mubr.bf16.gmra.mrb[0].mxu0 %v5081
        %v6823 = vpop.f32.mrb[0].mxu0
        %v6824 = vadd.f32 0.0, %v6823
        %v6825 = vpop.f32.mrb[0].mxu0
        %v6826 = vadd.f32 0.0, %v6825
        %v6827 = vpop.f32.mrb[0].mxu0
        %v6828 = vadd.f32 0.0, %v6827
        %v6829 = vpop.f32.mrb[0].mxu0
        %v6830 = vadd.f32 0.0, %v6829
        %6831 = vmatprep.mubr.bf16.mxu0 %v5098
        %6832 = vmatmul.mubr.bf16.gmra.mrb[0].mxu0 %v5097
        %v6833 = vpop.f32.mrb[0].mxu0
        %v6834 = vadd.f32 0.0, %v6833
        %v6835 = vpop.f32.mrb[0].mxu0
        %v6836 = vadd.f32 0.0, %v6835
        %v6837 = vpop.f32.mrb[0].mxu0
        %v6838 = vadd.f32 0.0, %v6837
        %v6839 = vpop.f32.mrb[0].mxu0
        %v6840 = vadd.f32 0.0, %v6839
        %6841 = vdwg.mxu0
        %6842 = vmatprep.subr.bf16.mxu0 %v6170
        %6843 = vmatpush1.bf16.msra.mxu0 %v6169
        %6844 = vmatprep.subr.bf16.mxu0 %v6172
        %6845 = vmatpush1.bf16.msra.mxu0 %v6171
        %6846 = vmatprep.subr.bf16.mxu0 %v6174
        %6847 = vmatpush1.bf16.msra.mxu0 %v6173
        %6848 = vmatprep.subr.bf16.mxu0 %v6176
        %6849 = vmatpush1.bf16.msra.mxu0 %v6175
        %6850 = vmatprep.subr.bf16.mxu0 %v6178
        %6851 = vmatpush1.bf16.msra.mxu0 %v6177
        %6852 = vmatprep.subr.bf16.mxu0 %v6180
        %6853 = vmatpush1.bf16.msra.mxu0 %v6179
        %6854 = vmatprep.subr.bf16.mxu0 %v6182
        %6855 = vmatpush1.bf16.msra.mxu0 %v6181
        %6856 = vmatprep.subr.bf16.mxu0 %v6184
        %6857 = vmatpush1.bf16.msra.mxu0 %v6183
        %6858 = vmatprep.subr.bf16.mxu0 %v6186
        %6859 = vmatpush1.bf16.msra.mxu0 %v6185
        %6860 = vmatprep.subr.bf16.mxu0 %v6188
        %6861 = vmatpush1.bf16.msra.mxu0 %v6187
        %6862 = vmatprep.subr.bf16.mxu0 %v6190
        %6863 = vmatpush1.bf16.msra.mxu0 %v6189
        %6864 = vmatprep.subr.bf16.mxu0 %v6192
        %6865 = vmatpush1.bf16.msra.mxu0 %v6191
        %6866 = vmatprep.subr.bf16.mxu0 %v6194
        %6867 = vmatpush1.bf16.msra.mxu0 %v6193
        %6868 = vmatprep.subr.bf16.mxu0 %v6196
        %6869 = vmatpush1.bf16.msra.mxu0 %v6195
        %6870 = vmatprep.subr.bf16.mxu0 %v6198
        %6871 = vmatpush1.bf16.msra.mxu0 %v6197
        %6872 = vmatprep.subr.bf16.mxu0 %v6200
        %6873 = vmatpush1.bf16.msra.mxu0 %v6199
        %6874 = vmatprep.mubr.bf16.mxu0 %v4860
        %6875 = vmatmul.mubr.bf16.gmra.mrb[0].mxu0 %v4859
        %v6876 = vpop.f32.mrb[0].mxu0
        %v6877 = vadd.f32 %v6684, %v6876
        %v6878 = vpop.f32.mrb[0].mxu0
        %v6879 = vadd.f32 %v6686, %v6878
        %v6880 = vpop.f32.mrb[0].mxu0
        %v6881 = vadd.f32 %v6688, %v6880
        %v6882 = vpop.f32.mrb[0].mxu0
        %v6883 = vadd.f32 %v6690, %v6882
        %6884 = vmatprep.mubr.bf16.mxu0 %v4876
        %6885 = vmatmul.mubr.bf16.gmra.mrb[0].mxu0 %v4875
        %v6886 = vpop.f32.mrb[0].mxu0
        %v6887 = vadd.f32 %v6694, %v6886
        %v6888 = vpop.f32.mrb[0].mxu0
        %v6889 = vadd.f32 %v6696, %v6888
        %v6890 = vpop.f32.mrb[0].mxu0
        %v6891 = vadd.f32 %v6698, %v6890
        %v6892 = vpop.f32.mrb[0].mxu0
        %v6893 = vadd.f32 %v6700, %v6892
        %6894 = vmatprep.mubr.bf16.mxu0 %v4892
        %6895 = vmatmul.mubr.bf16.gmra.mrb[0].mxu0 %v4891
        %v6896 = vpop.f32.mrb[0].mxu0
        %v6897 = vadd.f32 %v6704, %v6896
        %v6898 = vpop.f32.mrb[0].mxu0
        %v6899 = vadd.f32 %v6706, %v6898
        %v6900 = vpop.f32.mrb[0].mxu0
        %v6901 = vadd.f32 %v6708, %v6900
        %v6902 = vpop.f32.mrb[0].mxu0
        %v6903 = vadd.f32 %v6710, %v6902
        %6904 = vmatprep.mubr.bf16.mxu0 %v4908
        %6905 = vmatmul.mubr.bf16.gmra.mrb[0].mxu0 %v4907
        %v6906 = vpop.f32.mrb[0].mxu0
        %v6907 = vadd.f32 %v6714, %v6906
        %v6908 = vpop.f32.mrb[0].mxu0
        %v6909 = vadd.f32 %v6716, %v6908
        %v6910 = vpop.f32.mrb[0].mxu0
        %v6911 = vadd.f32 %v6718, %v6910
        %v6912 = vpop.f32.mrb[0].mxu0
        %v6913 = vadd.f32 %v6720, %v6912
        %6914 = vmatprep.mubr.bf16.mxu0 %v4924
        %6915 = vmatmul.mubr.bf16.gmra.mrb[0].mxu0 %v4923
        %v6916 = vpop.f32.mrb[0].mxu0
        %v6917 = vadd.f32 %v6724, %v6916
        %v6918 = vpop.f32.mrb[0].mxu0
        %v6919 = vadd.f32 %v6726, %v6918
        %v6920 = vpop.f32.mrb[0].mxu0
        %v6921 = vadd.f32 %v6728, %v6920
        %v6922 = vpop.f32.mrb[0].mxu0
        %v6923 = vadd.f32 %v6730, %v6922
        %6924 = vmatprep.mubr.bf16.mxu0 %v4940
        %6925 = vmatmul.mubr.bf16.gmra.mrb[0].mxu0 %v4939
        %v6926 = vpop.f32.mrb[0].mxu0
        %v6927 = vadd.f32 %v6734, %v6926
        %v6928 = vpop.f32.mrb[0].mxu0
        %v6929 = vadd.f32 %v6736, %v6928
        %v6930 = vpop.f32.mrb[0].mxu0
        %v6931 = vadd.f32 %v6738, %v6930
        %v6932 = vpop.f32.mrb[0].mxu0
        %v6933 = vadd.f32 %v6740, %v6932
        %6934 = vmatprep.mubr.bf16.mxu0 %v4956
        %6935 = vmatmul.mubr.bf16.gmra.mrb[0].mxu0 %v4955
        %v6936 = vpop.f32.mrb[0].mxu0
        %v6937 = vadd.f32 %v6744, %v6936
        %v6938 = vpop.f32.mrb[0].mxu0
        %v6939 = vadd.f32 %v6746, %v6938
        %v6940 = vpop.f32.mrb[0].mxu0
        %v6941 = vadd.f32 %v6748, %v6940
        %v6942 = vpop.f32.mrb[0].mxu0
        %v6943 = vadd.f32 %v6750, %v6942
        %6944 = vmatprep.mubr.bf16.mxu0 %v4972
        %6945 = vmatmul.mubr.bf16.gmra.mrb[0].mxu0 %v4971
        %v6946 = vpop.f32.mrb[0].mxu0
        %v6947 = vadd.f32 %v6754, %v6946
        %v6948 = vpop.f32.mrb[0].mxu0
        %v6949 = vadd.f32 %v6756, %v6948
        %v6950 = vpop.f32.mrb[0].mxu0
        %v6951 = vadd.f32 %v6758, %v6950
        %v6952 = vpop.f32.mrb[0].mxu0
        %v6953 = vadd.f32 %v6760, %v6952
        %6954 = vmatprep.mubr.bf16.mxu0 %v4988
        %6955 = vmatmul.mubr.bf16.gmra.mrb[0].mxu0 %v4987
        %v6956 = vpop.f32.mrb[0].mxu0
        %v6957 = vadd.f32 %v6764, %v6956
        %v6958 = vpop.f32.mrb[0].mxu0
        %v6959 = vadd.f32 %v6766, %v6958
        %v6960 = vpop.f32.mrb[0].mxu0
        %v6961 = vadd.f32 %v6768, %v6960
        %v6962 = vpop.f32.mrb[0].mxu0
        %v6963 = vadd.f32 %v6770, %v6962
        %6964 = vmatprep.mubr.bf16.mxu0 %v5004
        %6965 = vmatmul.mubr.bf16.gmra.mrb[0].mxu0 %v5003
        %v6966 = vpop.f32.mrb[0].mxu0
        %v6967 = vadd.f32 %v6774, %v6966
        %v6968 = vpop.f32.mrb[0].mxu0
        %v6969 = vadd.f32 %v6776, %v6968
        %v6970 = vpop.f32.mrb[0].mxu0
        %v6971 = vadd.f32 %v6778, %v6970
        %v6972 = vpop.f32.mrb[0].mxu0
        %v6973 = vadd.f32 %v6780, %v6972
        %6974 = vmatprep.mubr.bf16.mxu0 %v5020
        %6975 = vmatmul.mubr.bf16.gmra.mrb[0].mxu0 %v5019
        %v6976 = vpop.f32.mrb[0].mxu0
        %v6977 = vadd.f32 %v6784, %v6976
        %v6978 = vpop.f32.mrb[0].mxu0
        %v6979 = vadd.f32 %v6786, %v6978
        %v6980 = vpop.f32.mrb[0].mxu0
        %v6981 = vadd.f32 %v6788, %v6980
        %v6982 = vpop.f32.mrb[0].mxu0
        %v6983 = vadd.f32 %v6790, %v6982
        %6984 = vmatprep.mubr.bf16.mxu0 %v5036
        %6985 = vmatmul.mubr.bf16.gmra.mrb[0].mxu0 %v5035
        %v6986 = vpop.f32.mrb[0].mxu0
        %v6987 = vadd.f32 %v6794, %v6986
        %v6988 = vpop.f32.mrb[0].mxu0
        %v6989 = vadd.f32 %v6796, %v6988
        %v6990 = vpop.f32.mrb[0].mxu0
        %v6991 = vadd.f32 %v6798, %v6990
        %v6992 = vpop.f32.mrb[0].mxu0
        %v6993 = vadd.f32 %v6800, %v6992
        %6994 = vmatprep.mubr.bf16.mxu0 %v5052
        %6995 = vmatmul.mubr.bf16.gmra.mrb[0].mxu0 %v5051
        %v6996 = vpop.f32.mrb[0].mxu0
        %v6997 = vadd.f32 %v6804, %v6996
        %v6998 = vpop.f32.mrb[0].mxu0
        %v6999 = vadd.f32 %v6806, %v6998
        %v7000 = vpop.f32.mrb[0].mxu0
        %v7001 = vadd.f32 %v6808, %v7000
        %v7002 = vpop.f32.mrb[0].mxu0
        %v7003 = vadd.f32 %v6810, %v7002
        %7004 = vmatprep.mubr.bf16.mxu0 %v5068
        %7005 = vmatmul.mubr.bf16.gmra.mrb[0].mxu0 %v5067
        %v7006 = vpop.f32.mrb[0].mxu0
        %v7007 = vadd.f32 %v6814, %v7006
        %v7008 = vpop.f32.mrb[0].mxu0
        %v7009 = vadd.f32 %v6816, %v7008
        %v7010 = vpop.f32.mrb[0].mxu0
        %v7011 = vadd.f32 %v6818, %v7010
        %v7012 = vpop.f32.mrb[0].mxu0
        %v7013 = vadd.f32 %v6820, %v7012
        %7014 = vmatprep.mubr.bf16.mxu0 %v5084
        %7015 = vmatmul.mubr.bf16.gmra.mrb[0].mxu0 %v5083
        %v7016 = vpop.f32.mrb[0].mxu0
        %v7017 = vadd.f32 %v6824, %v7016
        %v7018 = vpop.f32.mrb[0].mxu0
        %v7019 = vadd.f32 %v6826, %v7018
        %v7020 = vpop.f32.mrb[0].mxu0
        %v7021 = vadd.f32 %v6828, %v7020
        %v7022 = vpop.f32.mrb[0].mxu0
        %v7023 = vadd.f32 %v6830, %v7022
        %7024 = vmatprep.mubr.bf16.mxu0 %v5100
        %7025 = vmatmul.mubr.bf16.gmra.mrb[0].mxu0 %v5099
        %v7026 = vpop.f32.mrb[0].mxu0
        %v7027 = vadd.f32 %v6834, %v7026
        %v7028 = vpop.f32.mrb[0].mxu0
        %v7029 = vadd.f32 %v6836, %v7028
        %v7030 = vpop.f32.mrb[0].mxu0
        %v7031 = vadd.f32 %v6838, %v7030
        %v7032 = vpop.f32.mrb[0].mxu0
        %v7033 = vadd.f32 %v6840, %v7032
        %7034 = vdwg.mxu0
        %7035 = vmatprep.subr.bf16.mxu0 %v6202
        %7036 = vmatpush1.bf16.msra.mxu0 %v6201
        %7037 = vmatprep.subr.bf16.mxu0 %v6204
        %7038 = vmatpush1.bf16.msra.mxu0 %v6203
        %7039 = vmatprep.subr.bf16.mxu0 %v6206
        %7040 = vmatpush1.bf16.msra.mxu0 %v6205
        %7041 = vmatprep.subr.bf16.mxu0 %v6208
        %7042 = vmatpush1.bf16.msra.mxu0 %v6207
        %7043 = vmatprep.subr.bf16.mxu0 %v6210
        %7044 = vmatpush1.bf16.msra.mxu0 %v6209
        %7045 = vmatprep.subr.bf16.mxu0 %v6212
        %7046 = vmatpush1.bf16.msra.mxu0 %v6211
        %7047 = vmatprep.subr.bf16.mxu0 %v6214
        %7048 = vmatpush1.bf16.msra.mxu0 %v6213
        %7049 = vmatprep.subr.bf16.mxu0 %v6216
        %7050 = vmatpush1.bf16.msra.mxu0 %v6215
        %7051 = vmatprep.subr.bf16.mxu0 %v6218
        %7052 = vmatpush1.bf16.msra.mxu0 %v6217
        %7053 = vmatprep.subr.bf16.mxu0 %v6220
        %7054 = vmatpush1.bf16.msra.mxu0 %v6219
        %7055 = vmatprep.subr.bf16.mxu0 %v6222
        %7056 = vmatpush1.bf16.msra.mxu0 %v6221
        %7057 = vmatprep.subr.bf16.mxu0 %v6224
        %7058 = vmatpush1.bf16.msra.mxu0 %v6223
        %7059 = vmatprep.subr.bf16.mxu0 %v6226
        %7060 = vmatpush1.bf16.msra.mxu0 %v6225
        %7061 = vmatprep.subr.bf16.mxu0 %v6228
        %7062 = vmatpush1.bf16.msra.mxu0 %v6227
        %7063 = vmatprep.subr.bf16.mxu0 %v6230
        %7064 = vmatpush1.bf16.msra.mxu0 %v6229
        %7065 = vmatprep.subr.bf16.mxu0 %v6232
        %7066 = vmatpush1.bf16.msra.mxu0 %v6231
        %7067 = vmatprep.mubr.bf16.mxu0 %v4862
        %7068 = vmatmul.mubr.bf16.gmra.mrb[0].mxu0 %v4861
        %v7069 = vpop.f32.mrb[0].mxu0
        %v7070 = vadd.f32 %v6877, %v7069
        %v7071 = vpop.f32.mrb[0].mxu0
        %v7072 = vadd.f32 %v6879, %v7071
        %v7073 = vpop.f32.mrb[0].mxu0
        %v7074 = vadd.f32 %v6881, %v7073
        %v7075 = vpop.f32.mrb[0].mxu0
        %v7076 = vadd.f32 %v6883, %v7075
        %7077 = vmatprep.mubr.bf16.mxu0 %v4878
        %7078 = vmatmul.mubr.bf16.gmra.mrb[0].mxu0 %v4877
        %v7079 = vpop.f32.mrb[0].mxu0
        %v7080 = vadd.f32 %v6887, %v7079
        %v7081 = vpop.f32.mrb[0].mxu0
        %v7082 = vadd.f32 %v6889, %v7081
        %v7083 = vpop.f32.mrb[0].mxu0
        %v7084 = vadd.f32 %v6891, %v7083
        %v7085 = vpop.f32.mrb[0].mxu0
        %v7086 = vadd.f32 %v6893, %v7085
        %7087 = vmatprep.mubr.bf16.mxu0 %v4894
        %7088 = vmatmul.mubr.bf16.gmra.mrb[0].mxu0 %v4893
        %v7089 = vpop.f32.mrb[0].mxu0
        %v7090 = vadd.f32 %v6897, %v7089
        %v7091 = vpop.f32.mrb[0].mxu0
        %v7092 = vadd.f32 %v6899, %v7091
        %v7093 = vpop.f32.mrb[0].mxu0
        %v7094 = vadd.f32 %v6901, %v7093
        %v7095 = vpop.f32.mrb[0].mxu0
        %v7096 = vadd.f32 %v6903, %v7095
        %7097 = vmatprep.mubr.bf16.mxu0 %v4910
        %7098 = vmatmul.mubr.bf16.gmra.mrb[0].mxu0 %v4909
        %v7099 = vpop.f32.mrb[0].mxu0
        %v7100 = vadd.f32 %v6907, %v7099
        %v7101 = vpop.f32.mrb[0].mxu0
        %v7102 = vadd.f32 %v6909, %v7101
        %v7103 = vpop.f32.mrb[0].mxu0
        %v7104 = vadd.f32 %v6911, %v7103
        %v7105 = vpop.f32.mrb[0].mxu0
        %v7106 = vadd.f32 %v6913, %v7105
        %7107 = vmatprep.mubr.bf16.mxu0 %v4926
        %7108 = vmatmul.mubr.bf16.gmra.mrb[0].mxu0 %v4925
        %v7109 = vpop.f32.mrb[0].mxu0
        %v7110 = vadd.f32 %v6917, %v7109
        %v7111 = vpop.f32.mrb[0].mxu0
        %v7112 = vadd.f32 %v6919, %v7111
        %v7113 = vpop.f32.mrb[0].mxu0
        %v7114 = vadd.f32 %v6921, %v7113
        %v7115 = vpop.f32.mrb[0].mxu0
        %v7116 = vadd.f32 %v6923, %v7115
        %7117 = vmatprep.mubr.bf16.mxu0 %v4942
        %7118 = vmatmul.mubr.bf16.gmra.mrb[0].mxu0 %v4941
        %v7119 = vpop.f32.mrb[0].mxu0
        %v7120 = vadd.f32 %v6927, %v7119
        %v7121 = vpop.f32.mrb[0].mxu0
        %v7122 = vadd.f32 %v6929, %v7121
        %v7123 = vpop.f32.mrb[0].mxu0
        %v7124 = vadd.f32 %v6931, %v7123
        %v7125 = vpop.f32.mrb[0].mxu0
        %v7126 = vadd.f32 %v6933, %v7125
        %7127 = vmatprep.mubr.bf16.mxu0 %v4958
        %7128 = vmatmul.mubr.bf16.gmra.mrb[0].mxu0 %v4957
        %v7129 = vpop.f32.mrb[0].mxu0
        %v7130 = vadd.f32 %v6937, %v7129
        %v7131 = vpop.f32.mrb[0].mxu0
        %v7132 = vadd.f32 %v6939, %v7131
        %v7133 = vpop.f32.mrb[0].mxu0
        %v7134 = vadd.f32 %v6941, %v7133
        %v7135 = vpop.f32.mrb[0].mxu0
        %v7136 = vadd.f32 %v6943, %v7135
        %7137 = vmatprep.mubr.bf16.mxu0 %v4974
        %7138 = vmatmul.mubr.bf16.gmra.mrb[0].mxu0 %v4973
        %v7139 = vpop.f32.mrb[0].mxu0
        %v7140 = vadd.f32 %v6947, %v7139
        %v7141 = vpop.f32.mrb[0].mxu0
        %v7142 = vadd.f32 %v6949, %v7141
        %v7143 = vpop.f32.mrb[0].mxu0
        %v7144 = vadd.f32 %v6951, %v7143
        %v7145 = vpop.f32.mrb[0].mxu0
        %v7146 = vadd.f32 %v6953, %v7145
        %7147 = vmatprep.mubr.bf16.mxu0 %v4990
        %7148 = vmatmul.mubr.bf16.gmra.mrb[0].mxu0 %v4989
        %v7149 = vpop.f32.mrb[0].mxu0
        %v7150 = vadd.f32 %v6957, %v7149
        %v7151 = vpop.f32.mrb[0].mxu0
        %v7152 = vadd.f32 %v6959, %v7151
        %v7153 = vpop.f32.mrb[0].mxu0
        %v7154 = vadd.f32 %v6961, %v7153
        %v7155 = vpop.f32.mrb[0].mxu0
        %v7156 = vadd.f32 %v6963, %v7155
        %7157 = vmatprep.mubr.bf16.mxu0 %v5006
        %7158 = vmatmul.mubr.bf16.gmra.mrb[0].mxu0 %v5005
        %v7159 = vpop.f32.mrb[0].mxu0
        %v7160 = vadd.f32 %v6967, %v7159
        %v7161 = vpop.f32.mrb[0].mxu0
        %v7162 = vadd.f32 %v6969, %v7161
        %v7163 = vpop.f32.mrb[0].mxu0
        %v7164 = vadd.f32 %v6971, %v7163
        %v7165 = vpop.f32.mrb[0].mxu0
        %v7166 = vadd.f32 %v6973, %v7165
        %7167 = vmatprep.mubr.bf16.mxu0 %v5022
        %7168 = vmatmul.mubr.bf16.gmra.mrb[0].mxu0 %v5021
        %v7169 = vpop.f32.mrb[0].mxu0
        %v7170 = vadd.f32 %v6977, %v7169
        %v7171 = vpop.f32.mrb[0].mxu0
        %v7172 = vadd.f32 %v6979, %v7171
        %v7173 = vpop.f32.mrb[0].mxu0
        %v7174 = vadd.f32 %v6981, %v7173
        %v7175 = vpop.f32.mrb[0].mxu0
        %v7176 = vadd.f32 %v6983, %v7175
        %7177 = vmatprep.mubr.bf16.mxu0 %v5038
        %7178 = vmatmul.mubr.bf16.gmra.mrb[0].mxu0 %v5037
        %v7179 = vpop.f32.mrb[0].mxu0
        %v7180 = vadd.f32 %v6987, %v7179
        %v7181 = vpop.f32.mrb[0].mxu0
        %v7182 = vadd.f32 %v6989, %v7181
        %v7183 = vpop.f32.mrb[0].mxu0
        %v7184 = vadd.f32 %v6991, %v7183
        %v7185 = vpop.f32.mrb[0].mxu0
        %v7186 = vadd.f32 %v6993, %v7185
        %7187 = vmatprep.mubr.bf16.mxu0 %v5054
        %7188 = vmatmul.mubr.bf16.gmra.mrb[0].mxu0 %v5053
        %v7189 = vpop.f32.mrb[0].mxu0
        %v7190 = vadd.f32 %v6997, %v7189
        %v7191 = vpop.f32.mrb[0].mxu0
        %v7192 = vadd.f32 %v6999, %v7191
        %v7193 = vpop.f32.mrb[0].mxu0
        %v7194 = vadd.f32 %v7001, %v7193
        %v7195 = vpop.f32.mrb[0].mxu0
        %v7196 = vadd.f32 %v7003, %v7195
        %7197 = vmatprep.mubr.bf16.mxu0 %v5070
        %7198 = vmatmul.mubr.bf16.gmra.mrb[0].mxu0 %v5069
        %v7199 = vpop.f32.mrb[0].mxu0
        %v7200 = vadd.f32 %v7007, %v7199
        %v7201 = vpop.f32.mrb[0].mxu0
        %v7202 = vadd.f32 %v7009, %v7201
        %v7203 = vpop.f32.mrb[0].mxu0
        %v7204 = vadd.f32 %v7011, %v7203
        %v7205 = vpop.f32.mrb[0].mxu0
        %v7206 = vadd.f32 %v7013, %v7205
        %7207 = vmatprep.mubr.bf16.mxu0 %v5086
        %7208 = vmatmul.mubr.bf16.gmra.mrb[0].mxu0 %v5085
        %v7209 = vpop.f32.mrb[0].mxu0
        %v7210 = vadd.f32 %v7017, %v7209
        %v7211 = vpop.f32.mrb[0].mxu0
        %v7212 = vadd.f32 %v7019, %v7211
        %v7213 = vpop.f32.mrb[0].mxu0
        %v7214 = vadd.f32 %v7021, %v7213
        %v7215 = vpop.f32.mrb[0].mxu0
        %v7216 = vadd.f32 %v7023, %v7215
        %7217 = vmatprep.mubr.bf16.mxu0 %v5102
        %7218 = vmatmul.mubr.bf16.gmra.mrb[0].mxu0 %v5101
        %v7219 = vpop.f32.mrb[0].mxu0
        %v7220 = vadd.f32 %v7027, %v7219
        %v7221 = vpop.f32.mrb[0].mxu0
        %v7222 = vadd.f32 %v7029, %v7221
        %v7223 = vpop.f32.mrb[0].mxu0
        %v7224 = vadd.f32 %v7031, %v7223
        %v7225 = vpop.f32.mrb[0].mxu0
        %v7226 = vadd.f32 %v7033, %v7225
        %7227 = vdwg.mxu0
        %7228 = vmatprep.subr.bf16.mxu0 %v6234
        %7229 = vmatpush1.bf16.msra.mxu0 %v6233
        %7230 = vmatprep.subr.bf16.mxu0 %v6236
        %7231 = vmatpush1.bf16.msra.mxu0 %v6235
        %7232 = vmatprep.subr.bf16.mxu0 %v6238
        %7233 = vmatpush1.bf16.msra.mxu0 %v6237
        %7234 = vmatprep.subr.bf16.mxu0 %v6240
        %7235 = vmatpush1.bf16.msra.mxu0 %v6239
        %7236 = vmatprep.subr.bf16.mxu0 %v6242
        %7237 = vmatpush1.bf16.msra.mxu0 %v6241
        %7238 = vmatprep.subr.bf16.mxu0 %v6244
        %7239 = vmatpush1.bf16.msra.mxu0 %v6243
        %7240 = vmatprep.subr.bf16.mxu0 %v6246
        %7241 = vmatpush1.bf16.msra.mxu0 %v6245
        %7242 = vmatprep.subr.bf16.mxu0 %v6248
        %7243 = vmatpush1.bf16.msra.mxu0 %v6247
        %7244 = vmatprep.subr.bf16.mxu0 %v6250
        %7245 = vmatpush1.bf16.msra.mxu0 %v6249
        %7246 = vmatprep.subr.bf16.mxu0 %v6252
        %7247 = vmatpush1.bf16.msra.mxu0 %v6251
        %7248 = vmatprep.subr.bf16.mxu0 %v6254
        %7249 = vmatpush1.bf16.msra.mxu0 %v6253
        %7250 = vmatprep.subr.bf16.mxu0 %v6256
        %7251 = vmatpush1.bf16.msra.mxu0 %v6255
        %7252 = vmatprep.subr.bf16.mxu0 %v6258
        %7253 = vmatpush1.bf16.msra.mxu0 %v6257
        %7254 = vmatprep.subr.bf16.mxu0 %v6260
        %7255 = vmatpush1.bf16.msra.mxu0 %v6259
        %7256 = vmatprep.subr.bf16.mxu0 %v6262
        %7257 = vmatpush1.bf16.msra.mxu0 %v6261
        %7258 = vmatprep.subr.bf16.mxu0 %v6264
        %7259 = vmatpush1.bf16.msra.mxu0 %v6263
        %7260 = vmatprep.mubr.bf16.mxu0 %v4864
        %7261 = vmatmul.mubr.bf16.gmra.mrb[0].mxu0 %v4863
        %v7262 = vpop.f32.mrb[0].mxu0
        %v7263 = vadd.f32 %v7070, %v7262
        %v7264 = vpop.f32.mrb[0].mxu0
        %v7265 = vadd.f32 %v7072, %v7264
        %v7266 = vpop.f32.mrb[0].mxu0
        %v7267 = vadd.f32 %v7074, %v7266
        %v7268 = vpop.f32.mrb[0].mxu0
        %v7269 = vadd.f32 %v7076, %v7268
        %7270 = vmatprep.mubr.bf16.mxu0 %v4880
        %7271 = vmatmul.mubr.bf16.gmra.mrb[0].mxu0 %v4879
        %v7272 = vpop.f32.mrb[0].mxu0
        %v7273 = vadd.f32 %v7080, %v7272
        %v7274 = vpop.f32.mrb[0].mxu0
        %v7275 = vadd.f32 %v7082, %v7274
        %v7276 = vpop.f32.mrb[0].mxu0
        %v7277 = vadd.f32 %v7084, %v7276
        %v7278 = vpop.f32.mrb[0].mxu0
        %v7279 = vadd.f32 %v7086, %v7278
        %7280 = vmatprep.mubr.bf16.mxu0 %v4896
        %7281 = vmatmul.mubr.bf16.gmra.mrb[0].mxu0 %v4895
        %v7282 = vpop.f32.mrb[0].mxu0
        %v7283 = vadd.f32 %v7090, %v7282
        %v7284 = vpop.f32.mrb[0].mxu0
        %v7285 = vadd.f32 %v7092, %v7284
        %v7286 = vpop.f32.mrb[0].mxu0
        %v7287 = vadd.f32 %v7094, %v7286
        %v7288 = vpop.f32.mrb[0].mxu0
        %v7289 = vadd.f32 %v7096, %v7288
        %7290 = vmatprep.mubr.bf16.mxu0 %v4912
        %7291 = vmatmul.mubr.bf16.gmra.mrb[0].mxu0 %v4911
        %v7292 = vpop.f32.mrb[0].mxu0
        %v7293 = vadd.f32 %v7100, %v7292
        %v7294 = vpop.f32.mrb[0].mxu0
        %v7295 = vadd.f32 %v7102, %v7294
        %v7296 = vpop.f32.mrb[0].mxu0
        %v7297 = vadd.f32 %v7104, %v7296
        %v7298 = vpop.f32.mrb[0].mxu0
        %v7299 = vadd.f32 %v7106, %v7298
        %7300 = vmatprep.mubr.bf16.mxu0 %v4928
        %7301 = vmatmul.mubr.bf16.gmra.mrb[0].mxu0 %v4927
        %v7302 = vpop.f32.mrb[0].mxu0
        %v7303 = vadd.f32 %v7110, %v7302
        %v7304 = vpop.f32.mrb[0].mxu0
        %v7305 = vadd.f32 %v7112, %v7304
        %v7306 = vpop.f32.mrb[0].mxu0
        %v7307 = vadd.f32 %v7114, %v7306
        %v7308 = vpop.f32.mrb[0].mxu0
        %v7309 = vadd.f32 %v7116, %v7308
        %7310 = vmatprep.mubr.bf16.mxu0 %v4944
        %7311 = vmatmul.mubr.bf16.gmra.mrb[0].mxu0 %v4943
        %v7312 = vpop.f32.mrb[0].mxu0
        %v7313 = vadd.f32 %v7120, %v7312
        %v7314 = vpop.f32.mrb[0].mxu0
        %v7315 = vadd.f32 %v7122, %v7314
        %v7316 = vpop.f32.mrb[0].mxu0
        %v7317 = vadd.f32 %v7124, %v7316
        %v7318 = vpop.f32.mrb[0].mxu0
        %v7319 = vadd.f32 %v7126, %v7318
        %7320 = vmatprep.mubr.bf16.mxu0 %v4960
        %7321 = vmatmul.mubr.bf16.gmra.mrb[0].mxu0 %v4959
        %v7322 = vpop.f32.mrb[0].mxu0
        %v7323 = vadd.f32 %v7130, %v7322
        %v7324 = vpop.f32.mrb[0].mxu0
        %v7325 = vadd.f32 %v7132, %v7324
        %v7326 = vpop.f32.mrb[0].mxu0
        %v7327 = vadd.f32 %v7134, %v7326
        %v7328 = vpop.f32.mrb[0].mxu0
        %v7329 = vadd.f32 %v7136, %v7328
        %7330 = vmatprep.mubr.bf16.mxu0 %v4976
        %7331 = vmatmul.mubr.bf16.gmra.mrb[0].mxu0 %v4975
        %v7332 = vpop.f32.mrb[0].mxu0
        %v7333 = vadd.f32 %v7140, %v7332
        %v7334 = vpop.f32.mrb[0].mxu0
        %v7335 = vadd.f32 %v7142, %v7334
        %v7336 = vpop.f32.mrb[0].mxu0
        %v7337 = vadd.f32 %v7144, %v7336
        %v7338 = vpop.f32.mrb[0].mxu0
        %v7339 = vadd.f32 %v7146, %v7338
        %7340 = vmatprep.mubr.bf16.mxu0 %v4992
        %7341 = vmatmul.mubr.bf16.gmra.mrb[0].mxu0 %v4991
        %v7342 = vpop.f32.mrb[0].mxu0
        %v7343 = vadd.f32 %v7150, %v7342
        %v7344 = vpop.f32.mrb[0].mxu0
        %v7345 = vadd.f32 %v7152, %v7344
        %v7346 = vpop.f32.mrb[0].mxu0
        %v7347 = vadd.f32 %v7154, %v7346
        %v7348 = vpop.f32.mrb[0].mxu0
        %v7349 = vadd.f32 %v7156, %v7348
        %7350 = vmatprep.mubr.bf16.mxu0 %v5008
        %7351 = vmatmul.mubr.bf16.gmra.mrb[0].mxu0 %v5007
        %v7352 = vpop.f32.mrb[0].mxu0
        %v7353 = vadd.f32 %v7160, %v7352
        %v7354 = vpop.f32.mrb[0].mxu0
        %v7355 = vadd.f32 %v7162, %v7354
        %v7356 = vpop.f32.mrb[0].mxu0
        %v7357 = vadd.f32 %v7164, %v7356
        %v7358 = vpop.f32.mrb[0].mxu0
        %v7359 = vadd.f32 %v7166, %v7358
        %7360 = vmatprep.mubr.bf16.mxu0 %v5024
        %7361 = vmatmul.mubr.bf16.gmra.mrb[0].mxu0 %v5023
        %v7362 = vpop.f32.mrb[0].mxu0
        %v7363 = vadd.f32 %v7170, %v7362
        %v7364 = vpop.f32.mrb[0].mxu0
        %v7365 = vadd.f32 %v7172, %v7364
        %v7366 = vpop.f32.mrb[0].mxu0
        %v7367 = vadd.f32 %v7174, %v7366
        %v7368 = vpop.f32.mrb[0].mxu0
        %v7369 = vadd.f32 %v7176, %v7368
        %7370 = vmatprep.mubr.bf16.mxu0 %v5040
        %7371 = vmatmul.mubr.bf16.gmra.mrb[0].mxu0 %v5039
        %v7372 = vpop.f32.mrb[0].mxu0
        %v7373 = vadd.f32 %v7180, %v7372
        %v7374 = vpop.f32.mrb[0].mxu0
        %v7375 = vadd.f32 %v7182, %v7374
        %v7376 = vpop.f32.mrb[0].mxu0
        %v7377 = vadd.f32 %v7184, %v7376
        %v7378 = vpop.f32.mrb[0].mxu0
        %v7379 = vadd.f32 %v7186, %v7378
        %7380 = vmatprep.mubr.bf16.mxu0 %v5056
        %7381 = vmatmul.mubr.bf16.gmra.mrb[0].mxu0 %v5055
        %v7382 = vpop.f32.mrb[0].mxu0
        %v7383 = vadd.f32 %v7190, %v7382
        %v7384 = vpop.f32.mrb[0].mxu0
        %v7385 = vadd.f32 %v7192, %v7384
        %v7386 = vpop.f32.mrb[0].mxu0
        %v7387 = vadd.f32 %v7194, %v7386
        %v7388 = vpop.f32.mrb[0].mxu0
        %v7389 = vadd.f32 %v7196, %v7388
        %7390 = vmatprep.mubr.bf16.mxu0 %v5072
        %7391 = vmatmul.mubr.bf16.gmra.mrb[0].mxu0 %v5071
        %v7392 = vpop.f32.mrb[0].mxu0
        %v7393 = vadd.f32 %v7200, %v7392
        %v7394 = vpop.f32.mrb[0].mxu0
        %v7395 = vadd.f32 %v7202, %v7394
        %v7396 = vpop.f32.mrb[0].mxu0
        %v7397 = vadd.f32 %v7204, %v7396
        %v7398 = vpop.f32.mrb[0].mxu0
        %v7399 = vadd.f32 %v7206, %v7398
        %7400 = vmatprep.mubr.bf16.mxu0 %v5088
        %7401 = vmatmul.mubr.bf16.gmra.mrb[0].mxu0 %v5087
        %v7402 = vpop.f32.mrb[0].mxu0
        %v7403 = vadd.f32 %v7210, %v7402
        %v7404 = vpop.f32.mrb[0].mxu0
        %v7405 = vadd.f32 %v7212, %v7404
        %v7406 = vpop.f32.mrb[0].mxu0
        %v7407 = vadd.f32 %v7214, %v7406
        %v7408 = vpop.f32.mrb[0].mxu0
        %v7409 = vadd.f32 %v7216, %v7408
        %7410 = vmatprep.mubr.bf16.mxu0 %v5104
        %7411 = vmatmul.mubr.bf16.gmra.mrb[0].mxu0 %v5103
        %v7412 = vpop.f32.mrb[0].mxu0
        %v7413 = vadd.f32 %v7220, %v7412
        %v7414 = vpop.f32.mrb[0].mxu0
        %v7415 = vadd.f32 %v7222, %v7414
        %v7416 = vpop.f32.mrb[0].mxu0
        %v7417 = vadd.f32 %v7224, %v7416
        %v7418 = vpop.f32.mrb[0].mxu0
        %v7419 = vadd.f32 %v7226, %v7418
        %7420 = vdwg.mxu0
        %7421 = vmatprep.subr.bf16.mxu0 %v6266
        %7422 = vmatpush1.bf16.msra.mxu0 %v6265
        %7423 = vmatprep.subr.bf16.mxu0 %v6268
        %7424 = vmatpush1.bf16.msra.mxu0 %v6267
        %7425 = vmatprep.subr.bf16.mxu0 %v6270
        %7426 = vmatpush1.bf16.msra.mxu0 %v6269
        %7427 = vmatprep.subr.bf16.mxu0 %v6272
        %7428 = vmatpush1.bf16.msra.mxu0 %v6271
        %7429 = vmatprep.subr.bf16.mxu0 %v6274
        %7430 = vmatpush1.bf16.msra.mxu0 %v6273
        %7431 = vmatprep.subr.bf16.mxu0 %v6276
        %7432 = vmatpush1.bf16.msra.mxu0 %v6275
        %7433 = vmatprep.subr.bf16.mxu0 %v6278
        %7434 = vmatpush1.bf16.msra.mxu0 %v6277
        %7435 = vmatprep.subr.bf16.mxu0 %v6280
        %7436 = vmatpush1.bf16.msra.mxu0 %v6279
        %7437 = vmatprep.subr.bf16.mxu0 %v6282
        %7438 = vmatpush1.bf16.msra.mxu0 %v6281
        %7439 = vmatprep.subr.bf16.mxu0 %v6284
        %7440 = vmatpush1.bf16.msra.mxu0 %v6283
        %7441 = vmatprep.subr.bf16.mxu0 %v6286
        %7442 = vmatpush1.bf16.msra.mxu0 %v6285
        %7443 = vmatprep.subr.bf16.mxu0 %v6288
        %7444 = vmatpush1.bf16.msra.mxu0 %v6287
        %7445 = vmatprep.subr.bf16.mxu0 %v6290
        %7446 = vmatpush1.bf16.msra.mxu0 %v6289
        %7447 = vmatprep.subr.bf16.mxu0 %v6292
        %7448 = vmatpush1.bf16.msra.mxu0 %v6291
        %7449 = vmatprep.subr.bf16.mxu0 %v6294
        %7450 = vmatpush1.bf16.msra.mxu0 %v6293
        %7451 = vmatprep.subr.bf16.mxu0 %v6296
        %7452 = vmatpush1.bf16.msra.mxu0 %v6295
        %7453 = vmatprep.mubr.bf16.mxu0 %v4866
        %7454 = vmatmul.mubr.bf16.gmra.mrb[0].mxu0 %v4865
        %v7455 = vpop.f32.mrb[0].mxu0
        %v7456 = vadd.f32 %v7263, %v7455
        %v7457 = vpop.f32.mrb[0].mxu0
        %v7458 = vadd.f32 %v7265, %v7457
        %v7459 = vpop.f32.mrb[0].mxu0
        %v7460 = vadd.f32 %v7267, %v7459
        %v7461 = vpop.f32.mrb[0].mxu0
        %v7462 = vadd.f32 %v7269, %v7461
        %7463 = vmatprep.mubr.bf16.mxu0 %v4882
        %7464 = vmatmul.mubr.bf16.gmra.mrb[0].mxu0 %v4881
        %v7465 = vpop.f32.mrb[0].mxu0
        %v7466 = vadd.f32 %v7273, %v7465
        %v7467 = vpop.f32.mrb[0].mxu0
        %v7468 = vadd.f32 %v7275, %v7467
        %v7469 = vpop.f32.mrb[0].mxu0
        %v7470 = vadd.f32 %v7277, %v7469
        %v7471 = vpop.f32.mrb[0].mxu0
        %v7472 = vadd.f32 %v7279, %v7471
        %7473 = vmatprep.mubr.bf16.mxu0 %v4898
        %7474 = vmatmul.mubr.bf16.gmra.mrb[0].mxu0 %v4897
        %v7475 = vpop.f32.mrb[0].mxu0
        %v7476 = vadd.f32 %v7283, %v7475
        %v7477 = vpop.f32.mrb[0].mxu0
        %v7478 = vadd.f32 %v7285, %v7477
        %v7479 = vpop.f32.mrb[0].mxu0
        %v7480 = vadd.f32 %v7287, %v7479
        %v7481 = vpop.f32.mrb[0].mxu0
        %v7482 = vadd.f32 %v7289, %v7481
        %7483 = vmatprep.mubr.bf16.mxu0 %v4914
        %7484 = vmatmul.mubr.bf16.gmra.mrb[0].mxu0 %v4913
        %v7485 = vpop.f32.mrb[0].mxu0
        %v7486 = vadd.f32 %v7293, %v7485
        %v7487 = vpop.f32.mrb[0].mxu0
        %v7488 = vadd.f32 %v7295, %v7487
        %v7489 = vpop.f32.mrb[0].mxu0
        %v7490 = vadd.f32 %v7297, %v7489
        %v7491 = vpop.f32.mrb[0].mxu0
        %v7492 = vadd.f32 %v7299, %v7491
        %7493 = vmatprep.mubr.bf16.mxu0 %v4930
        %7494 = vmatmul.mubr.bf16.gmra.mrb[0].mxu0 %v4929
        %v7495 = vpop.f32.mrb[0].mxu0
        %v7496 = vadd.f32 %v7303, %v7495
        %v7497 = vpop.f32.mrb[0].mxu0
        %v7498 = vadd.f32 %v7305, %v7497
        %v7499 = vpop.f32.mrb[0].mxu0
        %v7500 = vadd.f32 %v7307, %v7499
        %v7501 = vpop.f32.mrb[0].mxu0
        %v7502 = vadd.f32 %v7309, %v7501
        %7503 = vmatprep.mubr.bf16.mxu0 %v4946
        %7504 = vmatmul.mubr.bf16.gmra.mrb[0].mxu0 %v4945
        %v7505 = vpop.f32.mrb[0].mxu0
        %v7506 = vadd.f32 %v7313, %v7505
        %v7507 = vpop.f32.mrb[0].mxu0
        %v7508 = vadd.f32 %v7315, %v7507
        %v7509 = vpop.f32.mrb[0].mxu0
        %v7510 = vadd.f32 %v7317, %v7509
        %v7511 = vpop.f32.mrb[0].mxu0
        %v7512 = vadd.f32 %v7319, %v7511
        %7513 = vmatprep.mubr.bf16.mxu0 %v4962
        %7514 = vmatmul.mubr.bf16.gmra.mrb[0].mxu0 %v4961
        %v7515 = vpop.f32.mrb[0].mxu0
        %v7516 = vadd.f32 %v7323, %v7515
        %v7517 = vpop.f32.mrb[0].mxu0
        %v7518 = vadd.f32 %v7325, %v7517
        %v7519 = vpop.f32.mrb[0].mxu0
        %v7520 = vadd.f32 %v7327, %v7519
        %v7521 = vpop.f32.mrb[0].mxu0
        %v7522 = vadd.f32 %v7329, %v7521
        %7523 = vmatprep.mubr.bf16.mxu0 %v4978
        %7524 = vmatmul.mubr.bf16.gmra.mrb[0].mxu0 %v4977
        %v7525 = vpop.f32.mrb[0].mxu0
        %v7526 = vadd.f32 %v7333, %v7525
        %v7527 = vpop.f32.mrb[0].mxu0
        %v7528 = vadd.f32 %v7335, %v7527
        %v7529 = vpop.f32.mrb[0].mxu0
        %v7530 = vadd.f32 %v7337, %v7529
        %v7531 = vpop.f32.mrb[0].mxu0
        %v7532 = vadd.f32 %v7339, %v7531
        %7533 = vmatprep.mubr.bf16.mxu0 %v4994
        %7534 = vmatmul.mubr.bf16.gmra.mrb[0].mxu0 %v4993
        %v7535 = vpop.f32.mrb[0].mxu0
        %v7536 = vadd.f32 %v7343, %v7535
        %v7537 = vpop.f32.mrb[0].mxu0
        %v7538 = vadd.f32 %v7345, %v7537
        %v7539 = vpop.f32.mrb[0].mxu0
        %v7540 = vadd.f32 %v7347, %v7539
        %v7541 = vpop.f32.mrb[0].mxu0
        %v7542 = vadd.f32 %v7349, %v7541
        %7543 = vmatprep.mubr.bf16.mxu0 %v5010
        %7544 = vmatmul.mubr.bf16.gmra.mrb[0].mxu0 %v5009
        %v7545 = vpop.f32.mrb[0].mxu0
        %v7546 = vadd.f32 %v7353, %v7545
        %v7547 = vpop.f32.mrb[0].mxu0
        %v7548 = vadd.f32 %v7355, %v7547
        %v7549 = vpop.f32.mrb[0].mxu0
        %v7550 = vadd.f32 %v7357, %v7549
        %v7551 = vpop.f32.mrb[0].mxu0
        %v7552 = vadd.f32 %v7359, %v7551
        %7553 = vmatprep.mubr.bf16.mxu0 %v5026
        %7554 = vmatmul.mubr.bf16.gmra.mrb[0].mxu0 %v5025
        %v7555 = vpop.f32.mrb[0].mxu0
        %v7556 = vadd.f32 %v7363, %v7555
        %v7557 = vpop.f32.mrb[0].mxu0
        %v7558 = vadd.f32 %v7365, %v7557
        %v7559 = vpop.f32.mrb[0].mxu0
        %v7560 = vadd.f32 %v7367, %v7559
        %v7561 = vpop.f32.mrb[0].mxu0
        %v7562 = vadd.f32 %v7369, %v7561
        %7563 = vmatprep.mubr.bf16.mxu0 %v5042
        %7564 = vmatmul.mubr.bf16.gmra.mrb[0].mxu0 %v5041
        %v7565 = vpop.f32.mrb[0].mxu0
        %v7566 = vadd.f32 %v7373, %v7565
        %v7567 = vpop.f32.mrb[0].mxu0
        %v7568 = vadd.f32 %v7375, %v7567
        %v7569 = vpop.f32.mrb[0].mxu0
        %v7570 = vadd.f32 %v7377, %v7569
        %v7571 = vpop.f32.mrb[0].mxu0
        %v7572 = vadd.f32 %v7379, %v7571
        %7573 = vmatprep.mubr.bf16.mxu0 %v5058
        %7574 = vmatmul.mubr.bf16.gmra.mrb[0].mxu0 %v5057
        %v7575 = vpop.f32.mrb[0].mxu0
        %v7576 = vadd.f32 %v7383, %v7575
        %v7577 = vpop.f32.mrb[0].mxu0
        %v7578 = vadd.f32 %v7385, %v7577
        %v7579 = vpop.f32.mrb[0].mxu0
        %v7580 = vadd.f32 %v7387, %v7579
        %v7581 = vpop.f32.mrb[0].mxu0
        %v7582 = vadd.f32 %v7389, %v7581
        %7583 = vmatprep.mubr.bf16.mxu0 %v5074
        %7584 = vmatmul.mubr.bf16.gmra.mrb[0].mxu0 %v5073
        %v7585 = vpop.f32.mrb[0].mxu0
        %v7586 = vadd.f32 %v7393, %v7585
        %v7587 = vpop.f32.mrb[0].mxu0
        %v7588 = vadd.f32 %v7395, %v7587
        %v7589 = vpop.f32.mrb[0].mxu0
        %v7590 = vadd.f32 %v7397, %v7589
        %v7591 = vpop.f32.mrb[0].mxu0
        %v7592 = vadd.f32 %v7399, %v7591
        %7593 = vmatprep.mubr.bf16.mxu0 %v5090
        %7594 = vmatmul.mubr.bf16.gmra.mrb[0].mxu0 %v5089
        %v7595 = vpop.f32.mrb[0].mxu0
        %v7596 = vadd.f32 %v7403, %v7595
        %v7597 = vpop.f32.mrb[0].mxu0
        %v7598 = vadd.f32 %v7405, %v7597
        %v7599 = vpop.f32.mrb[0].mxu0
        %v7600 = vadd.f32 %v7407, %v7599
        %v7601 = vpop.f32.mrb[0].mxu0
        %v7602 = vadd.f32 %v7409, %v7601
        %7603 = vmatprep.mubr.bf16.mxu0 %v5106
        %7604 = vmatmul.mubr.bf16.gmra.mrb[0].mxu0 %v5105
        %v7605 = vpop.f32.mrb[0].mxu0
        %v7606 = vadd.f32 %v7413, %v7605
        %v7607 = vpop.f32.mrb[0].mxu0
        %v7608 = vadd.f32 %v7415, %v7607
        %v7609 = vpop.f32.mrb[0].mxu0
        %v7610 = vadd.f32 %v7417, %v7609
        %v7611 = vpop.f32.mrb[0].mxu0
        %v7612 = vadd.f32 %v7419, %v7611
        %7613 = vdwg.mxu0
        %7614 = vmatprep.subr.bf16.mxu0 %v6298
        %7615 = vmatpush1.bf16.msra.mxu0 %v6297
        %7616 = vmatprep.subr.bf16.mxu0 %v6300
        %7617 = vmatpush1.bf16.msra.mxu0 %v6299
        %7618 = vmatprep.subr.bf16.mxu0 %v6302
        %7619 = vmatpush1.bf16.msra.mxu0 %v6301
        %7620 = vmatprep.subr.bf16.mxu0 %v6304
        %7621 = vmatpush1.bf16.msra.mxu0 %v6303
        %7622 = vmatprep.subr.bf16.mxu0 %v6306
        %7623 = vmatpush1.bf16.msra.mxu0 %v6305
        %7624 = vmatprep.subr.bf16.mxu0 %v6308
        %7625 = vmatpush1.bf16.msra.mxu0 %v6307
        %7626 = vmatprep.subr.bf16.mxu0 %v6310
        %7627 = vmatpush1.bf16.msra.mxu0 %v6309
        %7628 = vmatprep.subr.bf16.mxu0 %v6312
        %7629 = vmatpush1.bf16.msra.mxu0 %v6311
        %7630 = vmatprep.subr.bf16.mxu0 %v6314
        %7631 = vmatpush1.bf16.msra.mxu0 %v6313
        %7632 = vmatprep.subr.bf16.mxu0 %v6316
        %7633 = vmatpush1.bf16.msra.mxu0 %v6315
        %7634 = vmatprep.subr.bf16.mxu0 %v6318
        %7635 = vmatpush1.bf16.msra.mxu0 %v6317
        %7636 = vmatprep.subr.bf16.mxu0 %v6320
        %7637 = vmatpush1.bf16.msra.mxu0 %v6319
        %7638 = vmatprep.subr.bf16.mxu0 %v6322
        %7639 = vmatpush1.bf16.msra.mxu0 %v6321
        %7640 = vmatprep.subr.bf16.mxu0 %v6324
        %7641 = vmatpush1.bf16.msra.mxu0 %v6323
        %7642 = vmatprep.subr.bf16.mxu0 %v6326
        %7643 = vmatpush1.bf16.msra.mxu0 %v6325
        %7644 = vmatprep.subr.bf16.mxu0 %v6328
        %7645 = vmatpush1.bf16.msra.mxu0 %v6327
        %7646 = vmatprep.mubr.bf16.mxu0 %v4868
        %7647 = vmatmul.mubr.bf16.gmra.mrb[0].mxu0 %v4867
        %v7648 = vpop.f32.mrb[0].mxu0
        %v7649 = vadd.f32 %v7456, %v7648
        %v7650 = vpop.f32.mrb[0].mxu0
        %v7651 = vadd.f32 %v7458, %v7650
        %v7652 = vpop.f32.mrb[0].mxu0
        %v7653 = vadd.f32 %v7460, %v7652
        %v7654 = vpop.f32.mrb[0].mxu0
        %v7655 = vadd.f32 %v7462, %v7654
        %7656 = vmatprep.mubr.bf16.mxu0 %v4884
        %7657 = vmatmul.mubr.bf16.gmra.mrb[0].mxu0 %v4883
        %v7658 = vpop.f32.mrb[0].mxu0
        %v7659 = vadd.f32 %v7466, %v7658
        %v7660 = vpop.f32.mrb[0].mxu0
        %v7661 = vadd.f32 %v7468, %v7660
        %v7662 = vpop.f32.mrb[0].mxu0
        %v7663 = vadd.f32 %v7470, %v7662
        %v7664 = vpop.f32.mrb[0].mxu0
        %v7665 = vadd.f32 %v7472, %v7664
        %7666 = vmatprep.mubr.bf16.mxu0 %v4900
        %7667 = vmatmul.mubr.bf16.gmra.mrb[0].mxu0 %v4899
        %v7668 = vpop.f32.mrb[0].mxu0
        %v7669 = vadd.f32 %v7476, %v7668
        %v7670 = vpop.f32.mrb[0].mxu0
        %v7671 = vadd.f32 %v7478, %v7670
        %v7672 = vpop.f32.mrb[0].mxu0
        %v7673 = vadd.f32 %v7480, %v7672
        %v7674 = vpop.f32.mrb[0].mxu0
        %v7675 = vadd.f32 %v7482, %v7674
        %7676 = vmatprep.mubr.bf16.mxu0 %v4916
        %7677 = vmatmul.mubr.bf16.gmra.mrb[0].mxu0 %v4915
        %v7678 = vpop.f32.mrb[0].mxu0
        %v7679 = vadd.f32 %v7486, %v7678
        %v7680 = vpop.f32.mrb[0].mxu0
        %v7681 = vadd.f32 %v7488, %v7680
        %v7682 = vpop.f32.mrb[0].mxu0
        %v7683 = vadd.f32 %v7490, %v7682
        %v7684 = vpop.f32.mrb[0].mxu0
        %v7685 = vadd.f32 %v7492, %v7684
        %7686 = vmatprep.mubr.bf16.mxu0 %v4932
        %7687 = vmatmul.mubr.bf16.gmra.mrb[0].mxu0 %v4931
        %v7688 = vpop.f32.mrb[0].mxu0
        %v7689 = vadd.f32 %v7496, %v7688
        %v7690 = vpop.f32.mrb[0].mxu0
        %v7691 = vadd.f32 %v7498, %v7690
        %v7692 = vpop.f32.mrb[0].mxu0
        %v7693 = vadd.f32 %v7500, %v7692
        %v7694 = vpop.f32.mrb[0].mxu0
        %v7695 = vadd.f32 %v7502, %v7694
        %7696 = vmatprep.mubr.bf16.mxu0 %v4948
        %7697 = vmatmul.mubr.bf16.gmra.mrb[0].mxu0 %v4947
        %v7698 = vpop.f32.mrb[0].mxu0
        %v7699 = vadd.f32 %v7506, %v7698
        %v7700 = vpop.f32.mrb[0].mxu0
        %v7701 = vadd.f32 %v7508, %v7700
        %v7702 = vpop.f32.mrb[0].mxu0
        %v7703 = vadd.f32 %v7510, %v7702
        %v7704 = vpop.f32.mrb[0].mxu0
        %v7705 = vadd.f32 %v7512, %v7704
        %7706 = vmatprep.mubr.bf16.mxu0 %v4964
        %7707 = vmatmul.mubr.bf16.gmra.mrb[0].mxu0 %v4963
        %v7708 = vpop.f32.mrb[0].mxu0
        %v7709 = vadd.f32 %v7516, %v7708
        %v7710 = vpop.f32.mrb[0].mxu0
        %v7711 = vadd.f32 %v7518, %v7710
        %v7712 = vpop.f32.mrb[0].mxu0
        %v7713 = vadd.f32 %v7520, %v7712
        %v7714 = vpop.f32.mrb[0].mxu0
        %v7715 = vadd.f32 %v7522, %v7714
        %7716 = vmatprep.mubr.bf16.mxu0 %v4980
        %7717 = vmatmul.mubr.bf16.gmra.mrb[0].mxu0 %v4979
        %v7718 = vpop.f32.mrb[0].mxu0
        %v7719 = vadd.f32 %v7526, %v7718
        %v7720 = vpop.f32.mrb[0].mxu0
        %v7721 = vadd.f32 %v7528, %v7720
        %v7722 = vpop.f32.mrb[0].mxu0
        %v7723 = vadd.f32 %v7530, %v7722
        %v7724 = vpop.f32.mrb[0].mxu0
        %v7725 = vadd.f32 %v7532, %v7724
        %7726 = vmatprep.mubr.bf16.mxu0 %v4996
        %7727 = vmatmul.mubr.bf16.gmra.mrb[0].mxu0 %v4995
        %v7728 = vpop.f32.mrb[0].mxu0
        %v7729 = vadd.f32 %v7536, %v7728
        %v7730 = vpop.f32.mrb[0].mxu0
        %v7731 = vadd.f32 %v7538, %v7730
        %v7732 = vpop.f32.mrb[0].mxu0
        %v7733 = vadd.f32 %v7540, %v7732
        %v7734 = vpop.f32.mrb[0].mxu0
        %v7735 = vadd.f32 %v7542, %v7734
        %7736 = vmatprep.mubr.bf16.mxu0 %v5012
        %7737 = vmatmul.mubr.bf16.gmra.mrb[0].mxu0 %v5011
        %v7738 = vpop.f32.mrb[0].mxu0
        %v7739 = vadd.f32 %v7546, %v7738
        %v7740 = vpop.f32.mrb[0].mxu0
        %v7741 = vadd.f32 %v7548, %v7740
        %v7742 = vpop.f32.mrb[0].mxu0
        %v7743 = vadd.f32 %v7550, %v7742
        %v7744 = vpop.f32.mrb[0].mxu0
        %v7745 = vadd.f32 %v7552, %v7744
        %7746 = vmatprep.mubr.bf16.mxu0 %v5028
        %7747 = vmatmul.mubr.bf16.gmra.mrb[0].mxu0 %v5027
        %v7748 = vpop.f32.mrb[0].mxu0
        %v7749 = vadd.f32 %v7556, %v7748
        %v7750 = vpop.f32.mrb[0].mxu0
        %v7751 = vadd.f32 %v7558, %v7750
        %v7752 = vpop.f32.mrb[0].mxu0
        %v7753 = vadd.f32 %v7560, %v7752
        %v7754 = vpop.f32.mrb[0].mxu0
        %v7755 = vadd.f32 %v7562, %v7754
        %7756 = vmatprep.mubr.bf16.mxu0 %v5044
        %7757 = vmatmul.mubr.bf16.gmra.mrb[0].mxu0 %v5043
        %v7758 = vpop.f32.mrb[0].mxu0
        %v7759 = vadd.f32 %v7566, %v7758
        %v7760 = vpop.f32.mrb[0].mxu0
        %v7761 = vadd.f32 %v7568, %v7760
        %v7762 = vpop.f32.mrb[0].mxu0
        %v7763 = vadd.f32 %v7570, %v7762
        %v7764 = vpop.f32.mrb[0].mxu0
        %v7765 = vadd.f32 %v7572, %v7764
        %7766 = vmatprep.mubr.bf16.mxu0 %v5060
        %7767 = vmatmul.mubr.bf16.gmra.mrb[0].mxu0 %v5059
        %v7768 = vpop.f32.mrb[0].mxu0
        %v7769 = vadd.f32 %v7576, %v7768
        %v7770 = vpop.f32.mrb[0].mxu0
        %v7771 = vadd.f32 %v7578, %v7770
        %v7772 = vpop.f32.mrb[0].mxu0
        %v7773 = vadd.f32 %v7580, %v7772
        %v7774 = vpop.f32.mrb[0].mxu0
        %v7775 = vadd.f32 %v7582, %v7774
        %7776 = vmatprep.mubr.bf16.mxu0 %v5076
        %7777 = vmatmul.mubr.bf16.gmra.mrb[0].mxu0 %v5075
        %v7778 = vpop.f32.mrb[0].mxu0
        %v7779 = vadd.f32 %v7586, %v7778
        %v7780 = vpop.f32.mrb[0].mxu0
        %v7781 = vadd.f32 %v7588, %v7780
        %v7782 = vpop.f32.mrb[0].mxu0
        %v7783 = vadd.f32 %v7590, %v7782
        %v7784 = vpop.f32.mrb[0].mxu0
        %v7785 = vadd.f32 %v7592, %v7784
        %7786 = vmatprep.mubr.bf16.mxu0 %v5092
        %7787 = vmatmul.mubr.bf16.gmra.mrb[0].mxu0 %v5091
        %v7788 = vpop.f32.mrb[0].mxu0
        %v7789 = vadd.f32 %v7596, %v7788
        %v7790 = vpop.f32.mrb[0].mxu0
        %v7791 = vadd.f32 %v7598, %v7790
        %v7792 = vpop.f32.mrb[0].mxu0
        %v7793 = vadd.f32 %v7600, %v7792
        %v7794 = vpop.f32.mrb[0].mxu0
        %v7795 = vadd.f32 %v7602, %v7794
        %7796 = vmatprep.mubr.bf16.mxu0 %v5108
        %7797 = vmatmul.mubr.bf16.gmra.mrb[0].mxu0 %v5107
        %v7798 = vpop.f32.mrb[0].mxu0
        %v7799 = vadd.f32 %v7606, %v7798
        %v7800 = vpop.f32.mrb[0].mxu0
        %v7801 = vadd.f32 %v7608, %v7800
        %v7802 = vpop.f32.mrb[0].mxu0
        %v7803 = vadd.f32 %v7610, %v7802
        %v7804 = vpop.f32.mrb[0].mxu0
        %v7805 = vadd.f32 %v7612, %v7804
        %7806 = vdwg.mxu0
        %7807 = vmatprep.subr.bf16.mxu0 %v6330
        %7808 = vmatpush1.bf16.msra.mxu0 %v6329
        %7809 = vmatprep.subr.bf16.mxu0 %v6332
        %7810 = vmatpush1.bf16.msra.mxu0 %v6331
        %7811 = vmatprep.subr.bf16.mxu0 %v6334
        %7812 = vmatpush1.bf16.msra.mxu0 %v6333
        %7813 = vmatprep.subr.bf16.mxu0 %v6336
        %7814 = vmatpush1.bf16.msra.mxu0 %v6335
        %7815 = vmatprep.subr.bf16.mxu0 %v6338
        %7816 = vmatpush1.bf16.msra.mxu0 %v6337
        %7817 = vmatprep.subr.bf16.mxu0 %v6340
        %7818 = vmatpush1.bf16.msra.mxu0 %v6339
        %7819 = vmatprep.subr.bf16.mxu0 %v6342
        %7820 = vmatpush1.bf16.msra.mxu0 %v6341
        %7821 = vmatprep.subr.bf16.mxu0 %v6344
        %7822 = vmatpush1.bf16.msra.mxu0 %v6343
        %7823 = vmatprep.subr.bf16.mxu0 %v6346
        %7824 = vmatpush1.bf16.msra.mxu0 %v6345
        %7825 = vmatprep.subr.bf16.mxu0 %v6348
        %7826 = vmatpush1.bf16.msra.mxu0 %v6347
        %7827 = vmatprep.subr.bf16.mxu0 %v6350
        %7828 = vmatpush1.bf16.msra.mxu0 %v6349
        %7829 = vmatprep.subr.bf16.mxu0 %v6352
        %7830 = vmatpush1.bf16.msra.mxu0 %v6351
        %7831 = vmatprep.subr.bf16.mxu0 %v6354
        %7832 = vmatpush1.bf16.msra.mxu0 %v6353
        %7833 = vmatprep.subr.bf16.mxu0 %v6356
        %7834 = vmatpush1.bf16.msra.mxu0 %v6355
        %7835 = vmatprep.subr.bf16.mxu0 %v6358
        %7836 = vmatpush1.bf16.msra.mxu0 %v6357
        %7837 = vmatprep.subr.bf16.mxu0 %v6360
        %7838 = vmatpush1.bf16.msra.mxu0 %v6359
        %7839 = vmatprep.mubr.bf16.mxu0 %v4870
        %7840 = vmatmul.mubr.bf16.gmra.mrb[0].mxu0 %v4869
        %v7841 = vpop.f32.mrb[0].mxu0
        %v7842 = vadd.f32 %v7649, %v7841
        %v7843 = vpop.f32.mrb[0].mxu0
        %v7844 = vadd.f32 %v7651, %v7843
        %v7845 = vpop.f32.mrb[0].mxu0
        %v7846 = vadd.f32 %v7653, %v7845
        %v7847 = vpop.f32.mrb[0].mxu0
        %v7848 = vadd.f32 %v7655, %v7847
        %7849 = vmatprep.mubr.bf16.mxu0 %v4886
        %7850 = vmatmul.mubr.bf16.gmra.mrb[0].mxu0 %v4885
        %v7851 = vpop.f32.mrb[0].mxu0
        %v7852 = vadd.f32 %v7659, %v7851
        %v7853 = vpop.f32.mrb[0].mxu0
        %v7854 = vadd.f32 %v7661, %v7853
        %v7855 = vpop.f32.mrb[0].mxu0
        %v7856 = vadd.f32 %v7663, %v7855
        %v7857 = vpop.f32.mrb[0].mxu0
        %v7858 = vadd.f32 %v7665, %v7857
        %7859 = vmatprep.mubr.bf16.mxu0 %v4902
        %7860 = vmatmul.mubr.bf16.gmra.mrb[0].mxu0 %v4901
        %v7861 = vpop.f32.mrb[0].mxu0
        %v7862 = vadd.f32 %v7669, %v7861
        %v7863 = vpop.f32.mrb[0].mxu0
        %v7864 = vadd.f32 %v7671, %v7863
        %v7865 = vpop.f32.mrb[0].mxu0
        %v7866 = vadd.f32 %v7673, %v7865
        %v7867 = vpop.f32.mrb[0].mxu0
        %v7868 = vadd.f32 %v7675, %v7867
        %7869 = vmatprep.mubr.bf16.mxu0 %v4918
        %7870 = vmatmul.mubr.bf16.gmra.mrb[0].mxu0 %v4917
        %v7871 = vpop.f32.mrb[0].mxu0
        %v7872 = vadd.f32 %v7679, %v7871
        %v7873 = vpop.f32.mrb[0].mxu0
        %v7874 = vadd.f32 %v7681, %v7873
        %v7875 = vpop.f32.mrb[0].mxu0
        %v7876 = vadd.f32 %v7683, %v7875
        %v7877 = vpop.f32.mrb[0].mxu0
        %v7878 = vadd.f32 %v7685, %v7877
        %7879 = vmatprep.mubr.bf16.mxu0 %v4934
        %7880 = vmatmul.mubr.bf16.gmra.mrb[0].mxu0 %v4933
        %v7881 = vpop.f32.mrb[0].mxu0
        %v7882 = vadd.f32 %v7689, %v7881
        %v7883 = vpop.f32.mrb[0].mxu0
        %v7884 = vadd.f32 %v7691, %v7883
        %v7885 = vpop.f32.mrb[0].mxu0
        %v7886 = vadd.f32 %v7693, %v7885
        %v7887 = vpop.f32.mrb[0].mxu0
        %v7888 = vadd.f32 %v7695, %v7887
        %7889 = vmatprep.mubr.bf16.mxu0 %v4950
        %7890 = vmatmul.mubr.bf16.gmra.mrb[0].mxu0 %v4949
        %v7891 = vpop.f32.mrb[0].mxu0
        %v7892 = vadd.f32 %v7699, %v7891
        %v7893 = vpop.f32.mrb[0].mxu0
        %v7894 = vadd.f32 %v7701, %v7893
        %v7895 = vpop.f32.mrb[0].mxu0
        %v7896 = vadd.f32 %v7703, %v7895
        %v7897 = vpop.f32.mrb[0].mxu0
        %v7898 = vadd.f32 %v7705, %v7897
        %7899 = vmatprep.mubr.bf16.mxu0 %v4966
        %7900 = vmatmul.mubr.bf16.gmra.mrb[0].mxu0 %v4965
        %v7901 = vpop.f32.mrb[0].mxu0
        %v7902 = vadd.f32 %v7709, %v7901
        %v7903 = vpop.f32.mrb[0].mxu0
        %v7904 = vadd.f32 %v7711, %v7903
        %v7905 = vpop.f32.mrb[0].mxu0
        %v7906 = vadd.f32 %v7713, %v7905
        %v7907 = vpop.f32.mrb[0].mxu0
        %v7908 = vadd.f32 %v7715, %v7907
        %7909 = vmatprep.mubr.bf16.mxu0 %v4982
        %7910 = vmatmul.mubr.bf16.gmra.mrb[0].mxu0 %v4981
        %v7911 = vpop.f32.mrb[0].mxu0
        %v7912 = vadd.f32 %v7719, %v7911
        %v7913 = vpop.f32.mrb[0].mxu0
        %v7914 = vadd.f32 %v7721, %v7913
        %v7915 = vpop.f32.mrb[0].mxu0
        %v7916 = vadd.f32 %v7723, %v7915
        %v7917 = vpop.f32.mrb[0].mxu0
        %v7918 = vadd.f32 %v7725, %v7917
        %7919 = vmatprep.mubr.bf16.mxu0 %v4998
        %7920 = vmatmul.mubr.bf16.gmra.mrb[0].mxu0 %v4997
        %v7921 = vpop.f32.mrb[0].mxu0
        %v7922 = vadd.f32 %v7729, %v7921
        %v7923 = vpop.f32.mrb[0].mxu0
        %v7924 = vadd.f32 %v7731, %v7923
        %v7925 = vpop.f32.mrb[0].mxu0
        %v7926 = vadd.f32 %v7733, %v7925
        %v7927 = vpop.f32.mrb[0].mxu0
        %v7928 = vadd.f32 %v7735, %v7927
        %7929 = vmatprep.mubr.bf16.mxu0 %v5014
        %7930 = vmatmul.mubr.bf16.gmra.mrb[0].mxu0 %v5013
        %v7931 = vpop.f32.mrb[0].mxu0
        %v7932 = vadd.f32 %v7739, %v7931
        %v7933 = vpop.f32.mrb[0].mxu0
        %v7934 = vadd.f32 %v7741, %v7933
        %v7935 = vpop.f32.mrb[0].mxu0
        %v7936 = vadd.f32 %v7743, %v7935
        %v7937 = vpop.f32.mrb[0].mxu0
        %v7938 = vadd.f32 %v7745, %v7937
        %7939 = vmatprep.mubr.bf16.mxu0 %v5030
        %7940 = vmatmul.mubr.bf16.gmra.mrb[0].mxu0 %v5029
        %v7941 = vpop.f32.mrb[0].mxu0
        %v7942 = vadd.f32 %v7749, %v7941
        %v7943 = vpop.f32.mrb[0].mxu0
        %v7944 = vadd.f32 %v7751, %v7943
        %v7945 = vpop.f32.mrb[0].mxu0
        %v7946 = vadd.f32 %v7753, %v7945
        %v7947 = vpop.f32.mrb[0].mxu0
        %v7948 = vadd.f32 %v7755, %v7947
        %7949 = vmatprep.mubr.bf16.mxu0 %v5046
        %7950 = vmatmul.mubr.bf16.gmra.mrb[0].mxu0 %v5045
        %v7951 = vpop.f32.mrb[0].mxu0
        %v7952 = vadd.f32 %v7759, %v7951
        %v7953 = vpop.f32.mrb[0].mxu0
        %v7954 = vadd.f32 %v7761, %v7953
        %v7955 = vpop.f32.mrb[0].mxu0
        %v7956 = vadd.f32 %v7763, %v7955
        %v7957 = vpop.f32.mrb[0].mxu0
        %v7958 = vadd.f32 %v7765, %v7957
        %7959 = vmatprep.mubr.bf16.mxu0 %v5062
        %7960 = vmatmul.mubr.bf16.gmra.mrb[0].mxu0 %v5061
        %v7961 = vpop.f32.mrb[0].mxu0
        %v7962 = vadd.f32 %v7769, %v7961
        %v7963 = vpop.f32.mrb[0].mxu0
        %v7964 = vadd.f32 %v7771, %v7963
        %v7965 = vpop.f32.mrb[0].mxu0
        %v7966 = vadd.f32 %v7773, %v7965
        %v7967 = vpop.f32.mrb[0].mxu0
        %v7968 = vadd.f32 %v7775, %v7967
        %7969 = vmatprep.mubr.bf16.mxu0 %v5078
        %7970 = vmatmul.mubr.bf16.gmra.mrb[0].mxu0 %v5077
        %v7971 = vpop.f32.mrb[0].mxu0
        %v7972 = vadd.f32 %v7779, %v7971
        %v7973 = vpop.f32.mrb[0].mxu0
        %v7974 = vadd.f32 %v7781, %v7973
        %v7975 = vpop.f32.mrb[0].mxu0
        %v7976 = vadd.f32 %v7783, %v7975
        %v7977 = vpop.f32.mrb[0].mxu0
        %v7978 = vadd.f32 %v7785, %v7977
        %7979 = vmatprep.mubr.bf16.mxu0 %v5094
        %7980 = vmatmul.mubr.bf16.gmra.mrb[0].mxu0 %v5093
        %v7981 = vpop.f32.mrb[0].mxu0
        %v7982 = vadd.f32 %v7789, %v7981
        %v7983 = vpop.f32.mrb[0].mxu0
        %v7984 = vadd.f32 %v7791, %v7983
        %v7985 = vpop.f32.mrb[0].mxu0
        %v7986 = vadd.f32 %v7793, %v7985
        %v7987 = vpop.f32.mrb[0].mxu0
        %v7988 = vadd.f32 %v7795, %v7987
        %7989 = vmatprep.mubr.bf16.mxu0 %v5110
        %7990 = vmatmul.mubr.bf16.gmra.mrb[0].mxu0 %v5109
        %v7991 = vpop.f32.mrb[0].mxu0
        %v7992 = vadd.f32 %v7799, %v7991
        %v7993 = vpop.f32.mrb[0].mxu0
        %v7994 = vadd.f32 %v7801, %v7993
        %v7995 = vpop.f32.mrb[0].mxu0
        %v7996 = vadd.f32 %v7803, %v7995
        %v7997 = vpop.f32.mrb[0].mxu0
        %v7998 = vadd.f32 %v7805, %v7997
        %7999 = vdwg.mxu0
        %8000 = vmatprep.subr.bf16.mxu0 %v6362
        %8001 = vmatpush1.bf16.msra.mxu0 %v6361
        %8002 = vmatprep.subr.bf16.mxu0 %v6364
        %8003 = vmatpush1.bf16.msra.mxu0 %v6363
        %8004 = vmatprep.subr.bf16.mxu0 %v6366
        %8005 = vmatpush1.bf16.msra.mxu0 %v6365
        %8006 = vmatprep.subr.bf16.mxu0 %v6368
        %8007 = vmatpush1.bf16.msra.mxu0 %v6367
        %8008 = vmatprep.subr.bf16.mxu0 %v6370
        %8009 = vmatpush1.bf16.msra.mxu0 %v6369
        %8010 = vmatprep.subr.bf16.mxu0 %v6372
        %8011 = vmatpush1.bf16.msra.mxu0 %v6371
        %8012 = vmatprep.subr.bf16.mxu0 %v6374
        %8013 = vmatpush1.bf16.msra.mxu0 %v6373
        %8014 = vmatprep.subr.bf16.mxu0 %v6376
        %8015 = vmatpush1.bf16.msra.mxu0 %v6375
        %8016 = vmatprep.subr.bf16.mxu0 %v6378
        %8017 = vmatpush1.bf16.msra.mxu0 %v6377
        %8018 = vmatprep.subr.bf16.mxu0 %v6380
        %8019 = vmatpush1.bf16.msra.mxu0 %v6379
        %8020 = vmatprep.subr.bf16.mxu0 %v6382
        %8021 = vmatpush1.bf16.msra.mxu0 %v6381
        %8022 = vmatprep.subr.bf16.mxu0 %v6384
        %8023 = vmatpush1.bf16.msra.mxu0 %v6383
        %8024 = vmatprep.subr.bf16.mxu0 %v6386
        %8025 = vmatpush1.bf16.msra.mxu0 %v6385
        %8026 = vmatprep.subr.bf16.mxu0 %v6388
        %8027 = vmatpush1.bf16.msra.mxu0 %v6387
        %8028 = vmatprep.subr.bf16.mxu0 %v6390
        %8029 = vmatpush1.bf16.msra.mxu0 %v6389
        %8030 = vmatprep.subr.bf16.mxu0 %v6392
        %8031 = vmatpush1.bf16.msra.mxu0 %v6391
        %8032 = vmatprep.mubr.bf16.mxu0 %v4872
        %8033 = vmatmul.mubr.bf16.gmra.mrb[0].mxu0 %v4871
        %v8034 = vpop.f32.mrb[0].mxu0
        %v8035 = vadd.f32 %v7842, %v8034
        %v8036 = vpop.f32.mrb[0].mxu0
        %v8037 = vadd.f32 %v7844, %v8036
        %v8038 = vpop.f32.mrb[0].mxu0
        %v8039 = vadd.f32 %v7846, %v8038
        %v8040 = vpop.f32.mrb[0].mxu0
        %v8041 = vadd.f32 %v7848, %v8040
        %8042 = vmatprep.mubr.bf16.mxu0 %v4888
        %8043 = vmatmul.mubr.bf16.gmra.mrb[0].mxu0 %v4887
        %v8044 = vpop.f32.mrb[0].mxu0
        %v8045 = vadd.f32 %v7852, %v8044
        %v8046 = vpop.f32.mrb[0].mxu0
        %v8047 = vadd.f32 %v7854, %v8046
        %v8048 = vpop.f32.mrb[0].mxu0
        %v8049 = vadd.f32 %v7856, %v8048
        %v8050 = vpop.f32.mrb[0].mxu0
        %v8051 = vadd.f32 %v7858, %v8050
        %8052 = vmatprep.mubr.bf16.mxu0 %v4904
        %8053 = vmatmul.mubr.bf16.gmra.mrb[0].mxu0 %v4903
        %v8054 = vpop.f32.mrb[0].mxu0
        %v8055 = vadd.f32 %v7862, %v8054
        %v8056 = vpop.f32.mrb[0].mxu0
        %v8057 = vadd.f32 %v7864, %v8056
        %v8058 = vpop.f32.mrb[0].mxu0
        %v8059 = vadd.f32 %v7866, %v8058
        %v8060 = vpop.f32.mrb[0].mxu0
        %v8061 = vadd.f32 %v7868, %v8060
        %8062 = vmatprep.mubr.bf16.mxu0 %v4920
        %8063 = vmatmul.mubr.bf16.gmra.mrb[0].mxu0 %v4919
        %v8064 = vpop.f32.mrb[0].mxu0
        %v8065 = vadd.f32 %v7872, %v8064
        %v8066 = vpop.f32.mrb[0].mxu0
        %v8067 = vadd.f32 %v7874, %v8066
        %v8068 = vpop.f32.mrb[0].mxu0
        %v8069 = vadd.f32 %v7876, %v8068
        %v8070 = vpop.f32.mrb[0].mxu0
        %v8071 = vadd.f32 %v7878, %v8070
        %8072 = vmatprep.mubr.bf16.mxu0 %v4936
        %8073 = vmatmul.mubr.bf16.gmra.mrb[0].mxu0 %v4935
        %v8074 = vpop.f32.mrb[0].mxu0
        %v8075 = vadd.f32 %v7882, %v8074
        %v8076 = vpop.f32.mrb[0].mxu0
        %v8077 = vadd.f32 %v7884, %v8076
        %v8078 = vpop.f32.mrb[0].mxu0
        %v8079 = vadd.f32 %v7886, %v8078
        %v8080 = vpop.f32.mrb[0].mxu0
        %v8081 = vadd.f32 %v7888, %v8080
        %8082 = vmatprep.mubr.bf16.mxu0 %v4952
        %8083 = vmatmul.mubr.bf16.gmra.mrb[0].mxu0 %v4951
        %v8084 = vpop.f32.mrb[0].mxu0
        %v8085 = vadd.f32 %v7892, %v8084
        %v8086 = vpop.f32.mrb[0].mxu0
        %v8087 = vadd.f32 %v7894, %v8086
        %v8088 = vpop.f32.mrb[0].mxu0
        %v8089 = vadd.f32 %v7896, %v8088
        %v8090 = vpop.f32.mrb[0].mxu0
        %v8091 = vadd.f32 %v7898, %v8090
        %8092 = vmatprep.mubr.bf16.mxu0 %v4968
        %8093 = vmatmul.mubr.bf16.gmra.mrb[0].mxu0 %v4967
        %v8094 = vpop.f32.mrb[0].mxu0
        %v8095 = vadd.f32 %v7902, %v8094
        %v8096 = vpop.f32.mrb[0].mxu0
        %v8097 = vadd.f32 %v7904, %v8096
        %v8098 = vpop.f32.mrb[0].mxu0
        %v8099 = vadd.f32 %v7906, %v8098
        %v8100 = vpop.f32.mrb[0].mxu0
        %v8101 = vadd.f32 %v7908, %v8100
        %8102 = vmatprep.mubr.bf16.mxu0 %v4984
        %8103 = vmatmul.mubr.bf16.gmra.mrb[0].mxu0 %v4983
        %v8104 = vpop.f32.mrb[0].mxu0
        %v8105 = vadd.f32 %v7912, %v8104
        %v8106 = vpop.f32.mrb[0].mxu0
        %v8107 = vadd.f32 %v7914, %v8106
        %v8108 = vpop.f32.mrb[0].mxu0
        %v8109 = vadd.f32 %v7916, %v8108
        %v8110 = vpop.f32.mrb[0].mxu0
        %v8111 = vadd.f32 %v7918, %v8110
        %8112 = vmatprep.mubr.bf16.mxu0 %v5000
        %8113 = vmatmul.mubr.bf16.gmra.mrb[0].mxu0 %v4999
        %v8114 = vpop.f32.mrb[0].mxu0
        %v8115 = vadd.f32 %v7922, %v8114
        %v8116 = vpop.f32.mrb[0].mxu0
        %v8117 = vadd.f32 %v7924, %v8116
        %v8118 = vpop.f32.mrb[0].mxu0
        %v8119 = vadd.f32 %v7926, %v8118
        %v8120 = vpop.f32.mrb[0].mxu0
        %v8121 = vadd.f32 %v7928, %v8120
        %8122 = vmatprep.mubr.bf16.mxu0 %v5016
        %8123 = vmatmul.mubr.bf16.gmra.mrb[0].mxu0 %v5015
        %v8124 = vpop.f32.mrb[0].mxu0
        %v8125 = vadd.f32 %v7932, %v8124
        %v8126 = vpop.f32.mrb[0].mxu0
        %v8127 = vadd.f32 %v7934, %v8126
        %v8128 = vpop.f32.mrb[0].mxu0
        %v8129 = vadd.f32 %v7936, %v8128
        %v8130 = vpop.f32.mrb[0].mxu0
        %v8131 = vadd.f32 %v7938, %v8130
        %8132 = vmatprep.mubr.bf16.mxu0 %v5032
        %8133 = vmatmul.mubr.bf16.gmra.mrb[0].mxu0 %v5031
        %v8134 = vpop.f32.mrb[0].mxu0
        %v8135 = vadd.f32 %v7942, %v8134
        %v8136 = vpop.f32.mrb[0].mxu0
        %v8137 = vadd.f32 %v7944, %v8136
        %v8138 = vpop.f32.mrb[0].mxu0
        %v8139 = vadd.f32 %v7946, %v8138
        %v8140 = vpop.f32.mrb[0].mxu0
        %v8141 = vadd.f32 %v7948, %v8140
        %8142 = vmatprep.mubr.bf16.mxu0 %v5048
        %8143 = vmatmul.mubr.bf16.gmra.mrb[0].mxu0 %v5047
        %v8144 = vpop.f32.mrb[0].mxu0
        %v8145 = vadd.f32 %v7952, %v8144
        %v8146 = vpop.f32.mrb[0].mxu0
        %v8147 = vadd.f32 %v7954, %v8146
        %v8148 = vpop.f32.mrb[0].mxu0
        %v8149 = vadd.f32 %v7956, %v8148
        %v8150 = vpop.f32.mrb[0].mxu0
        %v8151 = vadd.f32 %v7958, %v8150
        %8152 = vmatprep.mubr.bf16.mxu0 %v5064
        %8153 = vmatmul.mubr.bf16.gmra.mrb[0].mxu0 %v5063
        %v8154 = vpop.f32.mrb[0].mxu0
        %v8155 = vadd.f32 %v7962, %v8154
        %v8156 = vpop.f32.mrb[0].mxu0
        %v8157 = vadd.f32 %v7964, %v8156
        %v8158 = vpop.f32.mrb[0].mxu0
        %v8159 = vadd.f32 %v7966, %v8158
        %v8160 = vpop.f32.mrb[0].mxu0
        %v8161 = vadd.f32 %v7968, %v8160
        %8162 = vmatprep.mubr.bf16.mxu0 %v5080
        %8163 = vmatmul.mubr.bf16.gmra.mrb[0].mxu0 %v5079
        %v8164 = vpop.f32.mrb[0].mxu0
        %v8165 = vadd.f32 %v7972, %v8164
        %v8166 = vpop.f32.mrb[0].mxu0
        %v8167 = vadd.f32 %v7974, %v8166
        %v8168 = vpop.f32.mrb[0].mxu0
        %v8169 = vadd.f32 %v7976, %v8168
        %v8170 = vpop.f32.mrb[0].mxu0
        %v8171 = vadd.f32 %v7978, %v8170
        %8172 = vmatprep.mubr.bf16.mxu0 %v5096
        %8173 = vmatmul.mubr.bf16.gmra.mrb[0].mxu0 %v5095
        %v8174 = vpop.f32.mrb[0].mxu0
        %v8175 = vadd.f32 %v7982, %v8174
        %v8176 = vpop.f32.mrb[0].mxu0
        %v8177 = vadd.f32 %v7984, %v8176
        %v8178 = vpop.f32.mrb[0].mxu0
        %v8179 = vadd.f32 %v7986, %v8178
        %v8180 = vpop.f32.mrb[0].mxu0
        %v8181 = vadd.f32 %v7988, %v8180
        %8182 = vmatprep.mubr.bf16.mxu0 %v5112
        %8183 = vmatmul.mubr.bf16.gmra.mrb[0].mxu0 %v5111
        %v8184 = vpop.f32.mrb[0].mxu0
        %v8185 = vadd.f32 %v7992, %v8184
        %v8186 = vpop.f32.mrb[0].mxu0
        %v8187 = vadd.f32 %v7994, %v8186
        %v8188 = vpop.f32.mrb[0].mxu0
        %v8189 = vadd.f32 %v7996, %v8188
        %v8190 = vpop.f32.mrb[0].mxu0
        %v8191 = vadd.f32 %v7998, %v8190
        %8192 = vdwg.mxu0
        %v8193 = vadd.f32 %v4793, %v8035
        %v8194 = vadd.f32 %v4794, %v8037
        %v8195 = vadd.f32 %v4795, %v8039
        %v8196 = vadd.f32 %v4796, %v8041
        %v8197 = vadd.f32 %v4797, %v8045
        %v8198 = vadd.f32 %v4798, %v8047
        %v8199 = vadd.f32 %v4799, %v8049
        %v8200 = vadd.f32 %v4800, %v8051
        %v8201 = vadd.f32 %v4801, %v8055
        %v8202 = vadd.f32 %v4802, %v8057
        %v8203 = vadd.f32 %v4803, %v8059
        %v8204 = vadd.f32 %v4804, %v8061
        %v8205 = vadd.f32 %v4805, %v8065
        %v8206 = vadd.f32 %v4806, %v8067
        %v8207 = vadd.f32 %v4807, %v8069
        %v8208 = vadd.f32 %v4808, %v8071
        %v8209 = vadd.f32 %v4809, %v8075
        %v8210 = vadd.f32 %v4810, %v8077
        %v8211 = vadd.f32 %v4811, %v8079
        %v8212 = vadd.f32 %v4812, %v8081
        %v8213 = vadd.f32 %v4813, %v8085
        %v8214 = vadd.f32 %v4814, %v8087
        %v8215 = vadd.f32 %v4815, %v8089
        %v8216 = vadd.f32 %v4816, %v8091
        %v8217 = vadd.f32 %v4817, %v8095
        %v8218 = vadd.f32 %v4818, %v8097
        %v8219 = vadd.f32 %v4819, %v8099
        %v8220 = vadd.f32 %v4820, %v8101
        %v8221 = vadd.f32 %v4821, %v8105
        %v8222 = vadd.f32 %v4822, %v8107
        %v8223 = vadd.f32 %v4823, %v8109
        %v8224 = vadd.f32 %v4824, %v8111
        %v8225 = vadd.f32 %v4825, %v8115
        %v8226 = vadd.f32 %v4826, %v8117
        %v8227 = vadd.f32 %v4827, %v8119
        %v8228 = vadd.f32 %v4828, %v8121
        %v8229 = vadd.f32 %v4829, %v8125
        %v8230 = vadd.f32 %v4830, %v8127
        %v8231 = vadd.f32 %v4831, %v8129
        %v8232 = vadd.f32 %v4832, %v8131
        %v8233 = vadd.f32 %v4833, %v8135
        %v8234 = vadd.f32 %v4834, %v8137
        %v8235 = vadd.f32 %v4835, %v8139
        %v8236 = vadd.f32 %v4836, %v8141
        %v8237 = vadd.f32 %v4837, %v8145
        %v8238 = vadd.f32 %v4838, %v8147
        %v8239 = vadd.f32 %v4839, %v8149
        %v8240 = vadd.f32 %v4840, %v8151
        %v8241 = vadd.f32 %v4841, %v8155
        %v8242 = vadd.f32 %v4842, %v8157
        %v8243 = vadd.f32 %v4843, %v8159
        %v8244 = vadd.f32 %v4844, %v8161
        %v8245 = vadd.f32 %v4845, %v8165
        %v8246 = vadd.f32 %v4846, %v8167
        %v8247 = vadd.f32 %v4847, %v8169
        %v8248 = vadd.f32 %v4848, %v8171
        %v8249 = vadd.f32 %v4849, %v8175
        %v8250 = vadd.f32 %v4850, %v8177
        %v8251 = vadd.f32 %v4851, %v8179
        %v8252 = vadd.f32 %v4852, %v8181
        %v8253 = vadd.f32 %v4853, %v8185
        %v8254 = vadd.f32 %v4854, %v8187
        %v8255 = vadd.f32 %v4855, %v8189
        %v8256 = vadd.f32 %v4856, %v8191
        %8257 = vst [vmem:[#allocation3] sm:$0xff] %v8193
        %8258 = vst [vmem:[#allocation3 + $0x8] sm:$0xff] %v8194
        %8259 = vst [vmem:[#allocation3 + $0x10] sm:$0xff] %v8195
        %8260 = vst [vmem:[#allocation3 + $0x18] sm:$0xff] %v8196
        %8261 = vst [vmem:[#allocation3 + $0x20] sm:$0xff] %v8197
        %8262 = vst [vmem:[#allocation3 + $0x28] sm:$0xff] %v8198
        %8263 = vst [vmem:[#allocation3 + $0x30] sm:$0xff] %v8199
        %8264 = vst [vmem:[#allocation3 + $0x38] sm:$0xff] %v8200
        %8265 = vst [vmem:[#allocation3 + $0x40] sm:$0xff] %v8201
        %8266 = vst [vmem:[#allocation3 + $0x48] sm:$0xff] %v8202
        %8267 = vst [vmem:[#allocation3 + $0x50] sm:$0xff] %v8203
        %8268 = vst [vmem:[#allocation3 + $0x58] sm:$0xff] %v8204
        %8269 = vst [vmem:[#allocation3 + $0x60] sm:$0xff] %v8205
        %8270 = vst [vmem:[#allocation3 + $0x68] sm:$0xff] %v8206
        %8271 = vst [vmem:[#allocation3 + $0x70] sm:$0xff] %v8207
        %8272 = vst [vmem:[#allocation3 + $0x78] sm:$0xff] %v8208
        %8273 = vst [vmem:[#allocation3 + $0x80] sm:$0xff] %v8209
        %8274 = vst [vmem:[#allocation3 + $0x88] sm:$0xff] %v8210
        %8275 = vst [vmem:[#allocation3 + $0x90] sm:$0xff] %v8211
        %8276 = vst [vmem:[#allocation3 + $0x98] sm:$0xff] %v8212
        %8277 = vst [vmem:[#allocation3 + $0xa0] sm:$0xff] %v8213
        %8278 = vst [vmem:[#allocation3 + $0xa8] sm:$0xff] %v8214
        %8279 = vst [vmem:[#allocation3 + $0xb0] sm:$0xff] %v8215
        %8280 = vst [vmem:[#allocation3 + $0xb8] sm:$0xff] %v8216
        %8281 = vst [vmem:[#allocation3 + $0xc0] sm:$0xff] %v8217
        %8282 = vst [vmem:[#allocation3 + $0xc8] sm:$0xff] %v8218
        %8283 = vst [vmem:[#allocation3 + $0xd0] sm:$0xff] %v8219
        %8284 = vst [vmem:[#allocation3 + $0xd8] sm:$0xff] %v8220
        %8285 = vst [vmem:[#allocation3 + $0xe0] sm:$0xff] %v8221
        %8286 = vst [vmem:[#allocation3 + $0xe8] sm:$0xff] %v8222
        %8287 = vst [vmem:[#allocation3 + $0xf0] sm:$0xff] %v8223
        %8288 = vst [vmem:[#allocation3 + $0xf8] sm:$0xff] %v8224
        %8289 = vst [vmem:[#allocation3 + $0x100] sm:$0xff] %v8225
        %8290 = vst [vmem:[#allocation3 + $0x108] sm:$0xff] %v8226
        %8291 = vst [vmem:[#allocation3 + $0x110] sm:$0xff] %v8227
        %8292 = vst [vmem:[#allocation3 + $0x118] sm:$0xff] %v8228
        %8293 = vst [vmem:[#allocation3 + $0x120] sm:$0xff] %v8229
        %8294 = vst [vmem:[#allocation3 + $0x128] sm:$0xff] %v8230
        %8295 = vst [vmem:[#allocation3 + $0x130] sm:$0xff] %v8231
        %8296 = vst [vmem:[#allocation3 + $0x138] sm:$0xff] %v8232
        %8297 = vst [vmem:[#allocation3 + $0x140] sm:$0xff] %v8233
        %8298 = vst [vmem:[#allocation3 + $0x148] sm:$0xff] %v8234
        %8299 = vst [vmem:[#allocation3 + $0x150] sm:$0xff] %v8235
        %8300 = vst [vmem:[#allocation3 + $0x158] sm:$0xff] %v8236
        %8301 = vst [vmem:[#allocation3 + $0x160] sm:$0xff] %v8237
        %8302 = vst [vmem:[#allocation3 + $0x168] sm:$0xff] %v8238
        %8303 = vst [vmem:[#allocation3 + $0x170] sm:$0xff] %v8239
        %8304 = vst [vmem:[#allocation3 + $0x178] sm:$0xff] %v8240
        %8305 = vst [vmem:[#allocation3 + $0x180] sm:$0xff] %v8241
        %8306 = vst [vmem:[#allocation3 + $0x188] sm:$0xff] %v8242
        %8307 = vst [vmem:[#allocation3 + $0x190] sm:$0xff] %v8243
        %8308 = vst [vmem:[#allocation3 + $0x198] sm:$0xff] %v8244
        %8309 = vst [vmem:[#allocation3 + $0x1a0] sm:$0xff] %v8245
        %8310 = vst [vmem:[#allocation3 + $0x1a8] sm:$0xff] %v8246
        %8311 = vst [vmem:[#allocation3 + $0x1b0] sm:$0xff] %v8247
        %8312 = vst [vmem:[#allocation3 + $0x1b8] sm:$0xff] %v8248
        %8313 = vst [vmem:[#allocation3 + $0x1c0] sm:$0xff] %v8249
        %8314 = vst [vmem:[#allocation3 + $0x1c8] sm:$0xff] %v8250
        %8315 = vst [vmem:[#allocation3 + $0x1d0] sm:$0xff] %v8251
        %8316 = vst [vmem:[#allocation3 + $0x1d8] sm:$0xff] %v8252
        %8317 = vst [vmem:[#allocation3 + $0x1e0] sm:$0xff] %v8253
        %8318 = vst [vmem:[#allocation3 + $0x1e8] sm:$0xff] %v8254
        %8319 = vst [vmem:[#allocation3 + $0x1f0] sm:$0xff] %v8255
        %8320 = vst [vmem:[#allocation3 + $0x1f8] sm:$0xff] %v8256
        // Predicated region
        $region61: #{tpu_custom_call.1} parent=39 // pred_check
          %p8321 = pneg %p345
        $region62: #{tpu_custom_call.1} parent=39 // pred_check_branch
          %8323 = sbr.rel (%p8321) target = $region64
        $region63: #{tpu_custom_call.1} parent=39 // pred_region
          %v8324 = vld [vmem:[#allocation3] sm:$0xff]
          %v8325 = vld [vmem:[#allocation3 + $0x8] sm:$0xff]
          %v8326 = vld [vmem:[#allocation3 + $0x10] sm:$0xff]
          %v8327 = vld [vmem:[#allocation3 + $0x18] sm:$0xff]
          %v8328 = vld [vmem:[#allocation3 + $0x20] sm:$0xff]
          %v8329 = vld [vmem:[#allocation3 + $0x28] sm:$0xff]
          %v8330 = vld [vmem:[#allocation3 + $0x30] sm:$0xff]
          %v8331 = vld [vmem:[#allocation3 + $0x38] sm:$0xff]
          %v8332 = vld [vmem:[#allocation3 + $0x40] sm:$0xff]
          %v8333 = vld [vmem:[#allocation3 + $0x48] sm:$0xff]
          %v8334 = vld [vmem:[#allocation3 + $0x50] sm:$0xff]
          %v8335 = vld [vmem:[#allocation3 + $0x58] sm:$0xff]
          %v8336 = vld [vmem:[#allocation3 + $0x60] sm:$0xff]
          %v8337 = vld [vmem:[#allocation3 + $0x68] sm:$0xff]
          %v8338 = vld [vmem:[#allocation3 + $0x70] sm:$0xff]
          %v8339 = vld [vmem:[#allocation3 + $0x78] sm:$0xff]
          %v8340 = vld [vmem:[#allocation3 + $0x80] sm:$0xff]
          %v8341 = vld [vmem:[#allocation3 + $0x88] sm:$0xff]
          %v8342 = vld [vmem:[#allocation3 + $0x90] sm:$0xff]
          %v8343 = vld [vmem:[#allocation3 + $0x98] sm:$0xff]
          %v8344 = vld [vmem:[#allocation3 + $0xa0] sm:$0xff]
          %v8345 = vld [vmem:[#allocation3 + $0xa8] sm:$0xff]
          %v8346 = vld [vmem:[#allocation3 + $0xb0] sm:$0xff]
          %v8347 = vld [vmem:[#allocation3 + $0xb8] sm:$0xff]
          %v8348 = vld [vmem:[#allocation3 + $0xc0] sm:$0xff]
          %v8349 = vld [vmem:[#allocation3 + $0xc8] sm:$0xff]
          %v8350 = vld [vmem:[#allocation3 + $0xd0] sm:$0xff]
          %v8351 = vld [vmem:[#allocation3 + $0xd8] sm:$0xff]
          %v8352 = vld [vmem:[#allocation3 + $0xe0] sm:$0xff]
          %v8353 = vld [vmem:[#allocation3 + $0xe8] sm:$0xff]
          %v8354 = vld [vmem:[#allocation3 + $0xf0] sm:$0xff]
          %v8355 = vld [vmem:[#allocation3 + $0xf8] sm:$0xff]
          %v8356 = vld [vmem:[#allocation3 + $0x100] sm:$0xff]
          %v8357 = vld [vmem:[#allocation3 + $0x108] sm:$0xff]
          %v8358 = vld [vmem:[#allocation3 + $0x110] sm:$0xff]
          %v8359 = vld [vmem:[#allocation3 + $0x118] sm:$0xff]
          %v8360 = vld [vmem:[#allocation3 + $0x120] sm:$0xff]
          %v8361 = vld [vmem:[#allocation3 + $0x128] sm:$0xff]
          %v8362 = vld [vmem:[#allocation3 + $0x130] sm:$0xff]
          %v8363 = vld [vmem:[#allocation3 + $0x138] sm:$0xff]
          %v8364 = vld [vmem:[#allocation3 + $0x140] sm:$0xff]
          %v8365 = vld [vmem:[#allocation3 + $0x148] sm:$0xff]
          %v8366 = vld [vmem:[#allocation3 + $0x150] sm:$0xff]
          %v8367 = vld [vmem:[#allocation3 + $0x158] sm:$0xff]
          %v8368 = vld [vmem:[#allocation3 + $0x160] sm:$0xff]
          %v8369 = vld [vmem:[#allocation3 + $0x168] sm:$0xff]
          %v8370 = vld [vmem:[#allocation3 + $0x170] sm:$0xff]
          %v8371 = vld [vmem:[#allocation3 + $0x178] sm:$0xff]
          %v8372 = vld [vmem:[#allocation3 + $0x180] sm:$0xff]
          %v8373 = vld [vmem:[#allocation3 + $0x188] sm:$0xff]
          %v8374 = vld [vmem:[#allocation3 + $0x190] sm:$0xff]
          %v8375 = vld [vmem:[#allocation3 + $0x198] sm:$0xff]
          %v8376 = vld [vmem:[#allocation3 + $0x1a0] sm:$0xff]
          %v8377 = vld [vmem:[#allocation3 + $0x1a8] sm:$0xff]
          %v8378 = vld [vmem:[#allocation3 + $0x1b0] sm:$0xff]
          %v8379 = vld [vmem:[#allocation3 + $0x1b8] sm:$0xff]
          %v8380 = vld [vmem:[#allocation3 + $0x1c0] sm:$0xff]
          %v8381 = vld [vmem:[#allocation3 + $0x1c8] sm:$0xff]
          %v8382 = vld [vmem:[#allocation3 + $0x1d0] sm:$0xff]
          %v8383 = vld [vmem:[#allocation3 + $0x1d8] sm:$0xff]
          %v8384 = vld [vmem:[#allocation3 + $0x1e0] sm:$0xff]
          %v8385 = vld [vmem:[#allocation3 + $0x1e8] sm:$0xff]
          %v8386 = vld [vmem:[#allocation3 + $0x1f0] sm:$0xff]
          %v8387 = vld [vmem:[#allocation3 + $0x1f8] sm:$0xff]
          %v8388 = vld [vmem:[%s4] sm:$0x3]
          %v8390 = vlaneseq
          %v8391 = vshrl.u32 %v8390, 7
          %v8392 = vsub.s32 0, %v8391
          %v8393 = vrot.slane %v8388, %v8392
          %v8394 = vlaneseq
          %v8395 = vshrl.u32 %v8394, 7
          %v8396 = vsub.s32 1, %v8395
          %v8397 = vrot.slane %v8388, %v8396
          %v8400 = vadd.f32 %v8324, %v8393
          %v8401 = vadd.f32 %v8325, %v8397
          %v8402 = vadd.f32 %v8326, %v8393
          %v8403 = vadd.f32 %v8327, %v8397
          %v8404 = vadd.f32 %v8328, %v8393
          %v8405 = vadd.f32 %v8329, %v8397
          %v8406 = vadd.f32 %v8330, %v8393
          %v8407 = vadd.f32 %v8331, %v8397
          %v8408 = vadd.f32 %v8332, %v8393
          %v8409 = vadd.f32 %v8333, %v8397
          %v8410 = vadd.f32 %v8334, %v8393
          %v8411 = vadd.f32 %v8335, %v8397
          %v8412 = vadd.f32 %v8336, %v8393
          %v8413 = vadd.f32 %v8337, %v8397
          %v8414 = vadd.f32 %v8338, %v8393
          %v8415 = vadd.f32 %v8339, %v8397
          %v8416 = vadd.f32 %v8340, %v8393
          %v8417 = vadd.f32 %v8341, %v8397
          %v8418 = vadd.f32 %v8342, %v8393
          %v8419 = vadd.f32 %v8343, %v8397
          %v8420 = vadd.f32 %v8344, %v8393
          %v8421 = vadd.f32 %v8345, %v8397
          %v8422 = vadd.f32 %v8346, %v8393
          %v8423 = vadd.f32 %v8347, %v8397
          %v8424 = vadd.f32 %v8348, %v8393
          %v8425 = vadd.f32 %v8349, %v8397
          %v8426 = vadd.f32 %v8350, %v8393
          %v8427 = vadd.f32 %v8351, %v8397
          %v8428 = vadd.f32 %v8352, %v8393
          %v8429 = vadd.f32 %v8353, %v8397
          %v8430 = vadd.f32 %v8354, %v8393
          %v8431 = vadd.f32 %v8355, %v8397
          %v8432 = vadd.f32 %v8356, %v8393
          %v8433 = vadd.f32 %v8357, %v8397
          %v8434 = vadd.f32 %v8358, %v8393
          %v8435 = vadd.f32 %v8359, %v8397
          %v8436 = vadd.f32 %v8360, %v8393
          %v8437 = vadd.f32 %v8361, %v8397
          %v8438 = vadd.f32 %v8362, %v8393
          %v8439 = vadd.f32 %v8363, %v8397
          %v8440 = vadd.f32 %v8364, %v8393
          %v8441 = vadd.f32 %v8365, %v8397
          %v8442 = vadd.f32 %v8366, %v8393
          %v8443 = vadd.f32 %v8367, %v8397
          %v8444 = vadd.f32 %v8368, %v8393
          %v8445 = vadd.f32 %v8369, %v8397
          %v8446 = vadd.f32 %v8370, %v8393
          %v8447 = vadd.f32 %v8371, %v8397
          %v8448 = vadd.f32 %v8372, %v8393
          %v8449 = vadd.f32 %v8373, %v8397
          %v8450 = vadd.f32 %v8374, %v8393
          %v8451 = vadd.f32 %v8375, %v8397
          %v8452 = vadd.f32 %v8376, %v8393
          %v8453 = vadd.f32 %v8377, %v8397
          %v8454 = vadd.f32 %v8378, %v8393
          %v8455 = vadd.f32 %v8379, %v8397
          %v8456 = vadd.f32 %v8380, %v8393
          %v8457 = vadd.f32 %v8381, %v8397
          %v8458 = vadd.f32 %v8382, %v8393
          %v8459 = vadd.f32 %v8383, %v8397
          %v8460 = vadd.f32 %v8384, %v8393
          %v8461 = vadd.f32 %v8385, %v8397
          %v8462 = vadd.f32 %v8386, %v8393
          %v8463 = vadd.f32 %v8387, %v8397
          %v8464 = vmax.f32 %v8400, 0.0
          %v8465 = vmax.f32 %v8401, 0.0
          %v8466 = vmax.f32 %v8402, 0.0
          %v8467 = vmax.f32 %v8403, 0.0
          %v8468 = vmax.f32 %v8404, 0.0
          %v8469 = vmax.f32 %v8405, 0.0
          %v8470 = vmax.f32 %v8406, 0.0
          %v8471 = vmax.f32 %v8407, 0.0
          %v8472 = vmax.f32 %v8408, 0.0
          %v8473 = vmax.f32 %v8409, 0.0
          %v8474 = vmax.f32 %v8410, 0.0
          %v8475 = vmax.f32 %v8411, 0.0
          %v8476 = vmax.f32 %v8412, 0.0
          %v8477 = vmax.f32 %v8413, 0.0
          %v8478 = vmax.f32 %v8414, 0.0
          %v8479 = vmax.f32 %v8415, 0.0
          %v8480 = vmax.f32 %v8416, 0.0
          %v8481 = vmax.f32 %v8417, 0.0
          %v8482 = vmax.f32 %v8418, 0.0
          %v8483 = vmax.f32 %v8419, 0.0
          %v8484 = vmax.f32 %v8420, 0.0
          %v8485 = vmax.f32 %v8421, 0.0
          %v8486 = vmax.f32 %v8422, 0.0
          %v8487 = vmax.f32 %v8423, 0.0
          %v8488 = vmax.f32 %v8424, 0.0
          %v8489 = vmax.f32 %v8425, 0.0
          %v8490 = vmax.f32 %v8426, 0.0
          %v8491 = vmax.f32 %v8427, 0.0
          %v8492 = vmax.f32 %v8428, 0.0
          %v8493 = vmax.f32 %v8429, 0.0
          %v8494 = vmax.f32 %v8430, 0.0
          %v8495 = vmax.f32 %v8431, 0.0
          %v8496 = vmax.f32 %v8432, 0.0
          %v8497 = vmax.f32 %v8433, 0.0
          %v8498 = vmax.f32 %v8434, 0.0
          %v8499 = vmax.f32 %v8435, 0.0
          %v8500 = vmax.f32 %v8436, 0.0
          %v8501 = vmax.f32 %v8437, 0.0
          %v8502 = vmax.f32 %v8438, 0.0
          %v8503 = vmax.f32 %v8439, 0.0
          %v8504 = vmax.f32 %v8440, 0.0
          %v8505 = vmax.f32 %v8441, 0.0
          %v8506 = vmax.f32 %v8442, 0.0
          %v8507 = vmax.f32 %v8443, 0.0
          %v8508 = vmax.f32 %v8444, 0.0
          %v8509 = vmax.f32 %v8445, 0.0
          %v8510 = vmax.f32 %v8446, 0.0
          %v8511 = vmax.f32 %v8447, 0.0
          %v8512 = vmax.f32 %v8448, 0.0
          %v8513 = vmax.f32 %v8449, 0.0
          %v8514 = vmax.f32 %v8450, 0.0
          %v8515 = vmax.f32 %v8451, 0.0
          %v8516 = vmax.f32 %v8452, 0.0
          %v8517 = vmax.f32 %v8453, 0.0
          %v8518 = vmax.f32 %v8454, 0.0
          %v8519 = vmax.f32 %v8455, 0.0
          %v8520 = vmax.f32 %v8456, 0.0
          %v8521 = vmax.f32 %v8457, 0.0
          %v8522 = vmax.f32 %v8458, 0.0
          %v8523 = vmax.f32 %v8459, 0.0
          %v8524 = vmax.f32 %v8460, 0.0
          %v8525 = vmax.f32 %v8461, 0.0
          %v8526 = vmax.f32 %v8462, 0.0
          %v8527 = vmax.f32 %v8463, 0.0
          %v8528 = vpack.c.bf16 %v8466, %v8464
          %v8529 = vpack.c.bf16 %v8467, %v8465
          %v8530 = vpack.c.bf16 %v8470, %v8468
          %v8531 = vpack.c.bf16 %v8471, %v8469
          %v8532 = vpack.c.bf16 %v8474, %v8472
          %v8533 = vpack.c.bf16 %v8475, %v8473
          %v8534 = vpack.c.bf16 %v8478, %v8476
          %v8535 = vpack.c.bf16 %v8479, %v8477
          %v8536 = vpack.c.bf16 %v8482, %v8480
          %v8537 = vpack.c.bf16 %v8483, %v8481
          %v8538 = vpack.c.bf16 %v8486, %v8484
          %v8539 = vpack.c.bf16 %v8487, %v8485
          %v8540 = vpack.c.bf16 %v8490, %v8488
          %v8541 = vpack.c.bf16 %v8491, %v8489
          %v8542 = vpack.c.bf16 %v8494, %v8492
          %v8543 = vpack.c.bf16 %v8495, %v8493
          %v8544 = vpack.c.bf16 %v8498, %v8496
          %v8545 = vpack.c.bf16 %v8499, %v8497
          %v8546 = vpack.c.bf16 %v8502, %v8500
          %v8547 = vpack.c.bf16 %v8503, %v8501
          %v8548 = vpack.c.bf16 %v8506, %v8504
          %v8549 = vpack.c.bf16 %v8507, %v8505
          %v8550 = vpack.c.bf16 %v8510, %v8508
          %v8551 = vpack.c.bf16 %v8511, %v8509
          %v8552 = vpack.c.bf16 %v8514, %v8512
          %v8553 = vpack.c.bf16 %v8515, %v8513
          %v8554 = vpack.c.bf16 %v8518, %v8516
          %v8555 = vpack.c.bf16 %v8519, %v8517
          %v8556 = vpack.c.bf16 %v8522, %v8520
          %v8557 = vpack.c.bf16 %v8523, %v8521
          %v8558 = vpack.c.bf16 %v8526, %v8524
          %v8559 = vpack.c.bf16 %v8527, %v8525
          %v8592 = vunpack.c.l.b16 %v8528
          %v8593 = vunpack.c.l.b16 %v8529
          %v8594 = vunpack.c.h.b16 %v8528
          %v8595 = vunpack.c.h.b16 %v8529
          %v8596 = vunpack.c.l.b16 %v8530
          %v8597 = vunpack.c.l.b16 %v8531
          %v8598 = vunpack.c.h.b16 %v8530
          %v8599 = vunpack.c.h.b16 %v8531
          %v8600 = vunpack.c.l.b16 %v8532
          %v8601 = vunpack.c.l.b16 %v8533
          %v8602 = vunpack.c.h.b16 %v8532
          %v8603 = vunpack.c.h.b16 %v8533
          %v8604 = vunpack.c.l.b16 %v8534
          %v8605 = vunpack.c.l.b16 %v8535
          %v8606 = vunpack.c.h.b16 %v8534
          %v8607 = vunpack.c.h.b16 %v8535
          %v8608 = vunpack.c.l.b16 %v8536
          %v8609 = vunpack.c.l.b16 %v8537
          %v8610 = vunpack.c.h.b16 %v8536
          %v8611 = vunpack.c.h.b16 %v8537
          %v8612 = vunpack.c.l.b16 %v8538
          %v8613 = vunpack.c.l.b16 %v8539
          %v8614 = vunpack.c.h.b16 %v8538
          %v8615 = vunpack.c.h.b16 %v8539
          %v8616 = vunpack.c.l.b16 %v8540
          %v8617 = vunpack.c.l.b16 %v8541
          %v8618 = vunpack.c.h.b16 %v8540
          %v8619 = vunpack.c.h.b16 %v8541
          %v8620 = vunpack.c.l.b16 %v8542
          %v8621 = vunpack.c.l.b16 %v8543
          %v8622 = vunpack.c.h.b16 %v8542
          %v8623 = vunpack.c.h.b16 %v8543
          %v8624 = vunpack.c.l.b16 %v8544
          %v8625 = vunpack.c.l.b16 %v8545
          %v8626 = vunpack.c.h.b16 %v8544
          %v8627 = vunpack.c.h.b16 %v8545
          %v8628 = vunpack.c.l.b16 %v8546
          %v8629 = vunpack.c.l.b16 %v8547
          %v8630 = vunpack.c.h.b16 %v8546
          %v8631 = vunpack.c.h.b16 %v8547
          %v8632 = vunpack.c.l.b16 %v8548
          %v8633 = vunpack.c.l.b16 %v8549
          %v8634 = vunpack.c.h.b16 %v8548
          %v8635 = vunpack.c.h.b16 %v8549
          %v8636 = vunpack.c.l.b16 %v8550
          %v8637 = vunpack.c.l.b16 %v8551
          %v8638 = vunpack.c.h.b16 %v8550
          %v8639 = vunpack.c.h.b16 %v8551
          %v8640 = vunpack.c.l.b16 %v8552
          %v8641 = vunpack.c.l.b16 %v8553
          %v8642 = vunpack.c.h.b16 %v8552
          %v8643 = vunpack.c.h.b16 %v8553
          %v8644 = vunpack.c.l.b16 %v8554
          %v8645 = vunpack.c.l.b16 %v8555
          %v8646 = vunpack.c.h.b16 %v8554
          %v8647 = vunpack.c.h.b16 %v8555
          %v8648 = vunpack.c.l.b16 %v8556
          %v8649 = vunpack.c.l.b16 %v8557
          %v8650 = vunpack.c.h.b16 %v8556
          %v8651 = vunpack.c.h.b16 %v8557
          %v8652 = vunpack.c.l.b16 %v8558
          %v8653 = vunpack.c.l.b16 %v8559
          %v8654 = vunpack.c.h.b16 %v8558
          %v8655 = vunpack.c.h.b16 %v8559
          %v8656 = vpack.c.b16 %v8593, %v8592
          %v8657 = vpack.c.b16 %v8595, %v8594
          %v8658 = vpack.c.b16 %v8597, %v8596
          %v8659 = vpack.c.b16 %v8599, %v8598
          %v8660 = vpack.c.b16 %v8601, %v8600
          %v8661 = vpack.c.b16 %v8603, %v8602
          %v8662 = vpack.c.b16 %v8605, %v8604
          %v8663 = vpack.c.b16 %v8607, %v8606
          %v8664 = vpack.c.b16 %v8609, %v8608
          %v8665 = vpack.c.b16 %v8611, %v8610
          %v8666 = vpack.c.b16 %v8613, %v8612
          %v8667 = vpack.c.b16 %v8615, %v8614
          %v8668 = vpack.c.b16 %v8617, %v8616
          %v8669 = vpack.c.b16 %v8619, %v8618
          %v8670 = vpack.c.b16 %v8621, %v8620
          %v8671 = vpack.c.b16 %v8623, %v8622
          %v8672 = vpack.c.b16 %v8625, %v8624
          %v8673 = vpack.c.b16 %v8627, %v8626
          %v8674 = vpack.c.b16 %v8629, %v8628
          %v8675 = vpack.c.b16 %v8631, %v8630
          %v8676 = vpack.c.b16 %v8633, %v8632
          %v8677 = vpack.c.b16 %v8635, %v8634
          %v8678 = vpack.c.b16 %v8637, %v8636
          %v8679 = vpack.c.b16 %v8639, %v8638
          %v8680 = vpack.c.b16 %v8641, %v8640
          %v8681 = vpack.c.b16 %v8643, %v8642
          %v8682 = vpack.c.b16 %v8645, %v8644
          %v8683 = vpack.c.b16 %v8647, %v8646
          %v8684 = vpack.c.b16 %v8649, %v8648
          %v8685 = vpack.c.b16 %v8651, %v8650
          %v8686 = vpack.c.b16 %v8653, %v8652
          %v8687 = vpack.c.b16 %v8655, %v8654
          %8720 = vst [vmem:[%s329] sm:$0xff] %v8656
          %8721 = vst [vmem:[%s329 + $0x8] sm:$0xff] %v8657
          %8722 = vst [vmem:[%s329 + $0x10] sm:$0xff] %v8658
          %8723 = vst [vmem:[%s329 + $0x18] sm:$0xff] %v8659
          %8724 = vst [vmem:[%s329 + $0x20] sm:$0xff] %v8660
          %8725 = vst [vmem:[%s329 + $0x28] sm:$0xff] %v8661
          %8726 = vst [vmem:[%s329 + $0x30] sm:$0xff] %v8662
          %8727 = vst [vmem:[%s329 + $0x38] sm:$0xff] %v8663
          %8728 = vst [vmem:[%s329 + $0x40] sm:$0xff] %v8664
          %8729 = vst [vmem:[%s329 + $0x48] sm:$0xff] %v8665
          %8730 = vst [vmem:[%s329 + $0x50] sm:$0xff] %v8666
          %8731 = vst [vmem:[%s329 + $0x58] sm:$0xff] %v8667
          %8732 = vst [vmem:[%s329 + $0x60] sm:$0xff] %v8668
          %8733 = vst [vmem:[%s329 + $0x68] sm:$0xff] %v8669
          %8734 = vst [vmem:[%s329 + $0x70] sm:$0xff] %v8670
          %8735 = vst [vmem:[%s329 + $0x78] sm:$0xff] %v8671
          %8736 = vst [vmem:[%s329 + $0x80] sm:$0xff] %v8672
          %8737 = vst [vmem:[%s329 + $0x88] sm:$0xff] %v8673
          %8738 = vst [vmem:[%s329 + $0x90] sm:$0xff] %v8674
          %8739 = vst [vmem:[%s329 + $0x98] sm:$0xff] %v8675
          %8740 = vst [vmem:[%s329 + $0xa0] sm:$0xff] %v8676
          %8741 = vst [vmem:[%s329 + $0xa8] sm:$0xff] %v8677
          %8742 = vst [vmem:[%s329 + $0xb0] sm:$0xff] %v8678
          %8743 = vst [vmem:[%s329 + $0xb8] sm:$0xff] %v8679
          %8744 = vst [vmem:[%s329 + $0xc0] sm:$0xff] %v8680
          %8745 = vst [vmem:[%s329 + $0xc8] sm:$0xff] %v8681
          %8746 = vst [vmem:[%s329 + $0xd0] sm:$0xff] %v8682
          %8747 = vst [vmem:[%s329 + $0xd8] sm:$0xff] %v8683
          %8748 = vst [vmem:[%s329 + $0xe0] sm:$0xff] %v8684
          %8749 = vst [vmem:[%s329 + $0xe8] sm:$0xff] %v8685
          %8750 = vst [vmem:[%s329 + $0xf0] sm:$0xff] %v8686
          %8751 = vst [vmem:[%s329 + $0xf8] sm:$0xff] %v8687
        $region64: #{tpu_custom_call.1} parent=39 // pred_fallthru
          _
        %s8752 = sand.u32 %s169, 1
        %s8753 = scalar_lea.sflag [#allocation6], %s8752
        %s8754 = sand.u32 %s169, 1
        %s8755 = smul.addr %s8754, 256
        %s8756 = scalar_lea.vmem [#allocation12], %s8755
        // Predicated region
        $region65: #{tpu_custom_call.1} parent=39 // pred_check
          %p8757 = pneg %p179
        $region66: #{tpu_custom_call.1} parent=39 // pred_check_branch
          %8759 = sbr.rel (%p8757) target = $region68
        $region67: #{tpu_custom_call.1} parent=39 // pred_region
          %s8760 = smul.u32 32, %s28
          %s8761 = ssub.s32 48, %s8760
          %p8762 = scmp.lt.s32.totalorder %s8761, 32
          %s8763 = scalar_select %p8762, %s8761, 32
          %s8764 = smul.u32 64, %s8763
          %s8765 = smul.u32 %s8764, 2
          %s8767 = ssub.s32 4096, %s8765
          %8768 = vsyncadd %s8753, %s8767
          %p8769 = scmp.ne.s32.totalorder 0, %s8765
          %s8770 = smul.addr %s8760, 2
          %s8771 = smul.addr %s8770, 64
          %s8772 = scalar_lea.hbm %s5, %s8771
          %s8773 = smul.u32 8, %s8763
          %s8774 = sshll.u32 %s8756, 4
          %s8775 = int_to_ptr.vmem [resolvable:$true] %s8774
          %s8776 = sshll.u32 %s8773, 4
          %8780 = dma.vmem_to_hbm [thread:$0]  (%p8769), %s8775, %s8776, %s8772, %s8753, 128, 128, 8
        $region68: #{tpu_custom_call.1} parent=39 // pred_fallthru
          _
      $region40: #{tpu_custom_call.1} parent=5 // pred_fallthru
        _
      %p8781 = scmp.le.s32.totalorder 2, %s19
      // Predicated region
      $region69: #{tpu_custom_call.1} parent=5 // pred_check
        %p8782 = pneg %p8781
      $region70: #{tpu_custom_call.1} parent=5 // pred_check_branch
        %8784 = sbr.rel (%p8782) target = $region72
      $region71: #{tpu_custom_call.1} parent=5 // pred_region
        %s8785 = ssub.s32 %s19, 2
        // Predicated region
        $region73: #{tpu_custom_call.1} parent=71 // pred_check
          %p8786 = pneg %p185
        $region74: #{tpu_custom_call.1} parent=71 // pred_check_branch
          %8788 = sbr.rel (%p8786) target = $region76
        $region75: #{tpu_custom_call.1} parent=71 // pred_region
          %s8789 = sand.u32 %s170, 1
          %s8790 = scalar_lea.sflag [#allocation6], %s8789
          %s8791 = sand.u32 %s170, 1
          %s8792 = smul.addr %s8791, 256
          %s8793 = scalar_lea.vmem [#allocation12], %s8792
          %8794 = dma.done %s8790, 4096
        $region76: #{tpu_custom_call.1} parent=71 // pred_fallthru
          _
      $region72: #{tpu_custom_call.1} parent=5 // pred_fallthru
        _
    $region6: #{tpu_custom_call.1} parent=1 // loop_footer
      %s23 = sadd.s32 1, %s19
    $region7: #{tpu_custom_call.1} parent=1 // loop_footer_branch
      %18 = sbr.rel target = $region3
    $region8: #{tpu_custom_call.1} parent=1 // loop_exit
      _
    %8795 = vsyncpa [#allocation5], 1
    %s8796 = scalar_lea.sflag [#allocation5], 1
    %8797 = vsyncpa %s8796, 1
    %8798 = vsyncpa [#allocation8], 1
    %8799 = vsyncpa [#allocation11], 1
    %8800 = vsyncpa [#allocation6], 1
    %s8801 = scalar_lea.sflag [#allocation6], 1
    %8802 = vsyncpa %s8801, 1

</llo_original>
